<compile_context>
chip_gen: v6e
topology: v6e:2x2x1
jax: 0.10.0
libtpu: 0.0.40
codegen_flags: <defaults>
</compile_context>

<pallas_src>
import functools
import math

import jax
import jax.numpy as jnp
from jax.experimental import pallas as pl
from jax.experimental.pallas import tpu as pltpu


# ------------------------------ helpers --------------------------------------


def _elu(x):
    return jnp.where(x > 0, x, jnp.exp(x) - 1.0)


def _pad_cols(w, mult=128):
    pad = (-w.shape[1]) % mult
    if pad:
        w = jnp.concatenate([w, jnp.zeros((w.shape[0], pad), w.dtype)], axis=1)
    return w


# --------------------------- projection kernel -------------------------------
# out = x @ [W_all | P_src | P_dst | 0-pad]   (tiled over rows, MXU, lane-dense)


def proj_kernel(x_ref, w_ref, out_ref):
    out_ref[...] = jnp.dot(
        x_ref[...], w_ref[...], preferred_element_type=jnp.float32
    ).astype(out_ref.dtype)


def project(x, w_cat, *, row_tile):
    n, nin = x.shape
    ncat = w_cat.shape[1]          # already padded to a multiple of 128
    grid = (n // row_tile,)
    return pl.pallas_call(
        proj_kernel,
        out_shape=jax.ShapeDtypeStruct((n, ncat), jnp.float32),
        grid_spec=pltpu.PrefetchScalarGridSpec(
            num_scalar_prefetch=0,
            grid=grid,
            in_specs=[
                pl.BlockSpec((row_tile, nin), lambda i: (i, 0)),
                pl.BlockSpec((nin, ncat), lambda i: (0, 0)),
            ],
            out_specs=pl.BlockSpec((row_tile, ncat), lambda i: (i, 0)),
        ),
        compiler_params=pltpu.CompilerParams(
            dimension_semantics=("parallel",),
            vmem_limit_bytes=32 * 1024 * 1024,
        ),
        cost_estimate=pl.CostEstimate(
            flops=2 * n * nin * ncat,
            transcendentals=0,
            bytes_accessed=4 * (n * nin + nin * ncat + n * ncat),
        ),
    )(x, w_cat)


# --------------------------- attention kernel ---------------------------------
# Fused multi-head sparse-GAT aggregation, (row, col)-tiled online accumulation.
# Per tile & head the score matrix is rebuilt from precomputed per-node exp
# factors (no EUP work), masked once, and pushed through the MXU against
# [h_k | 1] so numerator and rowsum come out of the same matmul.


def attn_kernel(
    src_ref,      # (TR, 3*nheads)  = [f_src | exp(-f_src) | exp(-a*f_src)]
    dstT_ref,     # (3*nheads, TC)  = [f_dst | exp(-f_dst) | exp(-a*f_dst)]^T
    h_ref,        # (TC, nheads*(nout+1))  per-head [h_k | 1] blocks
    adj_ref,      # (TR, TC) int8   sparsity pattern tile
    out_ref,      # (TR, nheads*nout)      output (resident across col tiles)
    acc_ref,      # VMEM (nheads, TR, nout+1) f32   [numerator | rowsum]
    *,
    nheads,
    nout,
    concat,
    final_logsoftmax,
):
    j = pl.program_id(1)

    @pl.when(j == 0)
    def _init():
        acc_ref[...] = jnp.zeros_like(acc_ref)

    # ---- accumulate this (row, col) tile -------------------------------------
    src = src_ref[...]
    dstT = dstT_ref[...]
    h = h_ref[...]
    mask = adj_ref[...].astype(jnp.float32)      # hoisted: one unpack per tile
    for k in range(nheads):                      # static unroll; adj reused
        s = src[:, k:k + 1] + dstT[k:k + 1, :]                       # sign only
        pos = src[:, nheads + k:nheads + k + 1] * dstT[nheads + k:nheads + k + 1, :]
        neg = (src[:, 2 * nheads + k:2 * nheads + k + 1]
               * dstT[2 * nheads + k:2 * nheads + k + 1, :])
        e = jnp.where(s > 0, pos, neg) * mask                        # (TR, TC)
        acc_ref[k] += jnp.dot(
            e, h[:, k * (nout + 1):(k + 1) * (nout + 1)],
            preferred_element_type=jnp.float32,
        )

    @pl.when(j == pl.num_programs(1) - 1)
    def _finalize():
        cols = []
        for k in range(nheads):
            blk = acc_ref[k]                                 # (TR, nout+1)
            # NOTE: matches pyGAT (no epsilon); demo guarantees self-loops so
            # every row has rowsum > 0.  Exact reciprocal to hold tolerance.
            inv = pl.reciprocal(blk[:, nout:nout + 1], approx=False)
            hp = blk[:, :nout] * inv
            if concat:
                hp = _elu(hp)
            cols.append(hp)
        res = jnp.concatenate(cols, axis=1) if nheads > 1 else cols[0]
        if final_logsoftmax:
            y = _elu(res)
            m = jnp.max(y, axis=1, keepdims=True)
            z = y - m
            res = z - jnp.log(jnp.sum(jnp.exp(z), axis=1, keepdims=True))
        out_ref[...] = res.astype(out_ref.dtype)


def gat_attention(
    src_feats, dstT_feats, h_aug, adj_i8, *,
    nheads, nout, concat, final_logsoftmax, row_tile, col_tile,
):
    n = adj_i8.shape[0]
    rt, ct = n // row_tile, n // col_tile
    width_aug = nheads * (nout + 1)
    width_out = nheads * nout
    f3 = 3 * nheads

    kernel = functools.partial(
        attn_kernel, nheads=nheads, nout=nout,
        concat=concat, final_logsoftmax=final_logsoftmax,
    )

    grid_spec = pltpu.PrefetchScalarGridSpec(
        num_scalar_prefetch=0,
        grid=(rt, ct),
        in_specs=[
            pl.BlockSpec((row_tile, f3), lambda i, j: (i, 0)),
            pl.BlockSpec((f3, col_tile), lambda i, j: (0, j)),
            pl.BlockSpec((col_tile, width_aug), lambda i, j: (j, 0)),
            pl.BlockSpec((row_tile, col_tile), lambda i, j: (i, j)),
        ],
        out_specs=pl.BlockSpec((row_tile, width_out), lambda i, j: (i, 0)),
        scratch_shapes=[
            pltpu.VMEM((nheads, row_tile, nout + 1), jnp.float32),
        ],
    )

    return pl.pallas_call(
        kernel,
        out_shape=jax.ShapeDtypeStruct((n, width_out), jnp.float32),
        grid_spec=grid_spec,
        compiler_params=pltpu.CompilerParams(
            dimension_semantics=("parallel", "arbitrary"),
            vmem_limit_bytes=64 * 1024 * 1024,
        ),
        cost_estimate=pl.CostEstimate(
            # per head per tile: ~6 VPU ops + a (TR,TC)x(TC,nout+1) matmul
            flops=n * n * nheads * (2 * (nout + 1) + 6),
            transcendentals=n * width_out,        # finalize ELU/softmax only
            bytes_accessed=(
                n * n                              # adj (int8), read once
                + rt * n * width_aug * 4           # h_aug re-read per row tile
                + rt * f3 * n * 4                  # dstT re-read per row tile
                + ct * n * f3 * 4                  # src read per col step
                + n * width_out * 4                # output written once
            ),
        ),
    )(src_feats, dstT_feats, h_aug, adj_i8)


# ------------------------------ SpGAT forward ---------------------------------


def _prep_layer(proj, nheads, nout, alpha):
    """Slice projection output, precompute per-node exp factors, build [h|1]."""
    width = nheads * nout
    h_all = proj[:, :width]
    f_src = proj[:, width:width + nheads]
    f_dst = proj[:, width + nheads:width + 2 * nheads]
    # per-node exp factors (O(N*nheads) transcendentals instead of O(N^2*nheads))
    src_feats = jnp.concatenate(
        [f_src, jnp.exp(-f_src), jnp.exp(-alpha * f_src)], axis=1)
    dst_feats = jnp.concatenate(
        [f_dst, jnp.exp(-f_dst), jnp.exp(-alpha * f_dst)], axis=1)
    n = h_all.shape[0]
    ones = jnp.ones((n, 1), dtype=h_all.dtype)
    blocks = []
    for k in range(nheads):
        blocks.append(h_all[:, k * nout:(k + 1) * nout])
        blocks.append(ones)                       # rowsum column for the MXU
    h_aug = jnp.concatenate(blocks, axis=1)       # (N, nheads*(nout+1))
    return src_feats, dst_feats.T, h_aug


def spgat_forward(params, x, adj, *, alpha, row_tile=128, col_tile=256):
    n = x.shape[0]
    row_tile = min(row_tile, n)
    col_tile = min(col_tile, n)
    assert n % row_tile == 0 and n % col_tile == 0, "N must divide the tile size"

    # adjacency: only the sparsity pattern matters -> int8 (4x less HBM traffic)
    adj_i8 = (adj != 0).astype(jnp.int8)

    # dropout(x) -> identity in eval mode

    # ---------------- layer 1: all heads fused --------------------------------
    nheads = len(params["heads"])
    nhid = params["heads"][0][0].shape[1]
    w_all = jnp.concatenate([w for (w, _) in params["heads"]], axis=1)
    p_src = jnp.concatenate(
        [w @ a[0, :nhid][:, None] for (w, a) in params["heads"]], axis=1)
    p_dst = jnp.concatenate(
        [w @ a[0, nhid:][:, None] for (w, a) in params["heads"]], axis=1)
    w_cat = _pad_cols(jnp.concatenate([w_all, p_src, p_dst], axis=1))

    proj = project(x, w_cat, row_tile=row_tile)
    src_f, dstT_f, h_aug = _prep_layer(proj, nheads, nhid, alpha)

    h1 = gat_attention(
        src_f, dstT_f, h_aug, adj_i8,
        nheads=nheads, nout=nhid, concat=True, final_logsoftmax=False,
        row_tile=row_tile, col_tile=col_tile,
    )

    # dropout(h1) -> identity in eval mode

    # ------------- layer 2: out attention + fused ELU + log_softmax -----------
    w2, a2 = params["out_w"], params["out_a"]
    nclass = w2.shape[1]
    p2_src = w2 @ a2[0, :nclass][:, None]
    p2_dst = w2 @ a2[0, nclass:][:, None]
    w2_cat = _pad_cols(jnp.concatenate([w2, p2_src, p2_dst], axis=1))

    proj2 = project(h1, w2_cat, row_tile=row_tile)
    src2, dstT2, h2_aug = _prep_layer(proj2, 1, nclass, alpha)

    return gat_attention(
        src2, dstT2, h2_aug, adj_i8,
        nheads=1, nout=nclass, concat=False, final_logsoftmax=True,
        row_tile=row_tile, col_tile=col_tile,
    )


# ------------------------- reference (pure JAX) --------------------------------


def _ref_layer(x, adj, w, a, alpha, concat):
    nout = w.shape[1]
    h = x @ w
    f_src = h @ a[0, :nout]
    f_dst = h @ a[0, nout:]
    s = f_src[:, None] + f_dst[None, :]
    mask = (adj != 0).astype(jnp.float32)
    e = jnp.exp(-jnp.where(s > 0, s, alpha * s)) * mask
    rowsum = e.sum(axis=1, keepdims=True)
    hp = (e @ h) / rowsum
    return _elu(hp) if concat else hp


def _ref_forward(params, x, adj, alpha):
    h = jnp.concatenate(
        [_ref_layer(x, adj, w, a, alpha, True) for (w, a) in params["heads"]],
        axis=1,
    )
    out = _ref_layer(h, adj, params["out_w"], params["out_a"], alpha, False)
    return jax.nn.log_softmax(_elu(out), axis=1)


# ----------------------------- parameter init ----------------------------------


def xavier_normal(key, shape, gain):
    fan_out, fan_in = shape[0], shape[1]
    std = gain * math.sqrt(2.0 / (fan_in + fan_out))
    return std * jax.random.normal(key, shape, dtype=jnp.float32)


def init_params(key, nfeat, nhid, nclass, nheads):
    gain = 1.414
    params = {"heads": []}
    for _ in range(nheads):
        key, kw, ka = jax.random.split(key, 3)
        w = xavier_normal(kw, (nfeat, nhid), gain)       # W: (in, out)
        a = xavier_normal(ka, (1, 2 * nhid), gain)       # a: (1, 2*out)
        params["heads"].append((w, a))
    key, kw, ka = jax.random.split(key, 3)
    params["out_w"] = xavier_normal(kw, (nhid * nheads, nclass), gain)
    params["out_a"] = xavier_normal(ka, (1, 2 * nclass), gain)
    return params


# ---------------------------------- main ---------------------------------------


if __name__ == "__main__":
    N, nfeat, nhid, nclass, nheads = 256, 32, 16, 8, 4
    alpha = 0.2

    key = jax.random.PRNGKey(0)
    kx, kadj, kparam = jax.random.split(key, 3)

    x = jax.random.normal(kx, (N, nfeat), dtype=jnp.float32)
    # random sparse-ish adjacency with self loops (every row has >= 1 edge)
    adj = (jax.random.uniform(kadj, (N, N)) < 0.1).astype(jnp.float32)
    adj = jnp.maximum(adj, jnp.eye(N, dtype=jnp.float32))

    params = init_params(kparam, nfeat, nhid, nclass, nheads)

    fwd = jax.jit(functools.partial(spgat_forward, alpha=alpha))
    out = jax.block_until_ready(fwd(params, x, adj))

    ref = _ref_forward(params, x, adj, alpha)
    assert out.shape == (N, nclass)
    max_err = float(jnp.max(jnp.abs(out - ref)))
    assert jnp.allclose(out, ref, atol=1e-3, rtol=1e-3), (
        f"mismatch vs reference, max abs err = {max_err}"
    )

    print("KERNEL_OK")
</pallas_src>

<mosaic_0001>
module attributes {stable_mosaic.version = 11 : i64} {
  func.func @proj_kernel(%arg0: i32, %arg1: memref<128x32xf32, #tpu.memory_space<vmem>>, %arg2: memref<32x128xf32, #tpu.memory_space<vmem>>, %arg3: memref<128x128xf32, #tpu.memory_space<vmem>>) attributes {dimension_semantics = [#tpu.dimension_semantics<parallel>], iteration_bounds = array<i64: 2>, scalar_prefetch = 0 : i64, scratch_operands = 0 : i64, tpu.core_type = #tpu.core_type<tc>, window_params = [{transform_indices = @transform_0, window_bounds = array<i64: 128, 32>}, {pipeline_mode = #tpu.pipeline_mode<synchronous>, transform_indices = @transform_1, window_bounds = array<i64: 32, 128>}, {transform_indices = @transform_2, window_bounds = array<i64: 128, 128>}]} {
    %c0 = arith.constant 0 : index
    %c0_0 = arith.constant 0 : index
    %0 = vector.load %arg1[%c0, %c0_0] : memref<128x32xf32, #tpu.memory_space<vmem>>, vector<128x32xf32>
    %c0_1 = arith.constant 0 : index
    %c0_2 = arith.constant 0 : index
    %1 = vector.load %arg2[%c0_1, %c0_2] : memref<32x128xf32, #tpu.memory_space<vmem>>, vector<32x128xf32>
    %cst = arith.constant dense<0.000000e+00> : vector<128x128xf32>
    %2 = tpu.matmul %0, %1, %cst {dimension_numbers = #tpu.dot_dimension_numbers<[1], [0], [0], [1], [0, 0, 1, 1], [], []>} : vector<128x32xf32>, vector<32x128xf32>, vector<128x128xf32> -> vector<128x128xf32>
    %c0_3 = arith.constant 0 : index
    %c0_4 = arith.constant 0 : index
    %3 = vector.load %arg3[%c0_3, %c0_4] : memref<128x128xf32, #tpu.memory_space<vmem>>, vector<128x128xf32>
    tpu.vector_store %arg3[%c0_3, %c0_4], %2 {strides = array<i32>} : memref<128x128xf32, #tpu.memory_space<vmem>>, vector<128x128xf32>,
    return
  }
  func.func @transform_0(%arg0: i32) -> (i32, i32) {
    %c0_i32 = arith.constant 0 : i32
    %c0_i32_0 = arith.constant 0 : i32
    return %arg0, %c0_i32 : i32, i32
  }
  func.func @transform_1(%arg0: i32) -> (i32, i32) {
    %c0_i32 = arith.constant 0 : i32
    %c0_i32_0 = arith.constant 0 : i32
    %c0_i32_1 = arith.constant 0 : i32
    return %c0_i32, %c0_i32_0 : i32, i32
  }
  func.func @transform_2(%arg0: i32) -> (i32, i32) {
    %c0_i32 = arith.constant 0 : i32
    %c0_i32_0 = arith.constant 0 : i32
    return %arg0, %c0_i32 : i32, i32
  }
}

module attributes {stable_mosaic.version = 11 : i64} {
  func.func @attn_kernel(%arg0: i32, %arg1: i32, %arg2: memref<128x12xf32, #tpu.memory_space<vmem>>, %arg3: memref<12x256xf32, #tpu.memory_space<vmem>>, %arg4: memref<256x68xf32, #tpu.memory_space<vmem>>, %arg5: memref<128x256xi8, #tpu.memory_space<vmem>>, %arg6: memref<128x64xf32, #tpu.memory_space<vmem>>, %arg7: memref<4x128x17xf32, #tpu.memory_space<vmem>>) attributes {dimension_semantics = [#tpu.dimension_semantics<parallel>, #tpu.dimension_semantics<arbitrary>], iteration_bounds = array<i64: 2, 1>, scalar_prefetch = 0 : i64, scratch_operands = 1 : i64, tpu.core_type = #tpu.core_type<tc>, window_params = [{transform_indices = @transform_0, window_bounds = array<i64: 128, 12>}, {transform_indices = @transform_1, window_bounds = array<i64: 12, 256>}, {transform_indices = @transform_2, window_bounds = array<i64: 256, 68>}, {transform_indices = @transform_3, window_bounds = array<i64: 128, 256>}, {transform_indices = @transform_4, window_bounds = array<i64: 128, 64>}]} {
    %c0_i32 = arith.constant 0 : i32
    %0 = arith.cmpi eq, %arg1, %c0_i32 : i32
    %1 = arith.extui %0 : i1 to i32
    %c0_i32_0 = arith.constant 0 : i32
    %2 = arith.cmpi ne, %1, %c0_i32_0 : i32
    scf.if %2 {
      %cst_38 = arith.constant 0.000000e+00 : f32
      %119 = vector.broadcast %cst_38 : f32 to vector<4x128x17xf32>
      %c0_39 = arith.constant 0 : index
      %c0_40 = arith.constant 0 : index
      %c0_41 = arith.constant 0 : index
      %120 = vector.load %arg7[%c0_39, %c0_40, %c0_41] : memref<4x128x17xf32, #tpu.memory_space<vmem>>, vector<4x128x17xf32>
      tpu.vector_store %arg7[%c0_39, %c0_40, %c0_41], %119 {strides = array<i32>} : memref<4x128x17xf32, #tpu.memory_space<vmem>>, vector<4x128x17xf32>,
    } else {
    }
    %c0 = arith.constant 0 : index
    %c0_1 = arith.constant 0 : index
    %3 = vector.load %arg2[%c0, %c0_1] : memref<128x12xf32, #tpu.memory_space<vmem>>, vector<128x12xf32>
    %c0_2 = arith.constant 0 : index
    %c0_3 = arith.constant 0 : index
    %4 = vector.load %arg3[%c0_2, %c0_3] : memref<12x256xf32, #tpu.memory_space<vmem>>, vector<12x256xf32>
    %c0_4 = arith.constant 0 : index
    %c0_5 = arith.constant 0 : index
    %5 = vector.load %arg4[%c0_4, %c0_5] : memref<256x68xf32, #tpu.memory_space<vmem>>, vector<256x68xf32>
    %c0_6 = arith.constant 0 : index
    %c0_7 = arith.constant 0 : index
    %6 = vector.load %arg5[%c0_6, %c0_7] : memref<128x256xi8, #tpu.memory_space<vmem>>, vector<128x256xi8>
    %7 = arith.sitofp %6 : vector<128x256xi8> to vector<128x256xf32>
    %8 = vector.extract_strided_slice %3 {offsets = [0, 0], sizes = [128, 1], strides = [1, 1]} : vector<128x12xf32> to vector<128x1xf32>
    %9 = vector.extract_strided_slice %4 {offsets = [0, 0], sizes = [1, 256], strides = [1, 1]} : vector<12x256xf32> to vector<1x256xf32>
    %10 = vector.broadcast %8 : vector<128x1xf32> to vector<128x256xf32>
    %11 = vector.broadcast %9 : vector<1x256xf32> to vector<128x256xf32>
    %12 = arith.addf %10, %11 : vector<128x256xf32>
    %13 = vector.extract_strided_slice %3 {offsets = [0, 4], sizes = [128, 1], strides = [1, 1]} : vector<128x12xf32> to vector<128x1xf32>
    %14 = vector.extract_strided_slice %4 {offsets = [4, 0], sizes = [1, 256], strides = [1, 1]} : vector<12x256xf32> to vector<1x256xf32>
    %15 = vector.broadcast %13 : vector<128x1xf32> to vector<128x256xf32>
    %16 = vector.broadcast %14 : vector<1x256xf32> to vector<128x256xf32>
    %17 = arith.mulf %15, %16 : vector<128x256xf32>
    %18 = vector.extract_strided_slice %3 {offsets = [0, 8], sizes = [128, 1], strides = [1, 1]} : vector<128x12xf32> to vector<128x1xf32>
    %19 = vector.extract_strided_slice %4 {offsets = [8, 0], sizes = [1, 256], strides = [1, 1]} : vector<12x256xf32> to vector<1x256xf32>
    %20 = vector.broadcast %18 : vector<128x1xf32> to vector<128x256xf32>
    %21 = vector.broadcast %19 : vector<1x256xf32> to vector<128x256xf32>
    %22 = arith.mulf %20, %21 : vector<128x256xf32>
    %cst = arith.constant 0.000000e+00 : f32
    %23 = vector.broadcast %cst : f32 to vector<128x256xf32>
    %24 = arith.cmpf ogt, %12, %23 : vector<128x256xf32>
    %25 = arith.select %24, %17, %22 : vector<128x256xi1>, vector<128x256xf32>
    %26 = arith.mulf %25, %7 : vector<128x256xf32>
    %c0_8 = arith.constant 0 : index
    %c0_9 = arith.constant 0 : index
    %c0_10 = arith.constant 0 : index
    %27 = vector.load %arg7[%c0_8, %c0_9, %c0_10] : memref<4x128x17xf32, #tpu.memory_space<vmem>>, vector<1x128x17xf32>
    %28 = vector.shape_cast %27 : vector<1x128x17xf32> to vector<128x17xf32>
    %29 = vector.extract_strided_slice %5 {offsets = [0, 0], sizes = [256, 17], strides = [1, 1]} : vector<256x68xf32> to vector<256x17xf32>
    %cst_11 = arith.constant dense<0.000000e+00> : vector<128x17xf32>
    %30 = tpu.matmul %26, %29, %cst_11 {dimension_numbers = #tpu.dot_dimension_numbers<[1], [0], [0], [1], [0, 0, 1, 1], [], []>} : vector<128x256xf32>, vector<256x17xf32>, vector<128x17xf32> -> vector<128x17xf32>
    %31 = arith.addf %28, %30 : vector<128x17xf32>
    %c0_12 = arith.constant 0 : index
    %c0_13 = arith.constant 0 : index
    %c0_14 = arith.constant 0 : index
    %32 = vector.load %arg7[%c0_12, %c0_13, %c0_14] : memref<4x128x17xf32, #tpu.memory_space<vmem>>, vector<1x128x17xf32>
    %33 = vector.shape_cast %32 : vector<1x128x17xf32> to vector<128x17xf32>
    %34 = vector.shape_cast %31 : vector<128x17xf32> to vector<1x128x17xf32>
    tpu.vector_store %arg7[%c0_12, %c0_13, %c0_14], %34 {strides = array<i32>} : memref<4x128x17xf32, #tpu.memory_space<vmem>>, vector<1x128x17xf32>,
    %35 = vector.extract_strided_slice %3 {offsets = [0, 1], sizes = [128, 1], strides = [1, 1]} : vector<128x12xf32> to vector<128x1xf32>
    %36 = vector.extract_strided_slice %4 {offsets = [1, 0], sizes = [1, 256], strides = [1, 1]} : vector<12x256xf32> to vector<1x256xf32>
    %37 = vector.broadcast %35 : vector<128x1xf32> to vector<128x256xf32>
    %38 = vector.broadcast %36 : vector<1x256xf32> to vector<128x256xf32>
    %39 = arith.addf %37, %38 : vector<128x256xf32>
    %40 = vector.extract_strided_slice %3 {offsets = [0, 5], sizes = [128, 1], strides = [1, 1]} : vector<128x12xf32> to vector<128x1xf32>
    %41 = vector.extract_strided_slice %4 {offsets = [5, 0], sizes = [1, 256], strides = [1, 1]} : vector<12x256xf32> to vector<1x256xf32>
    %42 = vector.broadcast %40 : vector<128x1xf32> to vector<128x256xf32>
    %43 = vector.broadcast %41 : vector<1x256xf32> to vector<128x256xf32>
    %44 = arith.mulf %42, %43 : vector<128x256xf32>
    %45 = vector.extract_strided_slice %3 {offsets = [0, 9], sizes = [128, 1], strides = [1, 1]} : vector<128x12xf32> to vector<128x1xf32>
    %46 = vector.extract_strided_slice %4 {offsets = [9, 0], sizes = [1, 256], strides = [1, 1]} : vector<12x256xf32> to vector<1x256xf32>
    %47 = vector.broadcast %45 : vector<128x1xf32> to vector<128x256xf32>
    %48 = vector.broadcast %46 : vector<1x256xf32> to vector<128x256xf32>
    %49 = arith.mulf %47, %48 : vector<128x256xf32>
    %cst_15 = arith.constant 0.000000e+00 : f32
    %50 = vector.broadcast %cst_15 : f32 to vector<128x256xf32>
    %51 = arith.cmpf ogt, %39, %50 : vector<128x256xf32>
    %52 = arith.select %51, %44, %49 : vector<128x256xi1>, vector<128x256xf32>
    %53 = arith.mulf %52, %7 : vector<128x256xf32>
    %c1 = arith.constant 1 : index
    %c0_16 = arith.constant 0 : index
    %c0_17 = arith.constant 0 : index
    %54 = vector.load %arg7[%c1, %c0_16, %c0_17] : memref<4x128x17xf32, #tpu.memory_space<vmem>>, vector<1x128x17xf32>
    %55 = vector.shape_cast %54 : vector<1x128x17xf32> to vector<128x17xf32>
    %56 = vector.extract_strided_slice %5 {offsets = [0, 17], sizes = [256, 17], strides = [1, 1]} : vector<256x68xf32> to vector<256x17xf32>
    %cst_18 = arith.constant dense<0.000000e+00> : vector<128x17xf32>
    %57 = tpu.matmul %53, %56, %cst_18 {dimension_numbers = #tpu.dot_dimension_numbers<[1], [0], [0], [1], [0, 0, 1, 1], [], []>} : vector<128x256xf32>, vector<256x17xf32>, vector<128x17xf32> -> vector<128x17xf32>
    %58 = arith.addf %55, %57 : vector<128x17xf32>
    %c1_19 = arith.constant 1 : index
    %c0_20 = arith.constant 0 : index
    %c0_21 = arith.constant 0 : index
    %59 = vector.load %arg7[%c1_19, %c0_20, %c0_21] : memref<4x128x17xf32, #tpu.memory_space<vmem>>, vector<1x128x17xf32>
    %60 = vector.shape_cast %59 : vector<1x128x17xf32> to vector<128x17xf32>
    %61 = vector.shape_cast %58 : vector<128x17xf32> to vector<1x128x17xf32>
    tpu.vector_store %arg7[%c1_19, %c0_20, %c0_21], %61 {strides = array<i32>} : memref<4x128x17xf32, #tpu.memory_space<vmem>>, vector<1x128x17xf32>,
    %62 = vector.extract_strided_slice %3 {offsets = [0, 2], sizes = [128, 1], strides = [1, 1]} : vector<128x12xf32> to vector<128x1xf32>
    %63 = vector.extract_strided_slice %4 {offsets = [2, 0], sizes = [1, 256], strides = [1, 1]} : vector<12x256xf32> to vector<1x256xf32>
    %64 = vector.broadcast %62 : vector<128x1xf32> to vector<128x256xf32>
    %65 = vector.broadcast %63 : vector<1x256xf32> to vector<128x256xf32>
    %66 = arith.addf %64, %65 : vector<128x256xf32>
    %67 = vector.extract_strided_slice %3 {offsets = [0, 6], sizes = [128, 1], strides = [1, 1]} : vector<128x12xf32> to vector<128x1xf32>
    %68 = vector.extract_strided_slice %4 {offsets = [6, 0], sizes = [1, 256], strides = [1, 1]} : vector<12x256xf32> to vector<1x256xf32>
    %69 = vector.broadcast %67 : vector<128x1xf32> to vector<128x256xf32>
    %70 = vector.broadcast %68 : vector<1x256xf32> to vector<128x256xf32>
    %71 = arith.mulf %69, %70 : vector<128x256xf32>
    %72 = vector.extract_strided_slice %3 {offsets = [0, 10], sizes = [128, 1], strides = [1, 1]} : vector<128x12xf32> to vector<128x1xf32>
    %73 = vector.extract_strided_slice %4 {offsets = [10, 0], sizes = [1, 256], strides = [1, 1]} : vector<12x256xf32> to vector<1x256xf32>
    %74 = vector.broadcast %72 : vector<128x1xf32> to vector<128x256xf32>
    %75 = vector.broadcast %73 : vector<1x256xf32> to vector<128x256xf32>
    %76 = arith.mulf %74, %75 : vector<128x256xf32>
    %cst_22 = arith.constant 0.000000e+00 : f32
    %77 = vector.broadcast %cst_22 : f32 to vector<128x256xf32>
    %78 = arith.cmpf ogt, %66, %77 : vector<128x256xf32>
    %79 = arith.select %78, %71, %76 : vector<128x256xi1>, vector<128x256xf32>
    %80 = arith.mulf %79, %7 : vector<128x256xf32>
    %c2 = arith.constant 2 : index
    %c0_23 = arith.constant 0 : index
    %c0_24 = arith.constant 0 : index
    %81 = vector.load %arg7[%c2, %c0_23, %c0_24] : memref<4x128x17xf32, #tpu.memory_space<vmem>>, vector<1x128x17xf32>
    %82 = vector.shape_cast %81 : vector<1x128x17xf32> to vector<128x17xf32>
    %83 = vector.extract_strided_slice %5 {offsets = [0, 34], sizes = [256, 17], strides = [1, 1]} : vector<256x68xf32> to vector<256x17xf32>
    %cst_25 = arith.constant dense<0.000000e+00> : vector<128x17xf32>
    %84 = tpu.matmul %80, %83, %cst_25 {dimension_numbers = #tpu.dot_dimension_numbers<[1], [0], [0], [1], [0, 0, 1, 1], [], []>} : vector<128x256xf32>, vector<256x17xf32>, vector<128x17xf32> -> vector<128x17xf32>
    %85 = arith.addf %82, %84 : vector<128x17xf32>
    %c2_26 = arith.constant 2 : index
    %c0_27 = arith.constant 0 : index
    %c0_28 = arith.constant 0 : index
    %86 = vector.load %arg7[%c2_26, %c0_27, %c0_28] : memref<4x128x17xf32, #tpu.memory_space<vmem>>, vector<1x128x17xf32>
    %87 = vector.shape_cast %86 : vector<1x128x17xf32> to vector<128x17xf32>
    %88 = vector.shape_cast %85 : vector<128x17xf32> to vector<1x128x17xf32>
    tpu.vector_store %arg7[%c2_26, %c0_27, %c0_28], %88 {strides = array<i32>} : memref<4x128x17xf32, #tpu.memory_space<vmem>>, vector<1x128x17xf32>,
    %89 = vector.extract_strided_slice %3 {offsets = [0, 3], sizes = [128, 1], strides = [1, 1]} : vector<128x12xf32> to vector<128x1xf32>
    %90 = vector.extract_strided_slice %4 {offsets = [3, 0], sizes = [1, 256], strides = [1, 1]} : vector<12x256xf32> to vector<1x256xf32>
    %91 = vector.broadcast %89 : vector<128x1xf32> to vector<128x256xf32>
    %92 = vector.broadcast %90 : vector<1x256xf32> to vector<128x256xf32>
    %93 = arith.addf %91, %92 : vector<128x256xf32>
    %94 = vector.extract_strided_slice %3 {offsets = [0, 7], sizes = [128, 1], strides = [1, 1]} : vector<128x12xf32> to vector<128x1xf32>
    %95 = vector.extract_strided_slice %4 {offsets = [7, 0], sizes = [1, 256], strides = [1, 1]} : vector<12x256xf32> to vector<1x256xf32>
    %96 = vector.broadcast %94 : vector<128x1xf32> to vector<128x256xf32>
    %97 = vector.broadcast %95 : vector<1x256xf32> to vector<128x256xf32>
    %98 = arith.mulf %96, %97 : vector<128x256xf32>
    %99 = vector.extract_strided_slice %3 {offsets = [0, 11], sizes = [128, 1], strides = [1, 1]} : vector<128x12xf32> to vector<128x1xf32>
    %100 = vector.extract_strided_slice %4 {offsets = [11, 0], sizes = [1, 256], strides = [1, 1]} : vector<12x256xf32> to vector<1x256xf32>
    %101 = vector.broadcast %99 : vector<128x1xf32> to vector<128x256xf32>
    %102 = vector.broadcast %100 : vector<1x256xf32> to vector<128x256xf32>
    %103 = arith.mulf %101, %102 : vector<128x256xf32>
    %cst_29 = arith.constant 0.000000e+00 : f32
    %104 = vector.broadcast %cst_29 : f32 to vector<128x256xf32>
    %105 = arith.cmpf ogt, %93, %104 : vector<128x256xf32>
    %106 = arith.select %105, %98, %103 : vector<128x256xi1>, vector<128x256xf32>
    %107 = arith.mulf %106, %7 : vector<128x256xf32>
    %c3 = arith.constant 3 : index
    %c0_30 = arith.constant 0 : index
    %c0_31 = arith.constant 0 : index
    %108 = vector.load %arg7[%c3, %c0_30, %c0_31] : memref<4x128x17xf32, #tpu.memory_space<vmem>>, vector<1x128x17xf32>
    %109 = vector.shape_cast %108 : vector<1x128x17xf32> to vector<128x17xf32>
    %110 = vector.extract_strided_slice %5 {offsets = [0, 51], sizes = [256, 17], strides = [1, 1]} : vector<256x68xf32> to vector<256x17xf32>
    %cst_32 = arith.constant dense<0.000000e+00> : vector<128x17xf32>
    %111 = tpu.matmul %107, %110, %cst_32 {dimension_numbers = #tpu.dot_dimension_numbers<[1], [0], [0], [1], [0, 0, 1, 1], [], []>} : vector<128x256xf32>, vector<256x17xf32>, vector<128x17xf32> -> vector<128x17xf32>
    %112 = arith.addf %109, %111 : vector<128x17xf32>
    %c3_33 = arith.constant 3 : index
    %c0_34 = arith.constant 0 : index
    %c0_35 = arith.constant 0 : index
    %113 = vector.load %arg7[%c3_33, %c0_34, %c0_35] : memref<4x128x17xf32, #tpu.memory_space<vmem>>, vector<1x128x17xf32>
    %114 = vector.shape_cast %113 : vector<1x128x17xf32> to vector<128x17xf32>
    %115 = vector.shape_cast %112 : vector<128x17xf32> to vector<1x128x17xf32>
    tpu.vector_store %arg7[%c3_33, %c0_34, %c0_35], %115 {strides = array<i32>} : memref<4x128x17xf32, #tpu.memory_space<vmem>>, vector<1x128x17xf32>,
    %c0_i32_36 = arith.constant 0 : i32
    %116 = arith.cmpi eq, %arg1, %c0_i32_36 : i32
    %117 = arith.extui %116 : i1 to i32
    %c0_i32_37 = arith.constant 0 : i32
    %118 = arith.cmpi ne, %117, %c0_i32_37 : i32
    scf.if %118 {
      %c0_38 = arith.constant 0 : index
      %c0_39 = arith.constant 0 : index
      %c0_40 = arith.constant 0 : index
      %119 = vector.load %arg7[%c0_38, %c0_39, %c0_40] : memref<4x128x17xf32, #tpu.memory_space<vmem>>, vector<1x128x17xf32>
      %120 = vector.shape_cast %119 : vector<1x128x17xf32> to vector<128x17xf32>
      %121 = vector.extract_strided_slice %120 {offsets = [0, 16], sizes = [128, 1], strides = [1, 1]} : vector<128x17xf32> to vector<128x1xf32>
      %122 = tpu.reciprocal %121 : vector<128x1xf32> -> vector<128x1xf32>
      %123 = vector.extract_strided_slice %120 {offsets = [0, 0], sizes = [128, 16], strides = [1, 1]} : vector<128x17xf32> to vector<128x16xf32>
      %124 = vector.broadcast %122 : vector<128x1xf32> to vector<128x16xf32>
      %125 = arith.mulf %123, %124 : vector<128x16xf32>
      %cst_41 = arith.constant 0.000000e+00 : f32
      %126 = vector.broadcast %cst_41 : f32 to vector<128x16xf32>
      %127 = arith.cmpf ogt, %125, %126 : vector<128x16xf32>
      %128 = math.exp %125 : vector<128x16xf32>
      %cst_42 = arith.constant 1.000000e+00 : f32
      %129 = vector.broadcast %cst_42 : f32 to vector<128x16xf32>
      %130 = arith.subf %128, %129 : vector<128x16xf32>
      %131 = arith.select %127, %125, %130 : vector<128x16xi1>, vector<128x16xf32>
      %c1_43 = arith.constant 1 : index
      %c0_44 = arith.constant 0 : index
      %c0_45 = arith.constant 0 : index
      %132 = vector.load %arg7[%c1_43, %c0_44, %c0_45] : memref<4x128x17xf32, #tpu.memory_space<vmem>>, vector<1x128x17xf32>
      %133 = vector.shape_cast %132 : vector<1x128x17xf32> to vector<128x17xf32>
      %134 = vector.extract_strided_slice %133 {offsets = [0, 16], sizes = [128, 1], strides = [1, 1]} : vector<128x17xf32> to vector<128x1xf32>
      %135 = tpu.reciprocal %134 : vector<128x1xf32> -> vector<128x1xf32>
      %136 = vector.extract_strided_slice %133 {offsets = [0, 0], sizes = [128, 16], strides = [1, 1]} : vector<128x17xf32> to vector<128x16xf32>
      %137 = vector.broadcast %135 : vector<128x1xf32> to vector<128x16xf32>
      %138 = arith.mulf %136, %137 : vector<128x16xf32>
      %cst_46 = arith.constant 0.000000e+00 : f32
      %139 = vector.broadcast %cst_46 : f32 to vector<128x16xf32>
      %140 = arith.cmpf ogt, %138, %139 : vector<128x16xf32>
      %141 = math.exp %138 : vector<128x16xf32>
      %cst_47 = arith.constant 1.000000e+00 : f32
      %142 = vector.broadcast %cst_47 : f32 to vector<128x16xf32>
      %143 = arith.subf %141, %142 : vector<128x16xf32>
      %144 = arith.select %140, %138, %143 : vector<128x16xi1>, vector<128x16xf32>
      %c2_48 = arith.constant 2 : index
      %c0_49 = arith.constant 0 : index
      %c0_50 = arith.constant 0 : index
      %145 = vector.load %arg7[%c2_48, %c0_49, %c0_50] : memref<4x128x17xf32, #tpu.memory_space<vmem>>, vector<1x128x17xf32>
      %146 = vector.shape_cast %145 : vector<1x128x17xf32> to vector<128x17xf32>
      %147 = vector.extract_strided_slice %146 {offsets = [0, 16], sizes = [128, 1], strides = [1, 1]} : vector<128x17xf32> to vector<128x1xf32>
      %148 = tpu.reciprocal %147 : vector<128x1xf32> -> vector<128x1xf32>
      %149 = vector.extract_strided_slice %146 {offsets = [0, 0], sizes = [128, 16], strides = [1, 1]} : vector<128x17xf32> to vector<128x16xf32>
      %150 = vector.broadcast %148 : vector<128x1xf32> to vector<128x16xf32>
      %151 = arith.mulf %149, %150 : vector<128x16xf32>
      %cst_51 = arith.constant 0.000000e+00 : f32
      %152 = vector.broadcast %cst_51 : f32 to vector<128x16xf32>
      %153 = arith.cmpf ogt, %151, %152 : vector<128x16xf32>
      %154 = math.exp %151 : vector<128x16xf32>
      %cst_52 = arith.constant 1.000000e+00 : f32
      %155 = vector.broadcast %cst_52 : f32 to vector<128x16xf32>
      %156 = arith.subf %154, %155 : vector<128x16xf32>
      %157 = arith.select %153, %151, %156 : vector<128x16xi1>, vector<128x16xf32>
      %c3_53 = arith.constant 3 : index
      %c0_54 = arith.constant 0 : index
      %c0_55 = arith.constant 0 : index
      %158 = vector.load %arg7[%c3_53, %c0_54, %c0_55] : memref<4x128x17xf32, #tpu.memory_space<vmem>>, vector<1x128x17xf32>
      %159 = vector.shape_cast %158 : vector<1x128x17xf32> to vector<128x17xf32>
      %160 = vector.extract_strided_slice %159 {offsets = [0, 16], sizes = [128, 1], strides = [1, 1]} : vector<128x17xf32> to vector<128x1xf32>
      %161 = tpu.reciprocal %160 : vector<128x1xf32> -> vector<128x1xf32>
      %162 = vector.extract_strided_slice %159 {offsets = [0, 0], sizes = [128, 16], strides = [1, 1]} : vector<128x17xf32> to vector<128x16xf32>
      %163 = vector.broadcast %161 : vector<128x1xf32> to vector<128x16xf32>
      %164 = arith.mulf %162, %163 : vector<128x16xf32>
      %cst_56 = arith.constant 0.000000e+00 : f32
      %165 = vector.broadcast %cst_56 : f32 to vector<128x16xf32>
      %166 = arith.cmpf ogt, %164, %165 : vector<128x16xf32>
      %167 = math.exp %164 : vector<128x16xf32>
      %cst_57 = arith.constant 1.000000e+00 : f32
      %168 = vector.broadcast %cst_57 : f32 to vector<128x16xf32>
      %169 = arith.subf %167, %168 : vector<128x16xf32>
      %170 = arith.select %166, %164, %169 : vector<128x16xi1>, vector<128x16xf32>
      %171 = tpu.concatenate %131, %144, %157, %170 in 1 : vector<128x16xf32>, vector<128x16xf32>, vector<128x16xf32>, vector<128x16xf32> -> vector<128x64xf32>
      %c0_58 = arith.constant 0 : index
      %c0_59 = arith.constant 0 : index
      %172 = vector.load %arg6[%c0_58, %c0_59] : memref<128x64xf32, #tpu.memory_space<vmem>>, vector<128x64xf32>
      tpu.vector_store %arg6[%c0_58, %c0_59], %171 {strides = array<i32>} : memref<128x64xf32, #tpu.memory_space<vmem>>, vector<128x64xf32>,
    } else {
    }
    return
  }
  func.func @transform_0(%arg0: i32, %arg1: i32) -> (i32, i32) {
    %c0_i32 = arith.constant 0 : i32
    %c0_i32_0 = arith.constant 0 : i32
    return %arg0, %c0_i32 : i32, i32
  }
  func.func @transform_1(%arg0: i32, %arg1: i32) -> (i32, i32) {
    %c0_i32 = arith.constant 0 : i32
    %c0_i32_0 = arith.constant 0 : i32
    return %c0_i32, %arg1 : i32, i32
  }
  func.func @transform_2(%arg0: i32, %arg1: i32) -> (i32, i32) {
    %c0_i32 = arith.constant 0 : i32
    %c0_i32_0 = arith.constant 0 : i32
    return %arg1, %c0_i32 : i32, i32
  }
  func.func @transform_3(%arg0: i32, %arg1: i32) -> (i32, i32) {
    %c0_i32 = arith.constant 0 : i32
    return %arg0, %arg1 : i32, i32
  }
  func.func @transform_4(%arg0: i32, %arg1: i32) -> (i32, i32) {
    %c0_i32 = arith.constant 0 : i32
    %c0_i32_0 = arith.constant 0 : i32
    return %arg0, %c0_i32 : i32, i32
  }
}

module attributes {stable_mosaic.version = 11 : i64} {
  func.func @proj_kernel(%arg0: i32, %arg1: memref<128x64xf32, #tpu.memory_space<vmem>>, %arg2: memref<64x128xf32, #tpu.memory_space<vmem>>, %arg3: memref<128x128xf32, #tpu.memory_space<vmem>>) attributes {dimension_semantics = [#tpu.dimension_semantics<parallel>], iteration_bounds = array<i64: 2>, scalar_prefetch = 0 : i64, scratch_operands = 0 : i64, tpu.core_type = #tpu.core_type<tc>, window_params = [{transform_indices = @transform_0, window_bounds = array<i64: 128, 64>}, {pipeline_mode = #tpu.pipeline_mode<synchronous>, transform_indices = @transform_1, window_bounds = array<i64: 64, 128>}, {transform_indices = @transform_2, window_bounds = array<i64: 128, 128>}]} {
    %c0 = arith.constant 0 : index
    %c0_0 = arith.constant 0 : index
    %0 = vector.load %arg1[%c0, %c0_0] : memref<128x64xf32, #tpu.memory_space<vmem>>, vector<128x64xf32>
    %c0_1 = arith.constant 0 : index
    %c0_2 = arith.constant 0 : index
    %1 = vector.load %arg2[%c0_1, %c0_2] : memref<64x128xf32, #tpu.memory_space<vmem>>, vector<64x128xf32>
    %cst = arith.constant dense<0.000000e+00> : vector<128x128xf32>
    %2 = tpu.matmul %0, %1, %cst {dimension_numbers = #tpu.dot_dimension_numbers<[1], [0], [0], [1], [0, 0, 1, 1], [], []>} : vector<128x64xf32>, vector<64x128xf32>, vector<128x128xf32> -> vector<128x128xf32>
    %c0_3 = arith.constant 0 : index
    %c0_4 = arith.constant 0 : index
    %3 = vector.load %arg3[%c0_3, %c0_4] : memref<128x128xf32, #tpu.memory_space<vmem>>, vector<128x128xf32>
    tpu.vector_store %arg3[%c0_3, %c0_4], %2 {strides = array<i32>} : memref<128x128xf32, #tpu.memory_space<vmem>>, vector<128x128xf32>,
    return
  }
  func.func @transform_0(%arg0: i32) -> (i32, i32) {
    %c0_i32 = arith.constant 0 : i32
    %c0_i32_0 = arith.constant 0 : i32
    return %arg0, %c0_i32 : i32, i32
  }
  func.func @transform_1(%arg0: i32) -> (i32, i32) {
    %c0_i32 = arith.constant 0 : i32
    %c0_i32_0 = arith.constant 0 : i32
    %c0_i32_1 = arith.constant 0 : i32
    return %c0_i32, %c0_i32_0 : i32, i32
  }
  func.func @transform_2(%arg0: i32) -> (i32, i32) {
    %c0_i32 = arith.constant 0 : i32
    %c0_i32_0 = arith.constant 0 : i32
    return %arg0, %c0_i32 : i32, i32
  }
}

module attributes {stable_mosaic.version = 11 : i64} {
  func.func @attn_kernel(%arg0: i32, %arg1: i32, %arg2: memref<128x3xf32, #tpu.memory_space<vmem>>, %arg3: memref<3x256xf32, #tpu.memory_space<vmem>>, %arg4: memref<256x9xf32, #tpu.memory_space<vmem>>, %arg5: memref<128x256xi8, #tpu.memory_space<vmem>>, %arg6: memref<128x8xf32, #tpu.memory_space<vmem>>, %arg7: memref<1x128x9xf32, #tpu.memory_space<vmem>>) attributes {dimension_semantics = [#tpu.dimension_semantics<parallel>, #tpu.dimension_semantics<arbitrary>], iteration_bounds = array<i64: 2, 1>, scalar_prefetch = 0 : i64, scratch_operands = 1 : i64, tpu.core_type = #tpu.core_type<tc>, window_params = [{transform_indices = @transform_0, window_bounds = array<i64: 128, 3>}, {transform_indices = @transform_1, window_bounds = array<i64: 3, 256>}, {transform_indices = @transform_2, window_bounds = array<i64: 256, 9>}, {transform_indices = @transform_3, window_bounds = array<i64: 128, 256>}, {transform_indices = @transform_4, window_bounds = array<i64: 128, 8>}]} {
    %c0_i32 = arith.constant 0 : i32
    %0 = arith.cmpi eq, %arg1, %c0_i32 : i32
    %1 = arith.extui %0 : i1 to i32
    %c0_i32_0 = arith.constant 0 : i32
    %2 = arith.cmpi ne, %1, %c0_i32_0 : i32
    scf.if %2 {
      %cst_17 = arith.constant 0.000000e+00 : f32
      %37 = vector.broadcast %cst_17 : f32 to vector<1x128x9xf32>
      %c0_18 = arith.constant 0 : index
      %c0_19 = arith.constant 0 : index
      %c0_20 = arith.constant 0 : index
      %38 = vector.load %arg7[%c0_18, %c0_19, %c0_20] : memref<1x128x9xf32, #tpu.memory_space<vmem>>, vector<1x128x9xf32>
      tpu.vector_store %arg7[%c0_18, %c0_19, %c0_20], %37 {strides = array<i32>} : memref<1x128x9xf32, #tpu.memory_space<vmem>>, vector<1x128x9xf32>,
    } else {
    }
    %c0 = arith.constant 0 : index
    %c0_1 = arith.constant 0 : index
    %3 = vector.load %arg2[%c0, %c0_1] : memref<128x3xf32, #tpu.memory_space<vmem>>, vector<128x3xf32>
    %c0_2 = arith.constant 0 : index
    %c0_3 = arith.constant 0 : index
    %4 = vector.load %arg3[%c0_2, %c0_3] : memref<3x256xf32, #tpu.memory_space<vmem>>, vector<3x256xf32>
    %c0_4 = arith.constant 0 : index
    %c0_5 = arith.constant 0 : index
    %5 = vector.load %arg4[%c0_4, %c0_5] : memref<256x9xf32, #tpu.memory_space<vmem>>, vector<256x9xf32>
    %c0_6 = arith.constant 0 : index
    %c0_7 = arith.constant 0 : index
    %6 = vector.load %arg5[%c0_6, %c0_7] : memref<128x256xi8, #tpu.memory_space<vmem>>, vector<128x256xi8>
    %7 = arith.sitofp %6 : vector<128x256xi8> to vector<128x256xf32>
    %8 = vector.extract_strided_slice %3 {offsets = [0, 0], sizes = [128, 1], strides = [1, 1]} : vector<128x3xf32> to vector<128x1xf32>
    %9 = vector.extract_strided_slice %4 {offsets = [0, 0], sizes = [1, 256], strides = [1, 1]} : vector<3x256xf32> to vector<1x256xf32>
    %10 = vector.broadcast %8 : vector<128x1xf32> to vector<128x256xf32>
    %11 = vector.broadcast %9 : vector<1x256xf32> to vector<128x256xf32>
    %12 = arith.addf %10, %11 : vector<128x256xf32>
    %13 = vector.extract_strided_slice %3 {offsets = [0, 1], sizes = [128, 1], strides = [1, 1]} : vector<128x3xf32> to vector<128x1xf32>
    %14 = vector.extract_strided_slice %4 {offsets = [1, 0], sizes = [1, 256], strides = [1, 1]} : vector<3x256xf32> to vector<1x256xf32>
    %15 = vector.broadcast %13 : vector<128x1xf32> to vector<128x256xf32>
    %16 = vector.broadcast %14 : vector<1x256xf32> to vector<128x256xf32>
    %17 = arith.mulf %15, %16 : vector<128x256xf32>
    %18 = vector.extract_strided_slice %3 {offsets = [0, 2], sizes = [128, 1], strides = [1, 1]} : vector<128x3xf32> to vector<128x1xf32>
    %19 = vector.extract_strided_slice %4 {offsets = [2, 0], sizes = [1, 256], strides = [1, 1]} : vector<3x256xf32> to vector<1x256xf32>
    %20 = vector.broadcast %18 : vector<128x1xf32> to vector<128x256xf32>
    %21 = vector.broadcast %19 : vector<1x256xf32> to vector<128x256xf32>
    %22 = arith.mulf %20, %21 : vector<128x256xf32>
    %cst = arith.constant 0.000000e+00 : f32
    %23 = vector.broadcast %cst : f32 to vector<128x256xf32>
    %24 = arith.cmpf ogt, %12, %23 : vector<128x256xf32>
    %25 = arith.select %24, %17, %22 : vector<128x256xi1>, vector<128x256xf32>
    %26 = arith.mulf %25, %7 : vector<128x256xf32>
    %c0_8 = arith.constant 0 : index
    %c0_9 = arith.constant 0 : index
    %c0_10 = arith.constant 0 : index
    %27 = vector.load %arg7[%c0_8, %c0_9, %c0_10] : memref<1x128x9xf32, #tpu.memory_space<vmem>>, vector<1x128x9xf32>
    %28 = vector.shape_cast %27 : vector<1x128x9xf32> to vector<128x9xf32>
    %cst_11 = arith.constant dense<0.000000e+00> : vector<128x9xf32>
    %29 = tpu.matmul %26, %5, %cst_11 {dimension_numbers = #tpu.dot_dimension_numbers<[1], [0], [0], [1], [0, 0, 1, 1], [], []>} : vector<128x256xf32>, vector<256x9xf32>, vector<128x9xf32> -> vector<128x9xf32>
    %30 = arith.addf %28, %29 : vector<128x9xf32>
    %c0_12 = arith.constant 0 : index
    %c0_13 = arith.constant 0 : index
    %c0_14 = arith.constant 0 : index
    %31 = vector.load %arg7[%c0_12, %c0_13, %c0_14] : memref<1x128x9xf32, #tpu.memory_space<vmem>>, vector<1x128x9xf32>
    %32 = vector.shape_cast %31 : vector<1x128x9xf32> to vector<128x9xf32>
    %33 = vector.shape_cast %30 : vector<128x9xf32> to vector<1x128x9xf32>
    tpu.vector_store %arg7[%c0_12, %c0_13, %c0_14], %33 {strides = array<i32>} : memref<1x128x9xf32, #tpu.memory_space<vmem>>, vector<1x128x9xf32>,
    %c0_i32_15 = arith.constant 0 : i32
    %34 = arith.cmpi eq, %arg1, %c0_i32_15 : i32
    %35 = arith.extui %34 : i1 to i32
    %c0_i32_16 = arith.constant 0 : i32
    %36 = arith.cmpi ne, %35, %c0_i32_16 : i32
    scf.if %36 {
      %c0_17 = arith.constant 0 : index
      %c0_18 = arith.constant 0 : index
      %c0_19 = arith.constant 0 : index
      %37 = vector.load %arg7[%c0_17, %c0_18, %c0_19] : memref<1x128x9xf32, #tpu.memory_space<vmem>>, vector<1x128x9xf32>
      %38 = vector.shape_cast %37 : vector<1x128x9xf32> to vector<128x9xf32>
      %39 = vector.extract_strided_slice %38 {offsets = [0, 8], sizes = [128, 1], strides = [1, 1]} : vector<128x9xf32> to vector<128x1xf32>
      %40 = tpu.reciprocal %39 : vector<128x1xf32> -> vector<128x1xf32>
      %41 = vector.extract_strided_slice %38 {offsets = [0, 0], sizes = [128, 8], strides = [1, 1]} : vector<128x9xf32> to vector<128x8xf32>
      %42 = vector.broadcast %40 : vector<128x1xf32> to vector<128x8xf32>
      %43 = arith.mulf %41, %42 : vector<128x8xf32>
      %cst_20 = arith.constant 0.000000e+00 : f32
      %44 = vector.broadcast %cst_20 : f32 to vector<128x8xf32>
      %45 = arith.cmpf ogt, %43, %44 : vector<128x8xf32>
      %46 = math.exp %43 : vector<128x8xf32>
      %cst_21 = arith.constant 1.000000e+00 : f32
      %47 = vector.broadcast %cst_21 : f32 to vector<128x8xf32>
      %48 = arith.subf %46, %47 : vector<128x8xf32>
      %49 = arith.select %45, %43, %48 : vector<128x8xi1>, vector<128x8xf32>
      %cst_22 = arith.constant dense<0xFF800000> : vector<128xf32>
      %50 = vector.multi_reduction <maximumf>, %49, %cst_22 [1] : vector<128x8xf32> to vector<128xf32>
      %51 = vector.shape_cast %50 : vector<128xf32> to vector<128x1xf32>
      %52 = vector.broadcast %51 : vector<128x1xf32> to vector<128x8xf32>
      %53 = arith.subf %49, %52 : vector<128x8xf32>
      %54 = math.exp %53 : vector<128x8xf32>
      %cst_23 = arith.constant dense<0.000000e+00> : vector<128xf32>
      %55 = vector.multi_reduction <add>, %54, %cst_23 [1] : vector<128x8xf32> to vector<128xf32>
      %56 = vector.shape_cast %55 : vector<128xf32> to vector<128x1xf32>
      %57 = math.log %56 : vector<128x1xf32>
      %58 = vector.broadcast %57 : vector<128x1xf32> to vector<128x8xf32>
      %59 = arith.subf %53, %58 : vector<128x8xf32>
      %c0_24 = arith.constant 0 : index
      %c0_25 = arith.constant 0 : index
      %60 = vector.load %arg6[%c0_24, %c0_25] : memref<128x8xf32, #tpu.memory_space<vmem>>, vector<128x8xf32>
      tpu.vector_store %arg6[%c0_24, %c0_25], %59 {strides = array<i32>} : memref<128x8xf32, #tpu.memory_space<vmem>>, vector<128x8xf32>,
    } else {
    }
    return
  }
  func.func @transform_0(%arg0: i32, %arg1: i32) -> (i32, i32) {
    %c0_i32 = arith.constant 0 : i32
    %c0_i32_0 = arith.constant 0 : i32
    return %arg0, %c0_i32 : i32, i32
  }
  func.func @transform_1(%arg0: i32, %arg1: i32) -> (i32, i32) {
    %c0_i32 = arith.constant 0 : i32
    %c0_i32_0 = arith.constant 0 : i32
    return %c0_i32, %arg1 : i32, i32
  }
  func.func @transform_2(%arg0: i32, %arg1: i32) -> (i32, i32) {
    %c0_i32 = arith.constant 0 : i32
    %c0_i32_0 = arith.constant 0 : i32
    return %arg1, %c0_i32 : i32, i32
  }
  func.func @transform_3(%arg0: i32, %arg1: i32) -> (i32, i32) {
    %c0_i32 = arith.constant 0 : i32
    return %arg0, %arg1 : i32, i32
  }
  func.func @transform_4(%arg0: i32, %arg1: i32) -> (i32, i32) {
    %c0_i32 = arith.constant 0 : i32
    %c0_i32_0 = arith.constant 0 : i32
    return %arg0, %c0_i32 : i32, i32
  }
}

</mosaic_0001>

<llo_original>
// kernel: spgat_forward.4
$region0: #{spgat_forward.4}
  #allocation0 [shape = 'u32[]', space=smem, size = 0x4, offset = 0x4, fixed_abs, tag = 'smem constant byte address 0x4 - core index']
  #allocation1 [shape = 'u32[144,128]{1,0:T(1,128)}', space=vmem, size = 0x12000, scoped, tag = 'internal scratch']
  %s0 = inlined_call_operand.vmem [shape: f32[256,32], index: 0, kind: input, shape index: {}]
  %s1 = inlined_call_operand.vmem [shape: f32[32,128], index: 1, kind: input, shape index: {}]
  %s2 = inlined_call_operand.vmem [shape: f32[256,128], index: 2, kind: output, shape index: {}]
  %s3 = sld [smem:[#allocation0]]
  $region41: #{spgat_forward.4} parent=0
    _
  %s5 = ssub.s32 1, %s3
  %s6 = scalar_select 0, %s5, %s3
  loop: start=0, step=1, limit=4
  $region2: #{spgat_forward.4} parent=0 // loop_pre_header
    _
  $region3: #{spgat_forward.4} parent=0 // loop_header
    %s8 = sphi 0, %s12
    %p9 = scmp.ge.s32.totalorder %s8, 4
    %s18 = sphi 0, %s20
    %s21 = sphi 0, %s18
    %s22 = sphi 0, %s21
    %s38 = sphi 0, %s22
    %s42 = sphi 0, %s42
    %s44 = sphi 0, %s42
    %s45 = sphi 0, %s44
    %s59 = sphi 0, %s45
    %s65 = sphi 0, %s67
    %s68 = sphi 0, %s65
    %s69 = sphi 0, %s68
    %s85 = sphi 0, %s69
  $region4: #{spgat_forward.4} parent=0 // loop_header_branch
    %11 = sbr.rel (%p9) target = $region8
  $region5: #{spgat_forward.4} parent=0 // loop_body
    %s13 = ssub.s32 %s8, 1
    %s14 = ssub.s32 %s8, 2
    %s15 = sadd.s32 %s8, 1
    %s16 = ssub.s32 %s8, %s15
    %p17 = scmp.eq.s32.totalorder %s16, 0
    %s19 = sadd.s32 %s18, 1
    %s20 = scalar_select %p17, %s18, %s19
    %p23 = pneg %p17
    %p24 = scmp.eq.s32.totalorder %s8, 1
    %p25 = por %p23, %p24
    %p26 = scmp.ne.s32.totalorder %s18, %s21
    %p27 = scmp.eq.s32.totalorder %s8, 0
    %p28 = por %p26, %p27
    %p29 = scmp.ne.s32.totalorder %s18, %s21
    %p30 = scmp.eq.s32.totalorder %s13, 1
    %p31 = por %p29, %p30
    %p32 = scmp.ne.s32.totalorder %s21, %s22
    %p33 = scmp.eq.s32.totalorder %s13, 0
    %p34 = por %p32, %p33
    %p35 = scmp.ne.s32.totalorder %s21, %s22
    %p36 = scmp.eq.s32.totalorder %s14, 1
    %p37 = por %p35, %p36
    %p39 = scmp.ne.s32.totalorder %s22, %s38
    %p40 = scmp.eq.s32.totalorder %s14, 0
    %p41 = por %p39, %p40
    %s43 = sadd.s32 %s42, 1
    %p46 = scmp.eq.s32.totalorder %s8, 1
    %p47 = scmp.ne.s32.totalorder %s42, %s44
    %p48 = scmp.eq.s32.totalorder %s8, 0
    %p49 = por %p47, %p48
    %p50 = scmp.ne.s32.totalorder %s42, %s44
    %p51 = scmp.eq.s32.totalorder %s13, 1
    %p52 = por %p50, %p51
    %p53 = scmp.ne.s32.totalorder %s44, %s45
    %p54 = scmp.eq.s32.totalorder %s13, 0
    %p55 = por %p53, %p54
    %p56 = scmp.ne.s32.totalorder %s44, %s45
    %p57 = scmp.eq.s32.totalorder %s14, 1
    %p58 = por %p56, %p57
    %p60 = scmp.ne.s32.totalorder %s45, %s59
    %p61 = scmp.eq.s32.totalorder %s14, 0
    %p62 = por %p60, %p61
    %s63 = ssub.s32 %s8, %s15
    %p64 = scmp.eq.s32.totalorder %s63, 0
    %s66 = sadd.s32 %s65, 1
    %s67 = scalar_select %p64, %s65, %s66
    %p70 = pneg %p64
    %p71 = scmp.eq.s32.totalorder %s8, 1
    %p72 = por %p70, %p71
    %p73 = scmp.ne.s32.totalorder %s65, %s68
    %p74 = scmp.eq.s32.totalorder %s8, 0
    %p75 = por %p73, %p74
    %p76 = scmp.ne.s32.totalorder %s65, %s68
    %p77 = scmp.eq.s32.totalorder %s13, 1
    %p78 = por %p76, %p77
    %p79 = scmp.ne.s32.totalorder %s68, %s69
    %p80 = scmp.eq.s32.totalorder %s13, 0
    %p81 = por %p79, %p80
    %p82 = scmp.ne.s32.totalorder %s68, %s69
    %p83 = scmp.eq.s32.totalorder %s14, 1
    %p84 = por %p82, %p83
    %p86 = scmp.ne.s32.totalorder %s69, %s85
    %p87 = scmp.eq.s32.totalorder %s14, 0
    %p88 = por %p86, %p87
    %p89 = scmp.le.s32.totalorder 1, %s8
    %p90 = scmp.lt.s32.totalorder %s8, 3
    %p91 = pnand %p89, %p90
    %p92 = pneg %p91
    // Predicated region
    $region9: #{spgat_forward.4} parent=5 // pred_check
      _
    $region10: #{spgat_forward.4} parent=5 // pred_check_branch
      %94 = sbr.rel (%p91) target = $region12
    $region11: #{spgat_forward.4} parent=5 // pred_region
      %s95 = ssub.s32 %s8, 1
      // Predicated region
      $region13: #{spgat_forward.4} parent=11 // pred_check
        %p96 = pneg %p55
      $region14: #{spgat_forward.4} parent=11 // pred_check_branch
        %98 = sbr.rel (%p96) target = $region16
      $region15: #{spgat_forward.4} parent=11 // pred_region
        _
      $region16: #{spgat_forward.4} parent=11 // pred_fallthru
        _
    $region12: #{spgat_forward.4} parent=5 // pred_fallthru
      _
    %p99 = scmp.lt.s32.totalorder %s8, 2
    // Predicated region
    $region17: #{spgat_forward.4} parent=5 // pred_check
      %p100 = pneg %p99
    $region18: #{spgat_forward.4} parent=5 // pred_check_branch
      %102 = sbr.rel (%p100) target = $region20
    $region19: #{spgat_forward.4} parent=5 // pred_region
      // Predicated region
      $region21: #{spgat_forward.4} parent=19 // pred_check
        %p103 = pneg %p28
      $region22: #{spgat_forward.4} parent=19 // pred_check_branch
        %105 = sbr.rel (%p103) target = $region24
      $region23: #{spgat_forward.4} parent=19 // pred_region
        %s106 = smul.u32 16, %s8
        %p107 = scmp.lt.s32.totalorder %s106, 31
        %s108 = scalar_select %p107, %s106, 31
        %s109 = smul.addr %s108, 8
        %s110 = scalar_lea.vmem %s0, %s109
        %s111 = smul.u32 16, %s8
      $region24: #{spgat_forward.4} parent=19 // pred_fallthru
        _
    $region20: #{spgat_forward.4} parent=5 // pred_fallthru
      _
    %p112 = scmp.le.s32.totalorder 1, %s8
    %p113 = scmp.lt.s32.totalorder %s8, 3
    %p114 = pnand %p112, %p113
    %p115 = pneg %p114
    // Predicated region
    $region25: #{spgat_forward.4} parent=5 // pred_check
      _
    $region26: #{spgat_forward.4} parent=5 // pred_check_branch
      %117 = sbr.rel (%p114) target = $region28
    $region27: #{spgat_forward.4} parent=5 // pred_region
      %s118 = ssub.s32 %s8, 1
      %s119 = smul.u32 16, %s13
      %p120 = scmp.lt.s32.totalorder %s119, 31
      %s121 = scalar_select %p120, %s119, 31
      %s122 = smul.addr %s121, 8
      %s123 = scalar_lea.vmem %s0, %s122
      %p124 = pneg %p34
      %p125 = pneg %p31
      %p126 = pneg %p55
      %p127 = pneg %p52
      %p128 = pneg %p81
      %p129 = pneg %p78
      %s130 = smul.u32 16, %s13
      %p131 = scmp.lt.s32.totalorder %s130, 31
      %s132 = scalar_select %p131, %s130, 31
      %s133 = smul.addr %s132, 8
      %s134 = scalar_lea.vmem %s2, %s133
      %s135 = smul.u32 16, %s13
      %p136 = scmp.lt.s32.totalorder %s135, 31
      %s137 = scalar_select %p136, %s135, 31
      %s138 = smul.addr %s137, 8
      %s139 = scalar_lea.vmem %s0, %s138
      %s140 = smul.u32 16, %s13
      %s141 = smul.u32 16, %s13
      %p142 = scmp.lt.s32.totalorder %s141, 31
      %s143 = scalar_select %p142, %s141, 31
      %s144 = smul.addr %s143, 8
      %s145 = scalar_lea.vmem %s2, %s144
      %s146 = smul.u32 16, %s13
      %v147 = vld [vmem:[%s139] sm:$0xff]
      %v148 = vld [vmem:[%s139 + $0x8] sm:$0xff]
      %v149 = vld [vmem:[%s139 + $0x10] sm:$0xff]
      %v150 = vld [vmem:[%s139 + $0x18] sm:$0xff]
      %v151 = vld [vmem:[%s139 + $0x20] sm:$0xff]
      %v152 = vld [vmem:[%s139 + $0x28] sm:$0xff]
      %v153 = vld [vmem:[%s139 + $0x30] sm:$0xff]
      %v154 = vld [vmem:[%s139 + $0x38] sm:$0xff]
      %v155 = vld [vmem:[%s139 + $0x40] sm:$0xff]
      %v156 = vld [vmem:[%s139 + $0x48] sm:$0xff]
      %v157 = vld [vmem:[%s139 + $0x50] sm:$0xff]
      %v158 = vld [vmem:[%s139 + $0x58] sm:$0xff]
      %v159 = vld [vmem:[%s139 + $0x60] sm:$0xff]
      %v160 = vld [vmem:[%s139 + $0x68] sm:$0xff]
      %v161 = vld [vmem:[%s139 + $0x70] sm:$0xff]
      %v162 = vld [vmem:[%s139 + $0x78] sm:$0xff]
      %v163 = vld [vmem:[%s1] sm:$0xff]
      %v164 = vld [vmem:[%s1 + $0x8] sm:$0xff]
      %v165 = vld [vmem:[%s1 + $0x10] sm:$0xff]
      %v166 = vld [vmem:[%s1 + $0x18] sm:$0xff]
      %vm167 = vcmask 261120
      %v169 = vsel %vm167, %v147, 0
      %v172 = vsel %vm167, %v148, 0
      %v175 = vsel %vm167, %v149, 0
      %v178 = vsel %vm167, %v150, 0
      %v181 = vsel %vm167, %v151, 0
      %v184 = vsel %vm167, %v152, 0
      %v187 = vsel %vm167, %v153, 0
      %v190 = vsel %vm167, %v154, 0
      %v193 = vsel %vm167, %v155, 0
      %v196 = vsel %vm167, %v156, 0
      %v199 = vsel %vm167, %v157, 0
      %v202 = vsel %vm167, %v158, 0
      %v205 = vsel %vm167, %v159, 0
      %v208 = vsel %vm167, %v160, 0
      %v211 = vsel %vm167, %v161, 0
      %v214 = vsel %vm167, %v162, 0
      %216 = vmatprep.subr.mxu0 0.0
      %217 = vmatpush1.msra.mxu0 0.0
      %218 = vmatprep.subr.mxu0 0.0
      %219 = vmatpush1.msra.mxu0 0.0
      %220 = vmatprep.subr.mxu0 0.0
      %221 = vmatpush1.msra.mxu0 0.0
      %222 = vmatprep.subr.mxu0 0.0
      %223 = vmatpush1.msra.mxu0 0.0
      %224 = vmatprep.subr.mxu0 0.0
      %225 = vmatpush1.msra.mxu0 0.0
      %226 = vmatprep.subr.mxu0 0.0
      %227 = vmatpush1.msra.mxu0 0.0
      %228 = vmatprep.subr.mxu0 0.0
      %229 = vmatpush1.msra.mxu0 0.0
      %230 = vmatprep.subr.mxu0 0.0
      %231 = vmatpush1.msra.mxu0 0.0
      %232 = vmatprep.subr.mxu0 0.0
      %233 = vmatpush1.msra.mxu0 0.0
      %234 = vmatprep.subr.mxu0 0.0
      %235 = vmatpush1.msra.mxu0 0.0
      %236 = vmatprep.subr.mxu0 0.0
      %237 = vmatpush1.msra.mxu0 0.0
      %238 = vmatprep.subr.mxu0 0.0
      %239 = vmatpush1.msra.mxu0 0.0
      %240 = vmatprep.subr.mxu0 0.0
      %241 = vmatpush1.msra.mxu0 %v166
      %242 = vmatprep.subr.mxu0 0.0
      %243 = vmatpush1.msra.mxu0 %v165
      %244 = vmatprep.subr.mxu0 0.0
      %245 = vmatpush1.msra.mxu0 %v164
      %246 = vmatprep.subr.mxu0 0.0
      %247 = vmatpush1.msra.mxu0 %v163
      %248 = vmatprep.subr.mxu0 0.0
      %249 = vmatpush2.msra.mxu0 0.0
      %250 = vmatprep.subr.mxu0 0.0
      %251 = vmatpush2.msra.mxu0 0.0
      %252 = vmatprep.subr.mxu0 0.0
      %253 = vmatpush2.msra.mxu0 0.0
      %254 = vmatprep.subr.mxu0 0.0
      %255 = vmatpush2.msra.mxu0 0.0
      %256 = vmatprep.subr.mxu0 0.0
      %257 = vmatpush2.msra.mxu0 0.0
      %258 = vmatprep.subr.mxu0 0.0
      %259 = vmatpush2.msra.mxu0 0.0
      %260 = vmatprep.subr.mxu0 0.0
      %261 = vmatpush2.msra.mxu0 0.0
      %262 = vmatprep.subr.mxu0 0.0
      %263 = vmatpush2.msra.mxu0 0.0
      %264 = vmatprep.subr.mxu0 0.0
      %265 = vmatpush2.msra.mxu0 0.0
      %266 = vmatprep.subr.mxu0 0.0
      %267 = vmatpush2.msra.mxu0 0.0
      %268 = vmatprep.subr.mxu0 0.0
      %269 = vmatpush2.msra.mxu0 0.0
      %270 = vmatprep.subr.mxu0 0.0
      %271 = vmatpush2.msra.mxu0 0.0
      %272 = vmatprep.subr.mxu0 0.0
      %273 = vmatpush2.msra.mxu0 0.0
      %274 = vmatprep.subr.mxu0 0.0
      %275 = vmatpush2.msra.mxu0 0.0
      %276 = vmatprep.subr.mxu0 0.0
      %277 = vmatpush2.msra.mxu0 0.0
      %278 = vmatprep.subr.mxu0 0.0
      %279 = vmatpush2.msra.mxu0 0.0
      %280 = vmatprep.mubr.f32.mxu0 0.0
      %281 = vmatmul.mubr.f32.gmra.mxu0 %v169
      %v282 = vpop.f32.mrf.mxu0
      %v283 = vadd.f32 0.0, %v282
      %v284 = vpop.f32.mrf.mxu0
      %285 = vmatprep.mubr.f32.mxu0 0.0
      %286 = vmatmul.mubr.f32.gmra.mxu0 %v172
      %v287 = vpop.f32.mrf.mxu0
      %v288 = vadd.f32 0.0, %v287
      %v289 = vpop.f32.mrf.mxu0
      %290 = vmatprep.mubr.f32.mxu0 0.0
      %291 = vmatmul.mubr.f32.gmra.mxu0 %v175
      %v292 = vpop.f32.mrf.mxu0
      %v293 = vadd.f32 0.0, %v292
      %v294 = vpop.f32.mrf.mxu0
      %295 = vmatprep.mubr.f32.mxu0 0.0
      %296 = vmatmul.mubr.f32.gmra.mxu0 %v178
      %v297 = vpop.f32.mrf.mxu0
      %v298 = vadd.f32 0.0, %v297
      %v299 = vpop.f32.mrf.mxu0
      %300 = vmatprep.mubr.f32.mxu0 0.0
      %301 = vmatmul.mubr.f32.gmra.mxu0 %v181
      %v302 = vpop.f32.mrf.mxu0
      %v303 = vadd.f32 0.0, %v302
      %v304 = vpop.f32.mrf.mxu0
      %305 = vmatprep.mubr.f32.mxu0 0.0
      %306 = vmatmul.mubr.f32.gmra.mxu0 %v184
      %v307 = vpop.f32.mrf.mxu0
      %v308 = vadd.f32 0.0, %v307
      %v309 = vpop.f32.mrf.mxu0
      %310 = vmatprep.mubr.f32.mxu0 0.0
      %311 = vmatmul.mubr.f32.gmra.mxu0 %v187
      %v312 = vpop.f32.mrf.mxu0
      %v313 = vadd.f32 0.0, %v312
      %v314 = vpop.f32.mrf.mxu0
      %315 = vmatprep.mubr.f32.mxu0 0.0
      %316 = vmatmul.mubr.f32.gmra.mxu0 %v190
      %v317 = vpop.f32.mrf.mxu0
      %v318 = vadd.f32 0.0, %v317
      %v319 = vpop.f32.mrf.mxu0
      %320 = vmatprep.mubr.f32.mxu0 0.0
      %321 = vmatmul.mubr.f32.gmra.mxu0 %v193
      %v322 = vpop.f32.mrf.mxu0
      %v323 = vadd.f32 0.0, %v322
      %v324 = vpop.f32.mrf.mxu0
      %325 = vmatprep.mubr.f32.mxu0 0.0
      %326 = vmatmul.mubr.f32.gmra.mxu0 %v196
      %v327 = vpop.f32.mrf.mxu0
      %v328 = vadd.f32 0.0, %v327
      %v329 = vpop.f32.mrf.mxu0
      %330 = vmatprep.mubr.f32.mxu0 0.0
      %331 = vmatmul.mubr.f32.gmra.mxu0 %v199
      %v332 = vpop.f32.mrf.mxu0
      %v333 = vadd.f32 0.0, %v332
      %v334 = vpop.f32.mrf.mxu0
      %335 = vmatprep.mubr.f32.mxu0 0.0
      %336 = vmatmul.mubr.f32.gmra.mxu0 %v202
      %v337 = vpop.f32.mrf.mxu0
      %v338 = vadd.f32 0.0, %v337
      %v339 = vpop.f32.mrf.mxu0
      %340 = vmatprep.mubr.f32.mxu0 0.0
      %341 = vmatmul.mubr.f32.gmra.mxu0 %v205
      %v342 = vpop.f32.mrf.mxu0
      %v343 = vadd.f32 0.0, %v342
      %v344 = vpop.f32.mrf.mxu0
      %345 = vmatprep.mubr.f32.mxu0 0.0
      %346 = vmatmul.mubr.f32.gmra.mxu0 %v208
      %v347 = vpop.f32.mrf.mxu0
      %v348 = vadd.f32 0.0, %v347
      %v349 = vpop.f32.mrf.mxu0
      %350 = vmatprep.mubr.f32.mxu0 0.0
      %351 = vmatmul.mubr.f32.gmra.mxu0 %v211
      %v352 = vpop.f32.mrf.mxu0
      %v353 = vadd.f32 0.0, %v352
      %v354 = vpop.f32.mrf.mxu0
      %355 = vmatprep.mubr.f32.mxu0 0.0
      %356 = vmatmul.mubr.f32.gmra.mxu0 %v214
      %v357 = vpop.f32.mrf.mxu0
      %v358 = vadd.f32 0.0, %v357
      %v359 = vpop.f32.mrf.mxu0
      %360 = vdwg.mxu0
      %361 = vst [vmem:[%s145] sm:$0xff] %v283
      %362 = vst [vmem:[%s145 + $0x8] sm:$0xff] %v288
      %363 = vst [vmem:[%s145 + $0x10] sm:$0xff] %v293
      %364 = vst [vmem:[%s145 + $0x18] sm:$0xff] %v298
      %365 = vst [vmem:[%s145 + $0x20] sm:$0xff] %v303
      %366 = vst [vmem:[%s145 + $0x28] sm:$0xff] %v308
      %367 = vst [vmem:[%s145 + $0x30] sm:$0xff] %v313
      %368 = vst [vmem:[%s145 + $0x38] sm:$0xff] %v318
      %369 = vst [vmem:[%s145 + $0x40] sm:$0xff] %v323
      %370 = vst [vmem:[%s145 + $0x48] sm:$0xff] %v328
      %371 = vst [vmem:[%s145 + $0x50] sm:$0xff] %v333
      %372 = vst [vmem:[%s145 + $0x58] sm:$0xff] %v338
      %373 = vst [vmem:[%s145 + $0x60] sm:$0xff] %v343
      %374 = vst [vmem:[%s145 + $0x68] sm:$0xff] %v348
      %375 = vst [vmem:[%s145 + $0x70] sm:$0xff] %v353
      %376 = vst [vmem:[%s145 + $0x78] sm:$0xff] %v358
      %s377 = smul.u32 16, %s13
      %p378 = scmp.lt.s32.totalorder %s377, 31
      %s379 = scalar_select %p378, %s377, 31
      %s380 = smul.addr %s379, 8
      %s381 = scalar_lea.vmem %s2, %s380
      // Predicated region
      $region29: #{spgat_forward.4} parent=27 // pred_check
        %p382 = pneg %p78
      $region30: #{spgat_forward.4} parent=27 // pred_check_branch
        %384 = sbr.rel (%p382) target = $region32
      $region31: #{spgat_forward.4} parent=27 // pred_region
        %s385 = smul.u32 16, %s13
      $region32: #{spgat_forward.4} parent=27 // pred_fallthru
        _
    $region28: #{spgat_forward.4} parent=5 // pred_fallthru
      _
    %p386 = scmp.le.s32.totalorder 2, %s8
    // Predicated region
    $region33: #{spgat_forward.4} parent=5 // pred_check
      %p387 = pneg %p386
    $region34: #{spgat_forward.4} parent=5 // pred_check_branch
      %389 = sbr.rel (%p387) target = $region36
    $region35: #{spgat_forward.4} parent=5 // pred_region
      %s390 = ssub.s32 %s8, 2
      // Predicated region
      $region37: #{spgat_forward.4} parent=35 // pred_check
        %p391 = pneg %p84
      $region38: #{spgat_forward.4} parent=35 // pred_check_branch
        %393 = sbr.rel (%p391) target = $region40
      $region39: #{spgat_forward.4} parent=35 // pred_region
        %s394 = smul.u32 16, %s14
        %p395 = scmp.lt.s32.totalorder %s394, 31
        %s396 = scalar_select %p395, %s394, 31
        %s397 = smul.addr %s396, 8
        %s398 = scalar_lea.vmem %s2, %s397
      $region40: #{spgat_forward.4} parent=35 // pred_fallthru
        _
    $region36: #{spgat_forward.4} parent=5 // pred_fallthru
      _
  $region6: #{spgat_forward.4} parent=0 // loop_footer
    %s12 = sadd.s32 1, %s8
  $region7: #{spgat_forward.4} parent=0 // loop_footer_branch
    %7 = sbr.rel target = $region3
  $region8: #{spgat_forward.4} parent=0 // loop_exit
    _

// kernel: spgat_forward.6
$region0: #{spgat_forward.6}
  #allocation0 [shape = 'u32[]', space=smem, size = 0x4, offset = 0x4, fixed_abs, tag = 'smem constant byte address 0x4 - core index']
  #allocation1 [shape = 'u32[144,128]{1,0:T(1,128)}', space=vmem, size = 0x12000, scoped, tag = 'internal scratch']
  %s0 = inlined_call_operand.vmem [shape: f32[256,64], index: 0, kind: input, shape index: {}]
  %s1 = inlined_call_operand.vmem [shape: f32[64,128], index: 1, kind: input, shape index: {}]
  %s2 = inlined_call_operand.vmem [shape: f32[256,128], index: 2, kind: output, shape index: {}]
  %s3 = sld [smem:[#allocation0]]
  $region41: #{spgat_forward.6} parent=0
    _
  %s5 = ssub.s32 1, %s3
  %s6 = scalar_select 0, %s5, %s3
  loop: start=0, step=1, limit=4
  $region2: #{spgat_forward.6} parent=0 // loop_pre_header
    _
  $region3: #{spgat_forward.6} parent=0 // loop_header
    %s8 = sphi 0, %s12
    %p9 = scmp.ge.s32.totalorder %s8, 4
    %s18 = sphi 0, %s20
    %s21 = sphi 0, %s18
    %s22 = sphi 0, %s21
    %s38 = sphi 0, %s22
    %s42 = sphi 0, %s42
    %s44 = sphi 0, %s42
    %s45 = sphi 0, %s44
    %s59 = sphi 0, %s45
    %s65 = sphi 0, %s67
    %s68 = sphi 0, %s65
    %s69 = sphi 0, %s68
    %s85 = sphi 0, %s69
  $region4: #{spgat_forward.6} parent=0 // loop_header_branch
    %11 = sbr.rel (%p9) target = $region8
  $region5: #{spgat_forward.6} parent=0 // loop_body
    %s13 = ssub.s32 %s8, 1
    %s14 = ssub.s32 %s8, 2
    %s15 = sadd.s32 %s8, 1
    %s16 = ssub.s32 %s8, %s15
    %p17 = scmp.eq.s32.totalorder %s16, 0
    %s19 = sadd.s32 %s18, 1
    %s20 = scalar_select %p17, %s18, %s19
    %p23 = pneg %p17
    %p24 = scmp.eq.s32.totalorder %s8, 1
    %p25 = por %p23, %p24
    %p26 = scmp.ne.s32.totalorder %s18, %s21
    %p27 = scmp.eq.s32.totalorder %s8, 0
    %p28 = por %p26, %p27
    %p29 = scmp.ne.s32.totalorder %s18, %s21
    %p30 = scmp.eq.s32.totalorder %s13, 1
    %p31 = por %p29, %p30
    %p32 = scmp.ne.s32.totalorder %s21, %s22
    %p33 = scmp.eq.s32.totalorder %s13, 0
    %p34 = por %p32, %p33
    %p35 = scmp.ne.s32.totalorder %s21, %s22
    %p36 = scmp.eq.s32.totalorder %s14, 1
    %p37 = por %p35, %p36
    %p39 = scmp.ne.s32.totalorder %s22, %s38
    %p40 = scmp.eq.s32.totalorder %s14, 0
    %p41 = por %p39, %p40
    %s43 = sadd.s32 %s42, 1
    %p46 = scmp.eq.s32.totalorder %s8, 1
    %p47 = scmp.ne.s32.totalorder %s42, %s44
    %p48 = scmp.eq.s32.totalorder %s8, 0
    %p49 = por %p47, %p48
    %p50 = scmp.ne.s32.totalorder %s42, %s44
    %p51 = scmp.eq.s32.totalorder %s13, 1
    %p52 = por %p50, %p51
    %p53 = scmp.ne.s32.totalorder %s44, %s45
    %p54 = scmp.eq.s32.totalorder %s13, 0
    %p55 = por %p53, %p54
    %p56 = scmp.ne.s32.totalorder %s44, %s45
    %p57 = scmp.eq.s32.totalorder %s14, 1
    %p58 = por %p56, %p57
    %p60 = scmp.ne.s32.totalorder %s45, %s59
    %p61 = scmp.eq.s32.totalorder %s14, 0
    %p62 = por %p60, %p61
    %s63 = ssub.s32 %s8, %s15
    %p64 = scmp.eq.s32.totalorder %s63, 0
    %s66 = sadd.s32 %s65, 1
    %s67 = scalar_select %p64, %s65, %s66
    %p70 = pneg %p64
    %p71 = scmp.eq.s32.totalorder %s8, 1
    %p72 = por %p70, %p71
    %p73 = scmp.ne.s32.totalorder %s65, %s68
    %p74 = scmp.eq.s32.totalorder %s8, 0
    %p75 = por %p73, %p74
    %p76 = scmp.ne.s32.totalorder %s65, %s68
    %p77 = scmp.eq.s32.totalorder %s13, 1
    %p78 = por %p76, %p77
    %p79 = scmp.ne.s32.totalorder %s68, %s69
    %p80 = scmp.eq.s32.totalorder %s13, 0
    %p81 = por %p79, %p80
    %p82 = scmp.ne.s32.totalorder %s68, %s69
    %p83 = scmp.eq.s32.totalorder %s14, 1
    %p84 = por %p82, %p83
    %p86 = scmp.ne.s32.totalorder %s69, %s85
    %p87 = scmp.eq.s32.totalorder %s14, 0
    %p88 = por %p86, %p87
    %p89 = scmp.le.s32.totalorder 1, %s8
    %p90 = scmp.lt.s32.totalorder %s8, 3
    %p91 = pnand %p89, %p90
    %p92 = pneg %p91
    // Predicated region
    $region9: #{spgat_forward.6} parent=5 // pred_check
      _
    $region10: #{spgat_forward.6} parent=5 // pred_check_branch
      %94 = sbr.rel (%p91) target = $region12
    $region11: #{spgat_forward.6} parent=5 // pred_region
      %s95 = ssub.s32 %s8, 1
      // Predicated region
      $region13: #{spgat_forward.6} parent=11 // pred_check
        %p96 = pneg %p55
      $region14: #{spgat_forward.6} parent=11 // pred_check_branch
        %98 = sbr.rel (%p96) target = $region16
      $region15: #{spgat_forward.6} parent=11 // pred_region
        _
      $region16: #{spgat_forward.6} parent=11 // pred_fallthru
        _
    $region12: #{spgat_forward.6} parent=5 // pred_fallthru
      _
    %p99 = scmp.lt.s32.totalorder %s8, 2
    // Predicated region
    $region17: #{spgat_forward.6} parent=5 // pred_check
      %p100 = pneg %p99
    $region18: #{spgat_forward.6} parent=5 // pred_check_branch
      %102 = sbr.rel (%p100) target = $region20
    $region19: #{spgat_forward.6} parent=5 // pred_region
      // Predicated region
      $region21: #{spgat_forward.6} parent=19 // pred_check
        %p103 = pneg %p28
      $region22: #{spgat_forward.6} parent=19 // pred_check_branch
        %105 = sbr.rel (%p103) target = $region24
      $region23: #{spgat_forward.6} parent=19 // pred_region
        %s106 = smul.u32 16, %s8
        %p107 = scmp.lt.s32.totalorder %s106, 31
        %s108 = scalar_select %p107, %s106, 31
        %s109 = smul.addr %s108, 8
        %s110 = scalar_lea.vmem %s0, %s109
        %s111 = smul.u32 16, %s8
      $region24: #{spgat_forward.6} parent=19 // pred_fallthru
        _
    $region20: #{spgat_forward.6} parent=5 // pred_fallthru
      _
    %p112 = scmp.le.s32.totalorder 1, %s8
    %p113 = scmp.lt.s32.totalorder %s8, 3
    %p114 = pnand %p112, %p113
    %p115 = pneg %p114
    // Predicated region
    $region25: #{spgat_forward.6} parent=5 // pred_check
      _
    $region26: #{spgat_forward.6} parent=5 // pred_check_branch
      %117 = sbr.rel (%p114) target = $region28
    $region27: #{spgat_forward.6} parent=5 // pred_region
      %s118 = ssub.s32 %s8, 1
      %s119 = smul.u32 16, %s13
      %p120 = scmp.lt.s32.totalorder %s119, 31
      %s121 = scalar_select %p120, %s119, 31
      %s122 = smul.addr %s121, 8
      %s123 = scalar_lea.vmem %s0, %s122
      %p124 = pneg %p34
      %p125 = pneg %p31
      %p126 = pneg %p55
      %p127 = pneg %p52
      %p128 = pneg %p81
      %p129 = pneg %p78
      %s130 = smul.u32 16, %s13
      %p131 = scmp.lt.s32.totalorder %s130, 31
      %s132 = scalar_select %p131, %s130, 31
      %s133 = smul.addr %s132, 8
      %s134 = scalar_lea.vmem %s2, %s133
      %s135 = smul.u32 16, %s13
      %p136 = scmp.lt.s32.totalorder %s135, 31
      %s137 = scalar_select %p136, %s135, 31
      %s138 = smul.addr %s137, 8
      %s139 = scalar_lea.vmem %s0, %s138
      %s140 = smul.u32 16, %s13
      %s141 = smul.u32 16, %s13
      %p142 = scmp.lt.s32.totalorder %s141, 31
      %s143 = scalar_select %p142, %s141, 31
      %s144 = smul.addr %s143, 8
      %s145 = scalar_lea.vmem %s2, %s144
      %s146 = smul.u32 16, %s13
      %v147 = vld [vmem:[%s139] sm:$0xff]
      %v148 = vld [vmem:[%s139 + $0x8] sm:$0xff]
      %v149 = vld [vmem:[%s139 + $0x10] sm:$0xff]
      %v150 = vld [vmem:[%s139 + $0x18] sm:$0xff]
      %v151 = vld [vmem:[%s139 + $0x20] sm:$0xff]
      %v152 = vld [vmem:[%s139 + $0x28] sm:$0xff]
      %v153 = vld [vmem:[%s139 + $0x30] sm:$0xff]
      %v154 = vld [vmem:[%s139 + $0x38] sm:$0xff]
      %v155 = vld [vmem:[%s139 + $0x40] sm:$0xff]
      %v156 = vld [vmem:[%s139 + $0x48] sm:$0xff]
      %v157 = vld [vmem:[%s139 + $0x50] sm:$0xff]
      %v158 = vld [vmem:[%s139 + $0x58] sm:$0xff]
      %v159 = vld [vmem:[%s139 + $0x60] sm:$0xff]
      %v160 = vld [vmem:[%s139 + $0x68] sm:$0xff]
      %v161 = vld [vmem:[%s139 + $0x70] sm:$0xff]
      %v162 = vld [vmem:[%s139 + $0x78] sm:$0xff]
      %v163 = vld [vmem:[%s1] sm:$0xff]
      %v164 = vld [vmem:[%s1 + $0x8] sm:$0xff]
      %v165 = vld [vmem:[%s1 + $0x10] sm:$0xff]
      %v166 = vld [vmem:[%s1 + $0x18] sm:$0xff]
      %v167 = vld [vmem:[%s1 + $0x20] sm:$0xff]
      %v168 = vld [vmem:[%s1 + $0x28] sm:$0xff]
      %v169 = vld [vmem:[%s1 + $0x30] sm:$0xff]
      %v170 = vld [vmem:[%s1 + $0x38] sm:$0xff]
      %vm171 = vcmask 523264
      %v173 = vsel %vm171, %v147, 0
      %v176 = vsel %vm171, %v148, 0
      %v179 = vsel %vm171, %v149, 0
      %v182 = vsel %vm171, %v150, 0
      %v185 = vsel %vm171, %v151, 0
      %v188 = vsel %vm171, %v152, 0
      %v191 = vsel %vm171, %v153, 0
      %v194 = vsel %vm171, %v154, 0
      %v197 = vsel %vm171, %v155, 0
      %v200 = vsel %vm171, %v156, 0
      %v203 = vsel %vm171, %v157, 0
      %v206 = vsel %vm171, %v158, 0
      %v209 = vsel %vm171, %v159, 0
      %v212 = vsel %vm171, %v160, 0
      %v215 = vsel %vm171, %v161, 0
      %v218 = vsel %vm171, %v162, 0
      %220 = vmatprep.subr.mxu0 0.0
      %221 = vmatpush1.msra.mxu0 0.0
      %222 = vmatprep.subr.mxu0 0.0
      %223 = vmatpush1.msra.mxu0 0.0
      %224 = vmatprep.subr.mxu0 0.0
      %225 = vmatpush1.msra.mxu0 0.0
      %226 = vmatprep.subr.mxu0 0.0
      %227 = vmatpush1.msra.mxu0 0.0
      %228 = vmatprep.subr.mxu0 0.0
      %229 = vmatpush1.msra.mxu0 0.0
      %230 = vmatprep.subr.mxu0 0.0
      %231 = vmatpush1.msra.mxu0 0.0
      %232 = vmatprep.subr.mxu0 0.0
      %233 = vmatpush1.msra.mxu0 0.0
      %234 = vmatprep.subr.mxu0 0.0
      %235 = vmatpush1.msra.mxu0 0.0
      %236 = vmatprep.subr.mxu0 0.0
      %237 = vmatpush1.msra.mxu0 %v170
      %238 = vmatprep.subr.mxu0 0.0
      %239 = vmatpush1.msra.mxu0 %v169
      %240 = vmatprep.subr.mxu0 0.0
      %241 = vmatpush1.msra.mxu0 %v168
      %242 = vmatprep.subr.mxu0 0.0
      %243 = vmatpush1.msra.mxu0 %v167
      %244 = vmatprep.subr.mxu0 0.0
      %245 = vmatpush1.msra.mxu0 %v166
      %246 = vmatprep.subr.mxu0 0.0
      %247 = vmatpush1.msra.mxu0 %v165
      %248 = vmatprep.subr.mxu0 0.0
      %249 = vmatpush1.msra.mxu0 %v164
      %250 = vmatprep.subr.mxu0 0.0
      %251 = vmatpush1.msra.mxu0 %v163
      %252 = vmatprep.subr.mxu0 0.0
      %253 = vmatpush2.msra.mxu0 0.0
      %254 = vmatprep.subr.mxu0 0.0
      %255 = vmatpush2.msra.mxu0 0.0
      %256 = vmatprep.subr.mxu0 0.0
      %257 = vmatpush2.msra.mxu0 0.0
      %258 = vmatprep.subr.mxu0 0.0
      %259 = vmatpush2.msra.mxu0 0.0
      %260 = vmatprep.subr.mxu0 0.0
      %261 = vmatpush2.msra.mxu0 0.0
      %262 = vmatprep.subr.mxu0 0.0
      %263 = vmatpush2.msra.mxu0 0.0
      %264 = vmatprep.subr.mxu0 0.0
      %265 = vmatpush2.msra.mxu0 0.0
      %266 = vmatprep.subr.mxu0 0.0
      %267 = vmatpush2.msra.mxu0 0.0
      %268 = vmatprep.subr.mxu0 0.0
      %269 = vmatpush2.msra.mxu0 0.0
      %270 = vmatprep.subr.mxu0 0.0
      %271 = vmatpush2.msra.mxu0 0.0
      %272 = vmatprep.subr.mxu0 0.0
      %273 = vmatpush2.msra.mxu0 0.0
      %274 = vmatprep.subr.mxu0 0.0
      %275 = vmatpush2.msra.mxu0 0.0
      %276 = vmatprep.subr.mxu0 0.0
      %277 = vmatpush2.msra.mxu0 0.0
      %278 = vmatprep.subr.mxu0 0.0
      %279 = vmatpush2.msra.mxu0 0.0
      %280 = vmatprep.subr.mxu0 0.0
      %281 = vmatpush2.msra.mxu0 0.0
      %282 = vmatprep.subr.mxu0 0.0
      %283 = vmatpush2.msra.mxu0 0.0
      %284 = vmatprep.mubr.f32.mxu0 0.0
      %285 = vmatmul.mubr.f32.gmra.mxu0 %v173
      %v286 = vpop.f32.mrf.mxu0
      %v287 = vadd.f32 0.0, %v286
      %v288 = vpop.f32.mrf.mxu0
      %289 = vmatprep.mubr.f32.mxu0 0.0
      %290 = vmatmul.mubr.f32.gmra.mxu0 %v176
      %v291 = vpop.f32.mrf.mxu0
      %v292 = vadd.f32 0.0, %v291
      %v293 = vpop.f32.mrf.mxu0
      %294 = vmatprep.mubr.f32.mxu0 0.0
      %295 = vmatmul.mubr.f32.gmra.mxu0 %v179
      %v296 = vpop.f32.mrf.mxu0
      %v297 = vadd.f32 0.0, %v296
      %v298 = vpop.f32.mrf.mxu0
      %299 = vmatprep.mubr.f32.mxu0 0.0
      %300 = vmatmul.mubr.f32.gmra.mxu0 %v182
      %v301 = vpop.f32.mrf.mxu0
      %v302 = vadd.f32 0.0, %v301
      %v303 = vpop.f32.mrf.mxu0
      %304 = vmatprep.mubr.f32.mxu0 0.0
      %305 = vmatmul.mubr.f32.gmra.mxu0 %v185
      %v306 = vpop.f32.mrf.mxu0
      %v307 = vadd.f32 0.0, %v306
      %v308 = vpop.f32.mrf.mxu0
      %309 = vmatprep.mubr.f32.mxu0 0.0
      %310 = vmatmul.mubr.f32.gmra.mxu0 %v188
      %v311 = vpop.f32.mrf.mxu0
      %v312 = vadd.f32 0.0, %v311
      %v313 = vpop.f32.mrf.mxu0
      %314 = vmatprep.mubr.f32.mxu0 0.0
      %315 = vmatmul.mubr.f32.gmra.mxu0 %v191
      %v316 = vpop.f32.mrf.mxu0
      %v317 = vadd.f32 0.0, %v316
      %v318 = vpop.f32.mrf.mxu0
      %319 = vmatprep.mubr.f32.mxu0 0.0
      %320 = vmatmul.mubr.f32.gmra.mxu0 %v194
      %v321 = vpop.f32.mrf.mxu0
      %v322 = vadd.f32 0.0, %v321
      %v323 = vpop.f32.mrf.mxu0
      %324 = vmatprep.mubr.f32.mxu0 0.0
      %325 = vmatmul.mubr.f32.gmra.mxu0 %v197
      %v326 = vpop.f32.mrf.mxu0
      %v327 = vadd.f32 0.0, %v326
      %v328 = vpop.f32.mrf.mxu0
      %329 = vmatprep.mubr.f32.mxu0 0.0
      %330 = vmatmul.mubr.f32.gmra.mxu0 %v200
      %v331 = vpop.f32.mrf.mxu0
      %v332 = vadd.f32 0.0, %v331
      %v333 = vpop.f32.mrf.mxu0
      %334 = vmatprep.mubr.f32.mxu0 0.0
      %335 = vmatmul.mubr.f32.gmra.mxu0 %v203
      %v336 = vpop.f32.mrf.mxu0
      %v337 = vadd.f32 0.0, %v336
      %v338 = vpop.f32.mrf.mxu0
      %339 = vmatprep.mubr.f32.mxu0 0.0
      %340 = vmatmul.mubr.f32.gmra.mxu0 %v206
      %v341 = vpop.f32.mrf.mxu0
      %v342 = vadd.f32 0.0, %v341
      %v343 = vpop.f32.mrf.mxu0
      %344 = vmatprep.mubr.f32.mxu0 0.0
      %345 = vmatmul.mubr.f32.gmra.mxu0 %v209
      %v346 = vpop.f32.mrf.mxu0
      %v347 = vadd.f32 0.0, %v346
      %v348 = vpop.f32.mrf.mxu0
      %349 = vmatprep.mubr.f32.mxu0 0.0
      %350 = vmatmul.mubr.f32.gmra.mxu0 %v212
      %v351 = vpop.f32.mrf.mxu0
      %v352 = vadd.f32 0.0, %v351
      %v353 = vpop.f32.mrf.mxu0
      %354 = vmatprep.mubr.f32.mxu0 0.0
      %355 = vmatmul.mubr.f32.gmra.mxu0 %v215
      %v356 = vpop.f32.mrf.mxu0
      %v357 = vadd.f32 0.0, %v356
      %v358 = vpop.f32.mrf.mxu0
      %359 = vmatprep.mubr.f32.mxu0 0.0
      %360 = vmatmul.mubr.f32.gmra.mxu0 %v218
      %v361 = vpop.f32.mrf.mxu0
      %v362 = vadd.f32 0.0, %v361
      %v363 = vpop.f32.mrf.mxu0
      %364 = vdwg.mxu0
      %365 = vst [vmem:[%s145] sm:$0xff] %v287
      %366 = vst [vmem:[%s145 + $0x8] sm:$0xff] %v292
      %367 = vst [vmem:[%s145 + $0x10] sm:$0xff] %v297
      %368 = vst [vmem:[%s145 + $0x18] sm:$0xff] %v302
      %369 = vst [vmem:[%s145 + $0x20] sm:$0xff] %v307
      %370 = vst [vmem:[%s145 + $0x28] sm:$0xff] %v312
      %371 = vst [vmem:[%s145 + $0x30] sm:$0xff] %v317
      %372 = vst [vmem:[%s145 + $0x38] sm:$0xff] %v322
      %373 = vst [vmem:[%s145 + $0x40] sm:$0xff] %v327
      %374 = vst [vmem:[%s145 + $0x48] sm:$0xff] %v332
      %375 = vst [vmem:[%s145 + $0x50] sm:$0xff] %v337
      %376 = vst [vmem:[%s145 + $0x58] sm:$0xff] %v342
      %377 = vst [vmem:[%s145 + $0x60] sm:$0xff] %v347
      %378 = vst [vmem:[%s145 + $0x68] sm:$0xff] %v352
      %379 = vst [vmem:[%s145 + $0x70] sm:$0xff] %v357
      %380 = vst [vmem:[%s145 + $0x78] sm:$0xff] %v362
      %s381 = smul.u32 16, %s13
      %p382 = scmp.lt.s32.totalorder %s381, 31
      %s383 = scalar_select %p382, %s381, 31
      %s384 = smul.addr %s383, 8
      %s385 = scalar_lea.vmem %s2, %s384
      // Predicated region
      $region29: #{spgat_forward.6} parent=27 // pred_check
        %p386 = pneg %p78
      $region30: #{spgat_forward.6} parent=27 // pred_check_branch
        %388 = sbr.rel (%p386) target = $region32
      $region31: #{spgat_forward.6} parent=27 // pred_region
        %s389 = smul.u32 16, %s13
      $region32: #{spgat_forward.6} parent=27 // pred_fallthru
        _
    $region28: #{spgat_forward.6} parent=5 // pred_fallthru
      _
    %p390 = scmp.le.s32.totalorder 2, %s8
    // Predicated region
    $region33: #{spgat_forward.6} parent=5 // pred_check
      %p391 = pneg %p390
    $region34: #{spgat_forward.6} parent=5 // pred_check_branch
      %393 = sbr.rel (%p391) target = $region36
    $region35: #{spgat_forward.6} parent=5 // pred_region
      %s394 = ssub.s32 %s8, 2
      // Predicated region
      $region37: #{spgat_forward.6} parent=35 // pred_check
        %p395 = pneg %p84
      $region38: #{spgat_forward.6} parent=35 // pred_check_branch
        %397 = sbr.rel (%p395) target = $region40
      $region39: #{spgat_forward.6} parent=35 // pred_region
        %s398 = smul.u32 16, %s14
        %p399 = scmp.lt.s32.totalorder %s398, 31
        %s400 = scalar_select %p399, %s398, 31
        %s401 = smul.addr %s400, 8
        %s402 = scalar_lea.vmem %s2, %s401
      $region40: #{spgat_forward.6} parent=35 // pred_fallthru
        _
    $region36: #{spgat_forward.6} parent=5 // pred_fallthru
      _
  $region6: #{spgat_forward.6} parent=0 // loop_footer
    %s12 = sadd.s32 1, %s8
  $region7: #{spgat_forward.6} parent=0 // loop_footer_branch
    %7 = sbr.rel target = $region3
  $region8: #{spgat_forward.6} parent=0 // loop_exit
    _

// kernel: spgat_forward.7
$region0: #{spgat_forward.7}
  #allocation0 [shape = 'u32[]', space=smem, size = 0x4, offset = 0x4, fixed_abs, tag = 'smem constant byte address 0x4 - core index']
  #allocation1 [shape = 'u32[144,128]{1,0:T(1,128)}', space=vmem, size = 0x12000, scoped, tag = 'internal scratch']
  #allocation2 [shape = 'f32[1,128,9]{2,1,0:T(8,128)}', space=vmem, size = 0x10000, scoped, tag = 'scratch operand']
  %s0 = inlined_call_operand.vmem [shape: f32[256,3], index: 0, kind: input, shape index: {}]
  %s1 = inlined_call_operand.vmem [shape: f32[3,256], index: 1, kind: input, shape index: {}]
  %s2 = inlined_call_operand.vmem [shape: f32[256,9], index: 2, kind: input, shape index: {}]
  %s3 = inlined_call_operand.vmem [shape: s8[256,256], index: 3, kind: input, shape index: {}]
  %s4 = inlined_call_operand.vmem [shape: f32[256,8], index: 4, kind: output, shape index: {}]
  %s5 = sld [smem:[#allocation0]]
  $region57: #{spgat_forward.7} parent=0
    _
  %s7 = ssub.s32 1, %s5
  %s8 = scalar_select 0, %s7, %s5
  loop: start=0, step=1, limit=4
  $region2: #{spgat_forward.7} parent=0 // loop_pre_header
    _
  $region3: #{spgat_forward.7} parent=0 // loop_header
    %s10 = sphi 0, %s14
    %p11 = scmp.ge.s32.totalorder %s10, 4
    %s17 = sphi 0, %s29
    %s18 = sphi 0, %s25
    %s19 = sphi 0, %s17
    %s20 = sphi 0, %s18
    %s21 = sphi 0, %s19
    %s22 = sphi 0, %s20
    %s32 = sphi 0, %s34
    %s35 = sphi 0, %s32
    %s36 = sphi 0, %s35
    %s52 = sphi 0, %s36
    %s58 = sphi 0, %s60
    %s61 = sphi 0, %s58
    %s62 = sphi 0, %s61
    %s78 = sphi 0, %s62
    %s84 = sphi 0, %s86
    %s87 = sphi 0, %s84
    %s88 = sphi 0, %s87
    %s104 = sphi 0, %s88
    %s112 = sphi 0, %s114
    %s115 = sphi 0, %s112
    %s116 = sphi 0, %s115
    %s132 = sphi 0, %s116
    %s138 = sphi 0, %s140
    %s141 = sphi 0, %s138
    %s142 = sphi 0, %s141
    %s158 = sphi 0, %s142
  $region4: #{spgat_forward.7} parent=0 // loop_header_branch
    %13 = sbr.rel (%p11) target = $region8
  $region5: #{spgat_forward.7} parent=0 // loop_body
    %s15 = ssub.s32 %s10, 1
    %s16 = ssub.s32 %s10, 2
    %s23 = sadd.s32 1, %s18
    %p24 = scmp.ge.s32.totalorder %s23, 1
    %s25 = scalar_select %p24, 0, %s23
    %s26 = sadd.s32 1, %s17
    %s27 = scalar_select %p24, %s26, %s17
    %p28 = scmp.ge.s32.totalorder %s27, 2
    %s29 = scalar_select %p28, 0, %s27
    %s30 = ssub.s32 %s17, %s29
    %p31 = scmp.eq.s32.totalorder %s30, 0
    %s33 = sadd.s32 %s32, 1
    %s34 = scalar_select %p31, %s32, %s33
    %p37 = pneg %p31
    %p38 = scmp.eq.s32.totalorder %s10, 1
    %p39 = por %p37, %p38
    %p40 = scmp.ne.s32.totalorder %s32, %s35
    %p41 = scmp.eq.s32.totalorder %s10, 0
    %p42 = por %p40, %p41
    %p43 = scmp.ne.s32.totalorder %s32, %s35
    %p44 = scmp.eq.s32.totalorder %s15, 1
    %p45 = por %p43, %p44
    %p46 = scmp.ne.s32.totalorder %s35, %s36
    %p47 = scmp.eq.s32.totalorder %s15, 0
    %p48 = por %p46, %p47
    %p49 = scmp.ne.s32.totalorder %s35, %s36
    %p50 = scmp.eq.s32.totalorder %s16, 1
    %p51 = por %p49, %p50
    %p53 = scmp.ne.s32.totalorder %s36, %s52
    %p54 = scmp.eq.s32.totalorder %s16, 0
    %p55 = por %p53, %p54
    %s56 = ssub.s32 %s18, %s25
    %p57 = scmp.eq.s32.totalorder %s56, 0
    %s59 = sadd.s32 %s58, 1
    %s60 = scalar_select %p57, %s58, %s59
    %p63 = pneg %p57
    %p64 = scmp.eq.s32.totalorder %s10, 1
    %p65 = por %p63, %p64
    %p66 = scmp.ne.s32.totalorder %s58, %s61
    %p67 = scmp.eq.s32.totalorder %s10, 0
    %p68 = por %p66, %p67
    %p69 = scmp.ne.s32.totalorder %s58, %s61
    %p70 = scmp.eq.s32.totalorder %s15, 1
    %p71 = por %p69, %p70
    %p72 = scmp.ne.s32.totalorder %s61, %s62
    %p73 = scmp.eq.s32.totalorder %s15, 0
    %p74 = por %p72, %p73
    %p75 = scmp.ne.s32.totalorder %s61, %s62
    %p76 = scmp.eq.s32.totalorder %s16, 1
    %p77 = por %p75, %p76
    %p79 = scmp.ne.s32.totalorder %s62, %s78
    %p80 = scmp.eq.s32.totalorder %s16, 0
    %p81 = por %p79, %p80
    %s82 = ssub.s32 %s18, %s25
    %p83 = scmp.eq.s32.totalorder %s82, 0
    %s85 = sadd.s32 %s84, 1
    %s86 = scalar_select %p83, %s84, %s85
    %p89 = pneg %p83
    %p90 = scmp.eq.s32.totalorder %s10, 1
    %p91 = por %p89, %p90
    %p92 = scmp.ne.s32.totalorder %s84, %s87
    %p93 = scmp.eq.s32.totalorder %s10, 0
    %p94 = por %p92, %p93
    %p95 = scmp.ne.s32.totalorder %s84, %s87
    %p96 = scmp.eq.s32.totalorder %s15, 1
    %p97 = por %p95, %p96
    %p98 = scmp.ne.s32.totalorder %s87, %s88
    %p99 = scmp.eq.s32.totalorder %s15, 0
    %p100 = por %p98, %p99
    %p101 = scmp.ne.s32.totalorder %s87, %s88
    %p102 = scmp.eq.s32.totalorder %s16, 1
    %p103 = por %p101, %p102
    %p105 = scmp.ne.s32.totalorder %s88, %s104
    %p106 = scmp.eq.s32.totalorder %s16, 0
    %p107 = por %p105, %p106
    %s108 = ssub.s32 %s17, %s29
    %s109 = ssub.s32 %s18, %s25
    %s110 = sor.u32 %s108, %s109
    %p111 = scmp.eq.s32.totalorder %s110, 0
    %s113 = sadd.s32 %s112, 1
    %s114 = scalar_select %p111, %s112, %s113
    %p117 = pneg %p111
    %p118 = scmp.eq.s32.totalorder %s10, 1
    %p119 = por %p117, %p118
    %p120 = scmp.ne.s32.totalorder %s112, %s115
    %p121 = scmp.eq.s32.totalorder %s10, 0
    %p122 = por %p120, %p121
    %p123 = scmp.ne.s32.totalorder %s112, %s115
    %p124 = scmp.eq.s32.totalorder %s15, 1
    %p125 = por %p123, %p124
    %p126 = scmp.ne.s32.totalorder %s115, %s116
    %p127 = scmp.eq.s32.totalorder %s15, 0
    %p128 = por %p126, %p127
    %p129 = scmp.ne.s32.totalorder %s115, %s116
    %p130 = scmp.eq.s32.totalorder %s16, 1
    %p131 = por %p129, %p130
    %p133 = scmp.ne.s32.totalorder %s116, %s132
    %p134 = scmp.eq.s32.totalorder %s16, 0
    %p135 = por %p133, %p134
    %s136 = ssub.s32 %s17, %s29
    %p137 = scmp.eq.s32.totalorder %s136, 0
    %s139 = sadd.s32 %s138, 1
    %s140 = scalar_select %p137, %s138, %s139
    %p143 = pneg %p137
    %p144 = scmp.eq.s32.totalorder %s10, 1
    %p145 = por %p143, %p144
    %p146 = scmp.ne.s32.totalorder %s138, %s141
    %p147 = scmp.eq.s32.totalorder %s10, 0
    %p148 = por %p146, %p147
    %p149 = scmp.ne.s32.totalorder %s138, %s141
    %p150 = scmp.eq.s32.totalorder %s15, 1
    %p151 = por %p149, %p150
    %p152 = scmp.ne.s32.totalorder %s141, %s142
    %p153 = scmp.eq.s32.totalorder %s15, 0
    %p154 = por %p152, %p153
    %p155 = scmp.ne.s32.totalorder %s141, %s142
    %p156 = scmp.eq.s32.totalorder %s16, 1
    %p157 = por %p155, %p156
    %p159 = scmp.ne.s32.totalorder %s142, %s158
    %p160 = scmp.eq.s32.totalorder %s16, 0
    %p161 = por %p159, %p160
    %p162 = scmp.le.s32.totalorder 1, %s10
    %p163 = scmp.lt.s32.totalorder %s10, 3
    %p164 = pnand %p162, %p163
    %p165 = pneg %p164
    // Predicated region
    $region9: #{spgat_forward.7} parent=5 // pred_check
      _
    $region10: #{spgat_forward.7} parent=5 // pred_check_branch
      %167 = sbr.rel (%p164) target = $region12
    $region11: #{spgat_forward.7} parent=5 // pred_region
      %s168 = ssub.s32 %s10, 1
      // Predicated region
      $region13: #{spgat_forward.7} parent=11 // pred_check
        %p169 = pneg %p74
      $region14: #{spgat_forward.7} parent=11 // pred_check_branch
        %171 = sbr.rel (%p169) target = $region16
      $region15: #{spgat_forward.7} parent=11 // pred_region
        %s172 = smul.u32 2, %s20
        %p173 = scmp.lt.s32.totalorder %s172, 1
        %s174 = scalar_select %p173, %s172, 1
        %s175 = smul.addr %s174, 4
        %s176 = scalar_lea.vmem %s1, %s175
        %s177 = smul.u32 2, %s20
      $region16: #{spgat_forward.7} parent=11 // pred_fallthru
        _
      // Predicated region
      $region17: #{spgat_forward.7} parent=11 // pred_check
        %p178 = pneg %p100
      $region18: #{spgat_forward.7} parent=11 // pred_check_branch
        %180 = sbr.rel (%p178) target = $region20
      $region19: #{spgat_forward.7} parent=11 // pred_region
        %s181 = smul.u32 32, %s20
        %p182 = scmp.lt.s32.totalorder %s181, 31
        %s183 = scalar_select %p182, %s181, 31
        %s184 = smul.addr %s183, 8
        %s185 = scalar_lea.vmem %s2, %s184
        %s186 = smul.u32 32, %s20
      $region20: #{spgat_forward.7} parent=11 // pred_fallthru
        _
    $region12: #{spgat_forward.7} parent=5 // pred_fallthru
      _
    %p187 = scmp.lt.s32.totalorder %s10, 2
    // Predicated region
    $region21: #{spgat_forward.7} parent=5 // pred_check
      %p188 = pneg %p187
    $region22: #{spgat_forward.7} parent=5 // pred_check_branch
      %190 = sbr.rel (%p188) target = $region24
    $region23: #{spgat_forward.7} parent=5 // pred_region
      // Predicated region
      $region25: #{spgat_forward.7} parent=23 // pred_check
        %p191 = pneg %p42
      $region26: #{spgat_forward.7} parent=23 // pred_check_branch
        %193 = sbr.rel (%p191) target = $region28
      $region27: #{spgat_forward.7} parent=23 // pred_region
        %s194 = smul.u32 16, %s17
        %p195 = scmp.lt.s32.totalorder %s194, 31
        %s196 = scalar_select %p195, %s194, 31
        %s197 = smul.addr %s196, 8
        %s198 = scalar_lea.vmem %s0, %s197
        %s199 = smul.u32 16, %s17
      $region28: #{spgat_forward.7} parent=23 // pred_fallthru
        _
      // Predicated region
      $region29: #{spgat_forward.7} parent=23 // pred_check
        %p200 = pneg %p122
      $region30: #{spgat_forward.7} parent=23 // pred_check_branch
        %202 = sbr.rel (%p200) target = $region32
      $region31: #{spgat_forward.7} parent=23 // pred_region
        %s203 = smul.u32 4, %s17
        %s204 = smul.u32 2, %s18
        %p205 = scmp.lt.s32.totalorder %s203, 7
        %s206 = scalar_select %p205, %s203, 7
        %p207 = scmp.lt.s32.totalorder %s204, 1
        %s208 = scalar_select %p207, %s204, 1
        %s209 = smul.addr %s206, 2
        %s210 = sadd.s32 %s208, %s209
        %s211 = smul.addr %s210, 8
        %s212 = scalar_lea.vmem %s3, %s211
        %s213 = smul.u32 4, %s17
        %s214 = smul.u32 2, %s18
      $region32: #{spgat_forward.7} parent=23 // pred_fallthru
        _
    $region24: #{spgat_forward.7} parent=5 // pred_fallthru
      _
    %p215 = scmp.le.s32.totalorder 1, %s10
    %p216 = scmp.lt.s32.totalorder %s10, 3
    %p217 = pnand %p215, %p216
    %p218 = pneg %p217
    // Predicated region
    $region33: #{spgat_forward.7} parent=5 // pred_check
      _
    $region34: #{spgat_forward.7} parent=5 // pred_check_branch
      %220 = sbr.rel (%p217) target = $region36
    $region35: #{spgat_forward.7} parent=5 // pred_region
      %s221 = ssub.s32 %s10, 1
      %s222 = smul.u32 16, %s19
      %p223 = scmp.lt.s32.totalorder %s222, 31
      %s224 = scalar_select %p223, %s222, 31
      %s225 = smul.addr %s224, 8
      %s226 = scalar_lea.vmem %s0, %s225
      %p227 = pneg %p48
      %p228 = pneg %p45
      %s229 = smul.u32 2, %s20
      %p230 = scmp.lt.s32.totalorder %s229, 1
      %s231 = scalar_select %p230, %s229, 1
      %s232 = smul.addr %s231, 4
      %s233 = scalar_lea.vmem %s1, %s232
      %p234 = pneg %p74
      %p235 = pneg %p71
      %s236 = smul.u32 32, %s20
      %p237 = scmp.lt.s32.totalorder %s236, 31
      %s238 = scalar_select %p237, %s236, 31
      %s239 = smul.addr %s238, 8
      %s240 = scalar_lea.vmem %s2, %s239
      %p241 = pneg %p100
      %p242 = pneg %p97
      %s243 = smul.u32 4, %s19
      %s244 = smul.u32 2, %s20
      %p245 = scmp.lt.s32.totalorder %s243, 7
      %s246 = scalar_select %p245, %s243, 7
      %p247 = scmp.lt.s32.totalorder %s244, 1
      %s248 = scalar_select %p247, %s244, 1
      %s249 = smul.addr %s246, 2
      %s250 = sadd.s32 %s248, %s249
      %s251 = smul.addr %s250, 8
      %s252 = scalar_lea.vmem %s3, %s251
      %p253 = pneg %p128
      %p254 = pneg %p125
      %p255 = pneg %p154
      %p256 = pneg %p151
      %s257 = smul.u32 16, %s19
      %p258 = scmp.lt.s32.totalorder %s257, 31
      %s259 = scalar_select %p258, %s257, 31
      %s260 = smul.addr %s259, 8
      %s261 = scalar_lea.vmem %s4, %s260
      %s262 = smul.u32 16, %s19
      %p263 = scmp.lt.s32.totalorder %s262, 31
      %s264 = scalar_select %p263, %s262, 31
      %s265 = smul.addr %s264, 8
      %s266 = scalar_lea.vmem %s0, %s265
      %s267 = smul.u32 16, %s19
      %s268 = smul.u32 2, %s20
      %p269 = scmp.lt.s32.totalorder %s268, 1
      %s270 = scalar_select %p269, %s268, 1
      %s271 = smul.addr %s270, 4
      %s272 = scalar_lea.vmem %s1, %s271
      %s273 = smul.u32 2, %s20
      %s274 = smul.u32 32, %s20
      %p275 = scmp.lt.s32.totalorder %s274, 31
      %s276 = scalar_select %p275, %s274, 31
      %s277 = smul.addr %s276, 8
      %s278 = scalar_lea.vmem %s2, %s277
      %s279 = smul.u32 32, %s20
      %s280 = smul.u32 4, %s19
      %s281 = smul.u32 2, %s20
      %p282 = scmp.lt.s32.totalorder %s280, 7
      %s283 = scalar_select %p282, %s280, 7
      %p284 = scmp.lt.s32.totalorder %s281, 1
      %s285 = scalar_select %p284, %s281, 1
      %s286 = smul.addr %s283, 2
      %s287 = sadd.s32 %s285, %s286
      %s288 = smul.addr %s287, 8
      %s289 = scalar_lea.vmem %s3, %s288
      %s290 = smul.u32 4, %s19
      %s291 = smul.u32 2, %s20
      %s292 = smul.u32 16, %s19
      %p293 = scmp.lt.s32.totalorder %s292, 31
      %s294 = scalar_select %p293, %s292, 31
      %s295 = smul.addr %s294, 8
      %s296 = scalar_lea.vmem %s4, %s295
      %s297 = smul.u32 16, %s19
      %p298 = scmp.eq.s32.totalorder %s20, 0
      // Predicated region
      $region37: #{spgat_forward.7} parent=35 // pred_check
        %p299 = pneg %p298
      $region38: #{spgat_forward.7} parent=35 // pred_check_branch
        %301 = sbr.rel (%p299) target = $region40
      $region39: #{spgat_forward.7} parent=35 // pred_region
        %vm302 = vcmask 72704
        %303 = vst.msk [vmem:[#allocation2] sm:$0xff] %vm302, 0.0
        %304 = vst.msk [vmem:[#allocation2 + $0x8] sm:$0xff] %vm302, 0.0
        %305 = vst.msk [vmem:[#allocation2 + $0x10] sm:$0xff] %vm302, 0.0
        %306 = vst.msk [vmem:[#allocation2 + $0x18] sm:$0xff] %vm302, 0.0
        %307 = vst.msk [vmem:[#allocation2 + $0x20] sm:$0xff] %vm302, 0.0
        %308 = vst.msk [vmem:[#allocation2 + $0x28] sm:$0xff] %vm302, 0.0
        %309 = vst.msk [vmem:[#allocation2 + $0x30] sm:$0xff] %vm302, 0.0
        %310 = vst.msk [vmem:[#allocation2 + $0x38] sm:$0xff] %vm302, 0.0
        %311 = vst.msk [vmem:[#allocation2 + $0x40] sm:$0xff] %vm302, 0.0
        %312 = vst.msk [vmem:[#allocation2 + $0x48] sm:$0xff] %vm302, 0.0
        %313 = vst.msk [vmem:[#allocation2 + $0x50] sm:$0xff] %vm302, 0.0
        %314 = vst.msk [vmem:[#allocation2 + $0x58] sm:$0xff] %vm302, 0.0
        %315 = vst.msk [vmem:[#allocation2 + $0x60] sm:$0xff] %vm302, 0.0
        %316 = vst.msk [vmem:[#allocation2 + $0x68] sm:$0xff] %vm302, 0.0
        %317 = vst.msk [vmem:[#allocation2 + $0x70] sm:$0xff] %vm302, 0.0
        %318 = vst.msk [vmem:[#allocation2 + $0x78] sm:$0xff] %vm302, 0.0
      $region40: #{spgat_forward.7} parent=35 // pred_fallthru
        _
      %v319 = vld [vmem:[%s266] sm:$0xff]
      %v320 = vld [vmem:[%s266 + $0x8] sm:$0xff]
      %v321 = vld [vmem:[%s266 + $0x10] sm:$0xff]
      %v322 = vld [vmem:[%s266 + $0x18] sm:$0xff]
      %v323 = vld [vmem:[%s266 + $0x20] sm:$0xff]
      %v324 = vld [vmem:[%s266 + $0x28] sm:$0xff]
      %v325 = vld [vmem:[%s266 + $0x30] sm:$0xff]
      %v326 = vld [vmem:[%s266 + $0x38] sm:$0xff]
      %v327 = vld [vmem:[%s266 + $0x40] sm:$0xff]
      %v328 = vld [vmem:[%s266 + $0x48] sm:$0xff]
      %v329 = vld [vmem:[%s266 + $0x50] sm:$0xff]
      %v330 = vld [vmem:[%s266 + $0x58] sm:$0xff]
      %v331 = vld [vmem:[%s266 + $0x60] sm:$0xff]
      %v332 = vld [vmem:[%s266 + $0x68] sm:$0xff]
      %v333 = vld [vmem:[%s266 + $0x70] sm:$0xff]
      %v334 = vld [vmem:[%s266 + $0x78] sm:$0xff]
      %v335 = vld [vmem:[%s272] sm:$0x77]
      %v336 = vld [vmem:[%s278] sm:$0xff]
      %v337 = vld [vmem:[%s278 + $0x8] sm:$0xff]
      %v338 = vld [vmem:[%s278 + $0x10] sm:$0xff]
      %v339 = vld [vmem:[%s278 + $0x18] sm:$0xff]
      %v340 = vld [vmem:[%s278 + $0x20] sm:$0xff]
      %v341 = vld [vmem:[%s278 + $0x28] sm:$0xff]
      %v342 = vld [vmem:[%s278 + $0x30] sm:$0xff]
      %v343 = vld [vmem:[%s278 + $0x38] sm:$0xff]
      %v344 = vld [vmem:[%s278 + $0x40] sm:$0xff]
      %v345 = vld [vmem:[%s278 + $0x48] sm:$0xff]
      %v346 = vld [vmem:[%s278 + $0x50] sm:$0xff]
      %v347 = vld [vmem:[%s278 + $0x58] sm:$0xff]
      %v348 = vld [vmem:[%s278 + $0x60] sm:$0xff]
      %v349 = vld [vmem:[%s278 + $0x68] sm:$0xff]
      %v350 = vld [vmem:[%s278 + $0x70] sm:$0xff]
      %v351 = vld [vmem:[%s278 + $0x78] sm:$0xff]
      %v352 = vld [vmem:[%s278 + $0x80] sm:$0xff]
      %v353 = vld [vmem:[%s278 + $0x88] sm:$0xff]
      %v354 = vld [vmem:[%s278 + $0x90] sm:$0xff]
      %v355 = vld [vmem:[%s278 + $0x98] sm:$0xff]
      %v356 = vld [vmem:[%s278 + $0xa0] sm:$0xff]
      %v357 = vld [vmem:[%s278 + $0xa8] sm:$0xff]
      %v358 = vld [vmem:[%s278 + $0xb0] sm:$0xff]
      %v359 = vld [vmem:[%s278 + $0xb8] sm:$0xff]
      %v360 = vld [vmem:[%s278 + $0xc0] sm:$0xff]
      %v361 = vld [vmem:[%s278 + $0xc8] sm:$0xff]
      %v362 = vld [vmem:[%s278 + $0xd0] sm:$0xff]
      %v363 = vld [vmem:[%s278 + $0xd8] sm:$0xff]
      %v364 = vld [vmem:[%s278 + $0xe0] sm:$0xff]
      %v365 = vld [vmem:[%s278 + $0xe8] sm:$0xff]
      %v366 = vld [vmem:[%s278 + $0xf0] sm:$0xff]
      %v367 = vld [vmem:[%s278 + $0xf8] sm:$0xff]
      %v368 = vld [vmem:[%s289] sm:$0xff]
      %v369 = vld [vmem:[%s289 + $0x8] sm:$0xff]
      %v370 = vld [vmem:[%s289 + $0x10] sm:$0xff]
      %v371 = vld [vmem:[%s289 + $0x18] sm:$0xff]
      %v372 = vld [vmem:[%s289 + $0x20] sm:$0xff]
      %v373 = vld [vmem:[%s289 + $0x28] sm:$0xff]
      %v374 = vld [vmem:[%s289 + $0x30] sm:$0xff]
      %v375 = vld [vmem:[%s289 + $0x38] sm:$0xff]
      %v376 = vunpack.c.0.s8 %v368
      %v377 = vunpack.c.0.s8 %v369
      %v378 = vunpack.c.1.s8 %v368
      %v379 = vunpack.c.1.s8 %v369
      %v380 = vunpack.c.2.s8 %v368
      %v381 = vunpack.c.2.s8 %v369
      %v382 = vunpack.c.3.s8 %v368
      %v383 = vunpack.c.3.s8 %v369
      %v384 = vunpack.c.0.s8 %v370
      %v385 = vunpack.c.0.s8 %v371
      %v386 = vunpack.c.1.s8 %v370
      %v387 = vunpack.c.1.s8 %v371
      %v388 = vunpack.c.2.s8 %v370
      %v389 = vunpack.c.2.s8 %v371
      %v390 = vunpack.c.3.s8 %v370
      %v391 = vunpack.c.3.s8 %v371
      %v392 = vunpack.c.0.s8 %v372
      %v393 = vunpack.c.0.s8 %v373
      %v394 = vunpack.c.1.s8 %v372
      %v395 = vunpack.c.1.s8 %v373
      %v396 = vunpack.c.2.s8 %v372
      %v397 = vunpack.c.2.s8 %v373
      %v398 = vunpack.c.3.s8 %v372
      %v399 = vunpack.c.3.s8 %v373
      %v400 = vunpack.c.0.s8 %v374
      %v401 = vunpack.c.0.s8 %v375
      %v402 = vunpack.c.1.s8 %v374
      %v403 = vunpack.c.1.s8 %v375
      %v404 = vunpack.c.2.s8 %v374
      %v405 = vunpack.c.2.s8 %v375
      %v406 = vunpack.c.3.s8 %v374
      %v407 = vunpack.c.3.s8 %v375
      %v408 = vcvt.s32.f32 %v376
      %v409 = vcvt.s32.f32 %v377
      %v410 = vcvt.s32.f32 %v378
      %v411 = vcvt.s32.f32 %v379
      %v412 = vcvt.s32.f32 %v380
      %v413 = vcvt.s32.f32 %v381
      %v414 = vcvt.s32.f32 %v382
      %v415 = vcvt.s32.f32 %v383
      %v416 = vcvt.s32.f32 %v384
      %v417 = vcvt.s32.f32 %v385
      %v418 = vcvt.s32.f32 %v386
      %v419 = vcvt.s32.f32 %v387
      %v420 = vcvt.s32.f32 %v388
      %v421 = vcvt.s32.f32 %v389
      %v422 = vcvt.s32.f32 %v390
      %v423 = vcvt.s32.f32 %v391
      %v424 = vcvt.s32.f32 %v392
      %v425 = vcvt.s32.f32 %v393
      %v426 = vcvt.s32.f32 %v394
      %v427 = vcvt.s32.f32 %v395
      %v428 = vcvt.s32.f32 %v396
      %v429 = vcvt.s32.f32 %v397
      %v430 = vcvt.s32.f32 %v398
      %v431 = vcvt.s32.f32 %v399
      %v432 = vcvt.s32.f32 %v400
      %v433 = vcvt.s32.f32 %v401
      %v434 = vcvt.s32.f32 %v402
      %v435 = vcvt.s32.f32 %v403
      %v436 = vcvt.s32.f32 %v404
      %v437 = vcvt.s32.f32 %v405
      %v438 = vcvt.s32.f32 %v406
      %v439 = vcvt.s32.f32 %v407
      %441 = vset.pattern.permute.xlu0 0
      %442 = vperm.xlu0 %441, %v319
      %v443 = vpop.permute.xlu0 %442
      %446 = vset.pattern.permute.xlu0 0
      %447 = vperm.xlu0 %446, %v320
      %v448 = vpop.permute.xlu0 %447
      %451 = vset.pattern.permute.xlu0 0
      %452 = vperm.xlu0 %451, %v321
      %v453 = vpop.permute.xlu0 %452
      %456 = vset.pattern.permute.xlu0 0
      %457 = vperm.xlu0 %456, %v322
      %v458 = vpop.permute.xlu0 %457
      %461 = vset.pattern.permute.xlu0 0
      %462 = vperm.xlu0 %461, %v323
      %v463 = vpop.permute.xlu0 %462
      %466 = vset.pattern.permute.xlu0 0
      %467 = vperm.xlu0 %466, %v324
      %v468 = vpop.permute.xlu0 %467
      %471 = vset.pattern.permute.xlu0 0
      %472 = vperm.xlu0 %471, %v325
      %v473 = vpop.permute.xlu0 %472
      %476 = vset.pattern.permute.xlu0 0
      %477 = vperm.xlu0 %476, %v326
      %v478 = vpop.permute.xlu0 %477
      %481 = vset.pattern.permute.xlu0 0
      %482 = vperm.xlu0 %481, %v327
      %v483 = vpop.permute.xlu0 %482
      %486 = vset.pattern.permute.xlu0 0
      %487 = vperm.xlu0 %486, %v328
      %v488 = vpop.permute.xlu0 %487
      %491 = vset.pattern.permute.xlu0 0
      %492 = vperm.xlu0 %491, %v329
      %v493 = vpop.permute.xlu0 %492
      %496 = vset.pattern.permute.xlu0 0
      %497 = vperm.xlu0 %496, %v330
      %v498 = vpop.permute.xlu0 %497
      %501 = vset.pattern.permute.xlu0 0
      %502 = vperm.xlu0 %501, %v331
      %v503 = vpop.permute.xlu0 %502
      %506 = vset.pattern.permute.xlu0 0
      %507 = vperm.xlu0 %506, %v332
      %v508 = vpop.permute.xlu0 %507
      %511 = vset.pattern.permute.xlu0 0
      %512 = vperm.xlu0 %511, %v333
      %v513 = vpop.permute.xlu0 %512
      %516 = vset.pattern.permute.xlu0 0
      %517 = vperm.xlu0 %516, %v334
      %v518 = vpop.permute.xlu0 %517
      %v521 = vlaneseq
      %v522 = vshrl.u32 %v521, 7
      %v523 = vsub.s32 0, %v522
      %v524 = vrot.slane %v335, %v523
      %v525 = vlaneseq
      %v526 = vshrl.u32 %v525, 7
      %v527 = vsub.s32 4, %v526
      %v528 = vrot.slane %v335, %v527
      %v531 = vlaneseq
      %v532 = vshrl.u32 %v531, 7
      %v533 = vsub.s32 0, %v532
      %v534 = vrot.slane %v524, %v533
      %v535 = vlaneseq
      %v536 = vshrl.u32 %v535, 7
      %v537 = vsub.s32 0, %v536
      %v538 = vrot.slane %v528, %v537
      %v539 = vadd.f32 %v443, %v534
      %v540 = vadd.f32 %v443, %v538
      %v541 = vadd.f32 %v448, %v534
      %v542 = vadd.f32 %v448, %v538
      %v543 = vadd.f32 %v453, %v534
      %v544 = vadd.f32 %v453, %v538
      %v545 = vadd.f32 %v458, %v534
      %v546 = vadd.f32 %v458, %v538
      %v547 = vadd.f32 %v463, %v534
      %v548 = vadd.f32 %v463, %v538
      %v549 = vadd.f32 %v468, %v534
      %v550 = vadd.f32 %v468, %v538
      %v551 = vadd.f32 %v473, %v534
      %v552 = vadd.f32 %v473, %v538
      %v553 = vadd.f32 %v478, %v534
      %v554 = vadd.f32 %v478, %v538
      %v555 = vadd.f32 %v483, %v534
      %v556 = vadd.f32 %v483, %v538
      %v557 = vadd.f32 %v488, %v534
      %v558 = vadd.f32 %v488, %v538
      %v559 = vadd.f32 %v493, %v534
      %v560 = vadd.f32 %v493, %v538
      %v561 = vadd.f32 %v498, %v534
      %v562 = vadd.f32 %v498, %v538
      %v563 = vadd.f32 %v503, %v534
      %v564 = vadd.f32 %v503, %v538
      %v565 = vadd.f32 %v508, %v534
      %v566 = vadd.f32 %v508, %v538
      %v567 = vadd.f32 %v513, %v534
      %v568 = vadd.f32 %v513, %v538
      %v569 = vadd.f32 %v518, %v534
      %v570 = vadd.f32 %v518, %v538
      %571 = vset.pattern.permute.xlu0 1
      %572 = vperm.xlu0 %571, %v319
      %v573 = vpop.permute.xlu0 %572
      %575 = vset.pattern.permute.xlu0 1
      %576 = vperm.xlu0 %575, %v320
      %v577 = vpop.permute.xlu0 %576
      %579 = vset.pattern.permute.xlu0 1
      %580 = vperm.xlu0 %579, %v321
      %v581 = vpop.permute.xlu0 %580
      %583 = vset.pattern.permute.xlu0 1
      %584 = vperm.xlu0 %583, %v322
      %v585 = vpop.permute.xlu0 %584
      %587 = vset.pattern.permute.xlu0 1
      %588 = vperm.xlu0 %587, %v323
      %v589 = vpop.permute.xlu0 %588
      %591 = vset.pattern.permute.xlu0 1
      %592 = vperm.xlu0 %591, %v324
      %v593 = vpop.permute.xlu0 %592
      %595 = vset.pattern.permute.xlu0 1
      %596 = vperm.xlu0 %595, %v325
      %v597 = vpop.permute.xlu0 %596
      %599 = vset.pattern.permute.xlu0 1
      %600 = vperm.xlu0 %599, %v326
      %v601 = vpop.permute.xlu0 %600
      %603 = vset.pattern.permute.xlu0 1
      %604 = vperm.xlu0 %603, %v327
      %v605 = vpop.permute.xlu0 %604
      %607 = vset.pattern.permute.xlu0 1
      %608 = vperm.xlu0 %607, %v328
      %v609 = vpop.permute.xlu0 %608
      %611 = vset.pattern.permute.xlu0 1
      %612 = vperm.xlu0 %611, %v329
      %v613 = vpop.permute.xlu0 %612
      %615 = vset.pattern.permute.xlu0 1
      %616 = vperm.xlu0 %615, %v330
      %v617 = vpop.permute.xlu0 %616
      %619 = vset.pattern.permute.xlu0 1
      %620 = vperm.xlu0 %619, %v331
      %v621 = vpop.permute.xlu0 %620
      %623 = vset.pattern.permute.xlu0 1
      %624 = vperm.xlu0 %623, %v332
      %v625 = vpop.permute.xlu0 %624
      %627 = vset.pattern.permute.xlu0 1
      %628 = vperm.xlu0 %627, %v333
      %v629 = vpop.permute.xlu0 %628
      %631 = vset.pattern.permute.xlu0 1
      %632 = vperm.xlu0 %631, %v334
      %v633 = vpop.permute.xlu0 %632
      %v635 = vlaneseq
      %v636 = vshrl.u32 %v635, 7
      %v637 = vsub.s32 1, %v636
      %v638 = vrot.slane %v335, %v637
      %v639 = vlaneseq
      %v640 = vshrl.u32 %v639, 7
      %v641 = vsub.s32 5, %v640
      %v642 = vrot.slane %v335, %v641
      %v645 = vlaneseq
      %v646 = vshrl.u32 %v645, 7
      %v647 = vsub.s32 1, %v646
      %v648 = vrot.slane %v638, %v647
      %v649 = vlaneseq
      %v650 = vshrl.u32 %v649, 7
      %v651 = vsub.s32 1, %v650
      %v652 = vrot.slane %v642, %v651
      %v653 = vmul.f32 %v573, %v648
      %v654 = vmul.f32 %v573, %v652
      %v655 = vmul.f32 %v577, %v648
      %v656 = vmul.f32 %v577, %v652
      %v657 = vmul.f32 %v581, %v648
      %v658 = vmul.f32 %v581, %v652
      %v659 = vmul.f32 %v585, %v648
      %v660 = vmul.f32 %v585, %v652
      %v661 = vmul.f32 %v589, %v648
      %v662 = vmul.f32 %v589, %v652
      %v663 = vmul.f32 %v593, %v648
      %v664 = vmul.f32 %v593, %v652
      %v665 = vmul.f32 %v597, %v648
      %v666 = vmul.f32 %v597, %v652
      %v667 = vmul.f32 %v601, %v648
      %v668 = vmul.f32 %v601, %v652
      %v669 = vmul.f32 %v605, %v648
      %v670 = vmul.f32 %v605, %v652
      %v671 = vmul.f32 %v609, %v648
      %v672 = vmul.f32 %v609, %v652
      %v673 = vmul.f32 %v613, %v648
      %v674 = vmul.f32 %v613, %v652
      %v675 = vmul.f32 %v617, %v648
      %v676 = vmul.f32 %v617, %v652
      %v677 = vmul.f32 %v621, %v648
      %v678 = vmul.f32 %v621, %v652
      %v679 = vmul.f32 %v625, %v648
      %v680 = vmul.f32 %v625, %v652
      %v681 = vmul.f32 %v629, %v648
      %v682 = vmul.f32 %v629, %v652
      %v683 = vmul.f32 %v633, %v648
      %v684 = vmul.f32 %v633, %v652
      %685 = vset.pattern.permute.xlu0 2
      %686 = vperm.xlu0 %685, %v319
      %v687 = vpop.permute.xlu0 %686
      %689 = vset.pattern.permute.xlu0 2
      %690 = vperm.xlu0 %689, %v320
      %v691 = vpop.permute.xlu0 %690
      %693 = vset.pattern.permute.xlu0 2
      %694 = vperm.xlu0 %693, %v321
      %v695 = vpop.permute.xlu0 %694
      %697 = vset.pattern.permute.xlu0 2
      %698 = vperm.xlu0 %697, %v322
      %v699 = vpop.permute.xlu0 %698
      %701 = vset.pattern.permute.xlu0 2
      %702 = vperm.xlu0 %701, %v323
      %v703 = vpop.permute.xlu0 %702
      %705 = vset.pattern.permute.xlu0 2
      %706 = vperm.xlu0 %705, %v324
      %v707 = vpop.permute.xlu0 %706
      %709 = vset.pattern.permute.xlu0 2
      %710 = vperm.xlu0 %709, %v325
      %v711 = vpop.permute.xlu0 %710
      %713 = vset.pattern.permute.xlu0 2
      %714 = vperm.xlu0 %713, %v326
      %v715 = vpop.permute.xlu0 %714
      %717 = vset.pattern.permute.xlu0 2
      %718 = vperm.xlu0 %717, %v327
      %v719 = vpop.permute.xlu0 %718
      %721 = vset.pattern.permute.xlu0 2
      %722 = vperm.xlu0 %721, %v328
      %v723 = vpop.permute.xlu0 %722
      %725 = vset.pattern.permute.xlu0 2
      %726 = vperm.xlu0 %725, %v329
      %v727 = vpop.permute.xlu0 %726
      %729 = vset.pattern.permute.xlu0 2
      %730 = vperm.xlu0 %729, %v330
      %v731 = vpop.permute.xlu0 %730
      %733 = vset.pattern.permute.xlu0 2
      %734 = vperm.xlu0 %733, %v331
      %v735 = vpop.permute.xlu0 %734
      %737 = vset.pattern.permute.xlu0 2
      %738 = vperm.xlu0 %737, %v332
      %v739 = vpop.permute.xlu0 %738
      %741 = vset.pattern.permute.xlu0 2
      %742 = vperm.xlu0 %741, %v333
      %v743 = vpop.permute.xlu0 %742
      %745 = vset.pattern.permute.xlu0 2
      %746 = vperm.xlu0 %745, %v334
      %v747 = vpop.permute.xlu0 %746
      %v749 = vlaneseq
      %v750 = vshrl.u32 %v749, 7
      %v751 = vsub.s32 2, %v750
      %v752 = vrot.slane %v335, %v751
      %v753 = vlaneseq
      %v754 = vshrl.u32 %v753, 7
      %v755 = vsub.s32 6, %v754
      %v756 = vrot.slane %v335, %v755
      %v759 = vlaneseq
      %v760 = vshrl.u32 %v759, 7
      %v761 = vsub.s32 2, %v760
      %v762 = vrot.slane %v752, %v761
      %v763 = vlaneseq
      %v764 = vshrl.u32 %v763, 7
      %v765 = vsub.s32 2, %v764
      %v766 = vrot.slane %v756, %v765
      %v767 = vmul.f32 %v687, %v762
      %v768 = vmul.f32 %v687, %v766
      %v769 = vmul.f32 %v691, %v762
      %v770 = vmul.f32 %v691, %v766
      %v771 = vmul.f32 %v695, %v762
      %v772 = vmul.f32 %v695, %v766
      %v773 = vmul.f32 %v699, %v762
      %v774 = vmul.f32 %v699, %v766
      %v775 = vmul.f32 %v703, %v762
      %v776 = vmul.f32 %v703, %v766
      %v777 = vmul.f32 %v707, %v762
      %v778 = vmul.f32 %v707, %v766
      %v779 = vmul.f32 %v711, %v762
      %v780 = vmul.f32 %v711, %v766
      %v781 = vmul.f32 %v715, %v762
      %v782 = vmul.f32 %v715, %v766
      %v783 = vmul.f32 %v719, %v762
      %v784 = vmul.f32 %v719, %v766
      %v785 = vmul.f32 %v723, %v762
      %v786 = vmul.f32 %v723, %v766
      %v787 = vmul.f32 %v727, %v762
      %v788 = vmul.f32 %v727, %v766
      %v789 = vmul.f32 %v731, %v762
      %v790 = vmul.f32 %v731, %v766
      %v791 = vmul.f32 %v735, %v762
      %v792 = vmul.f32 %v735, %v766
      %v793 = vmul.f32 %v739, %v762
      %v794 = vmul.f32 %v739, %v766
      %v795 = vmul.f32 %v743, %v762
      %v796 = vmul.f32 %v743, %v766
      %v797 = vmul.f32 %v747, %v762
      %v798 = vmul.f32 %v747, %v766
      %vm799 = vcmp.gt.f32.partialorder %v539, 0.0
      %vm800 = vcmp.gt.f32.partialorder %v540, 0.0
      %vm801 = vcmp.gt.f32.partialorder %v541, 0.0
      %vm802 = vcmp.gt.f32.partialorder %v542, 0.0
      %vm803 = vcmp.gt.f32.partialorder %v543, 0.0
      %vm804 = vcmp.gt.f32.partialorder %v544, 0.0
      %vm805 = vcmp.gt.f32.partialorder %v545, 0.0
      %vm806 = vcmp.gt.f32.partialorder %v546, 0.0
      %vm807 = vcmp.gt.f32.partialorder %v547, 0.0
      %vm808 = vcmp.gt.f32.partialorder %v548, 0.0
      %vm809 = vcmp.gt.f32.partialorder %v549, 0.0
      %vm810 = vcmp.gt.f32.partialorder %v550, 0.0
      %vm811 = vcmp.gt.f32.partialorder %v551, 0.0
      %vm812 = vcmp.gt.f32.partialorder %v552, 0.0
      %vm813 = vcmp.gt.f32.partialorder %v553, 0.0
      %vm814 = vcmp.gt.f32.partialorder %v554, 0.0
      %vm815 = vcmp.gt.f32.partialorder %v555, 0.0
      %vm816 = vcmp.gt.f32.partialorder %v556, 0.0
      %vm817 = vcmp.gt.f32.partialorder %v557, 0.0
      %vm818 = vcmp.gt.f32.partialorder %v558, 0.0
      %vm819 = vcmp.gt.f32.partialorder %v559, 0.0
      %vm820 = vcmp.gt.f32.partialorder %v560, 0.0
      %vm821 = vcmp.gt.f32.partialorder %v561, 0.0
      %vm822 = vcmp.gt.f32.partialorder %v562, 0.0
      %vm823 = vcmp.gt.f32.partialorder %v563, 0.0
      %vm824 = vcmp.gt.f32.partialorder %v564, 0.0
      %vm825 = vcmp.gt.f32.partialorder %v565, 0.0
      %vm826 = vcmp.gt.f32.partialorder %v566, 0.0
      %vm827 = vcmp.gt.f32.partialorder %v567, 0.0
      %vm828 = vcmp.gt.f32.partialorder %v568, 0.0
      %vm829 = vcmp.gt.f32.partialorder %v569, 0.0
      %vm830 = vcmp.gt.f32.partialorder %v570, 0.0
      %v831 = vsel %vm799, %v653, %v767
      %v832 = vsel %vm800, %v654, %v768
      %v833 = vsel %vm801, %v655, %v769
      %v834 = vsel %vm802, %v656, %v770
      %v835 = vsel %vm803, %v657, %v771
      %v836 = vsel %vm804, %v658, %v772
      %v837 = vsel %vm805, %v659, %v773
      %v838 = vsel %vm806, %v660, %v774
      %v839 = vsel %vm807, %v661, %v775
      %v840 = vsel %vm808, %v662, %v776
      %v841 = vsel %vm809, %v663, %v777
      %v842 = vsel %vm810, %v664, %v778
      %v843 = vsel %vm811, %v665, %v779
      %v844 = vsel %vm812, %v666, %v780
      %v845 = vsel %vm813, %v667, %v781
      %v846 = vsel %vm814, %v668, %v782
      %v847 = vsel %vm815, %v669, %v783
      %v848 = vsel %vm816, %v670, %v784
      %v849 = vsel %vm817, %v671, %v785
      %v850 = vsel %vm818, %v672, %v786
      %v851 = vsel %vm819, %v673, %v787
      %v852 = vsel %vm820, %v674, %v788
      %v853 = vsel %vm821, %v675, %v789
      %v854 = vsel %vm822, %v676, %v790
      %v855 = vsel %vm823, %v677, %v791
      %v856 = vsel %vm824, %v678, %v792
      %v857 = vsel %vm825, %v679, %v793
      %v858 = vsel %vm826, %v680, %v794
      %v859 = vsel %vm827, %v681, %v795
      %v860 = vsel %vm828, %v682, %v796
      %v861 = vsel %vm829, %v683, %v797
      %v862 = vsel %vm830, %v684, %v798
      %v863 = vmul.f32 %v831, %v408
      %v864 = vmul.f32 %v832, %v409
      %v865 = vmul.f32 %v833, %v410
      %v866 = vmul.f32 %v834, %v411
      %v867 = vmul.f32 %v835, %v412
      %v868 = vmul.f32 %v836, %v413
      %v869 = vmul.f32 %v837, %v414
      %v870 = vmul.f32 %v838, %v415
      %v871 = vmul.f32 %v839, %v416
      %v872 = vmul.f32 %v840, %v417
      %v873 = vmul.f32 %v841, %v418
      %v874 = vmul.f32 %v842, %v419
      %v875 = vmul.f32 %v843, %v420
      %v876 = vmul.f32 %v844, %v421
      %v877 = vmul.f32 %v845, %v422
      %v878 = vmul.f32 %v846, %v423
      %v879 = vmul.f32 %v847, %v424
      %v880 = vmul.f32 %v848, %v425
      %v881 = vmul.f32 %v849, %v426
      %v882 = vmul.f32 %v850, %v427
      %v883 = vmul.f32 %v851, %v428
      %v884 = vmul.f32 %v852, %v429
      %v885 = vmul.f32 %v853, %v430
      %v886 = vmul.f32 %v854, %v431
      %v887 = vmul.f32 %v855, %v432
      %v888 = vmul.f32 %v856, %v433
      %v889 = vmul.f32 %v857, %v434
      %v890 = vmul.f32 %v858, %v435
      %v891 = vmul.f32 %v859, %v436
      %v892 = vmul.f32 %v860, %v437
      %v893 = vmul.f32 %v861, %v438
      %v894 = vmul.f32 %v862, %v439
      %v895 = vld [vmem:[#allocation2] sm:$0xff]
      %v896 = vld [vmem:[#allocation2 + $0x8] sm:$0xff]
      %v897 = vld [vmem:[#allocation2 + $0x10] sm:$0xff]
      %v898 = vld [vmem:[#allocation2 + $0x18] sm:$0xff]
      %v899 = vld [vmem:[#allocation2 + $0x20] sm:$0xff]
      %v900 = vld [vmem:[#allocation2 + $0x28] sm:$0xff]
      %v901 = vld [vmem:[#allocation2 + $0x30] sm:$0xff]
      %v902 = vld [vmem:[#allocation2 + $0x38] sm:$0xff]
      %v903 = vld [vmem:[#allocation2 + $0x40] sm:$0xff]
      %v904 = vld [vmem:[#allocation2 + $0x48] sm:$0xff]
      %v905 = vld [vmem:[#allocation2 + $0x50] sm:$0xff]
      %v906 = vld [vmem:[#allocation2 + $0x58] sm:$0xff]
      %v907 = vld [vmem:[#allocation2 + $0x60] sm:$0xff]
      %v908 = vld [vmem:[#allocation2 + $0x68] sm:$0xff]
      %v909 = vld [vmem:[#allocation2 + $0x70] sm:$0xff]
      %v910 = vld [vmem:[#allocation2 + $0x78] sm:$0xff]
      %911 = vmatprep.subr.mxu0 0.0
      %912 = vmatpush1.msra.mxu0 %v351
      %913 = vmatprep.subr.mxu0 0.0
      %914 = vmatpush1.msra.mxu0 %v350
      %915 = vmatprep.subr.mxu0 0.0
      %916 = vmatpush1.msra.mxu0 %v349
      %917 = vmatprep.subr.mxu0 0.0
      %918 = vmatpush1.msra.mxu0 %v348
      %919 = vmatprep.subr.mxu0 0.0
      %920 = vmatpush1.msra.mxu0 %v347
      %921 = vmatprep.subr.mxu0 0.0
      %922 = vmatpush1.msra.mxu0 %v346
      %923 = vmatprep.subr.mxu0 0.0
      %924 = vmatpush1.msra.mxu0 %v345
      %925 = vmatprep.subr.mxu0 0.0
      %926 = vmatpush1.msra.mxu0 %v344
      %927 = vmatprep.subr.mxu0 0.0
      %928 = vmatpush1.msra.mxu0 %v343
      %929 = vmatprep.subr.mxu0 0.0
      %930 = vmatpush1.msra.mxu0 %v342
      %931 = vmatprep.subr.mxu0 0.0
      %932 = vmatpush1.msra.mxu0 %v341
      %933 = vmatprep.subr.mxu0 0.0
      %934 = vmatpush1.msra.mxu0 %v340
      %935 = vmatprep.subr.mxu0 0.0
      %936 = vmatpush1.msra.mxu0 %v339
      %937 = vmatprep.subr.mxu0 0.0
      %938 = vmatpush1.msra.mxu0 %v338
      %939 = vmatprep.subr.mxu0 0.0
      %940 = vmatpush1.msra.mxu0 %v337
      %941 = vmatprep.subr.mxu0 0.0
      %942 = vmatpush1.msra.mxu0 %v336
      %943 = vmatprep.subr.mxu0 0.0
      %944 = vmatpush2.msra.mxu0 %v367
      %945 = vmatprep.subr.mxu0 0.0
      %946 = vmatpush2.msra.mxu0 %v366
      %947 = vmatprep.subr.mxu0 0.0
      %948 = vmatpush2.msra.mxu0 %v365
      %949 = vmatprep.subr.mxu0 0.0
      %950 = vmatpush2.msra.mxu0 %v364
      %951 = vmatprep.subr.mxu0 0.0
      %952 = vmatpush2.msra.mxu0 %v363
      %953 = vmatprep.subr.mxu0 0.0
      %954 = vmatpush2.msra.mxu0 %v362
      %955 = vmatprep.subr.mxu0 0.0
      %956 = vmatpush2.msra.mxu0 %v361
      %957 = vmatprep.subr.mxu0 0.0
      %958 = vmatpush2.msra.mxu0 %v360
      %959 = vmatprep.subr.mxu0 0.0
      %960 = vmatpush2.msra.mxu0 %v359
      %961 = vmatprep.subr.mxu0 0.0
      %962 = vmatpush2.msra.mxu0 %v358
      %963 = vmatprep.subr.mxu0 0.0
      %964 = vmatpush2.msra.mxu0 %v357
      %965 = vmatprep.subr.mxu0 0.0
      %966 = vmatpush2.msra.mxu0 %v356
      %967 = vmatprep.subr.mxu0 0.0
      %968 = vmatpush2.msra.mxu0 %v355
      %969 = vmatprep.subr.mxu0 0.0
      %970 = vmatpush2.msra.mxu0 %v354
      %971 = vmatprep.subr.mxu0 0.0
      %972 = vmatpush2.msra.mxu0 %v353
      %973 = vmatprep.subr.mxu0 0.0
      %974 = vmatpush2.msra.mxu0 %v352
      %975 = vmatprep.mubr.f32.mxu0 %v864
      %976 = vmatmul.mubr.f32.gmra.mxu0 %v863
      %v977 = vpop.f32.mrf.mxu0
      %v978 = vadd.f32 0.0, %v977
      %v979 = vpop.f32.mrf.mxu0
      %980 = vmatprep.mubr.f32.mxu0 %v866
      %981 = vmatmul.mubr.f32.gmra.mxu0 %v865
      %v982 = vpop.f32.mrf.mxu0
      %v983 = vadd.f32 0.0, %v982
      %v984 = vpop.f32.mrf.mxu0
      %985 = vmatprep.mubr.f32.mxu0 %v868
      %986 = vmatmul.mubr.f32.gmra.mxu0 %v867
      %v987 = vpop.f32.mrf.mxu0
      %v988 = vadd.f32 0.0, %v987
      %v989 = vpop.f32.mrf.mxu0
      %990 = vmatprep.mubr.f32.mxu0 %v870
      %991 = vmatmul.mubr.f32.gmra.mxu0 %v869
      %v992 = vpop.f32.mrf.mxu0
      %v993 = vadd.f32 0.0, %v992
      %v994 = vpop.f32.mrf.mxu0
      %995 = vmatprep.mubr.f32.mxu0 %v872
      %996 = vmatmul.mubr.f32.gmra.mxu0 %v871
      %v997 = vpop.f32.mrf.mxu0
      %v998 = vadd.f32 0.0, %v997
      %v999 = vpop.f32.mrf.mxu0
      %1000 = vmatprep.mubr.f32.mxu0 %v874
      %1001 = vmatmul.mubr.f32.gmra.mxu0 %v873
      %v1002 = vpop.f32.mrf.mxu0
      %v1003 = vadd.f32 0.0, %v1002
      %v1004 = vpop.f32.mrf.mxu0
      %1005 = vmatprep.mubr.f32.mxu0 %v876
      %1006 = vmatmul.mubr.f32.gmra.mxu0 %v875
      %v1007 = vpop.f32.mrf.mxu0
      %v1008 = vadd.f32 0.0, %v1007
      %v1009 = vpop.f32.mrf.mxu0
      %1010 = vmatprep.mubr.f32.mxu0 %v878
      %1011 = vmatmul.mubr.f32.gmra.mxu0 %v877
      %v1012 = vpop.f32.mrf.mxu0
      %v1013 = vadd.f32 0.0, %v1012
      %v1014 = vpop.f32.mrf.mxu0
      %1015 = vmatprep.mubr.f32.mxu0 %v880
      %1016 = vmatmul.mubr.f32.gmra.mxu0 %v879
      %v1017 = vpop.f32.mrf.mxu0
      %v1018 = vadd.f32 0.0, %v1017
      %v1019 = vpop.f32.mrf.mxu0
      %1020 = vmatprep.mubr.f32.mxu0 %v882
      %1021 = vmatmul.mubr.f32.gmra.mxu0 %v881
      %v1022 = vpop.f32.mrf.mxu0
      %v1023 = vadd.f32 0.0, %v1022
      %v1024 = vpop.f32.mrf.mxu0
      %1025 = vmatprep.mubr.f32.mxu0 %v884
      %1026 = vmatmul.mubr.f32.gmra.mxu0 %v883
      %v1027 = vpop.f32.mrf.mxu0
      %v1028 = vadd.f32 0.0, %v1027
      %v1029 = vpop.f32.mrf.mxu0
      %1030 = vmatprep.mubr.f32.mxu0 %v886
      %1031 = vmatmul.mubr.f32.gmra.mxu0 %v885
      %v1032 = vpop.f32.mrf.mxu0
      %v1033 = vadd.f32 0.0, %v1032
      %v1034 = vpop.f32.mrf.mxu0
      %1035 = vmatprep.mubr.f32.mxu0 %v888
      %1036 = vmatmul.mubr.f32.gmra.mxu0 %v887
      %v1037 = vpop.f32.mrf.mxu0
      %v1038 = vadd.f32 0.0, %v1037
      %v1039 = vpop.f32.mrf.mxu0
      %1040 = vmatprep.mubr.f32.mxu0 %v890
      %1041 = vmatmul.mubr.f32.gmra.mxu0 %v889
      %v1042 = vpop.f32.mrf.mxu0
      %v1043 = vadd.f32 0.0, %v1042
      %v1044 = vpop.f32.mrf.mxu0
      %1045 = vmatprep.mubr.f32.mxu0 %v892
      %1046 = vmatmul.mubr.f32.gmra.mxu0 %v891
      %v1047 = vpop.f32.mrf.mxu0
      %v1048 = vadd.f32 0.0, %v1047
      %v1049 = vpop.f32.mrf.mxu0
      %1050 = vmatprep.mubr.f32.mxu0 %v894
      %1051 = vmatmul.mubr.f32.gmra.mxu0 %v893
      %v1052 = vpop.f32.mrf.mxu0
      %v1053 = vadd.f32 0.0, %v1052
      %v1054 = vpop.f32.mrf.mxu0
      %1055 = vdwg.mxu0
      %v1056 = vadd.f32 %v895, %v978
      %v1057 = vadd.f32 %v896, %v983
      %v1058 = vadd.f32 %v897, %v988
      %v1059 = vadd.f32 %v898, %v993
      %v1060 = vadd.f32 %v899, %v998
      %v1061 = vadd.f32 %v900, %v1003
      %v1062 = vadd.f32 %v901, %v1008
      %v1063 = vadd.f32 %v902, %v1013
      %v1064 = vadd.f32 %v903, %v1018
      %v1065 = vadd.f32 %v904, %v1023
      %v1066 = vadd.f32 %v905, %v1028
      %v1067 = vadd.f32 %v906, %v1033
      %v1068 = vadd.f32 %v907, %v1038
      %v1069 = vadd.f32 %v908, %v1043
      %v1070 = vadd.f32 %v909, %v1048
      %v1071 = vadd.f32 %v910, %v1053
      %vm1072 = vcmask 72704
      %1073 = vst.msk [vmem:[#allocation2] sm:$0xff] %vm1072, %v1056
      %1074 = vst.msk [vmem:[#allocation2 + $0x8] sm:$0xff] %vm1072, %v1057
      %1075 = vst.msk [vmem:[#allocation2 + $0x10] sm:$0xff] %vm1072, %v1058
      %1076 = vst.msk [vmem:[#allocation2 + $0x18] sm:$0xff] %vm1072, %v1059
      %1077 = vst.msk [vmem:[#allocation2 + $0x20] sm:$0xff] %vm1072, %v1060
      %1078 = vst.msk [vmem:[#allocation2 + $0x28] sm:$0xff] %vm1072, %v1061
      %1079 = vst.msk [vmem:[#allocation2 + $0x30] sm:$0xff] %vm1072, %v1062
      %1080 = vst.msk [vmem:[#allocation2 + $0x38] sm:$0xff] %vm1072, %v1063
      %1081 = vst.msk [vmem:[#allocation2 + $0x40] sm:$0xff] %vm1072, %v1064
      %1082 = vst.msk [vmem:[#allocation2 + $0x48] sm:$0xff] %vm1072, %v1065
      %1083 = vst.msk [vmem:[#allocation2 + $0x50] sm:$0xff] %vm1072, %v1066
      %1084 = vst.msk [vmem:[#allocation2 + $0x58] sm:$0xff] %vm1072, %v1067
      %1085 = vst.msk [vmem:[#allocation2 + $0x60] sm:$0xff] %vm1072, %v1068
      %1086 = vst.msk [vmem:[#allocation2 + $0x68] sm:$0xff] %vm1072, %v1069
      %1087 = vst.msk [vmem:[#allocation2 + $0x70] sm:$0xff] %vm1072, %v1070
      %1088 = vst.msk [vmem:[#allocation2 + $0x78] sm:$0xff] %vm1072, %v1071
      // Predicated region
      $region41: #{spgat_forward.7} parent=35 // pred_check
        %p1089 = pneg %p298
      $region42: #{spgat_forward.7} parent=35 // pred_check_branch
        %1091 = sbr.rel (%p1089) target = $region44
      $region43: #{spgat_forward.7} parent=35 // pred_region
        %v1092 = vld [vmem:[#allocation2] sm:$0xff]
        %v1093 = vld [vmem:[#allocation2 + $0x8] sm:$0xff]
        %v1094 = vld [vmem:[#allocation2 + $0x10] sm:$0xff]
        %v1095 = vld [vmem:[#allocation2 + $0x18] sm:$0xff]
        %v1096 = vld [vmem:[#allocation2 + $0x20] sm:$0xff]
        %v1097 = vld [vmem:[#allocation2 + $0x28] sm:$0xff]
        %v1098 = vld [vmem:[#allocation2 + $0x30] sm:$0xff]
        %v1099 = vld [vmem:[#allocation2 + $0x38] sm:$0xff]
        %v1100 = vld [vmem:[#allocation2 + $0x40] sm:$0xff]
        %v1101 = vld [vmem:[#allocation2 + $0x48] sm:$0xff]
        %v1102 = vld [vmem:[#allocation2 + $0x50] sm:$0xff]
        %v1103 = vld [vmem:[#allocation2 + $0x58] sm:$0xff]
        %v1104 = vld [vmem:[#allocation2 + $0x60] sm:$0xff]
        %v1105 = vld [vmem:[#allocation2 + $0x68] sm:$0xff]
        %v1106 = vld [vmem:[#allocation2 + $0x70] sm:$0xff]
        %v1107 = vld [vmem:[#allocation2 + $0x78] sm:$0xff]
        %v1108 = vrcp.pop %v1092
        %v1109 = vrcp.pop %v1093
        %v1110 = vrcp.pop %v1094
        %v1111 = vrcp.pop %v1095
        %v1112 = vrcp.pop %v1096
        %v1113 = vrcp.pop %v1097
        %v1114 = vrcp.pop %v1098
        %v1115 = vrcp.pop %v1099
        %v1116 = vrcp.pop %v1100
        %v1117 = vrcp.pop %v1101
        %v1118 = vrcp.pop %v1102
        %v1119 = vrcp.pop %v1103
        %v1120 = vrcp.pop %v1104
        %v1121 = vrcp.pop %v1105
        %v1122 = vrcp.pop %v1106
        %v1123 = vrcp.pop %v1107
        %1125 = vset.pattern.permute.xlu0 8
        %1126 = vperm.xlu0 %1125, %v1108
        %v1127 = vpop.permute.xlu0 %1126
        %1130 = vset.pattern.permute.xlu0 8
        %1131 = vperm.xlu0 %1130, %v1109
        %v1132 = vpop.permute.xlu0 %1131
        %1135 = vset.pattern.permute.xlu0 8
        %1136 = vperm.xlu0 %1135, %v1110
        %v1137 = vpop.permute.xlu0 %1136
        %1140 = vset.pattern.permute.xlu0 8
        %1141 = vperm.xlu0 %1140, %v1111
        %v1142 = vpop.permute.xlu0 %1141
        %1145 = vset.pattern.permute.xlu0 8
        %1146 = vperm.xlu0 %1145, %v1112
        %v1147 = vpop.permute.xlu0 %1146
        %1150 = vset.pattern.permute.xlu0 8
        %1151 = vperm.xlu0 %1150, %v1113
        %v1152 = vpop.permute.xlu0 %1151
        %1155 = vset.pattern.permute.xlu0 8
        %1156 = vperm.xlu0 %1155, %v1114
        %v1157 = vpop.permute.xlu0 %1156
        %1160 = vset.pattern.permute.xlu0 8
        %1161 = vperm.xlu0 %1160, %v1115
        %v1162 = vpop.permute.xlu0 %1161
        %1165 = vset.pattern.permute.xlu0 8
        %1166 = vperm.xlu0 %1165, %v1116
        %v1167 = vpop.permute.xlu0 %1166
        %1170 = vset.pattern.permute.xlu0 8
        %1171 = vperm.xlu0 %1170, %v1117
        %v1172 = vpop.permute.xlu0 %1171
        %1175 = vset.pattern.permute.xlu0 8
        %1176 = vperm.xlu0 %1175, %v1118
        %v1177 = vpop.permute.xlu0 %1176
        %1180 = vset.pattern.permute.xlu0 8
        %1181 = vperm.xlu0 %1180, %v1119
        %v1182 = vpop.permute.xlu0 %1181
        %1185 = vset.pattern.permute.xlu0 8
        %1186 = vperm.xlu0 %1185, %v1120
        %v1187 = vpop.permute.xlu0 %1186
        %1190 = vset.pattern.permute.xlu0 8
        %1191 = vperm.xlu0 %1190, %v1121
        %v1192 = vpop.permute.xlu0 %1191
        %1195 = vset.pattern.permute.xlu0 8
        %1196 = vperm.xlu0 %1195, %v1122
        %v1197 = vpop.permute.xlu0 %1196
        %1200 = vset.pattern.permute.xlu0 8
        %1201 = vperm.xlu0 %1200, %v1123
        %v1202 = vpop.permute.xlu0 %1201
        %v1204 = vmul.f32 %v1092, %v1127
        %v1205 = vmul.f32 %v1093, %v1132
        %v1206 = vmul.f32 %v1094, %v1137
        %v1207 = vmul.f32 %v1095, %v1142
        %v1208 = vmul.f32 %v1096, %v1147
        %v1209 = vmul.f32 %v1097, %v1152
        %v1210 = vmul.f32 %v1098, %v1157
        %v1211 = vmul.f32 %v1099, %v1162
        %v1212 = vmul.f32 %v1100, %v1167
        %v1213 = vmul.f32 %v1101, %v1172
        %v1214 = vmul.f32 %v1102, %v1177
        %v1215 = vmul.f32 %v1103, %v1182
        %v1216 = vmul.f32 %v1104, %v1187
        %v1217 = vmul.f32 %v1105, %v1192
        %v1218 = vmul.f32 %v1106, %v1197
        %v1219 = vmul.f32 %v1107, %v1202
        %vm1220 = vcmp.gt.f32.partialorder %v1204, 0.0
        %vm1221 = vcmp.gt.f32.partialorder %v1205, 0.0
        %vm1222 = vcmp.gt.f32.partialorder %v1206, 0.0
        %vm1223 = vcmp.gt.f32.partialorder %v1207, 0.0
        %vm1224 = vcmp.gt.f32.partialorder %v1208, 0.0
        %vm1225 = vcmp.gt.f32.partialorder %v1209, 0.0
        %vm1226 = vcmp.gt.f32.partialorder %v1210, 0.0
        %vm1227 = vcmp.gt.f32.partialorder %v1211, 0.0
        %vm1228 = vcmp.gt.f32.partialorder %v1212, 0.0
        %vm1229 = vcmp.gt.f32.partialorder %v1213, 0.0
        %vm1230 = vcmp.gt.f32.partialorder %v1214, 0.0
        %vm1231 = vcmp.gt.f32.partialorder %v1215, 0.0
        %vm1232 = vcmp.gt.f32.partialorder %v1216, 0.0
        %vm1233 = vcmp.gt.f32.partialorder %v1217, 0.0
        %vm1234 = vcmp.gt.f32.partialorder %v1218, 0.0
        %vm1235 = vcmp.gt.f32.partialorder %v1219, 0.0
        %v1236 = vmul.f32 %v1204, 1.442695
        %v1237 = vpow.pop %v1236
        %v1238 = vmul.f32 %v1205, 1.442695
        %v1239 = vpow.pop %v1238
        %v1240 = vmul.f32 %v1206, 1.442695
        %v1241 = vpow.pop %v1240
        %v1242 = vmul.f32 %v1207, 1.442695
        %v1243 = vpow.pop %v1242
        %v1244 = vmul.f32 %v1208, 1.442695
        %v1245 = vpow.pop %v1244
        %v1246 = vmul.f32 %v1209, 1.442695
        %v1247 = vpow.pop %v1246
        %v1248 = vmul.f32 %v1210, 1.442695
        %v1249 = vpow.pop %v1248
        %v1250 = vmul.f32 %v1211, 1.442695
        %v1251 = vpow.pop %v1250
        %v1252 = vmul.f32 %v1212, 1.442695
        %v1253 = vpow.pop %v1252
        %v1254 = vmul.f32 %v1213, 1.442695
        %v1255 = vpow.pop %v1254
        %v1256 = vmul.f32 %v1214, 1.442695
        %v1257 = vpow.pop %v1256
        %v1258 = vmul.f32 %v1215, 1.442695
        %v1259 = vpow.pop %v1258
        %v1260 = vmul.f32 %v1216, 1.442695
        %v1261 = vpow.pop %v1260
        %v1262 = vmul.f32 %v1217, 1.442695
        %v1263 = vpow.pop %v1262
        %v1264 = vmul.f32 %v1218, 1.442695
        %v1265 = vpow.pop %v1264
        %v1266 = vmul.f32 %v1219, 1.442695
        %v1267 = vpow.pop %v1266
        %v1268 = vsub.f32 %v1237, 1.0
        %v1269 = vsub.f32 %v1239, 1.0
        %v1270 = vsub.f32 %v1241, 1.0
        %v1271 = vsub.f32 %v1243, 1.0
        %v1272 = vsub.f32 %v1245, 1.0
        %v1273 = vsub.f32 %v1247, 1.0
        %v1274 = vsub.f32 %v1249, 1.0
        %v1275 = vsub.f32 %v1251, 1.0
        %v1276 = vsub.f32 %v1253, 1.0
        %v1277 = vsub.f32 %v1255, 1.0
        %v1278 = vsub.f32 %v1257, 1.0
        %v1279 = vsub.f32 %v1259, 1.0
        %v1280 = vsub.f32 %v1261, 1.0
        %v1281 = vsub.f32 %v1263, 1.0
        %v1282 = vsub.f32 %v1265, 1.0
        %v1283 = vsub.f32 %v1267, 1.0
        %v1284 = vsel %vm1220, %v1204, %v1268
        %v1285 = vsel %vm1221, %v1205, %v1269
        %v1286 = vsel %vm1222, %v1206, %v1270
        %v1287 = vsel %vm1223, %v1207, %v1271
        %v1288 = vsel %vm1224, %v1208, %v1272
        %v1289 = vsel %vm1225, %v1209, %v1273
        %v1290 = vsel %vm1226, %v1210, %v1274
        %v1291 = vsel %vm1227, %v1211, %v1275
        %v1292 = vsel %vm1228, %v1212, %v1276
        %v1293 = vsel %vm1229, %v1213, %v1277
        %v1294 = vsel %vm1230, %v1214, %v1278
        %v1295 = vsel %vm1231, %v1215, %v1279
        %v1296 = vsel %vm1232, %v1216, %v1280
        %v1297 = vsel %vm1233, %v1217, %v1281
        %v1298 = vsel %vm1234, %v1218, %v1282
        %v1299 = vsel %vm1235, %v1219, %v1283
        %vm1300 = vcmask 64512
        %v1301 = vsel %vm1300, %v1284, -inf
        %1302 = vmax.xlane.f32.xlu0 %v1301
        %v1303 = vpop.xlane.xlu0 %1302
        %v1304 = vsel %vm1300, %v1285, -inf
        %1305 = vmax.xlane.f32.xlu0 %v1304
        %v1306 = vpop.xlane.xlu0 %1305
        %v1307 = vsel %vm1300, %v1286, -inf
        %1308 = vmax.xlane.f32.xlu0 %v1307
        %v1309 = vpop.xlane.xlu0 %1308
        %v1310 = vsel %vm1300, %v1287, -inf
        %1311 = vmax.xlane.f32.xlu0 %v1310
        %v1312 = vpop.xlane.xlu0 %1311
        %v1313 = vsel %vm1300, %v1288, -inf
        %1314 = vmax.xlane.f32.xlu0 %v1313
        %v1315 = vpop.xlane.xlu0 %1314
        %v1316 = vsel %vm1300, %v1289, -inf
        %1317 = vmax.xlane.f32.xlu0 %v1316
        %v1318 = vpop.xlane.xlu0 %1317
        %v1319 = vsel %vm1300, %v1290, -inf
        %1320 = vmax.xlane.f32.xlu0 %v1319
        %v1321 = vpop.xlane.xlu0 %1320
        %v1322 = vsel %vm1300, %v1291, -inf
        %1323 = vmax.xlane.f32.xlu0 %v1322
        %v1324 = vpop.xlane.xlu0 %1323
        %v1325 = vsel %vm1300, %v1292, -inf
        %1326 = vmax.xlane.f32.xlu0 %v1325
        %v1327 = vpop.xlane.xlu0 %1326
        %v1328 = vsel %vm1300, %v1293, -inf
        %1329 = vmax.xlane.f32.xlu0 %v1328
        %v1330 = vpop.xlane.xlu0 %1329
        %v1331 = vsel %vm1300, %v1294, -inf
        %1332 = vmax.xlane.f32.xlu0 %v1331
        %v1333 = vpop.xlane.xlu0 %1332
        %v1334 = vsel %vm1300, %v1295, -inf
        %1335 = vmax.xlane.f32.xlu0 %v1334
        %v1336 = vpop.xlane.xlu0 %1335
        %v1337 = vsel %vm1300, %v1296, -inf
        %1338 = vmax.xlane.f32.xlu0 %v1337
        %v1339 = vpop.xlane.xlu0 %1338
        %v1340 = vsel %vm1300, %v1297, -inf
        %1341 = vmax.xlane.f32.xlu0 %v1340
        %v1342 = vpop.xlane.xlu0 %1341
        %v1343 = vsel %vm1300, %v1298, -inf
        %1344 = vmax.xlane.f32.xlu0 %v1343
        %v1345 = vpop.xlane.xlu0 %1344
        %v1346 = vsel %vm1300, %v1299, -inf
        %1347 = vmax.xlane.f32.xlu0 %v1346
        %v1348 = vpop.xlane.xlu0 %1347
        %v1349 = vsub.f32 %v1284, %v1303
        %v1350 = vsub.f32 %v1285, %v1306
        %v1351 = vsub.f32 %v1286, %v1309
        %v1352 = vsub.f32 %v1287, %v1312
        %v1353 = vsub.f32 %v1288, %v1315
        %v1354 = vsub.f32 %v1289, %v1318
        %v1355 = vsub.f32 %v1290, %v1321
        %v1356 = vsub.f32 %v1291, %v1324
        %v1357 = vsub.f32 %v1292, %v1327
        %v1358 = vsub.f32 %v1293, %v1330
        %v1359 = vsub.f32 %v1294, %v1333
        %v1360 = vsub.f32 %v1295, %v1336
        %v1361 = vsub.f32 %v1296, %v1339
        %v1362 = vsub.f32 %v1297, %v1342
        %v1363 = vsub.f32 %v1298, %v1345
        %v1364 = vsub.f32 %v1299, %v1348
        %v1365 = vmul.f32 %v1349, 1.442695
        %v1366 = vpow.pop %v1365
        %v1367 = vmul.f32 %v1350, 1.442695
        %v1368 = vpow.pop %v1367
        %v1369 = vmul.f32 %v1351, 1.442695
        %v1370 = vpow.pop %v1369
        %v1371 = vmul.f32 %v1352, 1.442695
        %v1372 = vpow.pop %v1371
        %v1373 = vmul.f32 %v1353, 1.442695
        %v1374 = vpow.pop %v1373
        %v1375 = vmul.f32 %v1354, 1.442695
        %v1376 = vpow.pop %v1375
        %v1377 = vmul.f32 %v1355, 1.442695
        %v1378 = vpow.pop %v1377
        %v1379 = vmul.f32 %v1356, 1.442695
        %v1380 = vpow.pop %v1379
        %v1381 = vmul.f32 %v1357, 1.442695
        %v1382 = vpow.pop %v1381
        %v1383 = vmul.f32 %v1358, 1.442695
        %v1384 = vpow.pop %v1383
        %v1385 = vmul.f32 %v1359, 1.442695
        %v1386 = vpow.pop %v1385
        %v1387 = vmul.f32 %v1360, 1.442695
        %v1388 = vpow.pop %v1387
        %v1389 = vmul.f32 %v1361, 1.442695
        %v1390 = vpow.pop %v1389
        %v1391 = vmul.f32 %v1362, 1.442695
        %v1392 = vpow.pop %v1391
        %v1393 = vmul.f32 %v1363, 1.442695
        %v1394 = vpow.pop %v1393
        %v1395 = vmul.f32 %v1364, 1.442695
        %v1396 = vpow.pop %v1395
        %v1397 = vsel %vm1300, %v1366, 0.0
        %1398 = vadd.xlane.f32.xlu0 %v1397
        %v1399 = vpop.xlane.xlu0 %1398
        %v1400 = vsel %vm1300, %v1368, 0.0
        %1401 = vadd.xlane.f32.xlu0 %v1400
        %v1402 = vpop.xlane.xlu0 %1401
        %v1403 = vsel %vm1300, %v1370, 0.0
        %1404 = vadd.xlane.f32.xlu0 %v1403
        %v1405 = vpop.xlane.xlu0 %1404
        %v1406 = vsel %vm1300, %v1372, 0.0
        %1407 = vadd.xlane.f32.xlu0 %v1406
        %v1408 = vpop.xlane.xlu0 %1407
        %v1409 = vsel %vm1300, %v1374, 0.0
        %1410 = vadd.xlane.f32.xlu0 %v1409
        %v1411 = vpop.xlane.xlu0 %1410
        %v1412 = vsel %vm1300, %v1376, 0.0
        %1413 = vadd.xlane.f32.xlu0 %v1412
        %v1414 = vpop.xlane.xlu0 %1413
        %v1415 = vsel %vm1300, %v1378, 0.0
        %1416 = vadd.xlane.f32.xlu0 %v1415
        %v1417 = vpop.xlane.xlu0 %1416
        %v1418 = vsel %vm1300, %v1380, 0.0
        %1419 = vadd.xlane.f32.xlu0 %v1418
        %v1420 = vpop.xlane.xlu0 %1419
        %v1421 = vsel %vm1300, %v1382, 0.0
        %1422 = vadd.xlane.f32.xlu0 %v1421
        %v1423 = vpop.xlane.xlu0 %1422
        %v1424 = vsel %vm1300, %v1384, 0.0
        %1425 = vadd.xlane.f32.xlu0 %v1424
        %v1426 = vpop.xlane.xlu0 %1425
        %v1427 = vsel %vm1300, %v1386, 0.0
        %1428 = vadd.xlane.f32.xlu0 %v1427
        %v1429 = vpop.xlane.xlu0 %1428
        %v1430 = vsel %vm1300, %v1388, 0.0
        %1431 = vadd.xlane.f32.xlu0 %v1430
        %v1432 = vpop.xlane.xlu0 %1431
        %v1433 = vsel %vm1300, %v1390, 0.0
        %1434 = vadd.xlane.f32.xlu0 %v1433
        %v1435 = vpop.xlane.xlu0 %1434
        %v1436 = vsel %vm1300, %v1392, 0.0
        %1437 = vadd.xlane.f32.xlu0 %v1436
        %v1438 = vpop.xlane.xlu0 %1437
        %v1439 = vsel %vm1300, %v1394, 0.0
        %1440 = vadd.xlane.f32.xlu0 %v1439
        %v1441 = vpop.xlane.xlu0 %1440
        %v1442 = vsel %vm1300, %v1396, 0.0
        %1443 = vadd.xlane.f32.xlu0 %v1442
        %v1444 = vpop.xlane.xlu0 %1443
        %v1445 = vlog2.pop %v1399
        %v1446 = vmul.f32 %v1445, 0.6931472
        %v1447 = vlog2.pop %v1402
        %v1448 = vmul.f32 %v1447, 0.6931472
        %v1449 = vlog2.pop %v1405
        %v1450 = vmul.f32 %v1449, 0.6931472
        %v1451 = vlog2.pop %v1408
        %v1452 = vmul.f32 %v1451, 0.6931472
        %v1453 = vlog2.pop %v1411
        %v1454 = vmul.f32 %v1453, 0.6931472
        %v1455 = vlog2.pop %v1414
        %v1456 = vmul.f32 %v1455, 0.6931472
        %v1457 = vlog2.pop %v1417
        %v1458 = vmul.f32 %v1457, 0.6931472
        %v1459 = vlog2.pop %v1420
        %v1460 = vmul.f32 %v1459, 0.6931472
        %v1461 = vlog2.pop %v1423
        %v1462 = vmul.f32 %v1461, 0.6931472
        %v1463 = vlog2.pop %v1426
        %v1464 = vmul.f32 %v1463, 0.6931472
        %v1465 = vlog2.pop %v1429
        %v1466 = vmul.f32 %v1465, 0.6931472
        %v1467 = vlog2.pop %v1432
        %v1468 = vmul.f32 %v1467, 0.6931472
        %v1469 = vlog2.pop %v1435
        %v1470 = vmul.f32 %v1469, 0.6931472
        %v1471 = vlog2.pop %v1438
        %v1472 = vmul.f32 %v1471, 0.6931472
        %v1473 = vlog2.pop %v1441
        %v1474 = vmul.f32 %v1473, 0.6931472
        %v1475 = vlog2.pop %v1444
        %v1476 = vmul.f32 %v1475, 0.6931472
        %v1477 = vsub.f32 %v1349, %v1446
        %v1478 = vsub.f32 %v1350, %v1448
        %v1479 = vsub.f32 %v1351, %v1450
        %v1480 = vsub.f32 %v1352, %v1452
        %v1481 = vsub.f32 %v1353, %v1454
        %v1482 = vsub.f32 %v1354, %v1456
        %v1483 = vsub.f32 %v1355, %v1458
        %v1484 = vsub.f32 %v1356, %v1460
        %v1485 = vsub.f32 %v1357, %v1462
        %v1486 = vsub.f32 %v1358, %v1464
        %v1487 = vsub.f32 %v1359, %v1466
        %v1488 = vsub.f32 %v1360, %v1468
        %v1489 = vsub.f32 %v1361, %v1470
        %v1490 = vsub.f32 %v1362, %v1472
        %v1491 = vsub.f32 %v1363, %v1474
        %v1492 = vsub.f32 %v1364, %v1476
        %1493 = vst.msk [vmem:[%s296] sm:$0xff] %vm1300, %v1477
        %1494 = vst.msk [vmem:[%s296 + $0x8] sm:$0xff] %vm1300, %v1478
        %1495 = vst.msk [vmem:[%s296 + $0x10] sm:$0xff] %vm1300, %v1479
        %1496 = vst.msk [vmem:[%s296 + $0x18] sm:$0xff] %vm1300, %v1480
        %1497 = vst.msk [vmem:[%s296 + $0x20] sm:$0xff] %vm1300, %v1481
        %1498 = vst.msk [vmem:[%s296 + $0x28] sm:$0xff] %vm1300, %v1482
        %1499 = vst.msk [vmem:[%s296 + $0x30] sm:$0xff] %vm1300, %v1483
        %1500 = vst.msk [vmem:[%s296 + $0x38] sm:$0xff] %vm1300, %v1484
        %1501 = vst.msk [vmem:[%s296 + $0x40] sm:$0xff] %vm1300, %v1485
        %1502 = vst.msk [vmem:[%s296 + $0x48] sm:$0xff] %vm1300, %v1486
        %1503 = vst.msk [vmem:[%s296 + $0x50] sm:$0xff] %vm1300, %v1487
        %1504 = vst.msk [vmem:[%s296 + $0x58] sm:$0xff] %vm1300, %v1488
        %1505 = vst.msk [vmem:[%s296 + $0x60] sm:$0xff] %vm1300, %v1489
        %1506 = vst.msk [vmem:[%s296 + $0x68] sm:$0xff] %vm1300, %v1490
        %1507 = vst.msk [vmem:[%s296 + $0x70] sm:$0xff] %vm1300, %v1491
        %1508 = vst.msk [vmem:[%s296 + $0x78] sm:$0xff] %vm1300, %v1492
      $region44: #{spgat_forward.7} parent=35 // pred_fallthru
        _
      %s1509 = smul.u32 16, %s19
      %p1510 = scmp.lt.s32.totalorder %s1509, 31
      %s1511 = scalar_select %p1510, %s1509, 31
      %s1512 = smul.addr %s1511, 8
      %s1513 = scalar_lea.vmem %s4, %s1512
      // Predicated region
      $region45: #{spgat_forward.7} parent=35 // pred_check
        %p1514 = pneg %p151
      $region46: #{spgat_forward.7} parent=35 // pred_check_branch
        %1516 = sbr.rel (%p1514) target = $region48
      $region47: #{spgat_forward.7} parent=35 // pred_region
        %s1517 = smul.u32 16, %s19
      $region48: #{spgat_forward.7} parent=35 // pred_fallthru
        _
    $region36: #{spgat_forward.7} parent=5 // pred_fallthru
      _
    %p1518 = scmp.le.s32.totalorder 2, %s10
    // Predicated region
    $region49: #{spgat_forward.7} parent=5 // pred_check
      %p1519 = pneg %p1518
    $region50: #{spgat_forward.7} parent=5 // pred_check_branch
      %1521 = sbr.rel (%p1519) target = $region52
    $region51: #{spgat_forward.7} parent=5 // pred_region
      %s1522 = ssub.s32 %s10, 2
      // Predicated region
      $region53: #{spgat_forward.7} parent=51 // pred_check
        %p1523 = pneg %p157
      $region54: #{spgat_forward.7} parent=51 // pred_check_branch
        %1525 = sbr.rel (%p1523) target = $region56
      $region55: #{spgat_forward.7} parent=51 // pred_region
        %s1526 = smul.u32 16, %s21
        %p1527 = scmp.lt.s32.totalorder %s1526, 31
        %s1528 = scalar_select %p1527, %s1526, 31
        %s1529 = smul.addr %s1528, 8
        %s1530 = scalar_lea.vmem %s4, %s1529
      $region56: #{spgat_forward.7} parent=51 // pred_fallthru
        _
    $region52: #{spgat_forward.7} parent=5 // pred_fallthru
      _
  $region6: #{spgat_forward.7} parent=0 // loop_footer
    %s14 = sadd.s32 1, %s10
  $region7: #{spgat_forward.7} parent=0 // loop_footer_branch
    %9 = sbr.rel target = $region3
  $region8: #{spgat_forward.7} parent=0 // loop_exit
    _

// kernel: spgat_forward.5
$region0: #{spgat_forward.5}
  #allocation0 [shape = 'u32[]', space=smem, size = 0x4, offset = 0x4, fixed_abs, tag = 'smem constant byte address 0x4 - core index']
  #allocation1 [shape = 'u32[144,128]{1,0:T(1,128)}', space=vmem, size = 0x12000, scoped, tag = 'internal scratch']
  #allocation2 [shape = 'f32[4,128,17]{2,1,0:T(8,128)}', space=vmem, size = 0x40000, scoped, tag = 'scratch operand']
  %s0 = inlined_call_operand.vmem [shape: f32[256,12], index: 0, kind: input, shape index: {}]
  %s1 = inlined_call_operand.vmem [shape: f32[12,256], index: 1, kind: input, shape index: {}]
  %s2 = inlined_call_operand.vmem [shape: f32[256,68], index: 2, kind: input, shape index: {}]
  %s3 = inlined_call_operand.vmem [shape: s8[256,256], index: 3, kind: input, shape index: {}]
  %s4 = inlined_call_operand.vmem [shape: f32[256,64], index: 4, kind: output, shape index: {}]
  %s5 = sld [smem:[#allocation0]]
  $region57: #{spgat_forward.5} parent=0
    _
  %s7 = ssub.s32 1, %s5
  %s8 = scalar_select 0, %s7, %s5
  loop: start=0, step=1, limit=4
  $region2: #{spgat_forward.5} parent=0 // loop_pre_header
    _
  $region3: #{spgat_forward.5} parent=0 // loop_header
    %s10 = sphi 0, %s14
    %p11 = scmp.ge.s32.totalorder %s10, 4
    %s17 = sphi 0, %s29
    %s18 = sphi 0, %s25
    %s19 = sphi 0, %s17
    %s20 = sphi 0, %s18
    %s21 = sphi 0, %s19
    %s22 = sphi 0, %s20
    %s32 = sphi 0, %s34
    %s35 = sphi 0, %s32
    %s36 = sphi 0, %s35
    %s52 = sphi 0, %s36
    %s58 = sphi 0, %s60
    %s61 = sphi 0, %s58
    %s62 = sphi 0, %s61
    %s78 = sphi 0, %s62
    %s84 = sphi 0, %s86
    %s87 = sphi 0, %s84
    %s88 = sphi 0, %s87
    %s104 = sphi 0, %s88
    %s112 = sphi 0, %s114
    %s115 = sphi 0, %s112
    %s116 = sphi 0, %s115
    %s132 = sphi 0, %s116
    %s138 = sphi 0, %s140
    %s141 = sphi 0, %s138
    %s142 = sphi 0, %s141
    %s158 = sphi 0, %s142
  $region4: #{spgat_forward.5} parent=0 // loop_header_branch
    %13 = sbr.rel (%p11) target = $region8
  $region5: #{spgat_forward.5} parent=0 // loop_body
    %s15 = ssub.s32 %s10, 1
    %s16 = ssub.s32 %s10, 2
    %s23 = sadd.s32 1, %s18
    %p24 = scmp.ge.s32.totalorder %s23, 1
    %s25 = scalar_select %p24, 0, %s23
    %s26 = sadd.s32 1, %s17
    %s27 = scalar_select %p24, %s26, %s17
    %p28 = scmp.ge.s32.totalorder %s27, 2
    %s29 = scalar_select %p28, 0, %s27
    %s30 = ssub.s32 %s17, %s29
    %p31 = scmp.eq.s32.totalorder %s30, 0
    %s33 = sadd.s32 %s32, 1
    %s34 = scalar_select %p31, %s32, %s33
    %p37 = pneg %p31
    %p38 = scmp.eq.s32.totalorder %s10, 1
    %p39 = por %p37, %p38
    %p40 = scmp.ne.s32.totalorder %s32, %s35
    %p41 = scmp.eq.s32.totalorder %s10, 0
    %p42 = por %p40, %p41
    %p43 = scmp.ne.s32.totalorder %s32, %s35
    %p44 = scmp.eq.s32.totalorder %s15, 1
    %p45 = por %p43, %p44
    %p46 = scmp.ne.s32.totalorder %s35, %s36
    %p47 = scmp.eq.s32.totalorder %s15, 0
    %p48 = por %p46, %p47
    %p49 = scmp.ne.s32.totalorder %s35, %s36
    %p50 = scmp.eq.s32.totalorder %s16, 1
    %p51 = por %p49, %p50
    %p53 = scmp.ne.s32.totalorder %s36, %s52
    %p54 = scmp.eq.s32.totalorder %s16, 0
    %p55 = por %p53, %p54
    %s56 = ssub.s32 %s18, %s25
    %p57 = scmp.eq.s32.totalorder %s56, 0
    %s59 = sadd.s32 %s58, 1
    %s60 = scalar_select %p57, %s58, %s59
    %p63 = pneg %p57
    %p64 = scmp.eq.s32.totalorder %s10, 1
    %p65 = por %p63, %p64
    %p66 = scmp.ne.s32.totalorder %s58, %s61
    %p67 = scmp.eq.s32.totalorder %s10, 0
    %p68 = por %p66, %p67
    %p69 = scmp.ne.s32.totalorder %s58, %s61
    %p70 = scmp.eq.s32.totalorder %s15, 1
    %p71 = por %p69, %p70
    %p72 = scmp.ne.s32.totalorder %s61, %s62
    %p73 = scmp.eq.s32.totalorder %s15, 0
    %p74 = por %p72, %p73
    %p75 = scmp.ne.s32.totalorder %s61, %s62
    %p76 = scmp.eq.s32.totalorder %s16, 1
    %p77 = por %p75, %p76
    %p79 = scmp.ne.s32.totalorder %s62, %s78
    %p80 = scmp.eq.s32.totalorder %s16, 0
    %p81 = por %p79, %p80
    %s82 = ssub.s32 %s18, %s25
    %p83 = scmp.eq.s32.totalorder %s82, 0
    %s85 = sadd.s32 %s84, 1
    %s86 = scalar_select %p83, %s84, %s85
    %p89 = pneg %p83
    %p90 = scmp.eq.s32.totalorder %s10, 1
    %p91 = por %p89, %p90
    %p92 = scmp.ne.s32.totalorder %s84, %s87
    %p93 = scmp.eq.s32.totalorder %s10, 0
    %p94 = por %p92, %p93
    %p95 = scmp.ne.s32.totalorder %s84, %s87
    %p96 = scmp.eq.s32.totalorder %s15, 1
    %p97 = por %p95, %p96
    %p98 = scmp.ne.s32.totalorder %s87, %s88
    %p99 = scmp.eq.s32.totalorder %s15, 0
    %p100 = por %p98, %p99
    %p101 = scmp.ne.s32.totalorder %s87, %s88
    %p102 = scmp.eq.s32.totalorder %s16, 1
    %p103 = por %p101, %p102
    %p105 = scmp.ne.s32.totalorder %s88, %s104
    %p106 = scmp.eq.s32.totalorder %s16, 0
    %p107 = por %p105, %p106
    %s108 = ssub.s32 %s17, %s29
    %s109 = ssub.s32 %s18, %s25
    %s110 = sor.u32 %s108, %s109
    %p111 = scmp.eq.s32.totalorder %s110, 0
    %s113 = sadd.s32 %s112, 1
    %s114 = scalar_select %p111, %s112, %s113
    %p117 = pneg %p111
    %p118 = scmp.eq.s32.totalorder %s10, 1
    %p119 = por %p117, %p118
    %p120 = scmp.ne.s32.totalorder %s112, %s115
    %p121 = scmp.eq.s32.totalorder %s10, 0
    %p122 = por %p120, %p121
    %p123 = scmp.ne.s32.totalorder %s112, %s115
    %p124 = scmp.eq.s32.totalorder %s15, 1
    %p125 = por %p123, %p124
    %p126 = scmp.ne.s32.totalorder %s115, %s116
    %p127 = scmp.eq.s32.totalorder %s15, 0
    %p128 = por %p126, %p127
    %p129 = scmp.ne.s32.totalorder %s115, %s116
    %p130 = scmp.eq.s32.totalorder %s16, 1
    %p131 = por %p129, %p130
    %p133 = scmp.ne.s32.totalorder %s116, %s132
    %p134 = scmp.eq.s32.totalorder %s16, 0
    %p135 = por %p133, %p134
    %s136 = ssub.s32 %s17, %s29
    %p137 = scmp.eq.s32.totalorder %s136, 0
    %s139 = sadd.s32 %s138, 1
    %s140 = scalar_select %p137, %s138, %s139
    %p143 = pneg %p137
    %p144 = scmp.eq.s32.totalorder %s10, 1
    %p145 = por %p143, %p144
    %p146 = scmp.ne.s32.totalorder %s138, %s141
    %p147 = scmp.eq.s32.totalorder %s10, 0
    %p148 = por %p146, %p147
    %p149 = scmp.ne.s32.totalorder %s138, %s141
    %p150 = scmp.eq.s32.totalorder %s15, 1
    %p151 = por %p149, %p150
    %p152 = scmp.ne.s32.totalorder %s141, %s142
    %p153 = scmp.eq.s32.totalorder %s15, 0
    %p154 = por %p152, %p153
    %p155 = scmp.ne.s32.totalorder %s141, %s142
    %p156 = scmp.eq.s32.totalorder %s16, 1
    %p157 = por %p155, %p156
    %p159 = scmp.ne.s32.totalorder %s142, %s158
    %p160 = scmp.eq.s32.totalorder %s16, 0
    %p161 = por %p159, %p160
    %p162 = scmp.le.s32.totalorder 1, %s10
    %p163 = scmp.lt.s32.totalorder %s10, 3
    %p164 = pnand %p162, %p163
    %p165 = pneg %p164
    // Predicated region
    $region9: #{spgat_forward.5} parent=5 // pred_check
      _
    $region10: #{spgat_forward.5} parent=5 // pred_check_branch
      %167 = sbr.rel (%p164) target = $region12
    $region11: #{spgat_forward.5} parent=5 // pred_region
      %s168 = ssub.s32 %s10, 1
      // Predicated region
      $region13: #{spgat_forward.5} parent=11 // pred_check
        %p169 = pneg %p74
      $region14: #{spgat_forward.5} parent=11 // pred_check_branch
        %171 = sbr.rel (%p169) target = $region16
      $region15: #{spgat_forward.5} parent=11 // pred_region
        %s172 = smul.u32 2, %s20
        %p173 = scmp.lt.s32.totalorder %s172, 1
        %s174 = scalar_select %p173, %s172, 1
        %s175 = smul.addr %s174, 8
        %s176 = scalar_lea.vmem %s1, %s175
        %s177 = smul.u32 2, %s20
      $region16: #{spgat_forward.5} parent=11 // pred_fallthru
        _
      // Predicated region
      $region17: #{spgat_forward.5} parent=11 // pred_check
        %p178 = pneg %p100
      $region18: #{spgat_forward.5} parent=11 // pred_check_branch
        %180 = sbr.rel (%p178) target = $region20
      $region19: #{spgat_forward.5} parent=11 // pred_region
        %s181 = smul.u32 32, %s20
        %p182 = scmp.lt.s32.totalorder %s181, 31
        %s183 = scalar_select %p182, %s181, 31
        %s184 = smul.addr %s183, 8
        %s185 = scalar_lea.vmem %s2, %s184
        %s186 = smul.u32 32, %s20
      $region20: #{spgat_forward.5} parent=11 // pred_fallthru
        _
    $region12: #{spgat_forward.5} parent=5 // pred_fallthru
      _
    %p187 = scmp.lt.s32.totalorder %s10, 2
    // Predicated region
    $region21: #{spgat_forward.5} parent=5 // pred_check
      %p188 = pneg %p187
    $region22: #{spgat_forward.5} parent=5 // pred_check_branch
      %190 = sbr.rel (%p188) target = $region24
    $region23: #{spgat_forward.5} parent=5 // pred_region
      // Predicated region
      $region25: #{spgat_forward.5} parent=23 // pred_check
        %p191 = pneg %p42
      $region26: #{spgat_forward.5} parent=23 // pred_check_branch
        %193 = sbr.rel (%p191) target = $region28
      $region27: #{spgat_forward.5} parent=23 // pred_region
        %s194 = smul.u32 16, %s17
        %p195 = scmp.lt.s32.totalorder %s194, 31
        %s196 = scalar_select %p195, %s194, 31
        %s197 = smul.addr %s196, 8
        %s198 = scalar_lea.vmem %s0, %s197
        %s199 = smul.u32 16, %s17
      $region28: #{spgat_forward.5} parent=23 // pred_fallthru
        _
      // Predicated region
      $region29: #{spgat_forward.5} parent=23 // pred_check
        %p200 = pneg %p122
      $region30: #{spgat_forward.5} parent=23 // pred_check_branch
        %202 = sbr.rel (%p200) target = $region32
      $region31: #{spgat_forward.5} parent=23 // pred_region
        %s203 = smul.u32 4, %s17
        %s204 = smul.u32 2, %s18
        %p205 = scmp.lt.s32.totalorder %s203, 7
        %s206 = scalar_select %p205, %s203, 7
        %p207 = scmp.lt.s32.totalorder %s204, 1
        %s208 = scalar_select %p207, %s204, 1
        %s209 = smul.addr %s206, 2
        %s210 = sadd.s32 %s208, %s209
        %s211 = smul.addr %s210, 8
        %s212 = scalar_lea.vmem %s3, %s211
        %s213 = smul.u32 4, %s17
        %s214 = smul.u32 2, %s18
      $region32: #{spgat_forward.5} parent=23 // pred_fallthru
        _
    $region24: #{spgat_forward.5} parent=5 // pred_fallthru
      _
    %p215 = scmp.le.s32.totalorder 1, %s10
    %p216 = scmp.lt.s32.totalorder %s10, 3
    %p217 = pnand %p215, %p216
    %p218 = pneg %p217
    // Predicated region
    $region33: #{spgat_forward.5} parent=5 // pred_check
      _
    $region34: #{spgat_forward.5} parent=5 // pred_check_branch
      %220 = sbr.rel (%p217) target = $region36
    $region35: #{spgat_forward.5} parent=5 // pred_region
      %s221 = ssub.s32 %s10, 1
      %s222 = smul.u32 16, %s19
      %p223 = scmp.lt.s32.totalorder %s222, 31
      %s224 = scalar_select %p223, %s222, 31
      %s225 = smul.addr %s224, 8
      %s226 = scalar_lea.vmem %s0, %s225
      %p227 = pneg %p48
      %p228 = pneg %p45
      %s229 = smul.u32 2, %s20
      %p230 = scmp.lt.s32.totalorder %s229, 1
      %s231 = scalar_select %p230, %s229, 1
      %s232 = smul.addr %s231, 8
      %s233 = scalar_lea.vmem %s1, %s232
      %p234 = pneg %p74
      %p235 = pneg %p71
      %s236 = smul.u32 32, %s20
      %p237 = scmp.lt.s32.totalorder %s236, 31
      %s238 = scalar_select %p237, %s236, 31
      %s239 = smul.addr %s238, 8
      %s240 = scalar_lea.vmem %s2, %s239
      %p241 = pneg %p100
      %p242 = pneg %p97
      %s243 = smul.u32 4, %s19
      %s244 = smul.u32 2, %s20
      %p245 = scmp.lt.s32.totalorder %s243, 7
      %s246 = scalar_select %p245, %s243, 7
      %p247 = scmp.lt.s32.totalorder %s244, 1
      %s248 = scalar_select %p247, %s244, 1
      %s249 = smul.addr %s246, 2
      %s250 = sadd.s32 %s248, %s249
      %s251 = smul.addr %s250, 8
      %s252 = scalar_lea.vmem %s3, %s251
      %p253 = pneg %p128
      %p254 = pneg %p125
      %p255 = pneg %p154
      %p256 = pneg %p151
      %s257 = smul.u32 16, %s19
      %p258 = scmp.lt.s32.totalorder %s257, 31
      %s259 = scalar_select %p258, %s257, 31
      %s260 = smul.addr %s259, 8
      %s261 = scalar_lea.vmem %s4, %s260
      %s262 = smul.u32 16, %s19
      %p263 = scmp.lt.s32.totalorder %s262, 31
      %s264 = scalar_select %p263, %s262, 31
      %s265 = smul.addr %s264, 8
      %s266 = scalar_lea.vmem %s0, %s265
      %s267 = smul.u32 16, %s19
      %s268 = smul.u32 2, %s20
      %p269 = scmp.lt.s32.totalorder %s268, 1
      %s270 = scalar_select %p269, %s268, 1
      %s271 = smul.addr %s270, 8
      %s272 = scalar_lea.vmem %s1, %s271
      %s273 = smul.u32 2, %s20
      %s274 = smul.u32 32, %s20
      %p275 = scmp.lt.s32.totalorder %s274, 31
      %s276 = scalar_select %p275, %s274, 31
      %s277 = smul.addr %s276, 8
      %s278 = scalar_lea.vmem %s2, %s277
      %s279 = smul.u32 32, %s20
      %s280 = smul.u32 4, %s19
      %s281 = smul.u32 2, %s20
      %p282 = scmp.lt.s32.totalorder %s280, 7
      %s283 = scalar_select %p282, %s280, 7
      %p284 = scmp.lt.s32.totalorder %s281, 1
      %s285 = scalar_select %p284, %s281, 1
      %s286 = smul.addr %s283, 2
      %s287 = sadd.s32 %s285, %s286
      %s288 = smul.addr %s287, 8
      %s289 = scalar_lea.vmem %s3, %s288
      %s290 = smul.u32 4, %s19
      %s291 = smul.u32 2, %s20
      %s292 = smul.u32 16, %s19
      %p293 = scmp.lt.s32.totalorder %s292, 31
      %s294 = scalar_select %p293, %s292, 31
      %s295 = smul.addr %s294, 8
      %s296 = scalar_lea.vmem %s4, %s295
      %s297 = smul.u32 16, %s19
      %p298 = scmp.eq.s32.totalorder %s20, 0
      // Predicated region
      $region37: #{spgat_forward.5} parent=35 // pred_check
        %p299 = pneg %p298
      $region38: #{spgat_forward.5} parent=35 // pred_check_branch
        %301 = sbr.rel (%p299) target = $region40
      $region39: #{spgat_forward.5} parent=35 // pred_region
        %vm302 = vcmask 138240
        %303 = vst.msk [vmem:[#allocation2] sm:$0xff] %vm302, 0.0
        %304 = vst.msk [vmem:[#allocation2 + $0x8] sm:$0xff] %vm302, 0.0
        %305 = vst.msk [vmem:[#allocation2 + $0x10] sm:$0xff] %vm302, 0.0
        %306 = vst.msk [vmem:[#allocation2 + $0x18] sm:$0xff] %vm302, 0.0
        %307 = vst.msk [vmem:[#allocation2 + $0x20] sm:$0xff] %vm302, 0.0
        %308 = vst.msk [vmem:[#allocation2 + $0x28] sm:$0xff] %vm302, 0.0
        %309 = vst.msk [vmem:[#allocation2 + $0x30] sm:$0xff] %vm302, 0.0
        %310 = vst.msk [vmem:[#allocation2 + $0x38] sm:$0xff] %vm302, 0.0
        %311 = vst.msk [vmem:[#allocation2 + $0x40] sm:$0xff] %vm302, 0.0
        %312 = vst.msk [vmem:[#allocation2 + $0x48] sm:$0xff] %vm302, 0.0
        %313 = vst.msk [vmem:[#allocation2 + $0x50] sm:$0xff] %vm302, 0.0
        %314 = vst.msk [vmem:[#allocation2 + $0x58] sm:$0xff] %vm302, 0.0
        %315 = vst.msk [vmem:[#allocation2 + $0x60] sm:$0xff] %vm302, 0.0
        %316 = vst.msk [vmem:[#allocation2 + $0x68] sm:$0xff] %vm302, 0.0
        %317 = vst.msk [vmem:[#allocation2 + $0x70] sm:$0xff] %vm302, 0.0
        %318 = vst.msk [vmem:[#allocation2 + $0x78] sm:$0xff] %vm302, 0.0
        %319 = vst.msk [vmem:[#allocation2 + $0x80] sm:$0xff] %vm302, 0.0
        %320 = vst.msk [vmem:[#allocation2 + $0x88] sm:$0xff] %vm302, 0.0
        %321 = vst.msk [vmem:[#allocation2 + $0x90] sm:$0xff] %vm302, 0.0
        %322 = vst.msk [vmem:[#allocation2 + $0x98] sm:$0xff] %vm302, 0.0
        %323 = vst.msk [vmem:[#allocation2 + $0xa0] sm:$0xff] %vm302, 0.0
        %324 = vst.msk [vmem:[#allocation2 + $0xa8] sm:$0xff] %vm302, 0.0
        %325 = vst.msk [vmem:[#allocation2 + $0xb0] sm:$0xff] %vm302, 0.0
        %326 = vst.msk [vmem:[#allocation2 + $0xb8] sm:$0xff] %vm302, 0.0
        %327 = vst.msk [vmem:[#allocation2 + $0xc0] sm:$0xff] %vm302, 0.0
        %328 = vst.msk [vmem:[#allocation2 + $0xc8] sm:$0xff] %vm302, 0.0
        %329 = vst.msk [vmem:[#allocation2 + $0xd0] sm:$0xff] %vm302, 0.0
        %330 = vst.msk [vmem:[#allocation2 + $0xd8] sm:$0xff] %vm302, 0.0
        %331 = vst.msk [vmem:[#allocation2 + $0xe0] sm:$0xff] %vm302, 0.0
        %332 = vst.msk [vmem:[#allocation2 + $0xe8] sm:$0xff] %vm302, 0.0
        %333 = vst.msk [vmem:[#allocation2 + $0xf0] sm:$0xff] %vm302, 0.0
        %334 = vst.msk [vmem:[#allocation2 + $0xf8] sm:$0xff] %vm302, 0.0
        %335 = vst.msk [vmem:[#allocation2 + $0x100] sm:$0xff] %vm302, 0.0
        %336 = vst.msk [vmem:[#allocation2 + $0x108] sm:$0xff] %vm302, 0.0
        %337 = vst.msk [vmem:[#allocation2 + $0x110] sm:$0xff] %vm302, 0.0
        %338 = vst.msk [vmem:[#allocation2 + $0x118] sm:$0xff] %vm302, 0.0
        %339 = vst.msk [vmem:[#allocation2 + $0x120] sm:$0xff] %vm302, 0.0
        %340 = vst.msk [vmem:[#allocation2 + $0x128] sm:$0xff] %vm302, 0.0
        %341 = vst.msk [vmem:[#allocation2 + $0x130] sm:$0xff] %vm302, 0.0
        %342 = vst.msk [vmem:[#allocation2 + $0x138] sm:$0xff] %vm302, 0.0
        %343 = vst.msk [vmem:[#allocation2 + $0x140] sm:$0xff] %vm302, 0.0
        %344 = vst.msk [vmem:[#allocation2 + $0x148] sm:$0xff] %vm302, 0.0
        %345 = vst.msk [vmem:[#allocation2 + $0x150] sm:$0xff] %vm302, 0.0
        %346 = vst.msk [vmem:[#allocation2 + $0x158] sm:$0xff] %vm302, 0.0
        %347 = vst.msk [vmem:[#allocation2 + $0x160] sm:$0xff] %vm302, 0.0
        %348 = vst.msk [vmem:[#allocation2 + $0x168] sm:$0xff] %vm302, 0.0
        %349 = vst.msk [vmem:[#allocation2 + $0x170] sm:$0xff] %vm302, 0.0
        %350 = vst.msk [vmem:[#allocation2 + $0x178] sm:$0xff] %vm302, 0.0
        %351 = vst.msk [vmem:[#allocation2 + $0x180] sm:$0xff] %vm302, 0.0
        %352 = vst.msk [vmem:[#allocation2 + $0x188] sm:$0xff] %vm302, 0.0
        %353 = vst.msk [vmem:[#allocation2 + $0x190] sm:$0xff] %vm302, 0.0
        %354 = vst.msk [vmem:[#allocation2 + $0x198] sm:$0xff] %vm302, 0.0
        %355 = vst.msk [vmem:[#allocation2 + $0x1a0] sm:$0xff] %vm302, 0.0
        %356 = vst.msk [vmem:[#allocation2 + $0x1a8] sm:$0xff] %vm302, 0.0
        %357 = vst.msk [vmem:[#allocation2 + $0x1b0] sm:$0xff] %vm302, 0.0
        %358 = vst.msk [vmem:[#allocation2 + $0x1b8] sm:$0xff] %vm302, 0.0
        %359 = vst.msk [vmem:[#allocation2 + $0x1c0] sm:$0xff] %vm302, 0.0
        %360 = vst.msk [vmem:[#allocation2 + $0x1c8] sm:$0xff] %vm302, 0.0
        %361 = vst.msk [vmem:[#allocation2 + $0x1d0] sm:$0xff] %vm302, 0.0
        %362 = vst.msk [vmem:[#allocation2 + $0x1d8] sm:$0xff] %vm302, 0.0
        %363 = vst.msk [vmem:[#allocation2 + $0x1e0] sm:$0xff] %vm302, 0.0
        %364 = vst.msk [vmem:[#allocation2 + $0x1e8] sm:$0xff] %vm302, 0.0
        %365 = vst.msk [vmem:[#allocation2 + $0x1f0] sm:$0xff] %vm302, 0.0
        %366 = vst.msk [vmem:[#allocation2 + $0x1f8] sm:$0xff] %vm302, 0.0
      $region40: #{spgat_forward.5} parent=35 // pred_fallthru
        _
      %v367 = vld [vmem:[%s266] sm:$0xff]
      %v368 = vld [vmem:[%s266 + $0x8] sm:$0xff]
      %v369 = vld [vmem:[%s266 + $0x10] sm:$0xff]
      %v370 = vld [vmem:[%s266 + $0x18] sm:$0xff]
      %v371 = vld [vmem:[%s266 + $0x20] sm:$0xff]
      %v372 = vld [vmem:[%s266 + $0x28] sm:$0xff]
      %v373 = vld [vmem:[%s266 + $0x30] sm:$0xff]
      %v374 = vld [vmem:[%s266 + $0x38] sm:$0xff]
      %v375 = vld [vmem:[%s266 + $0x40] sm:$0xff]
      %v376 = vld [vmem:[%s266 + $0x48] sm:$0xff]
      %v377 = vld [vmem:[%s266 + $0x50] sm:$0xff]
      %v378 = vld [vmem:[%s266 + $0x58] sm:$0xff]
      %v379 = vld [vmem:[%s266 + $0x60] sm:$0xff]
      %v380 = vld [vmem:[%s266 + $0x68] sm:$0xff]
      %v381 = vld [vmem:[%s266 + $0x70] sm:$0xff]
      %v382 = vld [vmem:[%s266 + $0x78] sm:$0xff]
      %v383 = vld [vmem:[%s272] sm:$0xff]
      %v384 = vld [vmem:[%s272 + $0x8] sm:$0xff]
      %v385 = vld [vmem:[%s272 + $0x10] sm:$0xf]
      %v386 = vld [vmem:[%s272 + $0x18] sm:$0xf]
      %v387 = vld [vmem:[%s278] sm:$0xff]
      %v388 = vld [vmem:[%s278 + $0x8] sm:$0xff]
      %v389 = vld [vmem:[%s278 + $0x10] sm:$0xff]
      %v390 = vld [vmem:[%s278 + $0x18] sm:$0xff]
      %v391 = vld [vmem:[%s278 + $0x20] sm:$0xff]
      %v392 = vld [vmem:[%s278 + $0x28] sm:$0xff]
      %v393 = vld [vmem:[%s278 + $0x30] sm:$0xff]
      %v394 = vld [vmem:[%s278 + $0x38] sm:$0xff]
      %v395 = vld [vmem:[%s278 + $0x40] sm:$0xff]
      %v396 = vld [vmem:[%s278 + $0x48] sm:$0xff]
      %v397 = vld [vmem:[%s278 + $0x50] sm:$0xff]
      %v398 = vld [vmem:[%s278 + $0x58] sm:$0xff]
      %v399 = vld [vmem:[%s278 + $0x60] sm:$0xff]
      %v400 = vld [vmem:[%s278 + $0x68] sm:$0xff]
      %v401 = vld [vmem:[%s278 + $0x70] sm:$0xff]
      %v402 = vld [vmem:[%s278 + $0x78] sm:$0xff]
      %v403 = vld [vmem:[%s278 + $0x80] sm:$0xff]
      %v404 = vld [vmem:[%s278 + $0x88] sm:$0xff]
      %v405 = vld [vmem:[%s278 + $0x90] sm:$0xff]
      %v406 = vld [vmem:[%s278 + $0x98] sm:$0xff]
      %v407 = vld [vmem:[%s278 + $0xa0] sm:$0xff]
      %v408 = vld [vmem:[%s278 + $0xa8] sm:$0xff]
      %v409 = vld [vmem:[%s278 + $0xb0] sm:$0xff]
      %v410 = vld [vmem:[%s278 + $0xb8] sm:$0xff]
      %v411 = vld [vmem:[%s278 + $0xc0] sm:$0xff]
      %v412 = vld [vmem:[%s278 + $0xc8] sm:$0xff]
      %v413 = vld [vmem:[%s278 + $0xd0] sm:$0xff]
      %v414 = vld [vmem:[%s278 + $0xd8] sm:$0xff]
      %v415 = vld [vmem:[%s278 + $0xe0] sm:$0xff]
      %v416 = vld [vmem:[%s278 + $0xe8] sm:$0xff]
      %v417 = vld [vmem:[%s278 + $0xf0] sm:$0xff]
      %v418 = vld [vmem:[%s278 + $0xf8] sm:$0xff]
      %v419 = vld [vmem:[%s289] sm:$0xff]
      %v420 = vld [vmem:[%s289 + $0x8] sm:$0xff]
      %v421 = vld [vmem:[%s289 + $0x10] sm:$0xff]
      %v422 = vld [vmem:[%s289 + $0x18] sm:$0xff]
      %v423 = vld [vmem:[%s289 + $0x20] sm:$0xff]
      %v424 = vld [vmem:[%s289 + $0x28] sm:$0xff]
      %v425 = vld [vmem:[%s289 + $0x30] sm:$0xff]
      %v426 = vld [vmem:[%s289 + $0x38] sm:$0xff]
      %v427 = vunpack.c.0.s8 %v419
      %v428 = vunpack.c.0.s8 %v420
      %v429 = vunpack.c.1.s8 %v419
      %v430 = vunpack.c.1.s8 %v420
      %v431 = vunpack.c.2.s8 %v419
      %v432 = vunpack.c.2.s8 %v420
      %v433 = vunpack.c.3.s8 %v419
      %v434 = vunpack.c.3.s8 %v420
      %v435 = vunpack.c.0.s8 %v421
      %v436 = vunpack.c.0.s8 %v422
      %v437 = vunpack.c.1.s8 %v421
      %v438 = vunpack.c.1.s8 %v422
      %v439 = vunpack.c.2.s8 %v421
      %v440 = vunpack.c.2.s8 %v422
      %v441 = vunpack.c.3.s8 %v421
      %v442 = vunpack.c.3.s8 %v422
      %v443 = vunpack.c.0.s8 %v423
      %v444 = vunpack.c.0.s8 %v424
      %v445 = vunpack.c.1.s8 %v423
      %v446 = vunpack.c.1.s8 %v424
      %v447 = vunpack.c.2.s8 %v423
      %v448 = vunpack.c.2.s8 %v424
      %v449 = vunpack.c.3.s8 %v423
      %v450 = vunpack.c.3.s8 %v424
      %v451 = vunpack.c.0.s8 %v425
      %v452 = vunpack.c.0.s8 %v426
      %v453 = vunpack.c.1.s8 %v425
      %v454 = vunpack.c.1.s8 %v426
      %v455 = vunpack.c.2.s8 %v425
      %v456 = vunpack.c.2.s8 %v426
      %v457 = vunpack.c.3.s8 %v425
      %v458 = vunpack.c.3.s8 %v426
      %v459 = vcvt.s32.f32 %v427
      %v460 = vcvt.s32.f32 %v428
      %v461 = vcvt.s32.f32 %v429
      %v462 = vcvt.s32.f32 %v430
      %v463 = vcvt.s32.f32 %v431
      %v464 = vcvt.s32.f32 %v432
      %v465 = vcvt.s32.f32 %v433
      %v466 = vcvt.s32.f32 %v434
      %v467 = vcvt.s32.f32 %v435
      %v468 = vcvt.s32.f32 %v436
      %v469 = vcvt.s32.f32 %v437
      %v470 = vcvt.s32.f32 %v438
      %v471 = vcvt.s32.f32 %v439
      %v472 = vcvt.s32.f32 %v440
      %v473 = vcvt.s32.f32 %v441
      %v474 = vcvt.s32.f32 %v442
      %v475 = vcvt.s32.f32 %v443
      %v476 = vcvt.s32.f32 %v444
      %v477 = vcvt.s32.f32 %v445
      %v478 = vcvt.s32.f32 %v446
      %v479 = vcvt.s32.f32 %v447
      %v480 = vcvt.s32.f32 %v448
      %v481 = vcvt.s32.f32 %v449
      %v482 = vcvt.s32.f32 %v450
      %v483 = vcvt.s32.f32 %v451
      %v484 = vcvt.s32.f32 %v452
      %v485 = vcvt.s32.f32 %v453
      %v486 = vcvt.s32.f32 %v454
      %v487 = vcvt.s32.f32 %v455
      %v488 = vcvt.s32.f32 %v456
      %v489 = vcvt.s32.f32 %v457
      %v490 = vcvt.s32.f32 %v458
      %492 = vset.pattern.permute.xlu0 0
      %493 = vperm.xlu0 %492, %v367
      %v494 = vpop.permute.xlu0 %493
      %497 = vset.pattern.permute.xlu0 0
      %498 = vperm.xlu0 %497, %v368
      %v499 = vpop.permute.xlu0 %498
      %502 = vset.pattern.permute.xlu0 0
      %503 = vperm.xlu0 %502, %v369
      %v504 = vpop.permute.xlu0 %503
      %507 = vset.pattern.permute.xlu0 0
      %508 = vperm.xlu0 %507, %v370
      %v509 = vpop.permute.xlu0 %508
      %512 = vset.pattern.permute.xlu0 0
      %513 = vperm.xlu0 %512, %v371
      %v514 = vpop.permute.xlu0 %513
      %517 = vset.pattern.permute.xlu0 0
      %518 = vperm.xlu0 %517, %v372
      %v519 = vpop.permute.xlu0 %518
      %522 = vset.pattern.permute.xlu0 0
      %523 = vperm.xlu0 %522, %v373
      %v524 = vpop.permute.xlu0 %523
      %527 = vset.pattern.permute.xlu0 0
      %528 = vperm.xlu0 %527, %v374
      %v529 = vpop.permute.xlu0 %528
      %532 = vset.pattern.permute.xlu0 0
      %533 = vperm.xlu0 %532, %v375
      %v534 = vpop.permute.xlu0 %533
      %537 = vset.pattern.permute.xlu0 0
      %538 = vperm.xlu0 %537, %v376
      %v539 = vpop.permute.xlu0 %538
      %542 = vset.pattern.permute.xlu0 0
      %543 = vperm.xlu0 %542, %v377
      %v544 = vpop.permute.xlu0 %543
      %547 = vset.pattern.permute.xlu0 0
      %548 = vperm.xlu0 %547, %v378
      %v549 = vpop.permute.xlu0 %548
      %552 = vset.pattern.permute.xlu0 0
      %553 = vperm.xlu0 %552, %v379
      %v554 = vpop.permute.xlu0 %553
      %557 = vset.pattern.permute.xlu0 0
      %558 = vperm.xlu0 %557, %v380
      %v559 = vpop.permute.xlu0 %558
      %562 = vset.pattern.permute.xlu0 0
      %563 = vperm.xlu0 %562, %v381
      %v564 = vpop.permute.xlu0 %563
      %567 = vset.pattern.permute.xlu0 0
      %568 = vperm.xlu0 %567, %v382
      %v569 = vpop.permute.xlu0 %568
      %v571 = vlaneseq
      %v572 = vshrl.u32 %v571, 7
      %v573 = vsub.s32 0, %v572
      %v574 = vrot.slane %v383, %v573
      %v575 = vlaneseq
      %v576 = vshrl.u32 %v575, 7
      %v577 = vsub.s32 0, %v576
      %v578 = vrot.slane %v384, %v577
      %v579 = vadd.f32 %v494, %v574
      %v580 = vadd.f32 %v494, %v578
      %v581 = vadd.f32 %v499, %v574
      %v582 = vadd.f32 %v499, %v578
      %v583 = vadd.f32 %v504, %v574
      %v584 = vadd.f32 %v504, %v578
      %v585 = vadd.f32 %v509, %v574
      %v586 = vadd.f32 %v509, %v578
      %v587 = vadd.f32 %v514, %v574
      %v588 = vadd.f32 %v514, %v578
      %v589 = vadd.f32 %v519, %v574
      %v590 = vadd.f32 %v519, %v578
      %v591 = vadd.f32 %v524, %v574
      %v592 = vadd.f32 %v524, %v578
      %v593 = vadd.f32 %v529, %v574
      %v594 = vadd.f32 %v529, %v578
      %v595 = vadd.f32 %v534, %v574
      %v596 = vadd.f32 %v534, %v578
      %v597 = vadd.f32 %v539, %v574
      %v598 = vadd.f32 %v539, %v578
      %v599 = vadd.f32 %v544, %v574
      %v600 = vadd.f32 %v544, %v578
      %v601 = vadd.f32 %v549, %v574
      %v602 = vadd.f32 %v549, %v578
      %v603 = vadd.f32 %v554, %v574
      %v604 = vadd.f32 %v554, %v578
      %v605 = vadd.f32 %v559, %v574
      %v606 = vadd.f32 %v559, %v578
      %v607 = vadd.f32 %v564, %v574
      %v608 = vadd.f32 %v564, %v578
      %v609 = vadd.f32 %v569, %v574
      %v610 = vadd.f32 %v569, %v578
      %611 = vset.pattern.permute.xlu0 4
      %612 = vperm.xlu0 %611, %v367
      %v613 = vpop.permute.xlu0 %612
      %615 = vset.pattern.permute.xlu0 4
      %616 = vperm.xlu0 %615, %v368
      %v617 = vpop.permute.xlu0 %616
      %619 = vset.pattern.permute.xlu0 4
      %620 = vperm.xlu0 %619, %v369
      %v621 = vpop.permute.xlu0 %620
      %623 = vset.pattern.permute.xlu0 4
      %624 = vperm.xlu0 %623, %v370
      %v625 = vpop.permute.xlu0 %624
      %627 = vset.pattern.permute.xlu0 4
      %628 = vperm.xlu0 %627, %v371
      %v629 = vpop.permute.xlu0 %628
      %631 = vset.pattern.permute.xlu0 4
      %632 = vperm.xlu0 %631, %v372
      %v633 = vpop.permute.xlu0 %632
      %635 = vset.pattern.permute.xlu0 4
      %636 = vperm.xlu0 %635, %v373
      %v637 = vpop.permute.xlu0 %636
      %639 = vset.pattern.permute.xlu0 4
      %640 = vperm.xlu0 %639, %v374
      %v641 = vpop.permute.xlu0 %640
      %643 = vset.pattern.permute.xlu0 4
      %644 = vperm.xlu0 %643, %v375
      %v645 = vpop.permute.xlu0 %644
      %647 = vset.pattern.permute.xlu0 4
      %648 = vperm.xlu0 %647, %v376
      %v649 = vpop.permute.xlu0 %648
      %651 = vset.pattern.permute.xlu0 4
      %652 = vperm.xlu0 %651, %v377
      %v653 = vpop.permute.xlu0 %652
      %655 = vset.pattern.permute.xlu0 4
      %656 = vperm.xlu0 %655, %v378
      %v657 = vpop.permute.xlu0 %656
      %659 = vset.pattern.permute.xlu0 4
      %660 = vperm.xlu0 %659, %v379
      %v661 = vpop.permute.xlu0 %660
      %663 = vset.pattern.permute.xlu0 4
      %664 = vperm.xlu0 %663, %v380
      %v665 = vpop.permute.xlu0 %664
      %667 = vset.pattern.permute.xlu0 4
      %668 = vperm.xlu0 %667, %v381
      %v669 = vpop.permute.xlu0 %668
      %671 = vset.pattern.permute.xlu0 4
      %672 = vperm.xlu0 %671, %v382
      %v673 = vpop.permute.xlu0 %672
      %v675 = vlaneseq
      %v676 = vshrl.u32 %v675, 7
      %v677 = vsub.s32 4, %v676
      %v678 = vrot.slane %v383, %v677
      %v679 = vlaneseq
      %v680 = vshrl.u32 %v679, 7
      %v681 = vsub.s32 4, %v680
      %v682 = vrot.slane %v384, %v681
      %v683 = vmul.f32 %v613, %v678
      %v684 = vmul.f32 %v613, %v682
      %v685 = vmul.f32 %v617, %v678
      %v686 = vmul.f32 %v617, %v682
      %v687 = vmul.f32 %v621, %v678
      %v688 = vmul.f32 %v621, %v682
      %v689 = vmul.f32 %v625, %v678
      %v690 = vmul.f32 %v625, %v682
      %v691 = vmul.f32 %v629, %v678
      %v692 = vmul.f32 %v629, %v682
      %v693 = vmul.f32 %v633, %v678
      %v694 = vmul.f32 %v633, %v682
      %v695 = vmul.f32 %v637, %v678
      %v696 = vmul.f32 %v637, %v682
      %v697 = vmul.f32 %v641, %v678
      %v698 = vmul.f32 %v641, %v682
      %v699 = vmul.f32 %v645, %v678
      %v700 = vmul.f32 %v645, %v682
      %v701 = vmul.f32 %v649, %v678
      %v702 = vmul.f32 %v649, %v682
      %v703 = vmul.f32 %v653, %v678
      %v704 = vmul.f32 %v653, %v682
      %v705 = vmul.f32 %v657, %v678
      %v706 = vmul.f32 %v657, %v682
      %v707 = vmul.f32 %v661, %v678
      %v708 = vmul.f32 %v661, %v682
      %v709 = vmul.f32 %v665, %v678
      %v710 = vmul.f32 %v665, %v682
      %v711 = vmul.f32 %v669, %v678
      %v712 = vmul.f32 %v669, %v682
      %v713 = vmul.f32 %v673, %v678
      %v714 = vmul.f32 %v673, %v682
      %715 = vset.pattern.permute.xlu0 8
      %716 = vperm.xlu0 %715, %v367
      %v717 = vpop.permute.xlu0 %716
      %719 = vset.pattern.permute.xlu0 8
      %720 = vperm.xlu0 %719, %v368
      %v721 = vpop.permute.xlu0 %720
      %723 = vset.pattern.permute.xlu0 8
      %724 = vperm.xlu0 %723, %v369
      %v725 = vpop.permute.xlu0 %724
      %727 = vset.pattern.permute.xlu0 8
      %728 = vperm.xlu0 %727, %v370
      %v729 = vpop.permute.xlu0 %728
      %731 = vset.pattern.permute.xlu0 8
      %732 = vperm.xlu0 %731, %v371
      %v733 = vpop.permute.xlu0 %732
      %735 = vset.pattern.permute.xlu0 8
      %736 = vperm.xlu0 %735, %v372
      %v737 = vpop.permute.xlu0 %736
      %739 = vset.pattern.permute.xlu0 8
      %740 = vperm.xlu0 %739, %v373
      %v741 = vpop.permute.xlu0 %740
      %743 = vset.pattern.permute.xlu0 8
      %744 = vperm.xlu0 %743, %v374
      %v745 = vpop.permute.xlu0 %744
      %747 = vset.pattern.permute.xlu0 8
      %748 = vperm.xlu0 %747, %v375
      %v749 = vpop.permute.xlu0 %748
      %751 = vset.pattern.permute.xlu0 8
      %752 = vperm.xlu0 %751, %v376
      %v753 = vpop.permute.xlu0 %752
      %755 = vset.pattern.permute.xlu0 8
      %756 = vperm.xlu0 %755, %v377
      %v757 = vpop.permute.xlu0 %756
      %759 = vset.pattern.permute.xlu0 8
      %760 = vperm.xlu0 %759, %v378
      %v761 = vpop.permute.xlu0 %760
      %763 = vset.pattern.permute.xlu0 8
      %764 = vperm.xlu0 %763, %v379
      %v765 = vpop.permute.xlu0 %764
      %767 = vset.pattern.permute.xlu0 8
      %768 = vperm.xlu0 %767, %v380
      %v769 = vpop.permute.xlu0 %768
      %771 = vset.pattern.permute.xlu0 8
      %772 = vperm.xlu0 %771, %v381
      %v773 = vpop.permute.xlu0 %772
      %775 = vset.pattern.permute.xlu0 8
      %776 = vperm.xlu0 %775, %v382
      %v777 = vpop.permute.xlu0 %776
      %v779 = vlaneseq
      %v780 = vshrl.u32 %v779, 7
      %v781 = vsub.s32 0, %v780
      %v782 = vrot.slane %v385, %v781
      %v783 = vlaneseq
      %v784 = vshrl.u32 %v783, 7
      %v785 = vsub.s32 0, %v784
      %v786 = vrot.slane %v386, %v785
      %v787 = vmul.f32 %v717, %v782
      %v788 = vmul.f32 %v717, %v786
      %v789 = vmul.f32 %v721, %v782
      %v790 = vmul.f32 %v721, %v786
      %v791 = vmul.f32 %v725, %v782
      %v792 = vmul.f32 %v725, %v786
      %v793 = vmul.f32 %v729, %v782
      %v794 = vmul.f32 %v729, %v786
      %v795 = vmul.f32 %v733, %v782
      %v796 = vmul.f32 %v733, %v786
      %v797 = vmul.f32 %v737, %v782
      %v798 = vmul.f32 %v737, %v786
      %v799 = vmul.f32 %v741, %v782
      %v800 = vmul.f32 %v741, %v786
      %v801 = vmul.f32 %v745, %v782
      %v802 = vmul.f32 %v745, %v786
      %v803 = vmul.f32 %v749, %v782
      %v804 = vmul.f32 %v749, %v786
      %v805 = vmul.f32 %v753, %v782
      %v806 = vmul.f32 %v753, %v786
      %v807 = vmul.f32 %v757, %v782
      %v808 = vmul.f32 %v757, %v786
      %v809 = vmul.f32 %v761, %v782
      %v810 = vmul.f32 %v761, %v786
      %v811 = vmul.f32 %v765, %v782
      %v812 = vmul.f32 %v765, %v786
      %v813 = vmul.f32 %v769, %v782
      %v814 = vmul.f32 %v769, %v786
      %v815 = vmul.f32 %v773, %v782
      %v816 = vmul.f32 %v773, %v786
      %v817 = vmul.f32 %v777, %v782
      %v818 = vmul.f32 %v777, %v786
      %vm819 = vcmp.gt.f32.partialorder %v579, 0.0
      %vm820 = vcmp.gt.f32.partialorder %v580, 0.0
      %vm821 = vcmp.gt.f32.partialorder %v581, 0.0
      %vm822 = vcmp.gt.f32.partialorder %v582, 0.0
      %vm823 = vcmp.gt.f32.partialorder %v583, 0.0
      %vm824 = vcmp.gt.f32.partialorder %v584, 0.0
      %vm825 = vcmp.gt.f32.partialorder %v585, 0.0
      %vm826 = vcmp.gt.f32.partialorder %v586, 0.0
      %vm827 = vcmp.gt.f32.partialorder %v587, 0.0
      %vm828 = vcmp.gt.f32.partialorder %v588, 0.0
      %vm829 = vcmp.gt.f32.partialorder %v589, 0.0
      %vm830 = vcmp.gt.f32.partialorder %v590, 0.0
      %vm831 = vcmp.gt.f32.partialorder %v591, 0.0
      %vm832 = vcmp.gt.f32.partialorder %v592, 0.0
      %vm833 = vcmp.gt.f32.partialorder %v593, 0.0
      %vm834 = vcmp.gt.f32.partialorder %v594, 0.0
      %vm835 = vcmp.gt.f32.partialorder %v595, 0.0
      %vm836 = vcmp.gt.f32.partialorder %v596, 0.0
      %vm837 = vcmp.gt.f32.partialorder %v597, 0.0
      %vm838 = vcmp.gt.f32.partialorder %v598, 0.0
      %vm839 = vcmp.gt.f32.partialorder %v599, 0.0
      %vm840 = vcmp.gt.f32.partialorder %v600, 0.0
      %vm841 = vcmp.gt.f32.partialorder %v601, 0.0
      %vm842 = vcmp.gt.f32.partialorder %v602, 0.0
      %vm843 = vcmp.gt.f32.partialorder %v603, 0.0
      %vm844 = vcmp.gt.f32.partialorder %v604, 0.0
      %vm845 = vcmp.gt.f32.partialorder %v605, 0.0
      %vm846 = vcmp.gt.f32.partialorder %v606, 0.0
      %vm847 = vcmp.gt.f32.partialorder %v607, 0.0
      %vm848 = vcmp.gt.f32.partialorder %v608, 0.0
      %vm849 = vcmp.gt.f32.partialorder %v609, 0.0
      %vm850 = vcmp.gt.f32.partialorder %v610, 0.0
      %v851 = vsel %vm819, %v683, %v787
      %v852 = vsel %vm820, %v684, %v788
      %v853 = vsel %vm821, %v685, %v789
      %v854 = vsel %vm822, %v686, %v790
      %v855 = vsel %vm823, %v687, %v791
      %v856 = vsel %vm824, %v688, %v792
      %v857 = vsel %vm825, %v689, %v793
      %v858 = vsel %vm826, %v690, %v794
      %v859 = vsel %vm827, %v691, %v795
      %v860 = vsel %vm828, %v692, %v796
      %v861 = vsel %vm829, %v693, %v797
      %v862 = vsel %vm830, %v694, %v798
      %v863 = vsel %vm831, %v695, %v799
      %v864 = vsel %vm832, %v696, %v800
      %v865 = vsel %vm833, %v697, %v801
      %v866 = vsel %vm834, %v698, %v802
      %v867 = vsel %vm835, %v699, %v803
      %v868 = vsel %vm836, %v700, %v804
      %v869 = vsel %vm837, %v701, %v805
      %v870 = vsel %vm838, %v702, %v806
      %v871 = vsel %vm839, %v703, %v807
      %v872 = vsel %vm840, %v704, %v808
      %v873 = vsel %vm841, %v705, %v809
      %v874 = vsel %vm842, %v706, %v810
      %v875 = vsel %vm843, %v707, %v811
      %v876 = vsel %vm844, %v708, %v812
      %v877 = vsel %vm845, %v709, %v813
      %v878 = vsel %vm846, %v710, %v814
      %v879 = vsel %vm847, %v711, %v815
      %v880 = vsel %vm848, %v712, %v816
      %v881 = vsel %vm849, %v713, %v817
      %v882 = vsel %vm850, %v714, %v818
      %v883 = vmul.f32 %v851, %v459
      %v884 = vmul.f32 %v852, %v460
      %v885 = vmul.f32 %v853, %v461
      %v886 = vmul.f32 %v854, %v462
      %v887 = vmul.f32 %v855, %v463
      %v888 = vmul.f32 %v856, %v464
      %v889 = vmul.f32 %v857, %v465
      %v890 = vmul.f32 %v858, %v466
      %v891 = vmul.f32 %v859, %v467
      %v892 = vmul.f32 %v860, %v468
      %v893 = vmul.f32 %v861, %v469
      %v894 = vmul.f32 %v862, %v470
      %v895 = vmul.f32 %v863, %v471
      %v896 = vmul.f32 %v864, %v472
      %v897 = vmul.f32 %v865, %v473
      %v898 = vmul.f32 %v866, %v474
      %v899 = vmul.f32 %v867, %v475
      %v900 = vmul.f32 %v868, %v476
      %v901 = vmul.f32 %v869, %v477
      %v902 = vmul.f32 %v870, %v478
      %v903 = vmul.f32 %v871, %v479
      %v904 = vmul.f32 %v872, %v480
      %v905 = vmul.f32 %v873, %v481
      %v906 = vmul.f32 %v874, %v482
      %v907 = vmul.f32 %v875, %v483
      %v908 = vmul.f32 %v876, %v484
      %v909 = vmul.f32 %v877, %v485
      %v910 = vmul.f32 %v878, %v486
      %v911 = vmul.f32 %v879, %v487
      %v912 = vmul.f32 %v880, %v488
      %v913 = vmul.f32 %v881, %v489
      %v914 = vmul.f32 %v882, %v490
      %v915 = vld [vmem:[#allocation2] sm:$0xff]
      %v916 = vld [vmem:[#allocation2 + $0x8] sm:$0xff]
      %v917 = vld [vmem:[#allocation2 + $0x10] sm:$0xff]
      %v918 = vld [vmem:[#allocation2 + $0x18] sm:$0xff]
      %v919 = vld [vmem:[#allocation2 + $0x20] sm:$0xff]
      %v920 = vld [vmem:[#allocation2 + $0x28] sm:$0xff]
      %v921 = vld [vmem:[#allocation2 + $0x30] sm:$0xff]
      %v922 = vld [vmem:[#allocation2 + $0x38] sm:$0xff]
      %v923 = vld [vmem:[#allocation2 + $0x40] sm:$0xff]
      %v924 = vld [vmem:[#allocation2 + $0x48] sm:$0xff]
      %v925 = vld [vmem:[#allocation2 + $0x50] sm:$0xff]
      %v926 = vld [vmem:[#allocation2 + $0x58] sm:$0xff]
      %v927 = vld [vmem:[#allocation2 + $0x60] sm:$0xff]
      %v928 = vld [vmem:[#allocation2 + $0x68] sm:$0xff]
      %v929 = vld [vmem:[#allocation2 + $0x70] sm:$0xff]
      %v930 = vld [vmem:[#allocation2 + $0x78] sm:$0xff]
      %931 = vmatprep.subr.mxu0 0.0
      %932 = vmatpush1.msra.mxu0 %v402
      %933 = vmatprep.subr.mxu0 0.0
      %934 = vmatpush1.msra.mxu0 %v401
      %935 = vmatprep.subr.mxu0 0.0
      %936 = vmatpush1.msra.mxu0 %v400
      %937 = vmatprep.subr.mxu0 0.0
      %938 = vmatpush1.msra.mxu0 %v399
      %939 = vmatprep.subr.mxu0 0.0
      %940 = vmatpush1.msra.mxu0 %v398
      %941 = vmatprep.subr.mxu0 0.0
      %942 = vmatpush1.msra.mxu0 %v397
      %943 = vmatprep.subr.mxu0 0.0
      %944 = vmatpush1.msra.mxu0 %v396
      %945 = vmatprep.subr.mxu0 0.0
      %946 = vmatpush1.msra.mxu0 %v395
      %947 = vmatprep.subr.mxu0 0.0
      %948 = vmatpush1.msra.mxu0 %v394
      %949 = vmatprep.subr.mxu0 0.0
      %950 = vmatpush1.msra.mxu0 %v393
      %951 = vmatprep.subr.mxu0 0.0
      %952 = vmatpush1.msra.mxu0 %v392
      %953 = vmatprep.subr.mxu0 0.0
      %954 = vmatpush1.msra.mxu0 %v391
      %955 = vmatprep.subr.mxu0 0.0
      %956 = vmatpush1.msra.mxu0 %v390
      %957 = vmatprep.subr.mxu0 0.0
      %958 = vmatpush1.msra.mxu0 %v389
      %959 = vmatprep.subr.mxu0 0.0
      %960 = vmatpush1.msra.mxu0 %v388
      %961 = vmatprep.subr.mxu0 0.0
      %962 = vmatpush1.msra.mxu0 %v387
      %963 = vmatprep.subr.mxu0 0.0
      %964 = vmatpush2.msra.mxu0 %v418
      %965 = vmatprep.subr.mxu0 0.0
      %966 = vmatpush2.msra.mxu0 %v417
      %967 = vmatprep.subr.mxu0 0.0
      %968 = vmatpush2.msra.mxu0 %v416
      %969 = vmatprep.subr.mxu0 0.0
      %970 = vmatpush2.msra.mxu0 %v415
      %971 = vmatprep.subr.mxu0 0.0
      %972 = vmatpush2.msra.mxu0 %v414
      %973 = vmatprep.subr.mxu0 0.0
      %974 = vmatpush2.msra.mxu0 %v413
      %975 = vmatprep.subr.mxu0 0.0
      %976 = vmatpush2.msra.mxu0 %v412
      %977 = vmatprep.subr.mxu0 0.0
      %978 = vmatpush2.msra.mxu0 %v411
      %979 = vmatprep.subr.mxu0 0.0
      %980 = vmatpush2.msra.mxu0 %v410
      %981 = vmatprep.subr.mxu0 0.0
      %982 = vmatpush2.msra.mxu0 %v409
      %983 = vmatprep.subr.mxu0 0.0
      %984 = vmatpush2.msra.mxu0 %v408
      %985 = vmatprep.subr.mxu0 0.0
      %986 = vmatpush2.msra.mxu0 %v407
      %987 = vmatprep.subr.mxu0 0.0
      %988 = vmatpush2.msra.mxu0 %v406
      %989 = vmatprep.subr.mxu0 0.0
      %990 = vmatpush2.msra.mxu0 %v405
      %991 = vmatprep.subr.mxu0 0.0
      %992 = vmatpush2.msra.mxu0 %v404
      %993 = vmatprep.subr.mxu0 0.0
      %994 = vmatpush2.msra.mxu0 %v403
      %995 = vmatprep.mubr.f32.mxu0 %v884
      %996 = vmatmul.mubr.f32.gmra.mxu0 %v883
      %v997 = vpop.f32.mrf.mxu0
      %v998 = vadd.f32 0.0, %v997
      %v999 = vpop.f32.mrf.mxu0
      %1000 = vmatprep.mubr.f32.mxu0 %v886
      %1001 = vmatmul.mubr.f32.gmra.mxu0 %v885
      %v1002 = vpop.f32.mrf.mxu0
      %v1003 = vadd.f32 0.0, %v1002
      %v1004 = vpop.f32.mrf.mxu0
      %1005 = vmatprep.mubr.f32.mxu0 %v888
      %1006 = vmatmul.mubr.f32.gmra.mxu0 %v887
      %v1007 = vpop.f32.mrf.mxu0
      %v1008 = vadd.f32 0.0, %v1007
      %v1009 = vpop.f32.mrf.mxu0
      %1010 = vmatprep.mubr.f32.mxu0 %v890
      %1011 = vmatmul.mubr.f32.gmra.mxu0 %v889
      %v1012 = vpop.f32.mrf.mxu0
      %v1013 = vadd.f32 0.0, %v1012
      %v1014 = vpop.f32.mrf.mxu0
      %1015 = vmatprep.mubr.f32.mxu0 %v892
      %1016 = vmatmul.mubr.f32.gmra.mxu0 %v891
      %v1017 = vpop.f32.mrf.mxu0
      %v1018 = vadd.f32 0.0, %v1017
      %v1019 = vpop.f32.mrf.mxu0
      %1020 = vmatprep.mubr.f32.mxu0 %v894
      %1021 = vmatmul.mubr.f32.gmra.mxu0 %v893
      %v1022 = vpop.f32.mrf.mxu0
      %v1023 = vadd.f32 0.0, %v1022
      %v1024 = vpop.f32.mrf.mxu0
      %1025 = vmatprep.mubr.f32.mxu0 %v896
      %1026 = vmatmul.mubr.f32.gmra.mxu0 %v895
      %v1027 = vpop.f32.mrf.mxu0
      %v1028 = vadd.f32 0.0, %v1027
      %v1029 = vpop.f32.mrf.mxu0
      %1030 = vmatprep.mubr.f32.mxu0 %v898
      %1031 = vmatmul.mubr.f32.gmra.mxu0 %v897
      %v1032 = vpop.f32.mrf.mxu0
      %v1033 = vadd.f32 0.0, %v1032
      %v1034 = vpop.f32.mrf.mxu0
      %1035 = vmatprep.mubr.f32.mxu0 %v900
      %1036 = vmatmul.mubr.f32.gmra.mxu0 %v899
      %v1037 = vpop.f32.mrf.mxu0
      %v1038 = vadd.f32 0.0, %v1037
      %v1039 = vpop.f32.mrf.mxu0
      %1040 = vmatprep.mubr.f32.mxu0 %v902
      %1041 = vmatmul.mubr.f32.gmra.mxu0 %v901
      %v1042 = vpop.f32.mrf.mxu0
      %v1043 = vadd.f32 0.0, %v1042
      %v1044 = vpop.f32.mrf.mxu0
      %1045 = vmatprep.mubr.f32.mxu0 %v904
      %1046 = vmatmul.mubr.f32.gmra.mxu0 %v903
      %v1047 = vpop.f32.mrf.mxu0
      %v1048 = vadd.f32 0.0, %v1047
      %v1049 = vpop.f32.mrf.mxu0
      %1050 = vmatprep.mubr.f32.mxu0 %v906
      %1051 = vmatmul.mubr.f32.gmra.mxu0 %v905
      %v1052 = vpop.f32.mrf.mxu0
      %v1053 = vadd.f32 0.0, %v1052
      %v1054 = vpop.f32.mrf.mxu0
      %1055 = vmatprep.mubr.f32.mxu0 %v908
      %1056 = vmatmul.mubr.f32.gmra.mxu0 %v907
      %v1057 = vpop.f32.mrf.mxu0
      %v1058 = vadd.f32 0.0, %v1057
      %v1059 = vpop.f32.mrf.mxu0
      %1060 = vmatprep.mubr.f32.mxu0 %v910
      %1061 = vmatmul.mubr.f32.gmra.mxu0 %v909
      %v1062 = vpop.f32.mrf.mxu0
      %v1063 = vadd.f32 0.0, %v1062
      %v1064 = vpop.f32.mrf.mxu0
      %1065 = vmatprep.mubr.f32.mxu0 %v912
      %1066 = vmatmul.mubr.f32.gmra.mxu0 %v911
      %v1067 = vpop.f32.mrf.mxu0
      %v1068 = vadd.f32 0.0, %v1067
      %v1069 = vpop.f32.mrf.mxu0
      %1070 = vmatprep.mubr.f32.mxu0 %v914
      %1071 = vmatmul.mubr.f32.gmra.mxu0 %v913
      %v1072 = vpop.f32.mrf.mxu0
      %v1073 = vadd.f32 0.0, %v1072
      %v1074 = vpop.f32.mrf.mxu0
      %1075 = vdwg.mxu0
      %v1076 = vadd.f32 %v915, %v998
      %v1077 = vadd.f32 %v916, %v1003
      %v1078 = vadd.f32 %v917, %v1008
      %v1079 = vadd.f32 %v918, %v1013
      %v1080 = vadd.f32 %v919, %v1018
      %v1081 = vadd.f32 %v920, %v1023
      %v1082 = vadd.f32 %v921, %v1028
      %v1083 = vadd.f32 %v922, %v1033
      %v1084 = vadd.f32 %v923, %v1038
      %v1085 = vadd.f32 %v924, %v1043
      %v1086 = vadd.f32 %v925, %v1048
      %v1087 = vadd.f32 %v926, %v1053
      %v1088 = vadd.f32 %v927, %v1058
      %v1089 = vadd.f32 %v928, %v1063
      %v1090 = vadd.f32 %v929, %v1068
      %v1091 = vadd.f32 %v930, %v1073
      %vm1092 = vcmask 138240
      %1093 = vst.msk [vmem:[#allocation2] sm:$0xff] %vm1092, %v1076
      %1094 = vst.msk [vmem:[#allocation2 + $0x8] sm:$0xff] %vm1092, %v1077
      %1095 = vst.msk [vmem:[#allocation2 + $0x10] sm:$0xff] %vm1092, %v1078
      %1096 = vst.msk [vmem:[#allocation2 + $0x18] sm:$0xff] %vm1092, %v1079
      %1097 = vst.msk [vmem:[#allocation2 + $0x20] sm:$0xff] %vm1092, %v1080
      %1098 = vst.msk [vmem:[#allocation2 + $0x28] sm:$0xff] %vm1092, %v1081
      %1099 = vst.msk [vmem:[#allocation2 + $0x30] sm:$0xff] %vm1092, %v1082
      %1100 = vst.msk [vmem:[#allocation2 + $0x38] sm:$0xff] %vm1092, %v1083
      %1101 = vst.msk [vmem:[#allocation2 + $0x40] sm:$0xff] %vm1092, %v1084
      %1102 = vst.msk [vmem:[#allocation2 + $0x48] sm:$0xff] %vm1092, %v1085
      %1103 = vst.msk [vmem:[#allocation2 + $0x50] sm:$0xff] %vm1092, %v1086
      %1104 = vst.msk [vmem:[#allocation2 + $0x58] sm:$0xff] %vm1092, %v1087
      %1105 = vst.msk [vmem:[#allocation2 + $0x60] sm:$0xff] %vm1092, %v1088
      %1106 = vst.msk [vmem:[#allocation2 + $0x68] sm:$0xff] %vm1092, %v1089
      %1107 = vst.msk [vmem:[#allocation2 + $0x70] sm:$0xff] %vm1092, %v1090
      %1108 = vst.msk [vmem:[#allocation2 + $0x78] sm:$0xff] %vm1092, %v1091
      %1109 = vset.pattern.permute.xlu0 1
      %1110 = vperm.xlu0 %1109, %v367
      %v1111 = vpop.permute.xlu0 %1110
      %1113 = vset.pattern.permute.xlu0 1
      %1114 = vperm.xlu0 %1113, %v368
      %v1115 = vpop.permute.xlu0 %1114
      %1117 = vset.pattern.permute.xlu0 1
      %1118 = vperm.xlu0 %1117, %v369
      %v1119 = vpop.permute.xlu0 %1118
      %1121 = vset.pattern.permute.xlu0 1
      %1122 = vperm.xlu0 %1121, %v370
      %v1123 = vpop.permute.xlu0 %1122
      %1125 = vset.pattern.permute.xlu0 1
      %1126 = vperm.xlu0 %1125, %v371
      %v1127 = vpop.permute.xlu0 %1126
      %1129 = vset.pattern.permute.xlu0 1
      %1130 = vperm.xlu0 %1129, %v372
      %v1131 = vpop.permute.xlu0 %1130
      %1133 = vset.pattern.permute.xlu0 1
      %1134 = vperm.xlu0 %1133, %v373
      %v1135 = vpop.permute.xlu0 %1134
      %1137 = vset.pattern.permute.xlu0 1
      %1138 = vperm.xlu0 %1137, %v374
      %v1139 = vpop.permute.xlu0 %1138
      %1141 = vset.pattern.permute.xlu0 1
      %1142 = vperm.xlu0 %1141, %v375
      %v1143 = vpop.permute.xlu0 %1142
      %1145 = vset.pattern.permute.xlu0 1
      %1146 = vperm.xlu0 %1145, %v376
      %v1147 = vpop.permute.xlu0 %1146
      %1149 = vset.pattern.permute.xlu0 1
      %1150 = vperm.xlu0 %1149, %v377
      %v1151 = vpop.permute.xlu0 %1150
      %1153 = vset.pattern.permute.xlu0 1
      %1154 = vperm.xlu0 %1153, %v378
      %v1155 = vpop.permute.xlu0 %1154
      %1157 = vset.pattern.permute.xlu0 1
      %1158 = vperm.xlu0 %1157, %v379
      %v1159 = vpop.permute.xlu0 %1158
      %1161 = vset.pattern.permute.xlu0 1
      %1162 = vperm.xlu0 %1161, %v380
      %v1163 = vpop.permute.xlu0 %1162
      %1165 = vset.pattern.permute.xlu0 1
      %1166 = vperm.xlu0 %1165, %v381
      %v1167 = vpop.permute.xlu0 %1166
      %1169 = vset.pattern.permute.xlu0 1
      %1170 = vperm.xlu0 %1169, %v382
      %v1171 = vpop.permute.xlu0 %1170
      %v1173 = vlaneseq
      %v1174 = vshrl.u32 %v1173, 7
      %v1175 = vsub.s32 1, %v1174
      %v1176 = vrot.slane %v383, %v1175
      %v1177 = vlaneseq
      %v1178 = vshrl.u32 %v1177, 7
      %v1179 = vsub.s32 1, %v1178
      %v1180 = vrot.slane %v384, %v1179
      %v1181 = vadd.f32 %v1111, %v1176
      %v1182 = vadd.f32 %v1111, %v1180
      %v1183 = vadd.f32 %v1115, %v1176
      %v1184 = vadd.f32 %v1115, %v1180
      %v1185 = vadd.f32 %v1119, %v1176
      %v1186 = vadd.f32 %v1119, %v1180
      %v1187 = vadd.f32 %v1123, %v1176
      %v1188 = vadd.f32 %v1123, %v1180
      %v1189 = vadd.f32 %v1127, %v1176
      %v1190 = vadd.f32 %v1127, %v1180
      %v1191 = vadd.f32 %v1131, %v1176
      %v1192 = vadd.f32 %v1131, %v1180
      %v1193 = vadd.f32 %v1135, %v1176
      %v1194 = vadd.f32 %v1135, %v1180
      %v1195 = vadd.f32 %v1139, %v1176
      %v1196 = vadd.f32 %v1139, %v1180
      %v1197 = vadd.f32 %v1143, %v1176
      %v1198 = vadd.f32 %v1143, %v1180
      %v1199 = vadd.f32 %v1147, %v1176
      %v1200 = vadd.f32 %v1147, %v1180
      %v1201 = vadd.f32 %v1151, %v1176
      %v1202 = vadd.f32 %v1151, %v1180
      %v1203 = vadd.f32 %v1155, %v1176
      %v1204 = vadd.f32 %v1155, %v1180
      %v1205 = vadd.f32 %v1159, %v1176
      %v1206 = vadd.f32 %v1159, %v1180
      %v1207 = vadd.f32 %v1163, %v1176
      %v1208 = vadd.f32 %v1163, %v1180
      %v1209 = vadd.f32 %v1167, %v1176
      %v1210 = vadd.f32 %v1167, %v1180
      %v1211 = vadd.f32 %v1171, %v1176
      %v1212 = vadd.f32 %v1171, %v1180
      %1213 = vset.pattern.permute.xlu0 5
      %1214 = vperm.xlu0 %1213, %v367
      %v1215 = vpop.permute.xlu0 %1214
      %1217 = vset.pattern.permute.xlu0 5
      %1218 = vperm.xlu0 %1217, %v368
      %v1219 = vpop.permute.xlu0 %1218
      %1221 = vset.pattern.permute.xlu0 5
      %1222 = vperm.xlu0 %1221, %v369
      %v1223 = vpop.permute.xlu0 %1222
      %1225 = vset.pattern.permute.xlu0 5
      %1226 = vperm.xlu0 %1225, %v370
      %v1227 = vpop.permute.xlu0 %1226
      %1229 = vset.pattern.permute.xlu0 5
      %1230 = vperm.xlu0 %1229, %v371
      %v1231 = vpop.permute.xlu0 %1230
      %1233 = vset.pattern.permute.xlu0 5
      %1234 = vperm.xlu0 %1233, %v372
      %v1235 = vpop.permute.xlu0 %1234
      %1237 = vset.pattern.permute.xlu0 5
      %1238 = vperm.xlu0 %1237, %v373
      %v1239 = vpop.permute.xlu0 %1238
      %1241 = vset.pattern.permute.xlu0 5
      %1242 = vperm.xlu0 %1241, %v374
      %v1243 = vpop.permute.xlu0 %1242
      %1245 = vset.pattern.permute.xlu0 5
      %1246 = vperm.xlu0 %1245, %v375
      %v1247 = vpop.permute.xlu0 %1246
      %1249 = vset.pattern.permute.xlu0 5
      %1250 = vperm.xlu0 %1249, %v376
      %v1251 = vpop.permute.xlu0 %1250
      %1253 = vset.pattern.permute.xlu0 5
      %1254 = vperm.xlu0 %1253, %v377
      %v1255 = vpop.permute.xlu0 %1254
      %1257 = vset.pattern.permute.xlu0 5
      %1258 = vperm.xlu0 %1257, %v378
      %v1259 = vpop.permute.xlu0 %1258
      %1261 = vset.pattern.permute.xlu0 5
      %1262 = vperm.xlu0 %1261, %v379
      %v1263 = vpop.permute.xlu0 %1262
      %1265 = vset.pattern.permute.xlu0 5
      %1266 = vperm.xlu0 %1265, %v380
      %v1267 = vpop.permute.xlu0 %1266
      %1269 = vset.pattern.permute.xlu0 5
      %1270 = vperm.xlu0 %1269, %v381
      %v1271 = vpop.permute.xlu0 %1270
      %1273 = vset.pattern.permute.xlu0 5
      %1274 = vperm.xlu0 %1273, %v382
      %v1275 = vpop.permute.xlu0 %1274
      %v1277 = vlaneseq
      %v1278 = vshrl.u32 %v1277, 7
      %v1279 = vsub.s32 5, %v1278
      %v1280 = vrot.slane %v383, %v1279
      %v1281 = vlaneseq
      %v1282 = vshrl.u32 %v1281, 7
      %v1283 = vsub.s32 5, %v1282
      %v1284 = vrot.slane %v384, %v1283
      %v1285 = vmul.f32 %v1215, %v1280
      %v1286 = vmul.f32 %v1215, %v1284
      %v1287 = vmul.f32 %v1219, %v1280
      %v1288 = vmul.f32 %v1219, %v1284
      %v1289 = vmul.f32 %v1223, %v1280
      %v1290 = vmul.f32 %v1223, %v1284
      %v1291 = vmul.f32 %v1227, %v1280
      %v1292 = vmul.f32 %v1227, %v1284
      %v1293 = vmul.f32 %v1231, %v1280
      %v1294 = vmul.f32 %v1231, %v1284
      %v1295 = vmul.f32 %v1235, %v1280
      %v1296 = vmul.f32 %v1235, %v1284
      %v1297 = vmul.f32 %v1239, %v1280
      %v1298 = vmul.f32 %v1239, %v1284
      %v1299 = vmul.f32 %v1243, %v1280
      %v1300 = vmul.f32 %v1243, %v1284
      %v1301 = vmul.f32 %v1247, %v1280
      %v1302 = vmul.f32 %v1247, %v1284
      %v1303 = vmul.f32 %v1251, %v1280
      %v1304 = vmul.f32 %v1251, %v1284
      %v1305 = vmul.f32 %v1255, %v1280
      %v1306 = vmul.f32 %v1255, %v1284
      %v1307 = vmul.f32 %v1259, %v1280
      %v1308 = vmul.f32 %v1259, %v1284
      %v1309 = vmul.f32 %v1263, %v1280
      %v1310 = vmul.f32 %v1263, %v1284
      %v1311 = vmul.f32 %v1267, %v1280
      %v1312 = vmul.f32 %v1267, %v1284
      %v1313 = vmul.f32 %v1271, %v1280
      %v1314 = vmul.f32 %v1271, %v1284
      %v1315 = vmul.f32 %v1275, %v1280
      %v1316 = vmul.f32 %v1275, %v1284
      %1317 = vset.pattern.permute.xlu0 9
      %1318 = vperm.xlu0 %1317, %v367
      %v1319 = vpop.permute.xlu0 %1318
      %1321 = vset.pattern.permute.xlu0 9
      %1322 = vperm.xlu0 %1321, %v368
      %v1323 = vpop.permute.xlu0 %1322
      %1325 = vset.pattern.permute.xlu0 9
      %1326 = vperm.xlu0 %1325, %v369
      %v1327 = vpop.permute.xlu0 %1326
      %1329 = vset.pattern.permute.xlu0 9
      %1330 = vperm.xlu0 %1329, %v370
      %v1331 = vpop.permute.xlu0 %1330
      %1333 = vset.pattern.permute.xlu0 9
      %1334 = vperm.xlu0 %1333, %v371
      %v1335 = vpop.permute.xlu0 %1334
      %1337 = vset.pattern.permute.xlu0 9
      %1338 = vperm.xlu0 %1337, %v372
      %v1339 = vpop.permute.xlu0 %1338
      %1341 = vset.pattern.permute.xlu0 9
      %1342 = vperm.xlu0 %1341, %v373
      %v1343 = vpop.permute.xlu0 %1342
      %1345 = vset.pattern.permute.xlu0 9
      %1346 = vperm.xlu0 %1345, %v374
      %v1347 = vpop.permute.xlu0 %1346
      %1349 = vset.pattern.permute.xlu0 9
      %1350 = vperm.xlu0 %1349, %v375
      %v1351 = vpop.permute.xlu0 %1350
      %1353 = vset.pattern.permute.xlu0 9
      %1354 = vperm.xlu0 %1353, %v376
      %v1355 = vpop.permute.xlu0 %1354
      %1357 = vset.pattern.permute.xlu0 9
      %1358 = vperm.xlu0 %1357, %v377
      %v1359 = vpop.permute.xlu0 %1358
      %1361 = vset.pattern.permute.xlu0 9
      %1362 = vperm.xlu0 %1361, %v378
      %v1363 = vpop.permute.xlu0 %1362
      %1365 = vset.pattern.permute.xlu0 9
      %1366 = vperm.xlu0 %1365, %v379
      %v1367 = vpop.permute.xlu0 %1366
      %1369 = vset.pattern.permute.xlu0 9
      %1370 = vperm.xlu0 %1369, %v380
      %v1371 = vpop.permute.xlu0 %1370
      %1373 = vset.pattern.permute.xlu0 9
      %1374 = vperm.xlu0 %1373, %v381
      %v1375 = vpop.permute.xlu0 %1374
      %1377 = vset.pattern.permute.xlu0 9
      %1378 = vperm.xlu0 %1377, %v382
      %v1379 = vpop.permute.xlu0 %1378
      %v1381 = vlaneseq
      %v1382 = vshrl.u32 %v1381, 7
      %v1383 = vsub.s32 1, %v1382
      %v1384 = vrot.slane %v385, %v1383
      %v1385 = vlaneseq
      %v1386 = vshrl.u32 %v1385, 7
      %v1387 = vsub.s32 1, %v1386
      %v1388 = vrot.slane %v386, %v1387
      %v1389 = vmul.f32 %v1319, %v1384
      %v1390 = vmul.f32 %v1319, %v1388
      %v1391 = vmul.f32 %v1323, %v1384
      %v1392 = vmul.f32 %v1323, %v1388
      %v1393 = vmul.f32 %v1327, %v1384
      %v1394 = vmul.f32 %v1327, %v1388
      %v1395 = vmul.f32 %v1331, %v1384
      %v1396 = vmul.f32 %v1331, %v1388
      %v1397 = vmul.f32 %v1335, %v1384
      %v1398 = vmul.f32 %v1335, %v1388
      %v1399 = vmul.f32 %v1339, %v1384
      %v1400 = vmul.f32 %v1339, %v1388
      %v1401 = vmul.f32 %v1343, %v1384
      %v1402 = vmul.f32 %v1343, %v1388
      %v1403 = vmul.f32 %v1347, %v1384
      %v1404 = vmul.f32 %v1347, %v1388
      %v1405 = vmul.f32 %v1351, %v1384
      %v1406 = vmul.f32 %v1351, %v1388
      %v1407 = vmul.f32 %v1355, %v1384
      %v1408 = vmul.f32 %v1355, %v1388
      %v1409 = vmul.f32 %v1359, %v1384
      %v1410 = vmul.f32 %v1359, %v1388
      %v1411 = vmul.f32 %v1363, %v1384
      %v1412 = vmul.f32 %v1363, %v1388
      %v1413 = vmul.f32 %v1367, %v1384
      %v1414 = vmul.f32 %v1367, %v1388
      %v1415 = vmul.f32 %v1371, %v1384
      %v1416 = vmul.f32 %v1371, %v1388
      %v1417 = vmul.f32 %v1375, %v1384
      %v1418 = vmul.f32 %v1375, %v1388
      %v1419 = vmul.f32 %v1379, %v1384
      %v1420 = vmul.f32 %v1379, %v1388
      %vm1421 = vcmp.gt.f32.partialorder %v1181, 0.0
      %vm1422 = vcmp.gt.f32.partialorder %v1182, 0.0
      %vm1423 = vcmp.gt.f32.partialorder %v1183, 0.0
      %vm1424 = vcmp.gt.f32.partialorder %v1184, 0.0
      %vm1425 = vcmp.gt.f32.partialorder %v1185, 0.0
      %vm1426 = vcmp.gt.f32.partialorder %v1186, 0.0
      %vm1427 = vcmp.gt.f32.partialorder %v1187, 0.0
      %vm1428 = vcmp.gt.f32.partialorder %v1188, 0.0
      %vm1429 = vcmp.gt.f32.partialorder %v1189, 0.0
      %vm1430 = vcmp.gt.f32.partialorder %v1190, 0.0
      %vm1431 = vcmp.gt.f32.partialorder %v1191, 0.0
      %vm1432 = vcmp.gt.f32.partialorder %v1192, 0.0
      %vm1433 = vcmp.gt.f32.partialorder %v1193, 0.0
      %vm1434 = vcmp.gt.f32.partialorder %v1194, 0.0
      %vm1435 = vcmp.gt.f32.partialorder %v1195, 0.0
      %vm1436 = vcmp.gt.f32.partialorder %v1196, 0.0
      %vm1437 = vcmp.gt.f32.partialorder %v1197, 0.0
      %vm1438 = vcmp.gt.f32.partialorder %v1198, 0.0
      %vm1439 = vcmp.gt.f32.partialorder %v1199, 0.0
      %vm1440 = vcmp.gt.f32.partialorder %v1200, 0.0
      %vm1441 = vcmp.gt.f32.partialorder %v1201, 0.0
      %vm1442 = vcmp.gt.f32.partialorder %v1202, 0.0
      %vm1443 = vcmp.gt.f32.partialorder %v1203, 0.0
      %vm1444 = vcmp.gt.f32.partialorder %v1204, 0.0
      %vm1445 = vcmp.gt.f32.partialorder %v1205, 0.0
      %vm1446 = vcmp.gt.f32.partialorder %v1206, 0.0
      %vm1447 = vcmp.gt.f32.partialorder %v1207, 0.0
      %vm1448 = vcmp.gt.f32.partialorder %v1208, 0.0
      %vm1449 = vcmp.gt.f32.partialorder %v1209, 0.0
      %vm1450 = vcmp.gt.f32.partialorder %v1210, 0.0
      %vm1451 = vcmp.gt.f32.partialorder %v1211, 0.0
      %vm1452 = vcmp.gt.f32.partialorder %v1212, 0.0
      %v1453 = vsel %vm1421, %v1285, %v1389
      %v1454 = vsel %vm1422, %v1286, %v1390
      %v1455 = vsel %vm1423, %v1287, %v1391
      %v1456 = vsel %vm1424, %v1288, %v1392
      %v1457 = vsel %vm1425, %v1289, %v1393
      %v1458 = vsel %vm1426, %v1290, %v1394
      %v1459 = vsel %vm1427, %v1291, %v1395
      %v1460 = vsel %vm1428, %v1292, %v1396
      %v1461 = vsel %vm1429, %v1293, %v1397
      %v1462 = vsel %vm1430, %v1294, %v1398
      %v1463 = vsel %vm1431, %v1295, %v1399
      %v1464 = vsel %vm1432, %v1296, %v1400
      %v1465 = vsel %vm1433, %v1297, %v1401
      %v1466 = vsel %vm1434, %v1298, %v1402
      %v1467 = vsel %vm1435, %v1299, %v1403
      %v1468 = vsel %vm1436, %v1300, %v1404
      %v1469 = vsel %vm1437, %v1301, %v1405
      %v1470 = vsel %vm1438, %v1302, %v1406
      %v1471 = vsel %vm1439, %v1303, %v1407
      %v1472 = vsel %vm1440, %v1304, %v1408
      %v1473 = vsel %vm1441, %v1305, %v1409
      %v1474 = vsel %vm1442, %v1306, %v1410
      %v1475 = vsel %vm1443, %v1307, %v1411
      %v1476 = vsel %vm1444, %v1308, %v1412
      %v1477 = vsel %vm1445, %v1309, %v1413
      %v1478 = vsel %vm1446, %v1310, %v1414
      %v1479 = vsel %vm1447, %v1311, %v1415
      %v1480 = vsel %vm1448, %v1312, %v1416
      %v1481 = vsel %vm1449, %v1313, %v1417
      %v1482 = vsel %vm1450, %v1314, %v1418
      %v1483 = vsel %vm1451, %v1315, %v1419
      %v1484 = vsel %vm1452, %v1316, %v1420
      %v1485 = vmul.f32 %v1453, %v459
      %v1486 = vmul.f32 %v1454, %v460
      %v1487 = vmul.f32 %v1455, %v461
      %v1488 = vmul.f32 %v1456, %v462
      %v1489 = vmul.f32 %v1457, %v463
      %v1490 = vmul.f32 %v1458, %v464
      %v1491 = vmul.f32 %v1459, %v465
      %v1492 = vmul.f32 %v1460, %v466
      %v1493 = vmul.f32 %v1461, %v467
      %v1494 = vmul.f32 %v1462, %v468
      %v1495 = vmul.f32 %v1463, %v469
      %v1496 = vmul.f32 %v1464, %v470
      %v1497 = vmul.f32 %v1465, %v471
      %v1498 = vmul.f32 %v1466, %v472
      %v1499 = vmul.f32 %v1467, %v473
      %v1500 = vmul.f32 %v1468, %v474
      %v1501 = vmul.f32 %v1469, %v475
      %v1502 = vmul.f32 %v1470, %v476
      %v1503 = vmul.f32 %v1471, %v477
      %v1504 = vmul.f32 %v1472, %v478
      %v1505 = vmul.f32 %v1473, %v479
      %v1506 = vmul.f32 %v1474, %v480
      %v1507 = vmul.f32 %v1475, %v481
      %v1508 = vmul.f32 %v1476, %v482
      %v1509 = vmul.f32 %v1477, %v483
      %v1510 = vmul.f32 %v1478, %v484
      %v1511 = vmul.f32 %v1479, %v485
      %v1512 = vmul.f32 %v1480, %v486
      %v1513 = vmul.f32 %v1481, %v487
      %v1514 = vmul.f32 %v1482, %v488
      %v1515 = vmul.f32 %v1483, %v489
      %v1516 = vmul.f32 %v1484, %v490
      %s1517 = scalar_lea.vmem [#allocation2], 128
      %v1518 = vld [vmem:[%s1517] sm:$0xff]
      %v1519 = vld [vmem:[%s1517 + $0x8] sm:$0xff]
      %v1520 = vld [vmem:[%s1517 + $0x10] sm:$0xff]
      %v1521 = vld [vmem:[%s1517 + $0x18] sm:$0xff]
      %v1522 = vld [vmem:[%s1517 + $0x20] sm:$0xff]
      %v1523 = vld [vmem:[%s1517 + $0x28] sm:$0xff]
      %v1524 = vld [vmem:[%s1517 + $0x30] sm:$0xff]
      %v1525 = vld [vmem:[%s1517 + $0x38] sm:$0xff]
      %v1526 = vld [vmem:[%s1517 + $0x40] sm:$0xff]
      %v1527 = vld [vmem:[%s1517 + $0x48] sm:$0xff]
      %v1528 = vld [vmem:[%s1517 + $0x50] sm:$0xff]
      %v1529 = vld [vmem:[%s1517 + $0x58] sm:$0xff]
      %v1530 = vld [vmem:[%s1517 + $0x60] sm:$0xff]
      %v1531 = vld [vmem:[%s1517 + $0x68] sm:$0xff]
      %v1532 = vld [vmem:[%s1517 + $0x70] sm:$0xff]
      %v1533 = vld [vmem:[%s1517 + $0x78] sm:$0xff]
      %1566 = vrot.lane.b32.xlu0 %v387, 111
      %v1567 = vpop.permute.xlu0 %1566
      %1568 = vrot.lane.b32.xlu0 %v388, 111
      %v1569 = vpop.permute.xlu0 %1568
      %1570 = vrot.lane.b32.xlu0 %v389, 111
      %v1571 = vpop.permute.xlu0 %1570
      %1572 = vrot.lane.b32.xlu0 %v390, 111
      %v1573 = vpop.permute.xlu0 %1572
      %1574 = vrot.lane.b32.xlu0 %v391, 111
      %v1575 = vpop.permute.xlu0 %1574
      %1576 = vrot.lane.b32.xlu0 %v392, 111
      %v1577 = vpop.permute.xlu0 %1576
      %1578 = vrot.lane.b32.xlu0 %v393, 111
      %v1579 = vpop.permute.xlu0 %1578
      %1580 = vrot.lane.b32.xlu0 %v394, 111
      %v1581 = vpop.permute.xlu0 %1580
      %1582 = vrot.lane.b32.xlu0 %v395, 111
      %v1583 = vpop.permute.xlu0 %1582
      %1584 = vrot.lane.b32.xlu0 %v396, 111
      %v1585 = vpop.permute.xlu0 %1584
      %1586 = vrot.lane.b32.xlu0 %v397, 111
      %v1587 = vpop.permute.xlu0 %1586
      %1588 = vrot.lane.b32.xlu0 %v398, 111
      %v1589 = vpop.permute.xlu0 %1588
      %1590 = vrot.lane.b32.xlu0 %v399, 111
      %v1591 = vpop.permute.xlu0 %1590
      %1592 = vrot.lane.b32.xlu0 %v400, 111
      %v1593 = vpop.permute.xlu0 %1592
      %1594 = vrot.lane.b32.xlu0 %v401, 111
      %v1595 = vpop.permute.xlu0 %1594
      %1596 = vrot.lane.b32.xlu0 %v402, 111
      %v1597 = vpop.permute.xlu0 %1596
      %1598 = vrot.lane.b32.xlu0 %v403, 111
      %v1599 = vpop.permute.xlu0 %1598
      %1600 = vrot.lane.b32.xlu0 %v404, 111
      %v1601 = vpop.permute.xlu0 %1600
      %1602 = vrot.lane.b32.xlu0 %v405, 111
      %v1603 = vpop.permute.xlu0 %1602
      %1604 = vrot.lane.b32.xlu0 %v406, 111
      %v1605 = vpop.permute.xlu0 %1604
      %1606 = vrot.lane.b32.xlu0 %v407, 111
      %v1607 = vpop.permute.xlu0 %1606
      %1608 = vrot.lane.b32.xlu0 %v408, 111
      %v1609 = vpop.permute.xlu0 %1608
      %1610 = vrot.lane.b32.xlu0 %v409, 111
      %v1611 = vpop.permute.xlu0 %1610
      %1612 = vrot.lane.b32.xlu0 %v410, 111
      %v1613 = vpop.permute.xlu0 %1612
      %1614 = vrot.lane.b32.xlu0 %v411, 111
      %v1615 = vpop.permute.xlu0 %1614
      %1616 = vrot.lane.b32.xlu0 %v412, 111
      %v1617 = vpop.permute.xlu0 %1616
      %1618 = vrot.lane.b32.xlu0 %v413, 111
      %v1619 = vpop.permute.xlu0 %1618
      %1620 = vrot.lane.b32.xlu0 %v414, 111
      %v1621 = vpop.permute.xlu0 %1620
      %1622 = vrot.lane.b32.xlu0 %v415, 111
      %v1623 = vpop.permute.xlu0 %1622
      %1624 = vrot.lane.b32.xlu0 %v416, 111
      %v1625 = vpop.permute.xlu0 %1624
      %1626 = vrot.lane.b32.xlu0 %v417, 111
      %v1627 = vpop.permute.xlu0 %1626
      %1628 = vrot.lane.b32.xlu0 %v418, 111
      %v1629 = vpop.permute.xlu0 %1628
      %1662 = vmatprep.subr.mxu0 0.0
      %1663 = vmatpush1.msra.mxu0 %v1597
      %1664 = vmatprep.subr.mxu0 0.0
      %1665 = vmatpush1.msra.mxu0 %v1595
      %1666 = vmatprep.subr.mxu0 0.0
      %1667 = vmatpush1.msra.mxu0 %v1593
      %1668 = vmatprep.subr.mxu0 0.0
      %1669 = vmatpush1.msra.mxu0 %v1591
      %1670 = vmatprep.subr.mxu0 0.0
      %1671 = vmatpush1.msra.mxu0 %v1589
      %1672 = vmatprep.subr.mxu0 0.0
      %1673 = vmatpush1.msra.mxu0 %v1587
      %1674 = vmatprep.subr.mxu0 0.0
      %1675 = vmatpush1.msra.mxu0 %v1585
      %1676 = vmatprep.subr.mxu0 0.0
      %1677 = vmatpush1.msra.mxu0 %v1583
      %1678 = vmatprep.subr.mxu0 0.0
      %1679 = vmatpush1.msra.mxu0 %v1581
      %1680 = vmatprep.subr.mxu0 0.0
      %1681 = vmatpush1.msra.mxu0 %v1579
      %1682 = vmatprep.subr.mxu0 0.0
      %1683 = vmatpush1.msra.mxu0 %v1577
      %1684 = vmatprep.subr.mxu0 0.0
      %1685 = vmatpush1.msra.mxu0 %v1575
      %1686 = vmatprep.subr.mxu0 0.0
      %1687 = vmatpush1.msra.mxu0 %v1573
      %1688 = vmatprep.subr.mxu0 0.0
      %1689 = vmatpush1.msra.mxu0 %v1571
      %1690 = vmatprep.subr.mxu0 0.0
      %1691 = vmatpush1.msra.mxu0 %v1569
      %1692 = vmatprep.subr.mxu0 0.0
      %1693 = vmatpush1.msra.mxu0 %v1567
      %1694 = vmatprep.subr.mxu0 0.0
      %1695 = vmatpush2.msra.mxu0 %v1629
      %1696 = vmatprep.subr.mxu0 0.0
      %1697 = vmatpush2.msra.mxu0 %v1627
      %1698 = vmatprep.subr.mxu0 0.0
      %1699 = vmatpush2.msra.mxu0 %v1625
      %1700 = vmatprep.subr.mxu0 0.0
      %1701 = vmatpush2.msra.mxu0 %v1623
      %1702 = vmatprep.subr.mxu0 0.0
      %1703 = vmatpush2.msra.mxu0 %v1621
      %1704 = vmatprep.subr.mxu0 0.0
      %1705 = vmatpush2.msra.mxu0 %v1619
      %1706 = vmatprep.subr.mxu0 0.0
      %1707 = vmatpush2.msra.mxu0 %v1617
      %1708 = vmatprep.subr.mxu0 0.0
      %1709 = vmatpush2.msra.mxu0 %v1615
      %1710 = vmatprep.subr.mxu0 0.0
      %1711 = vmatpush2.msra.mxu0 %v1613
      %1712 = vmatprep.subr.mxu0 0.0
      %1713 = vmatpush2.msra.mxu0 %v1611
      %1714 = vmatprep.subr.mxu0 0.0
      %1715 = vmatpush2.msra.mxu0 %v1609
      %1716 = vmatprep.subr.mxu0 0.0
      %1717 = vmatpush2.msra.mxu0 %v1607
      %1718 = vmatprep.subr.mxu0 0.0
      %1719 = vmatpush2.msra.mxu0 %v1605
      %1720 = vmatprep.subr.mxu0 0.0
      %1721 = vmatpush2.msra.mxu0 %v1603
      %1722 = vmatprep.subr.mxu0 0.0
      %1723 = vmatpush2.msra.mxu0 %v1601
      %1724 = vmatprep.subr.mxu0 0.0
      %1725 = vmatpush2.msra.mxu0 %v1599
      %1726 = vmatprep.mubr.f32.mxu0 %v1486
      %1727 = vmatmul.mubr.f32.gmra.mxu0 %v1485
      %v1728 = vpop.f32.mrf.mxu0
      %v1729 = vadd.f32 0.0, %v1728
      %v1730 = vpop.f32.mrf.mxu0
      %1731 = vmatprep.mubr.f32.mxu0 %v1488
      %1732 = vmatmul.mubr.f32.gmra.mxu0 %v1487
      %v1733 = vpop.f32.mrf.mxu0
      %v1734 = vadd.f32 0.0, %v1733
      %v1735 = vpop.f32.mrf.mxu0
      %1736 = vmatprep.mubr.f32.mxu0 %v1490
      %1737 = vmatmul.mubr.f32.gmra.mxu0 %v1489
      %v1738 = vpop.f32.mrf.mxu0
      %v1739 = vadd.f32 0.0, %v1738
      %v1740 = vpop.f32.mrf.mxu0
      %1741 = vmatprep.mubr.f32.mxu0 %v1492
      %1742 = vmatmul.mubr.f32.gmra.mxu0 %v1491
      %v1743 = vpop.f32.mrf.mxu0
      %v1744 = vadd.f32 0.0, %v1743
      %v1745 = vpop.f32.mrf.mxu0
      %1746 = vmatprep.mubr.f32.mxu0 %v1494
      %1747 = vmatmul.mubr.f32.gmra.mxu0 %v1493
      %v1748 = vpop.f32.mrf.mxu0
      %v1749 = vadd.f32 0.0, %v1748
      %v1750 = vpop.f32.mrf.mxu0
      %1751 = vmatprep.mubr.f32.mxu0 %v1496
      %1752 = vmatmul.mubr.f32.gmra.mxu0 %v1495
      %v1753 = vpop.f32.mrf.mxu0
      %v1754 = vadd.f32 0.0, %v1753
      %v1755 = vpop.f32.mrf.mxu0
      %1756 = vmatprep.mubr.f32.mxu0 %v1498
      %1757 = vmatmul.mubr.f32.gmra.mxu0 %v1497
      %v1758 = vpop.f32.mrf.mxu0
      %v1759 = vadd.f32 0.0, %v1758
      %v1760 = vpop.f32.mrf.mxu0
      %1761 = vmatprep.mubr.f32.mxu0 %v1500
      %1762 = vmatmul.mubr.f32.gmra.mxu0 %v1499
      %v1763 = vpop.f32.mrf.mxu0
      %v1764 = vadd.f32 0.0, %v1763
      %v1765 = vpop.f32.mrf.mxu0
      %1766 = vmatprep.mubr.f32.mxu0 %v1502
      %1767 = vmatmul.mubr.f32.gmra.mxu0 %v1501
      %v1768 = vpop.f32.mrf.mxu0
      %v1769 = vadd.f32 0.0, %v1768
      %v1770 = vpop.f32.mrf.mxu0
      %1771 = vmatprep.mubr.f32.mxu0 %v1504
      %1772 = vmatmul.mubr.f32.gmra.mxu0 %v1503
      %v1773 = vpop.f32.mrf.mxu0
      %v1774 = vadd.f32 0.0, %v1773
      %v1775 = vpop.f32.mrf.mxu0
      %1776 = vmatprep.mubr.f32.mxu0 %v1506
      %1777 = vmatmul.mubr.f32.gmra.mxu0 %v1505
      %v1778 = vpop.f32.mrf.mxu0
      %v1779 = vadd.f32 0.0, %v1778
      %v1780 = vpop.f32.mrf.mxu0
      %1781 = vmatprep.mubr.f32.mxu0 %v1508
      %1782 = vmatmul.mubr.f32.gmra.mxu0 %v1507
      %v1783 = vpop.f32.mrf.mxu0
      %v1784 = vadd.f32 0.0, %v1783
      %v1785 = vpop.f32.mrf.mxu0
      %1786 = vmatprep.mubr.f32.mxu0 %v1510
      %1787 = vmatmul.mubr.f32.gmra.mxu0 %v1509
      %v1788 = vpop.f32.mrf.mxu0
      %v1789 = vadd.f32 0.0, %v1788
      %v1790 = vpop.f32.mrf.mxu0
      %1791 = vmatprep.mubr.f32.mxu0 %v1512
      %1792 = vmatmul.mubr.f32.gmra.mxu0 %v1511
      %v1793 = vpop.f32.mrf.mxu0
      %v1794 = vadd.f32 0.0, %v1793
      %v1795 = vpop.f32.mrf.mxu0
      %1796 = vmatprep.mubr.f32.mxu0 %v1514
      %1797 = vmatmul.mubr.f32.gmra.mxu0 %v1513
      %v1798 = vpop.f32.mrf.mxu0
      %v1799 = vadd.f32 0.0, %v1798
      %v1800 = vpop.f32.mrf.mxu0
      %1801 = vmatprep.mubr.f32.mxu0 %v1516
      %1802 = vmatmul.mubr.f32.gmra.mxu0 %v1515
      %v1803 = vpop.f32.mrf.mxu0
      %v1804 = vadd.f32 0.0, %v1803
      %v1805 = vpop.f32.mrf.mxu0
      %1806 = vdwg.mxu0
      %v1807 = vadd.f32 %v1518, %v1729
      %v1808 = vadd.f32 %v1519, %v1734
      %v1809 = vadd.f32 %v1520, %v1739
      %v1810 = vadd.f32 %v1521, %v1744
      %v1811 = vadd.f32 %v1522, %v1749
      %v1812 = vadd.f32 %v1523, %v1754
      %v1813 = vadd.f32 %v1524, %v1759
      %v1814 = vadd.f32 %v1525, %v1764
      %v1815 = vadd.f32 %v1526, %v1769
      %v1816 = vadd.f32 %v1527, %v1774
      %v1817 = vadd.f32 %v1528, %v1779
      %v1818 = vadd.f32 %v1529, %v1784
      %v1819 = vadd.f32 %v1530, %v1789
      %v1820 = vadd.f32 %v1531, %v1794
      %v1821 = vadd.f32 %v1532, %v1799
      %v1822 = vadd.f32 %v1533, %v1804
      %1823 = vst.msk [vmem:[%s1517] sm:$0xff] %vm1092, %v1807
      %1824 = vst.msk [vmem:[%s1517 + $0x8] sm:$0xff] %vm1092, %v1808
      %1825 = vst.msk [vmem:[%s1517 + $0x10] sm:$0xff] %vm1092, %v1809
      %1826 = vst.msk [vmem:[%s1517 + $0x18] sm:$0xff] %vm1092, %v1810
      %1827 = vst.msk [vmem:[%s1517 + $0x20] sm:$0xff] %vm1092, %v1811
      %1828 = vst.msk [vmem:[%s1517 + $0x28] sm:$0xff] %vm1092, %v1812
      %1829 = vst.msk [vmem:[%s1517 + $0x30] sm:$0xff] %vm1092, %v1813
      %1830 = vst.msk [vmem:[%s1517 + $0x38] sm:$0xff] %vm1092, %v1814
      %1831 = vst.msk [vmem:[%s1517 + $0x40] sm:$0xff] %vm1092, %v1815
      %1832 = vst.msk [vmem:[%s1517 + $0x48] sm:$0xff] %vm1092, %v1816
      %1833 = vst.msk [vmem:[%s1517 + $0x50] sm:$0xff] %vm1092, %v1817
      %1834 = vst.msk [vmem:[%s1517 + $0x58] sm:$0xff] %vm1092, %v1818
      %1835 = vst.msk [vmem:[%s1517 + $0x60] sm:$0xff] %vm1092, %v1819
      %1836 = vst.msk [vmem:[%s1517 + $0x68] sm:$0xff] %vm1092, %v1820
      %1837 = vst.msk [vmem:[%s1517 + $0x70] sm:$0xff] %vm1092, %v1821
      %1838 = vst.msk [vmem:[%s1517 + $0x78] sm:$0xff] %vm1092, %v1822
      %1839 = vset.pattern.permute.xlu0 2
      %1840 = vperm.xlu0 %1839, %v367
      %v1841 = vpop.permute.xlu0 %1840
      %1843 = vset.pattern.permute.xlu0 2
      %1844 = vperm.xlu0 %1843, %v368
      %v1845 = vpop.permute.xlu0 %1844
      %1847 = vset.pattern.permute.xlu0 2
      %1848 = vperm.xlu0 %1847, %v369
      %v1849 = vpop.permute.xlu0 %1848
      %1851 = vset.pattern.permute.xlu0 2
      %1852 = vperm.xlu0 %1851, %v370
      %v1853 = vpop.permute.xlu0 %1852
      %1855 = vset.pattern.permute.xlu0 2
      %1856 = vperm.xlu0 %1855, %v371
      %v1857 = vpop.permute.xlu0 %1856
      %1859 = vset.pattern.permute.xlu0 2
      %1860 = vperm.xlu0 %1859, %v372
      %v1861 = vpop.permute.xlu0 %1860
      %1863 = vset.pattern.permute.xlu0 2
      %1864 = vperm.xlu0 %1863, %v373
      %v1865 = vpop.permute.xlu0 %1864
      %1867 = vset.pattern.permute.xlu0 2
      %1868 = vperm.xlu0 %1867, %v374
      %v1869 = vpop.permute.xlu0 %1868
      %1871 = vset.pattern.permute.xlu0 2
      %1872 = vperm.xlu0 %1871, %v375
      %v1873 = vpop.permute.xlu0 %1872
      %1875 = vset.pattern.permute.xlu0 2
      %1876 = vperm.xlu0 %1875, %v376
      %v1877 = vpop.permute.xlu0 %1876
      %1879 = vset.pattern.permute.xlu0 2
      %1880 = vperm.xlu0 %1879, %v377
      %v1881 = vpop.permute.xlu0 %1880
      %1883 = vset.pattern.permute.xlu0 2
      %1884 = vperm.xlu0 %1883, %v378
      %v1885 = vpop.permute.xlu0 %1884
      %1887 = vset.pattern.permute.xlu0 2
      %1888 = vperm.xlu0 %1887, %v379
      %v1889 = vpop.permute.xlu0 %1888
      %1891 = vset.pattern.permute.xlu0 2
      %1892 = vperm.xlu0 %1891, %v380
      %v1893 = vpop.permute.xlu0 %1892
      %1895 = vset.pattern.permute.xlu0 2
      %1896 = vperm.xlu0 %1895, %v381
      %v1897 = vpop.permute.xlu0 %1896
      %1899 = vset.pattern.permute.xlu0 2
      %1900 = vperm.xlu0 %1899, %v382
      %v1901 = vpop.permute.xlu0 %1900
      %v1903 = vlaneseq
      %v1904 = vshrl.u32 %v1903, 7
      %v1905 = vsub.s32 2, %v1904
      %v1906 = vrot.slane %v383, %v1905
      %v1907 = vlaneseq
      %v1908 = vshrl.u32 %v1907, 7
      %v1909 = vsub.s32 2, %v1908
      %v1910 = vrot.slane %v384, %v1909
      %v1911 = vadd.f32 %v1841, %v1906
      %v1912 = vadd.f32 %v1841, %v1910
      %v1913 = vadd.f32 %v1845, %v1906
      %v1914 = vadd.f32 %v1845, %v1910
      %v1915 = vadd.f32 %v1849, %v1906
      %v1916 = vadd.f32 %v1849, %v1910
      %v1917 = vadd.f32 %v1853, %v1906
      %v1918 = vadd.f32 %v1853, %v1910
      %v1919 = vadd.f32 %v1857, %v1906
      %v1920 = vadd.f32 %v1857, %v1910
      %v1921 = vadd.f32 %v1861, %v1906
      %v1922 = vadd.f32 %v1861, %v1910
      %v1923 = vadd.f32 %v1865, %v1906
      %v1924 = vadd.f32 %v1865, %v1910
      %v1925 = vadd.f32 %v1869, %v1906
      %v1926 = vadd.f32 %v1869, %v1910
      %v1927 = vadd.f32 %v1873, %v1906
      %v1928 = vadd.f32 %v1873, %v1910
      %v1929 = vadd.f32 %v1877, %v1906
      %v1930 = vadd.f32 %v1877, %v1910
      %v1931 = vadd.f32 %v1881, %v1906
      %v1932 = vadd.f32 %v1881, %v1910
      %v1933 = vadd.f32 %v1885, %v1906
      %v1934 = vadd.f32 %v1885, %v1910
      %v1935 = vadd.f32 %v1889, %v1906
      %v1936 = vadd.f32 %v1889, %v1910
      %v1937 = vadd.f32 %v1893, %v1906
      %v1938 = vadd.f32 %v1893, %v1910
      %v1939 = vadd.f32 %v1897, %v1906
      %v1940 = vadd.f32 %v1897, %v1910
      %v1941 = vadd.f32 %v1901, %v1906
      %v1942 = vadd.f32 %v1901, %v1910
      %1943 = vset.pattern.permute.xlu0 6
      %1944 = vperm.xlu0 %1943, %v367
      %v1945 = vpop.permute.xlu0 %1944
      %1947 = vset.pattern.permute.xlu0 6
      %1948 = vperm.xlu0 %1947, %v368
      %v1949 = vpop.permute.xlu0 %1948
      %1951 = vset.pattern.permute.xlu0 6
      %1952 = vperm.xlu0 %1951, %v369
      %v1953 = vpop.permute.xlu0 %1952
      %1955 = vset.pattern.permute.xlu0 6
      %1956 = vperm.xlu0 %1955, %v370
      %v1957 = vpop.permute.xlu0 %1956
      %1959 = vset.pattern.permute.xlu0 6
      %1960 = vperm.xlu0 %1959, %v371
      %v1961 = vpop.permute.xlu0 %1960
      %1963 = vset.pattern.permute.xlu0 6
      %1964 = vperm.xlu0 %1963, %v372
      %v1965 = vpop.permute.xlu0 %1964
      %1967 = vset.pattern.permute.xlu0 6
      %1968 = vperm.xlu0 %1967, %v373
      %v1969 = vpop.permute.xlu0 %1968
      %1971 = vset.pattern.permute.xlu0 6
      %1972 = vperm.xlu0 %1971, %v374
      %v1973 = vpop.permute.xlu0 %1972
      %1975 = vset.pattern.permute.xlu0 6
      %1976 = vperm.xlu0 %1975, %v375
      %v1977 = vpop.permute.xlu0 %1976
      %1979 = vset.pattern.permute.xlu0 6
      %1980 = vperm.xlu0 %1979, %v376
      %v1981 = vpop.permute.xlu0 %1980
      %1983 = vset.pattern.permute.xlu0 6
      %1984 = vperm.xlu0 %1983, %v377
      %v1985 = vpop.permute.xlu0 %1984
      %1987 = vset.pattern.permute.xlu0 6
      %1988 = vperm.xlu0 %1987, %v378
      %v1989 = vpop.permute.xlu0 %1988
      %1991 = vset.pattern.permute.xlu0 6
      %1992 = vperm.xlu0 %1991, %v379
      %v1993 = vpop.permute.xlu0 %1992
      %1995 = vset.pattern.permute.xlu0 6
      %1996 = vperm.xlu0 %1995, %v380
      %v1997 = vpop.permute.xlu0 %1996
      %1999 = vset.pattern.permute.xlu0 6
      %2000 = vperm.xlu0 %1999, %v381
      %v2001 = vpop.permute.xlu0 %2000
      %2003 = vset.pattern.permute.xlu0 6
      %2004 = vperm.xlu0 %2003, %v382
      %v2005 = vpop.permute.xlu0 %2004
      %v2007 = vlaneseq
      %v2008 = vshrl.u32 %v2007, 7
      %v2009 = vsub.s32 6, %v2008
      %v2010 = vrot.slane %v383, %v2009
      %v2011 = vlaneseq
      %v2012 = vshrl.u32 %v2011, 7
      %v2013 = vsub.s32 6, %v2012
      %v2014 = vrot.slane %v384, %v2013
      %v2015 = vmul.f32 %v1945, %v2010
      %v2016 = vmul.f32 %v1945, %v2014
      %v2017 = vmul.f32 %v1949, %v2010
      %v2018 = vmul.f32 %v1949, %v2014
      %v2019 = vmul.f32 %v1953, %v2010
      %v2020 = vmul.f32 %v1953, %v2014
      %v2021 = vmul.f32 %v1957, %v2010
      %v2022 = vmul.f32 %v1957, %v2014
      %v2023 = vmul.f32 %v1961, %v2010
      %v2024 = vmul.f32 %v1961, %v2014
      %v2025 = vmul.f32 %v1965, %v2010
      %v2026 = vmul.f32 %v1965, %v2014
      %v2027 = vmul.f32 %v1969, %v2010
      %v2028 = vmul.f32 %v1969, %v2014
      %v2029 = vmul.f32 %v1973, %v2010
      %v2030 = vmul.f32 %v1973, %v2014
      %v2031 = vmul.f32 %v1977, %v2010
      %v2032 = vmul.f32 %v1977, %v2014
      %v2033 = vmul.f32 %v1981, %v2010
      %v2034 = vmul.f32 %v1981, %v2014
      %v2035 = vmul.f32 %v1985, %v2010
      %v2036 = vmul.f32 %v1985, %v2014
      %v2037 = vmul.f32 %v1989, %v2010
      %v2038 = vmul.f32 %v1989, %v2014
      %v2039 = vmul.f32 %v1993, %v2010
      %v2040 = vmul.f32 %v1993, %v2014
      %v2041 = vmul.f32 %v1997, %v2010
      %v2042 = vmul.f32 %v1997, %v2014
      %v2043 = vmul.f32 %v2001, %v2010
      %v2044 = vmul.f32 %v2001, %v2014
      %v2045 = vmul.f32 %v2005, %v2010
      %v2046 = vmul.f32 %v2005, %v2014
      %2047 = vset.pattern.permute.xlu0 10
      %2048 = vperm.xlu0 %2047, %v367
      %v2049 = vpop.permute.xlu0 %2048
      %2051 = vset.pattern.permute.xlu0 10
      %2052 = vperm.xlu0 %2051, %v368
      %v2053 = vpop.permute.xlu0 %2052
      %2055 = vset.pattern.permute.xlu0 10
      %2056 = vperm.xlu0 %2055, %v369
      %v2057 = vpop.permute.xlu0 %2056
      %2059 = vset.pattern.permute.xlu0 10
      %2060 = vperm.xlu0 %2059, %v370
      %v2061 = vpop.permute.xlu0 %2060
      %2063 = vset.pattern.permute.xlu0 10
      %2064 = vperm.xlu0 %2063, %v371
      %v2065 = vpop.permute.xlu0 %2064
      %2067 = vset.pattern.permute.xlu0 10
      %2068 = vperm.xlu0 %2067, %v372
      %v2069 = vpop.permute.xlu0 %2068
      %2071 = vset.pattern.permute.xlu0 10
      %2072 = vperm.xlu0 %2071, %v373
      %v2073 = vpop.permute.xlu0 %2072
      %2075 = vset.pattern.permute.xlu0 10
      %2076 = vperm.xlu0 %2075, %v374
      %v2077 = vpop.permute.xlu0 %2076
      %2079 = vset.pattern.permute.xlu0 10
      %2080 = vperm.xlu0 %2079, %v375
      %v2081 = vpop.permute.xlu0 %2080
      %2083 = vset.pattern.permute.xlu0 10
      %2084 = vperm.xlu0 %2083, %v376
      %v2085 = vpop.permute.xlu0 %2084
      %2087 = vset.pattern.permute.xlu0 10
      %2088 = vperm.xlu0 %2087, %v377
      %v2089 = vpop.permute.xlu0 %2088
      %2091 = vset.pattern.permute.xlu0 10
      %2092 = vperm.xlu0 %2091, %v378
      %v2093 = vpop.permute.xlu0 %2092
      %2095 = vset.pattern.permute.xlu0 10
      %2096 = vperm.xlu0 %2095, %v379
      %v2097 = vpop.permute.xlu0 %2096
      %2099 = vset.pattern.permute.xlu0 10
      %2100 = vperm.xlu0 %2099, %v380
      %v2101 = vpop.permute.xlu0 %2100
      %2103 = vset.pattern.permute.xlu0 10
      %2104 = vperm.xlu0 %2103, %v381
      %v2105 = vpop.permute.xlu0 %2104
      %2107 = vset.pattern.permute.xlu0 10
      %2108 = vperm.xlu0 %2107, %v382
      %v2109 = vpop.permute.xlu0 %2108
      %v2111 = vlaneseq
      %v2112 = vshrl.u32 %v2111, 7
      %v2113 = vsub.s32 2, %v2112
      %v2114 = vrot.slane %v385, %v2113
      %v2115 = vlaneseq
      %v2116 = vshrl.u32 %v2115, 7
      %v2117 = vsub.s32 2, %v2116
      %v2118 = vrot.slane %v386, %v2117
      %v2119 = vmul.f32 %v2049, %v2114
      %v2120 = vmul.f32 %v2049, %v2118
      %v2121 = vmul.f32 %v2053, %v2114
      %v2122 = vmul.f32 %v2053, %v2118
      %v2123 = vmul.f32 %v2057, %v2114
      %v2124 = vmul.f32 %v2057, %v2118
      %v2125 = vmul.f32 %v2061, %v2114
      %v2126 = vmul.f32 %v2061, %v2118
      %v2127 = vmul.f32 %v2065, %v2114
      %v2128 = vmul.f32 %v2065, %v2118
      %v2129 = vmul.f32 %v2069, %v2114
      %v2130 = vmul.f32 %v2069, %v2118
      %v2131 = vmul.f32 %v2073, %v2114
      %v2132 = vmul.f32 %v2073, %v2118
      %v2133 = vmul.f32 %v2077, %v2114
      %v2134 = vmul.f32 %v2077, %v2118
      %v2135 = vmul.f32 %v2081, %v2114
      %v2136 = vmul.f32 %v2081, %v2118
      %v2137 = vmul.f32 %v2085, %v2114
      %v2138 = vmul.f32 %v2085, %v2118
      %v2139 = vmul.f32 %v2089, %v2114
      %v2140 = vmul.f32 %v2089, %v2118
      %v2141 = vmul.f32 %v2093, %v2114
      %v2142 = vmul.f32 %v2093, %v2118
      %v2143 = vmul.f32 %v2097, %v2114
      %v2144 = vmul.f32 %v2097, %v2118
      %v2145 = vmul.f32 %v2101, %v2114
      %v2146 = vmul.f32 %v2101, %v2118
      %v2147 = vmul.f32 %v2105, %v2114
      %v2148 = vmul.f32 %v2105, %v2118
      %v2149 = vmul.f32 %v2109, %v2114
      %v2150 = vmul.f32 %v2109, %v2118
      %vm2151 = vcmp.gt.f32.partialorder %v1911, 0.0
      %vm2152 = vcmp.gt.f32.partialorder %v1912, 0.0
      %vm2153 = vcmp.gt.f32.partialorder %v1913, 0.0
      %vm2154 = vcmp.gt.f32.partialorder %v1914, 0.0
      %vm2155 = vcmp.gt.f32.partialorder %v1915, 0.0
      %vm2156 = vcmp.gt.f32.partialorder %v1916, 0.0
      %vm2157 = vcmp.gt.f32.partialorder %v1917, 0.0
      %vm2158 = vcmp.gt.f32.partialorder %v1918, 0.0
      %vm2159 = vcmp.gt.f32.partialorder %v1919, 0.0
      %vm2160 = vcmp.gt.f32.partialorder %v1920, 0.0
      %vm2161 = vcmp.gt.f32.partialorder %v1921, 0.0
      %vm2162 = vcmp.gt.f32.partialorder %v1922, 0.0
      %vm2163 = vcmp.gt.f32.partialorder %v1923, 0.0
      %vm2164 = vcmp.gt.f32.partialorder %v1924, 0.0
      %vm2165 = vcmp.gt.f32.partialorder %v1925, 0.0
      %vm2166 = vcmp.gt.f32.partialorder %v1926, 0.0
      %vm2167 = vcmp.gt.f32.partialorder %v1927, 0.0
      %vm2168 = vcmp.gt.f32.partialorder %v1928, 0.0
      %vm2169 = vcmp.gt.f32.partialorder %v1929, 0.0
      %vm2170 = vcmp.gt.f32.partialorder %v1930, 0.0
      %vm2171 = vcmp.gt.f32.partialorder %v1931, 0.0
      %vm2172 = vcmp.gt.f32.partialorder %v1932, 0.0
      %vm2173 = vcmp.gt.f32.partialorder %v1933, 0.0
      %vm2174 = vcmp.gt.f32.partialorder %v1934, 0.0
      %vm2175 = vcmp.gt.f32.partialorder %v1935, 0.0
      %vm2176 = vcmp.gt.f32.partialorder %v1936, 0.0
      %vm2177 = vcmp.gt.f32.partialorder %v1937, 0.0
      %vm2178 = vcmp.gt.f32.partialorder %v1938, 0.0
      %vm2179 = vcmp.gt.f32.partialorder %v1939, 0.0
      %vm2180 = vcmp.gt.f32.partialorder %v1940, 0.0
      %vm2181 = vcmp.gt.f32.partialorder %v1941, 0.0
      %vm2182 = vcmp.gt.f32.partialorder %v1942, 0.0
      %v2183 = vsel %vm2151, %v2015, %v2119
      %v2184 = vsel %vm2152, %v2016, %v2120
      %v2185 = vsel %vm2153, %v2017, %v2121
      %v2186 = vsel %vm2154, %v2018, %v2122
      %v2187 = vsel %vm2155, %v2019, %v2123
      %v2188 = vsel %vm2156, %v2020, %v2124
      %v2189 = vsel %vm2157, %v2021, %v2125
      %v2190 = vsel %vm2158, %v2022, %v2126
      %v2191 = vsel %vm2159, %v2023, %v2127
      %v2192 = vsel %vm2160, %v2024, %v2128
      %v2193 = vsel %vm2161, %v2025, %v2129
      %v2194 = vsel %vm2162, %v2026, %v2130
      %v2195 = vsel %vm2163, %v2027, %v2131
      %v2196 = vsel %vm2164, %v2028, %v2132
      %v2197 = vsel %vm2165, %v2029, %v2133
      %v2198 = vsel %vm2166, %v2030, %v2134
      %v2199 = vsel %vm2167, %v2031, %v2135
      %v2200 = vsel %vm2168, %v2032, %v2136
      %v2201 = vsel %vm2169, %v2033, %v2137
      %v2202 = vsel %vm2170, %v2034, %v2138
      %v2203 = vsel %vm2171, %v2035, %v2139
      %v2204 = vsel %vm2172, %v2036, %v2140
      %v2205 = vsel %vm2173, %v2037, %v2141
      %v2206 = vsel %vm2174, %v2038, %v2142
      %v2207 = vsel %vm2175, %v2039, %v2143
      %v2208 = vsel %vm2176, %v2040, %v2144
      %v2209 = vsel %vm2177, %v2041, %v2145
      %v2210 = vsel %vm2178, %v2042, %v2146
      %v2211 = vsel %vm2179, %v2043, %v2147
      %v2212 = vsel %vm2180, %v2044, %v2148
      %v2213 = vsel %vm2181, %v2045, %v2149
      %v2214 = vsel %vm2182, %v2046, %v2150
      %v2215 = vmul.f32 %v2183, %v459
      %v2216 = vmul.f32 %v2184, %v460
      %v2217 = vmul.f32 %v2185, %v461
      %v2218 = vmul.f32 %v2186, %v462
      %v2219 = vmul.f32 %v2187, %v463
      %v2220 = vmul.f32 %v2188, %v464
      %v2221 = vmul.f32 %v2189, %v465
      %v2222 = vmul.f32 %v2190, %v466
      %v2223 = vmul.f32 %v2191, %v467
      %v2224 = vmul.f32 %v2192, %v468
      %v2225 = vmul.f32 %v2193, %v469
      %v2226 = vmul.f32 %v2194, %v470
      %v2227 = vmul.f32 %v2195, %v471
      %v2228 = vmul.f32 %v2196, %v472
      %v2229 = vmul.f32 %v2197, %v473
      %v2230 = vmul.f32 %v2198, %v474
      %v2231 = vmul.f32 %v2199, %v475
      %v2232 = vmul.f32 %v2200, %v476
      %v2233 = vmul.f32 %v2201, %v477
      %v2234 = vmul.f32 %v2202, %v478
      %v2235 = vmul.f32 %v2203, %v479
      %v2236 = vmul.f32 %v2204, %v480
      %v2237 = vmul.f32 %v2205, %v481
      %v2238 = vmul.f32 %v2206, %v482
      %v2239 = vmul.f32 %v2207, %v483
      %v2240 = vmul.f32 %v2208, %v484
      %v2241 = vmul.f32 %v2209, %v485
      %v2242 = vmul.f32 %v2210, %v486
      %v2243 = vmul.f32 %v2211, %v487
      %v2244 = vmul.f32 %v2212, %v488
      %v2245 = vmul.f32 %v2213, %v489
      %v2246 = vmul.f32 %v2214, %v490
      %s2247 = scalar_lea.vmem [#allocation2], 256
      %v2248 = vld [vmem:[%s2247] sm:$0xff]
      %v2249 = vld [vmem:[%s2247 + $0x8] sm:$0xff]
      %v2250 = vld [vmem:[%s2247 + $0x10] sm:$0xff]
      %v2251 = vld [vmem:[%s2247 + $0x18] sm:$0xff]
      %v2252 = vld [vmem:[%s2247 + $0x20] sm:$0xff]
      %v2253 = vld [vmem:[%s2247 + $0x28] sm:$0xff]
      %v2254 = vld [vmem:[%s2247 + $0x30] sm:$0xff]
      %v2255 = vld [vmem:[%s2247 + $0x38] sm:$0xff]
      %v2256 = vld [vmem:[%s2247 + $0x40] sm:$0xff]
      %v2257 = vld [vmem:[%s2247 + $0x48] sm:$0xff]
      %v2258 = vld [vmem:[%s2247 + $0x50] sm:$0xff]
      %v2259 = vld [vmem:[%s2247 + $0x58] sm:$0xff]
      %v2260 = vld [vmem:[%s2247 + $0x60] sm:$0xff]
      %v2261 = vld [vmem:[%s2247 + $0x68] sm:$0xff]
      %v2262 = vld [vmem:[%s2247 + $0x70] sm:$0xff]
      %v2263 = vld [vmem:[%s2247 + $0x78] sm:$0xff]
      %2264 = vrot.lane.b32.xlu0 %v387, 94
      %v2265 = vpop.permute.xlu0 %2264
      %2266 = vrot.lane.b32.xlu0 %v388, 94
      %v2267 = vpop.permute.xlu0 %2266
      %2268 = vrot.lane.b32.xlu0 %v389, 94
      %v2269 = vpop.permute.xlu0 %2268
      %2270 = vrot.lane.b32.xlu0 %v390, 94
      %v2271 = vpop.permute.xlu0 %2270
      %2272 = vrot.lane.b32.xlu0 %v391, 94
      %v2273 = vpop.permute.xlu0 %2272
      %2274 = vrot.lane.b32.xlu0 %v392, 94
      %v2275 = vpop.permute.xlu0 %2274
      %2276 = vrot.lane.b32.xlu0 %v393, 94
      %v2277 = vpop.permute.xlu0 %2276
      %2278 = vrot.lane.b32.xlu0 %v394, 94
      %v2279 = vpop.permute.xlu0 %2278
      %2280 = vrot.lane.b32.xlu0 %v395, 94
      %v2281 = vpop.permute.xlu0 %2280
      %2282 = vrot.lane.b32.xlu0 %v396, 94
      %v2283 = vpop.permute.xlu0 %2282
      %2284 = vrot.lane.b32.xlu0 %v397, 94
      %v2285 = vpop.permute.xlu0 %2284
      %2286 = vrot.lane.b32.xlu0 %v398, 94
      %v2287 = vpop.permute.xlu0 %2286
      %2288 = vrot.lane.b32.xlu0 %v399, 94
      %v2289 = vpop.permute.xlu0 %2288
      %2290 = vrot.lane.b32.xlu0 %v400, 94
      %v2291 = vpop.permute.xlu0 %2290
      %2292 = vrot.lane.b32.xlu0 %v401, 94
      %v2293 = vpop.permute.xlu0 %2292
      %2294 = vrot.lane.b32.xlu0 %v402, 94
      %v2295 = vpop.permute.xlu0 %2294
      %2296 = vrot.lane.b32.xlu0 %v403, 94
      %v2297 = vpop.permute.xlu0 %2296
      %2298 = vrot.lane.b32.xlu0 %v404, 94
      %v2299 = vpop.permute.xlu0 %2298
      %2300 = vrot.lane.b32.xlu0 %v405, 94
      %v2301 = vpop.permute.xlu0 %2300
      %2302 = vrot.lane.b32.xlu0 %v406, 94
      %v2303 = vpop.permute.xlu0 %2302
      %2304 = vrot.lane.b32.xlu0 %v407, 94
      %v2305 = vpop.permute.xlu0 %2304
      %2306 = vrot.lane.b32.xlu0 %v408, 94
      %v2307 = vpop.permute.xlu0 %2306
      %2308 = vrot.lane.b32.xlu0 %v409, 94
      %v2309 = vpop.permute.xlu0 %2308
      %2310 = vrot.lane.b32.xlu0 %v410, 94
      %v2311 = vpop.permute.xlu0 %2310
      %2312 = vrot.lane.b32.xlu0 %v411, 94
      %v2313 = vpop.permute.xlu0 %2312
      %2314 = vrot.lane.b32.xlu0 %v412, 94
      %v2315 = vpop.permute.xlu0 %2314
      %2316 = vrot.lane.b32.xlu0 %v413, 94
      %v2317 = vpop.permute.xlu0 %2316
      %2318 = vrot.lane.b32.xlu0 %v414, 94
      %v2319 = vpop.permute.xlu0 %2318
      %2320 = vrot.lane.b32.xlu0 %v415, 94
      %v2321 = vpop.permute.xlu0 %2320
      %2322 = vrot.lane.b32.xlu0 %v416, 94
      %v2323 = vpop.permute.xlu0 %2322
      %2324 = vrot.lane.b32.xlu0 %v417, 94
      %v2325 = vpop.permute.xlu0 %2324
      %2326 = vrot.lane.b32.xlu0 %v418, 94
      %v2327 = vpop.permute.xlu0 %2326
      %2360 = vmatprep.subr.mxu0 0.0
      %2361 = vmatpush1.msra.mxu0 %v2295
      %2362 = vmatprep.subr.mxu0 0.0
      %2363 = vmatpush1.msra.mxu0 %v2293
      %2364 = vmatprep.subr.mxu0 0.0
      %2365 = vmatpush1.msra.mxu0 %v2291
      %2366 = vmatprep.subr.mxu0 0.0
      %2367 = vmatpush1.msra.mxu0 %v2289
      %2368 = vmatprep.subr.mxu0 0.0
      %2369 = vmatpush1.msra.mxu0 %v2287
      %2370 = vmatprep.subr.mxu0 0.0
      %2371 = vmatpush1.msra.mxu0 %v2285
      %2372 = vmatprep.subr.mxu0 0.0
      %2373 = vmatpush1.msra.mxu0 %v2283
      %2374 = vmatprep.subr.mxu0 0.0
      %2375 = vmatpush1.msra.mxu0 %v2281
      %2376 = vmatprep.subr.mxu0 0.0
      %2377 = vmatpush1.msra.mxu0 %v2279
      %2378 = vmatprep.subr.mxu0 0.0
      %2379 = vmatpush1.msra.mxu0 %v2277
      %2380 = vmatprep.subr.mxu0 0.0
      %2381 = vmatpush1.msra.mxu0 %v2275
      %2382 = vmatprep.subr.mxu0 0.0
      %2383 = vmatpush1.msra.mxu0 %v2273
      %2384 = vmatprep.subr.mxu0 0.0
      %2385 = vmatpush1.msra.mxu0 %v2271
      %2386 = vmatprep.subr.mxu0 0.0
      %2387 = vmatpush1.msra.mxu0 %v2269
      %2388 = vmatprep.subr.mxu0 0.0
      %2389 = vmatpush1.msra.mxu0 %v2267
      %2390 = vmatprep.subr.mxu0 0.0
      %2391 = vmatpush1.msra.mxu0 %v2265
      %2392 = vmatprep.subr.mxu0 0.0
      %2393 = vmatpush2.msra.mxu0 %v2327
      %2394 = vmatprep.subr.mxu0 0.0
      %2395 = vmatpush2.msra.mxu0 %v2325
      %2396 = vmatprep.subr.mxu0 0.0
      %2397 = vmatpush2.msra.mxu0 %v2323
      %2398 = vmatprep.subr.mxu0 0.0
      %2399 = vmatpush2.msra.mxu0 %v2321
      %2400 = vmatprep.subr.mxu0 0.0
      %2401 = vmatpush2.msra.mxu0 %v2319
      %2402 = vmatprep.subr.mxu0 0.0
      %2403 = vmatpush2.msra.mxu0 %v2317
      %2404 = vmatprep.subr.mxu0 0.0
      %2405 = vmatpush2.msra.mxu0 %v2315
      %2406 = vmatprep.subr.mxu0 0.0
      %2407 = vmatpush2.msra.mxu0 %v2313
      %2408 = vmatprep.subr.mxu0 0.0
      %2409 = vmatpush2.msra.mxu0 %v2311
      %2410 = vmatprep.subr.mxu0 0.0
      %2411 = vmatpush2.msra.mxu0 %v2309
      %2412 = vmatprep.subr.mxu0 0.0
      %2413 = vmatpush2.msra.mxu0 %v2307
      %2414 = vmatprep.subr.mxu0 0.0
      %2415 = vmatpush2.msra.mxu0 %v2305
      %2416 = vmatprep.subr.mxu0 0.0
      %2417 = vmatpush2.msra.mxu0 %v2303
      %2418 = vmatprep.subr.mxu0 0.0
      %2419 = vmatpush2.msra.mxu0 %v2301
      %2420 = vmatprep.subr.mxu0 0.0
      %2421 = vmatpush2.msra.mxu0 %v2299
      %2422 = vmatprep.subr.mxu0 0.0
      %2423 = vmatpush2.msra.mxu0 %v2297
      %2424 = vmatprep.mubr.f32.mxu0 %v2216
      %2425 = vmatmul.mubr.f32.gmra.mxu0 %v2215
      %v2426 = vpop.f32.mrf.mxu0
      %v2427 = vadd.f32 0.0, %v2426
      %v2428 = vpop.f32.mrf.mxu0
      %2429 = vmatprep.mubr.f32.mxu0 %v2218
      %2430 = vmatmul.mubr.f32.gmra.mxu0 %v2217
      %v2431 = vpop.f32.mrf.mxu0
      %v2432 = vadd.f32 0.0, %v2431
      %v2433 = vpop.f32.mrf.mxu0
      %2434 = vmatprep.mubr.f32.mxu0 %v2220
      %2435 = vmatmul.mubr.f32.gmra.mxu0 %v2219
      %v2436 = vpop.f32.mrf.mxu0
      %v2437 = vadd.f32 0.0, %v2436
      %v2438 = vpop.f32.mrf.mxu0
      %2439 = vmatprep.mubr.f32.mxu0 %v2222
      %2440 = vmatmul.mubr.f32.gmra.mxu0 %v2221
      %v2441 = vpop.f32.mrf.mxu0
      %v2442 = vadd.f32 0.0, %v2441
      %v2443 = vpop.f32.mrf.mxu0
      %2444 = vmatprep.mubr.f32.mxu0 %v2224
      %2445 = vmatmul.mubr.f32.gmra.mxu0 %v2223
      %v2446 = vpop.f32.mrf.mxu0
      %v2447 = vadd.f32 0.0, %v2446
      %v2448 = vpop.f32.mrf.mxu0
      %2449 = vmatprep.mubr.f32.mxu0 %v2226
      %2450 = vmatmul.mubr.f32.gmra.mxu0 %v2225
      %v2451 = vpop.f32.mrf.mxu0
      %v2452 = vadd.f32 0.0, %v2451
      %v2453 = vpop.f32.mrf.mxu0
      %2454 = vmatprep.mubr.f32.mxu0 %v2228
      %2455 = vmatmul.mubr.f32.gmra.mxu0 %v2227
      %v2456 = vpop.f32.mrf.mxu0
      %v2457 = vadd.f32 0.0, %v2456
      %v2458 = vpop.f32.mrf.mxu0
      %2459 = vmatprep.mubr.f32.mxu0 %v2230
      %2460 = vmatmul.mubr.f32.gmra.mxu0 %v2229
      %v2461 = vpop.f32.mrf.mxu0
      %v2462 = vadd.f32 0.0, %v2461
      %v2463 = vpop.f32.mrf.mxu0
      %2464 = vmatprep.mubr.f32.mxu0 %v2232
      %2465 = vmatmul.mubr.f32.gmra.mxu0 %v2231
      %v2466 = vpop.f32.mrf.mxu0
      %v2467 = vadd.f32 0.0, %v2466
      %v2468 = vpop.f32.mrf.mxu0
      %2469 = vmatprep.mubr.f32.mxu0 %v2234
      %2470 = vmatmul.mubr.f32.gmra.mxu0 %v2233
      %v2471 = vpop.f32.mrf.mxu0
      %v2472 = vadd.f32 0.0, %v2471
      %v2473 = vpop.f32.mrf.mxu0
      %2474 = vmatprep.mubr.f32.mxu0 %v2236
      %2475 = vmatmul.mubr.f32.gmra.mxu0 %v2235
      %v2476 = vpop.f32.mrf.mxu0
      %v2477 = vadd.f32 0.0, %v2476
      %v2478 = vpop.f32.mrf.mxu0
      %2479 = vmatprep.mubr.f32.mxu0 %v2238
      %2480 = vmatmul.mubr.f32.gmra.mxu0 %v2237
      %v2481 = vpop.f32.mrf.mxu0
      %v2482 = vadd.f32 0.0, %v2481
      %v2483 = vpop.f32.mrf.mxu0
      %2484 = vmatprep.mubr.f32.mxu0 %v2240
      %2485 = vmatmul.mubr.f32.gmra.mxu0 %v2239
      %v2486 = vpop.f32.mrf.mxu0
      %v2487 = vadd.f32 0.0, %v2486
      %v2488 = vpop.f32.mrf.mxu0
      %2489 = vmatprep.mubr.f32.mxu0 %v2242
      %2490 = vmatmul.mubr.f32.gmra.mxu0 %v2241
      %v2491 = vpop.f32.mrf.mxu0
      %v2492 = vadd.f32 0.0, %v2491
      %v2493 = vpop.f32.mrf.mxu0
      %2494 = vmatprep.mubr.f32.mxu0 %v2244
      %2495 = vmatmul.mubr.f32.gmra.mxu0 %v2243
      %v2496 = vpop.f32.mrf.mxu0
      %v2497 = vadd.f32 0.0, %v2496
      %v2498 = vpop.f32.mrf.mxu0
      %2499 = vmatprep.mubr.f32.mxu0 %v2246
      %2500 = vmatmul.mubr.f32.gmra.mxu0 %v2245
      %v2501 = vpop.f32.mrf.mxu0
      %v2502 = vadd.f32 0.0, %v2501
      %v2503 = vpop.f32.mrf.mxu0
      %2504 = vdwg.mxu0
      %v2505 = vadd.f32 %v2248, %v2427
      %v2506 = vadd.f32 %v2249, %v2432
      %v2507 = vadd.f32 %v2250, %v2437
      %v2508 = vadd.f32 %v2251, %v2442
      %v2509 = vadd.f32 %v2252, %v2447
      %v2510 = vadd.f32 %v2253, %v2452
      %v2511 = vadd.f32 %v2254, %v2457
      %v2512 = vadd.f32 %v2255, %v2462
      %v2513 = vadd.f32 %v2256, %v2467
      %v2514 = vadd.f32 %v2257, %v2472
      %v2515 = vadd.f32 %v2258, %v2477
      %v2516 = vadd.f32 %v2259, %v2482
      %v2517 = vadd.f32 %v2260, %v2487
      %v2518 = vadd.f32 %v2261, %v2492
      %v2519 = vadd.f32 %v2262, %v2497
      %v2520 = vadd.f32 %v2263, %v2502
      %2521 = vst.msk [vmem:[%s2247] sm:$0xff] %vm1092, %v2505
      %2522 = vst.msk [vmem:[%s2247 + $0x8] sm:$0xff] %vm1092, %v2506
      %2523 = vst.msk [vmem:[%s2247 + $0x10] sm:$0xff] %vm1092, %v2507
      %2524 = vst.msk [vmem:[%s2247 + $0x18] sm:$0xff] %vm1092, %v2508
      %2525 = vst.msk [vmem:[%s2247 + $0x20] sm:$0xff] %vm1092, %v2509
      %2526 = vst.msk [vmem:[%s2247 + $0x28] sm:$0xff] %vm1092, %v2510
      %2527 = vst.msk [vmem:[%s2247 + $0x30] sm:$0xff] %vm1092, %v2511
      %2528 = vst.msk [vmem:[%s2247 + $0x38] sm:$0xff] %vm1092, %v2512
      %2529 = vst.msk [vmem:[%s2247 + $0x40] sm:$0xff] %vm1092, %v2513
      %2530 = vst.msk [vmem:[%s2247 + $0x48] sm:$0xff] %vm1092, %v2514
      %2531 = vst.msk [vmem:[%s2247 + $0x50] sm:$0xff] %vm1092, %v2515
      %2532 = vst.msk [vmem:[%s2247 + $0x58] sm:$0xff] %vm1092, %v2516
      %2533 = vst.msk [vmem:[%s2247 + $0x60] sm:$0xff] %vm1092, %v2517
      %2534 = vst.msk [vmem:[%s2247 + $0x68] sm:$0xff] %vm1092, %v2518
      %2535 = vst.msk [vmem:[%s2247 + $0x70] sm:$0xff] %vm1092, %v2519
      %2536 = vst.msk [vmem:[%s2247 + $0x78] sm:$0xff] %vm1092, %v2520
      %2537 = vset.pattern.permute.xlu0 3
      %2538 = vperm.xlu0 %2537, %v367
      %v2539 = vpop.permute.xlu0 %2538
      %2541 = vset.pattern.permute.xlu0 3
      %2542 = vperm.xlu0 %2541, %v368
      %v2543 = vpop.permute.xlu0 %2542
      %2545 = vset.pattern.permute.xlu0 3
      %2546 = vperm.xlu0 %2545, %v369
      %v2547 = vpop.permute.xlu0 %2546
      %2549 = vset.pattern.permute.xlu0 3
      %2550 = vperm.xlu0 %2549, %v370
      %v2551 = vpop.permute.xlu0 %2550
      %2553 = vset.pattern.permute.xlu0 3
      %2554 = vperm.xlu0 %2553, %v371
      %v2555 = vpop.permute.xlu0 %2554
      %2557 = vset.pattern.permute.xlu0 3
      %2558 = vperm.xlu0 %2557, %v372
      %v2559 = vpop.permute.xlu0 %2558
      %2561 = vset.pattern.permute.xlu0 3
      %2562 = vperm.xlu0 %2561, %v373
      %v2563 = vpop.permute.xlu0 %2562
      %2565 = vset.pattern.permute.xlu0 3
      %2566 = vperm.xlu0 %2565, %v374
      %v2567 = vpop.permute.xlu0 %2566
      %2569 = vset.pattern.permute.xlu0 3
      %2570 = vperm.xlu0 %2569, %v375
      %v2571 = vpop.permute.xlu0 %2570
      %2573 = vset.pattern.permute.xlu0 3
      %2574 = vperm.xlu0 %2573, %v376
      %v2575 = vpop.permute.xlu0 %2574
      %2577 = vset.pattern.permute.xlu0 3
      %2578 = vperm.xlu0 %2577, %v377
      %v2579 = vpop.permute.xlu0 %2578
      %2581 = vset.pattern.permute.xlu0 3
      %2582 = vperm.xlu0 %2581, %v378
      %v2583 = vpop.permute.xlu0 %2582
      %2585 = vset.pattern.permute.xlu0 3
      %2586 = vperm.xlu0 %2585, %v379
      %v2587 = vpop.permute.xlu0 %2586
      %2589 = vset.pattern.permute.xlu0 3
      %2590 = vperm.xlu0 %2589, %v380
      %v2591 = vpop.permute.xlu0 %2590
      %2593 = vset.pattern.permute.xlu0 3
      %2594 = vperm.xlu0 %2593, %v381
      %v2595 = vpop.permute.xlu0 %2594
      %2597 = vset.pattern.permute.xlu0 3
      %2598 = vperm.xlu0 %2597, %v382
      %v2599 = vpop.permute.xlu0 %2598
      %v2601 = vlaneseq
      %v2602 = vshrl.u32 %v2601, 7
      %v2603 = vsub.s32 3, %v2602
      %v2604 = vrot.slane %v383, %v2603
      %v2605 = vlaneseq
      %v2606 = vshrl.u32 %v2605, 7
      %v2607 = vsub.s32 3, %v2606
      %v2608 = vrot.slane %v384, %v2607
      %v2609 = vadd.f32 %v2539, %v2604
      %v2610 = vadd.f32 %v2539, %v2608
      %v2611 = vadd.f32 %v2543, %v2604
      %v2612 = vadd.f32 %v2543, %v2608
      %v2613 = vadd.f32 %v2547, %v2604
      %v2614 = vadd.f32 %v2547, %v2608
      %v2615 = vadd.f32 %v2551, %v2604
      %v2616 = vadd.f32 %v2551, %v2608
      %v2617 = vadd.f32 %v2555, %v2604
      %v2618 = vadd.f32 %v2555, %v2608
      %v2619 = vadd.f32 %v2559, %v2604
      %v2620 = vadd.f32 %v2559, %v2608
      %v2621 = vadd.f32 %v2563, %v2604
      %v2622 = vadd.f32 %v2563, %v2608
      %v2623 = vadd.f32 %v2567, %v2604
      %v2624 = vadd.f32 %v2567, %v2608
      %v2625 = vadd.f32 %v2571, %v2604
      %v2626 = vadd.f32 %v2571, %v2608
      %v2627 = vadd.f32 %v2575, %v2604
      %v2628 = vadd.f32 %v2575, %v2608
      %v2629 = vadd.f32 %v2579, %v2604
      %v2630 = vadd.f32 %v2579, %v2608
      %v2631 = vadd.f32 %v2583, %v2604
      %v2632 = vadd.f32 %v2583, %v2608
      %v2633 = vadd.f32 %v2587, %v2604
      %v2634 = vadd.f32 %v2587, %v2608
      %v2635 = vadd.f32 %v2591, %v2604
      %v2636 = vadd.f32 %v2591, %v2608
      %v2637 = vadd.f32 %v2595, %v2604
      %v2638 = vadd.f32 %v2595, %v2608
      %v2639 = vadd.f32 %v2599, %v2604
      %v2640 = vadd.f32 %v2599, %v2608
      %2641 = vset.pattern.permute.xlu0 7
      %2642 = vperm.xlu0 %2641, %v367
      %v2643 = vpop.permute.xlu0 %2642
      %2645 = vset.pattern.permute.xlu0 7
      %2646 = vperm.xlu0 %2645, %v368
      %v2647 = vpop.permute.xlu0 %2646
      %2649 = vset.pattern.permute.xlu0 7
      %2650 = vperm.xlu0 %2649, %v369
      %v2651 = vpop.permute.xlu0 %2650
      %2653 = vset.pattern.permute.xlu0 7
      %2654 = vperm.xlu0 %2653, %v370
      %v2655 = vpop.permute.xlu0 %2654
      %2657 = vset.pattern.permute.xlu0 7
      %2658 = vperm.xlu0 %2657, %v371
      %v2659 = vpop.permute.xlu0 %2658
      %2661 = vset.pattern.permute.xlu0 7
      %2662 = vperm.xlu0 %2661, %v372
      %v2663 = vpop.permute.xlu0 %2662
      %2665 = vset.pattern.permute.xlu0 7
      %2666 = vperm.xlu0 %2665, %v373
      %v2667 = vpop.permute.xlu0 %2666
      %2669 = vset.pattern.permute.xlu0 7
      %2670 = vperm.xlu0 %2669, %v374
      %v2671 = vpop.permute.xlu0 %2670
      %2673 = vset.pattern.permute.xlu0 7
      %2674 = vperm.xlu0 %2673, %v375
      %v2675 = vpop.permute.xlu0 %2674
      %2677 = vset.pattern.permute.xlu0 7
      %2678 = vperm.xlu0 %2677, %v376
      %v2679 = vpop.permute.xlu0 %2678
      %2681 = vset.pattern.permute.xlu0 7
      %2682 = vperm.xlu0 %2681, %v377
      %v2683 = vpop.permute.xlu0 %2682
      %2685 = vset.pattern.permute.xlu0 7
      %2686 = vperm.xlu0 %2685, %v378
      %v2687 = vpop.permute.xlu0 %2686
      %2689 = vset.pattern.permute.xlu0 7
      %2690 = vperm.xlu0 %2689, %v379
      %v2691 = vpop.permute.xlu0 %2690
      %2693 = vset.pattern.permute.xlu0 7
      %2694 = vperm.xlu0 %2693, %v380
      %v2695 = vpop.permute.xlu0 %2694
      %2697 = vset.pattern.permute.xlu0 7
      %2698 = vperm.xlu0 %2697, %v381
      %v2699 = vpop.permute.xlu0 %2698
      %2701 = vset.pattern.permute.xlu0 7
      %2702 = vperm.xlu0 %2701, %v382
      %v2703 = vpop.permute.xlu0 %2702
      %v2705 = vlaneseq
      %v2706 = vshrl.u32 %v2705, 7
      %v2707 = vsub.s32 7, %v2706
      %v2708 = vrot.slane %v383, %v2707
      %v2709 = vlaneseq
      %v2710 = vshrl.u32 %v2709, 7
      %v2711 = vsub.s32 7, %v2710
      %v2712 = vrot.slane %v384, %v2711
      %v2713 = vmul.f32 %v2643, %v2708
      %v2714 = vmul.f32 %v2643, %v2712
      %v2715 = vmul.f32 %v2647, %v2708
      %v2716 = vmul.f32 %v2647, %v2712
      %v2717 = vmul.f32 %v2651, %v2708
      %v2718 = vmul.f32 %v2651, %v2712
      %v2719 = vmul.f32 %v2655, %v2708
      %v2720 = vmul.f32 %v2655, %v2712
      %v2721 = vmul.f32 %v2659, %v2708
      %v2722 = vmul.f32 %v2659, %v2712
      %v2723 = vmul.f32 %v2663, %v2708
      %v2724 = vmul.f32 %v2663, %v2712
      %v2725 = vmul.f32 %v2667, %v2708
      %v2726 = vmul.f32 %v2667, %v2712
      %v2727 = vmul.f32 %v2671, %v2708
      %v2728 = vmul.f32 %v2671, %v2712
      %v2729 = vmul.f32 %v2675, %v2708
      %v2730 = vmul.f32 %v2675, %v2712
      %v2731 = vmul.f32 %v2679, %v2708
      %v2732 = vmul.f32 %v2679, %v2712
      %v2733 = vmul.f32 %v2683, %v2708
      %v2734 = vmul.f32 %v2683, %v2712
      %v2735 = vmul.f32 %v2687, %v2708
      %v2736 = vmul.f32 %v2687, %v2712
      %v2737 = vmul.f32 %v2691, %v2708
      %v2738 = vmul.f32 %v2691, %v2712
      %v2739 = vmul.f32 %v2695, %v2708
      %v2740 = vmul.f32 %v2695, %v2712
      %v2741 = vmul.f32 %v2699, %v2708
      %v2742 = vmul.f32 %v2699, %v2712
      %v2743 = vmul.f32 %v2703, %v2708
      %v2744 = vmul.f32 %v2703, %v2712
      %2745 = vset.pattern.permute.xlu0 11
      %2746 = vperm.xlu0 %2745, %v367
      %v2747 = vpop.permute.xlu0 %2746
      %2749 = vset.pattern.permute.xlu0 11
      %2750 = vperm.xlu0 %2749, %v368
      %v2751 = vpop.permute.xlu0 %2750
      %2753 = vset.pattern.permute.xlu0 11
      %2754 = vperm.xlu0 %2753, %v369
      %v2755 = vpop.permute.xlu0 %2754
      %2757 = vset.pattern.permute.xlu0 11
      %2758 = vperm.xlu0 %2757, %v370
      %v2759 = vpop.permute.xlu0 %2758
      %2761 = vset.pattern.permute.xlu0 11
      %2762 = vperm.xlu0 %2761, %v371
      %v2763 = vpop.permute.xlu0 %2762
      %2765 = vset.pattern.permute.xlu0 11
      %2766 = vperm.xlu0 %2765, %v372
      %v2767 = vpop.permute.xlu0 %2766
      %2769 = vset.pattern.permute.xlu0 11
      %2770 = vperm.xlu0 %2769, %v373
      %v2771 = vpop.permute.xlu0 %2770
      %2773 = vset.pattern.permute.xlu0 11
      %2774 = vperm.xlu0 %2773, %v374
      %v2775 = vpop.permute.xlu0 %2774
      %2777 = vset.pattern.permute.xlu0 11
      %2778 = vperm.xlu0 %2777, %v375
      %v2779 = vpop.permute.xlu0 %2778
      %2781 = vset.pattern.permute.xlu0 11
      %2782 = vperm.xlu0 %2781, %v376
      %v2783 = vpop.permute.xlu0 %2782
      %2785 = vset.pattern.permute.xlu0 11
      %2786 = vperm.xlu0 %2785, %v377
      %v2787 = vpop.permute.xlu0 %2786
      %2789 = vset.pattern.permute.xlu0 11
      %2790 = vperm.xlu0 %2789, %v378
      %v2791 = vpop.permute.xlu0 %2790
      %2793 = vset.pattern.permute.xlu0 11
      %2794 = vperm.xlu0 %2793, %v379
      %v2795 = vpop.permute.xlu0 %2794
      %2797 = vset.pattern.permute.xlu0 11
      %2798 = vperm.xlu0 %2797, %v380
      %v2799 = vpop.permute.xlu0 %2798
      %2801 = vset.pattern.permute.xlu0 11
      %2802 = vperm.xlu0 %2801, %v381
      %v2803 = vpop.permute.xlu0 %2802
      %2805 = vset.pattern.permute.xlu0 11
      %2806 = vperm.xlu0 %2805, %v382
      %v2807 = vpop.permute.xlu0 %2806
      %v2809 = vlaneseq
      %v2810 = vshrl.u32 %v2809, 7
      %v2811 = vsub.s32 3, %v2810
      %v2812 = vrot.slane %v385, %v2811
      %v2813 = vlaneseq
      %v2814 = vshrl.u32 %v2813, 7
      %v2815 = vsub.s32 3, %v2814
      %v2816 = vrot.slane %v386, %v2815
      %v2817 = vmul.f32 %v2747, %v2812
      %v2818 = vmul.f32 %v2747, %v2816
      %v2819 = vmul.f32 %v2751, %v2812
      %v2820 = vmul.f32 %v2751, %v2816
      %v2821 = vmul.f32 %v2755, %v2812
      %v2822 = vmul.f32 %v2755, %v2816
      %v2823 = vmul.f32 %v2759, %v2812
      %v2824 = vmul.f32 %v2759, %v2816
      %v2825 = vmul.f32 %v2763, %v2812
      %v2826 = vmul.f32 %v2763, %v2816
      %v2827 = vmul.f32 %v2767, %v2812
      %v2828 = vmul.f32 %v2767, %v2816
      %v2829 = vmul.f32 %v2771, %v2812
      %v2830 = vmul.f32 %v2771, %v2816
      %v2831 = vmul.f32 %v2775, %v2812
      %v2832 = vmul.f32 %v2775, %v2816
      %v2833 = vmul.f32 %v2779, %v2812
      %v2834 = vmul.f32 %v2779, %v2816
      %v2835 = vmul.f32 %v2783, %v2812
      %v2836 = vmul.f32 %v2783, %v2816
      %v2837 = vmul.f32 %v2787, %v2812
      %v2838 = vmul.f32 %v2787, %v2816
      %v2839 = vmul.f32 %v2791, %v2812
      %v2840 = vmul.f32 %v2791, %v2816
      %v2841 = vmul.f32 %v2795, %v2812
      %v2842 = vmul.f32 %v2795, %v2816
      %v2843 = vmul.f32 %v2799, %v2812
      %v2844 = vmul.f32 %v2799, %v2816
      %v2845 = vmul.f32 %v2803, %v2812
      %v2846 = vmul.f32 %v2803, %v2816
      %v2847 = vmul.f32 %v2807, %v2812
      %v2848 = vmul.f32 %v2807, %v2816
      %vm2849 = vcmp.gt.f32.partialorder %v2609, 0.0
      %vm2850 = vcmp.gt.f32.partialorder %v2610, 0.0
      %vm2851 = vcmp.gt.f32.partialorder %v2611, 0.0
      %vm2852 = vcmp.gt.f32.partialorder %v2612, 0.0
      %vm2853 = vcmp.gt.f32.partialorder %v2613, 0.0
      %vm2854 = vcmp.gt.f32.partialorder %v2614, 0.0
      %vm2855 = vcmp.gt.f32.partialorder %v2615, 0.0
      %vm2856 = vcmp.gt.f32.partialorder %v2616, 0.0
      %vm2857 = vcmp.gt.f32.partialorder %v2617, 0.0
      %vm2858 = vcmp.gt.f32.partialorder %v2618, 0.0
      %vm2859 = vcmp.gt.f32.partialorder %v2619, 0.0
      %vm2860 = vcmp.gt.f32.partialorder %v2620, 0.0
      %vm2861 = vcmp.gt.f32.partialorder %v2621, 0.0
      %vm2862 = vcmp.gt.f32.partialorder %v2622, 0.0
      %vm2863 = vcmp.gt.f32.partialorder %v2623, 0.0
      %vm2864 = vcmp.gt.f32.partialorder %v2624, 0.0
      %vm2865 = vcmp.gt.f32.partialorder %v2625, 0.0
      %vm2866 = vcmp.gt.f32.partialorder %v2626, 0.0
      %vm2867 = vcmp.gt.f32.partialorder %v2627, 0.0
      %vm2868 = vcmp.gt.f32.partialorder %v2628, 0.0
      %vm2869 = vcmp.gt.f32.partialorder %v2629, 0.0
      %vm2870 = vcmp.gt.f32.partialorder %v2630, 0.0
      %vm2871 = vcmp.gt.f32.partialorder %v2631, 0.0
      %vm2872 = vcmp.gt.f32.partialorder %v2632, 0.0
      %vm2873 = vcmp.gt.f32.partialorder %v2633, 0.0
      %vm2874 = vcmp.gt.f32.partialorder %v2634, 0.0
      %vm2875 = vcmp.gt.f32.partialorder %v2635, 0.0
      %vm2876 = vcmp.gt.f32.partialorder %v2636, 0.0
      %vm2877 = vcmp.gt.f32.partialorder %v2637, 0.0
      %vm2878 = vcmp.gt.f32.partialorder %v2638, 0.0
      %vm2879 = vcmp.gt.f32.partialorder %v2639, 0.0
      %vm2880 = vcmp.gt.f32.partialorder %v2640, 0.0
      %v2881 = vsel %vm2849, %v2713, %v2817
      %v2882 = vsel %vm2850, %v2714, %v2818
      %v2883 = vsel %vm2851, %v2715, %v2819
      %v2884 = vsel %vm2852, %v2716, %v2820
      %v2885 = vsel %vm2853, %v2717, %v2821
      %v2886 = vsel %vm2854, %v2718, %v2822
      %v2887 = vsel %vm2855, %v2719, %v2823
      %v2888 = vsel %vm2856, %v2720, %v2824
      %v2889 = vsel %vm2857, %v2721, %v2825
      %v2890 = vsel %vm2858, %v2722, %v2826
      %v2891 = vsel %vm2859, %v2723, %v2827
      %v2892 = vsel %vm2860, %v2724, %v2828
      %v2893 = vsel %vm2861, %v2725, %v2829
      %v2894 = vsel %vm2862, %v2726, %v2830
      %v2895 = vsel %vm2863, %v2727, %v2831
      %v2896 = vsel %vm2864, %v2728, %v2832
      %v2897 = vsel %vm2865, %v2729, %v2833
      %v2898 = vsel %vm2866, %v2730, %v2834
      %v2899 = vsel %vm2867, %v2731, %v2835
      %v2900 = vsel %vm2868, %v2732, %v2836
      %v2901 = vsel %vm2869, %v2733, %v2837
      %v2902 = vsel %vm2870, %v2734, %v2838
      %v2903 = vsel %vm2871, %v2735, %v2839
      %v2904 = vsel %vm2872, %v2736, %v2840
      %v2905 = vsel %vm2873, %v2737, %v2841
      %v2906 = vsel %vm2874, %v2738, %v2842
      %v2907 = vsel %vm2875, %v2739, %v2843
      %v2908 = vsel %vm2876, %v2740, %v2844
      %v2909 = vsel %vm2877, %v2741, %v2845
      %v2910 = vsel %vm2878, %v2742, %v2846
      %v2911 = vsel %vm2879, %v2743, %v2847
      %v2912 = vsel %vm2880, %v2744, %v2848
      %v2913 = vmul.f32 %v2881, %v459
      %v2914 = vmul.f32 %v2882, %v460
      %v2915 = vmul.f32 %v2883, %v461
      %v2916 = vmul.f32 %v2884, %v462
      %v2917 = vmul.f32 %v2885, %v463
      %v2918 = vmul.f32 %v2886, %v464
      %v2919 = vmul.f32 %v2887, %v465
      %v2920 = vmul.f32 %v2888, %v466
      %v2921 = vmul.f32 %v2889, %v467
      %v2922 = vmul.f32 %v2890, %v468
      %v2923 = vmul.f32 %v2891, %v469
      %v2924 = vmul.f32 %v2892, %v470
      %v2925 = vmul.f32 %v2893, %v471
      %v2926 = vmul.f32 %v2894, %v472
      %v2927 = vmul.f32 %v2895, %v473
      %v2928 = vmul.f32 %v2896, %v474
      %v2929 = vmul.f32 %v2897, %v475
      %v2930 = vmul.f32 %v2898, %v476
      %v2931 = vmul.f32 %v2899, %v477
      %v2932 = vmul.f32 %v2900, %v478
      %v2933 = vmul.f32 %v2901, %v479
      %v2934 = vmul.f32 %v2902, %v480
      %v2935 = vmul.f32 %v2903, %v481
      %v2936 = vmul.f32 %v2904, %v482
      %v2937 = vmul.f32 %v2905, %v483
      %v2938 = vmul.f32 %v2906, %v484
      %v2939 = vmul.f32 %v2907, %v485
      %v2940 = vmul.f32 %v2908, %v486
      %v2941 = vmul.f32 %v2909, %v487
      %v2942 = vmul.f32 %v2910, %v488
      %v2943 = vmul.f32 %v2911, %v489
      %v2944 = vmul.f32 %v2912, %v490
      %s2945 = scalar_lea.vmem [#allocation2], 384
      %v2946 = vld [vmem:[%s2945] sm:$0xff]
      %v2947 = vld [vmem:[%s2945 + $0x8] sm:$0xff]
      %v2948 = vld [vmem:[%s2945 + $0x10] sm:$0xff]
      %v2949 = vld [vmem:[%s2945 + $0x18] sm:$0xff]
      %v2950 = vld [vmem:[%s2945 + $0x20] sm:$0xff]
      %v2951 = vld [vmem:[%s2945 + $0x28] sm:$0xff]
      %v2952 = vld [vmem:[%s2945 + $0x30] sm:$0xff]
      %v2953 = vld [vmem:[%s2945 + $0x38] sm:$0xff]
      %v2954 = vld [vmem:[%s2945 + $0x40] sm:$0xff]
      %v2955 = vld [vmem:[%s2945 + $0x48] sm:$0xff]
      %v2956 = vld [vmem:[%s2945 + $0x50] sm:$0xff]
      %v2957 = vld [vmem:[%s2945 + $0x58] sm:$0xff]
      %v2958 = vld [vmem:[%s2945 + $0x60] sm:$0xff]
      %v2959 = vld [vmem:[%s2945 + $0x68] sm:$0xff]
      %v2960 = vld [vmem:[%s2945 + $0x70] sm:$0xff]
      %v2961 = vld [vmem:[%s2945 + $0x78] sm:$0xff]
      %2962 = vrot.lane.b32.xlu0 %v387, 77
      %v2963 = vpop.permute.xlu0 %2962
      %2964 = vrot.lane.b32.xlu0 %v388, 77
      %v2965 = vpop.permute.xlu0 %2964
      %2966 = vrot.lane.b32.xlu0 %v389, 77
      %v2967 = vpop.permute.xlu0 %2966
      %2968 = vrot.lane.b32.xlu0 %v390, 77
      %v2969 = vpop.permute.xlu0 %2968
      %2970 = vrot.lane.b32.xlu0 %v391, 77
      %v2971 = vpop.permute.xlu0 %2970
      %2972 = vrot.lane.b32.xlu0 %v392, 77
      %v2973 = vpop.permute.xlu0 %2972
      %2974 = vrot.lane.b32.xlu0 %v393, 77
      %v2975 = vpop.permute.xlu0 %2974
      %2976 = vrot.lane.b32.xlu0 %v394, 77
      %v2977 = vpop.permute.xlu0 %2976
      %2978 = vrot.lane.b32.xlu0 %v395, 77
      %v2979 = vpop.permute.xlu0 %2978
      %2980 = vrot.lane.b32.xlu0 %v396, 77
      %v2981 = vpop.permute.xlu0 %2980
      %2982 = vrot.lane.b32.xlu0 %v397, 77
      %v2983 = vpop.permute.xlu0 %2982
      %2984 = vrot.lane.b32.xlu0 %v398, 77
      %v2985 = vpop.permute.xlu0 %2984
      %2986 = vrot.lane.b32.xlu0 %v399, 77
      %v2987 = vpop.permute.xlu0 %2986
      %2988 = vrot.lane.b32.xlu0 %v400, 77
      %v2989 = vpop.permute.xlu0 %2988
      %2990 = vrot.lane.b32.xlu0 %v401, 77
      %v2991 = vpop.permute.xlu0 %2990
      %2992 = vrot.lane.b32.xlu0 %v402, 77
      %v2993 = vpop.permute.xlu0 %2992
      %2994 = vrot.lane.b32.xlu0 %v403, 77
      %v2995 = vpop.permute.xlu0 %2994
      %2996 = vrot.lane.b32.xlu0 %v404, 77
      %v2997 = vpop.permute.xlu0 %2996
      %2998 = vrot.lane.b32.xlu0 %v405, 77
      %v2999 = vpop.permute.xlu0 %2998
      %3000 = vrot.lane.b32.xlu0 %v406, 77
      %v3001 = vpop.permute.xlu0 %3000
      %3002 = vrot.lane.b32.xlu0 %v407, 77
      %v3003 = vpop.permute.xlu0 %3002
      %3004 = vrot.lane.b32.xlu0 %v408, 77
      %v3005 = vpop.permute.xlu0 %3004
      %3006 = vrot.lane.b32.xlu0 %v409, 77
      %v3007 = vpop.permute.xlu0 %3006
      %3008 = vrot.lane.b32.xlu0 %v410, 77
      %v3009 = vpop.permute.xlu0 %3008
      %3010 = vrot.lane.b32.xlu0 %v411, 77
      %v3011 = vpop.permute.xlu0 %3010
      %3012 = vrot.lane.b32.xlu0 %v412, 77
      %v3013 = vpop.permute.xlu0 %3012
      %3014 = vrot.lane.b32.xlu0 %v413, 77
      %v3015 = vpop.permute.xlu0 %3014
      %3016 = vrot.lane.b32.xlu0 %v414, 77
      %v3017 = vpop.permute.xlu0 %3016
      %3018 = vrot.lane.b32.xlu0 %v415, 77
      %v3019 = vpop.permute.xlu0 %3018
      %3020 = vrot.lane.b32.xlu0 %v416, 77
      %v3021 = vpop.permute.xlu0 %3020
      %3022 = vrot.lane.b32.xlu0 %v417, 77
      %v3023 = vpop.permute.xlu0 %3022
      %3024 = vrot.lane.b32.xlu0 %v418, 77
      %v3025 = vpop.permute.xlu0 %3024
      %3058 = vmatprep.subr.mxu0 0.0
      %3059 = vmatpush1.msra.mxu0 %v2993
      %3060 = vmatprep.subr.mxu0 0.0
      %3061 = vmatpush1.msra.mxu0 %v2991
      %3062 = vmatprep.subr.mxu0 0.0
      %3063 = vmatpush1.msra.mxu0 %v2989
      %3064 = vmatprep.subr.mxu0 0.0
      %3065 = vmatpush1.msra.mxu0 %v2987
      %3066 = vmatprep.subr.mxu0 0.0
      %3067 = vmatpush1.msra.mxu0 %v2985
      %3068 = vmatprep.subr.mxu0 0.0
      %3069 = vmatpush1.msra.mxu0 %v2983
      %3070 = vmatprep.subr.mxu0 0.0
      %3071 = vmatpush1.msra.mxu0 %v2981
      %3072 = vmatprep.subr.mxu0 0.0
      %3073 = vmatpush1.msra.mxu0 %v2979
      %3074 = vmatprep.subr.mxu0 0.0
      %3075 = vmatpush1.msra.mxu0 %v2977
      %3076 = vmatprep.subr.mxu0 0.0
      %3077 = vmatpush1.msra.mxu0 %v2975
      %3078 = vmatprep.subr.mxu0 0.0
      %3079 = vmatpush1.msra.mxu0 %v2973
      %3080 = vmatprep.subr.mxu0 0.0
      %3081 = vmatpush1.msra.mxu0 %v2971
      %3082 = vmatprep.subr.mxu0 0.0
      %3083 = vmatpush1.msra.mxu0 %v2969
      %3084 = vmatprep.subr.mxu0 0.0
      %3085 = vmatpush1.msra.mxu0 %v2967
      %3086 = vmatprep.subr.mxu0 0.0
      %3087 = vmatpush1.msra.mxu0 %v2965
      %3088 = vmatprep.subr.mxu0 0.0
      %3089 = vmatpush1.msra.mxu0 %v2963
      %3090 = vmatprep.subr.mxu0 0.0
      %3091 = vmatpush2.msra.mxu0 %v3025
      %3092 = vmatprep.subr.mxu0 0.0
      %3093 = vmatpush2.msra.mxu0 %v3023
      %3094 = vmatprep.subr.mxu0 0.0
      %3095 = vmatpush2.msra.mxu0 %v3021
      %3096 = vmatprep.subr.mxu0 0.0
      %3097 = vmatpush2.msra.mxu0 %v3019
      %3098 = vmatprep.subr.mxu0 0.0
      %3099 = vmatpush2.msra.mxu0 %v3017
      %3100 = vmatprep.subr.mxu0 0.0
      %3101 = vmatpush2.msra.mxu0 %v3015
      %3102 = vmatprep.subr.mxu0 0.0
      %3103 = vmatpush2.msra.mxu0 %v3013
      %3104 = vmatprep.subr.mxu0 0.0
      %3105 = vmatpush2.msra.mxu0 %v3011
      %3106 = vmatprep.subr.mxu0 0.0
      %3107 = vmatpush2.msra.mxu0 %v3009
      %3108 = vmatprep.subr.mxu0 0.0
      %3109 = vmatpush2.msra.mxu0 %v3007
      %3110 = vmatprep.subr.mxu0 0.0
      %3111 = vmatpush2.msra.mxu0 %v3005
      %3112 = vmatprep.subr.mxu0 0.0
      %3113 = vmatpush2.msra.mxu0 %v3003
      %3114 = vmatprep.subr.mxu0 0.0
      %3115 = vmatpush2.msra.mxu0 %v3001
      %3116 = vmatprep.subr.mxu0 0.0
      %3117 = vmatpush2.msra.mxu0 %v2999
      %3118 = vmatprep.subr.mxu0 0.0
      %3119 = vmatpush2.msra.mxu0 %v2997
      %3120 = vmatprep.subr.mxu0 0.0
      %3121 = vmatpush2.msra.mxu0 %v2995
      %3122 = vmatprep.mubr.f32.mxu0 %v2914
      %3123 = vmatmul.mubr.f32.gmra.mxu0 %v2913
      %v3124 = vpop.f32.mrf.mxu0
      %v3125 = vadd.f32 0.0, %v3124
      %v3126 = vpop.f32.mrf.mxu0
      %3127 = vmatprep.mubr.f32.mxu0 %v2916
      %3128 = vmatmul.mubr.f32.gmra.mxu0 %v2915
      %v3129 = vpop.f32.mrf.mxu0
      %v3130 = vadd.f32 0.0, %v3129
      %v3131 = vpop.f32.mrf.mxu0
      %3132 = vmatprep.mubr.f32.mxu0 %v2918
      %3133 = vmatmul.mubr.f32.gmra.mxu0 %v2917
      %v3134 = vpop.f32.mrf.mxu0
      %v3135 = vadd.f32 0.0, %v3134
      %v3136 = vpop.f32.mrf.mxu0
      %3137 = vmatprep.mubr.f32.mxu0 %v2920
      %3138 = vmatmul.mubr.f32.gmra.mxu0 %v2919
      %v3139 = vpop.f32.mrf.mxu0
      %v3140 = vadd.f32 0.0, %v3139
      %v3141 = vpop.f32.mrf.mxu0
      %3142 = vmatprep.mubr.f32.mxu0 %v2922
      %3143 = vmatmul.mubr.f32.gmra.mxu0 %v2921
      %v3144 = vpop.f32.mrf.mxu0
      %v3145 = vadd.f32 0.0, %v3144
      %v3146 = vpop.f32.mrf.mxu0
      %3147 = vmatprep.mubr.f32.mxu0 %v2924
      %3148 = vmatmul.mubr.f32.gmra.mxu0 %v2923
      %v3149 = vpop.f32.mrf.mxu0
      %v3150 = vadd.f32 0.0, %v3149
      %v3151 = vpop.f32.mrf.mxu0
      %3152 = vmatprep.mubr.f32.mxu0 %v2926
      %3153 = vmatmul.mubr.f32.gmra.mxu0 %v2925
      %v3154 = vpop.f32.mrf.mxu0
      %v3155 = vadd.f32 0.0, %v3154
      %v3156 = vpop.f32.mrf.mxu0
      %3157 = vmatprep.mubr.f32.mxu0 %v2928
      %3158 = vmatmul.mubr.f32.gmra.mxu0 %v2927
      %v3159 = vpop.f32.mrf.mxu0
      %v3160 = vadd.f32 0.0, %v3159
      %v3161 = vpop.f32.mrf.mxu0
      %3162 = vmatprep.mubr.f32.mxu0 %v2930
      %3163 = vmatmul.mubr.f32.gmra.mxu0 %v2929
      %v3164 = vpop.f32.mrf.mxu0
      %v3165 = vadd.f32 0.0, %v3164
      %v3166 = vpop.f32.mrf.mxu0
      %3167 = vmatprep.mubr.f32.mxu0 %v2932
      %3168 = vmatmul.mubr.f32.gmra.mxu0 %v2931
      %v3169 = vpop.f32.mrf.mxu0
      %v3170 = vadd.f32 0.0, %v3169
      %v3171 = vpop.f32.mrf.mxu0
      %3172 = vmatprep.mubr.f32.mxu0 %v2934
      %3173 = vmatmul.mubr.f32.gmra.mxu0 %v2933
      %v3174 = vpop.f32.mrf.mxu0
      %v3175 = vadd.f32 0.0, %v3174
      %v3176 = vpop.f32.mrf.mxu0
      %3177 = vmatprep.mubr.f32.mxu0 %v2936
      %3178 = vmatmul.mubr.f32.gmra.mxu0 %v2935
      %v3179 = vpop.f32.mrf.mxu0
      %v3180 = vadd.f32 0.0, %v3179
      %v3181 = vpop.f32.mrf.mxu0
      %3182 = vmatprep.mubr.f32.mxu0 %v2938
      %3183 = vmatmul.mubr.f32.gmra.mxu0 %v2937
      %v3184 = vpop.f32.mrf.mxu0
      %v3185 = vadd.f32 0.0, %v3184
      %v3186 = vpop.f32.mrf.mxu0
      %3187 = vmatprep.mubr.f32.mxu0 %v2940
      %3188 = vmatmul.mubr.f32.gmra.mxu0 %v2939
      %v3189 = vpop.f32.mrf.mxu0
      %v3190 = vadd.f32 0.0, %v3189
      %v3191 = vpop.f32.mrf.mxu0
      %3192 = vmatprep.mubr.f32.mxu0 %v2942
      %3193 = vmatmul.mubr.f32.gmra.mxu0 %v2941
      %v3194 = vpop.f32.mrf.mxu0
      %v3195 = vadd.f32 0.0, %v3194
      %v3196 = vpop.f32.mrf.mxu0
      %3197 = vmatprep.mubr.f32.mxu0 %v2944
      %3198 = vmatmul.mubr.f32.gmra.mxu0 %v2943
      %v3199 = vpop.f32.mrf.mxu0
      %v3200 = vadd.f32 0.0, %v3199
      %v3201 = vpop.f32.mrf.mxu0
      %3202 = vdwg.mxu0
      %v3203 = vadd.f32 %v2946, %v3125
      %v3204 = vadd.f32 %v2947, %v3130
      %v3205 = vadd.f32 %v2948, %v3135
      %v3206 = vadd.f32 %v2949, %v3140
      %v3207 = vadd.f32 %v2950, %v3145
      %v3208 = vadd.f32 %v2951, %v3150
      %v3209 = vadd.f32 %v2952, %v3155
      %v3210 = vadd.f32 %v2953, %v3160
      %v3211 = vadd.f32 %v2954, %v3165
      %v3212 = vadd.f32 %v2955, %v3170
      %v3213 = vadd.f32 %v2956, %v3175
      %v3214 = vadd.f32 %v2957, %v3180
      %v3215 = vadd.f32 %v2958, %v3185
      %v3216 = vadd.f32 %v2959, %v3190
      %v3217 = vadd.f32 %v2960, %v3195
      %v3218 = vadd.f32 %v2961, %v3200
      %3219 = vst.msk [vmem:[%s2945] sm:$0xff] %vm1092, %v3203
      %3220 = vst.msk [vmem:[%s2945 + $0x8] sm:$0xff] %vm1092, %v3204
      %3221 = vst.msk [vmem:[%s2945 + $0x10] sm:$0xff] %vm1092, %v3205
      %3222 = vst.msk [vmem:[%s2945 + $0x18] sm:$0xff] %vm1092, %v3206
      %3223 = vst.msk [vmem:[%s2945 + $0x20] sm:$0xff] %vm1092, %v3207
      %3224 = vst.msk [vmem:[%s2945 + $0x28] sm:$0xff] %vm1092, %v3208
      %3225 = vst.msk [vmem:[%s2945 + $0x30] sm:$0xff] %vm1092, %v3209
      %3226 = vst.msk [vmem:[%s2945 + $0x38] sm:$0xff] %vm1092, %v3210
      %3227 = vst.msk [vmem:[%s2945 + $0x40] sm:$0xff] %vm1092, %v3211
      %3228 = vst.msk [vmem:[%s2945 + $0x48] sm:$0xff] %vm1092, %v3212
      %3229 = vst.msk [vmem:[%s2945 + $0x50] sm:$0xff] %vm1092, %v3213
      %3230 = vst.msk [vmem:[%s2945 + $0x58] sm:$0xff] %vm1092, %v3214
      %3231 = vst.msk [vmem:[%s2945 + $0x60] sm:$0xff] %vm1092, %v3215
      %3232 = vst.msk [vmem:[%s2945 + $0x68] sm:$0xff] %vm1092, %v3216
      %3233 = vst.msk [vmem:[%s2945 + $0x70] sm:$0xff] %vm1092, %v3217
      %3234 = vst.msk [vmem:[%s2945 + $0x78] sm:$0xff] %vm1092, %v3218
      // Predicated region
      $region41: #{spgat_forward.5} parent=35 // pred_check
        %p3235 = pneg %p298
      $region42: #{spgat_forward.5} parent=35 // pred_check_branch
        %3237 = sbr.rel (%p3235) target = $region44
      $region43: #{spgat_forward.5} parent=35 // pred_region
        %v3238 = vld [vmem:[#allocation2] sm:$0xff]
        %v3239 = vld [vmem:[#allocation2 + $0x8] sm:$0xff]
        %v3240 = vld [vmem:[#allocation2 + $0x10] sm:$0xff]
        %v3241 = vld [vmem:[#allocation2 + $0x18] sm:$0xff]
        %v3242 = vld [vmem:[#allocation2 + $0x20] sm:$0xff]
        %v3243 = vld [vmem:[#allocation2 + $0x28] sm:$0xff]
        %v3244 = vld [vmem:[#allocation2 + $0x30] sm:$0xff]
        %v3245 = vld [vmem:[#allocation2 + $0x38] sm:$0xff]
        %v3246 = vld [vmem:[#allocation2 + $0x40] sm:$0xff]
        %v3247 = vld [vmem:[#allocation2 + $0x48] sm:$0xff]
        %v3248 = vld [vmem:[#allocation2 + $0x50] sm:$0xff]
        %v3249 = vld [vmem:[#allocation2 + $0x58] sm:$0xff]
        %v3250 = vld [vmem:[#allocation2 + $0x60] sm:$0xff]
        %v3251 = vld [vmem:[#allocation2 + $0x68] sm:$0xff]
        %v3252 = vld [vmem:[#allocation2 + $0x70] sm:$0xff]
        %v3253 = vld [vmem:[#allocation2 + $0x78] sm:$0xff]
        %v3254 = vrcp.pop %v3238
        %v3255 = vrcp.pop %v3239
        %v3256 = vrcp.pop %v3240
        %v3257 = vrcp.pop %v3241
        %v3258 = vrcp.pop %v3242
        %v3259 = vrcp.pop %v3243
        %v3260 = vrcp.pop %v3244
        %v3261 = vrcp.pop %v3245
        %v3262 = vrcp.pop %v3246
        %v3263 = vrcp.pop %v3247
        %v3264 = vrcp.pop %v3248
        %v3265 = vrcp.pop %v3249
        %v3266 = vrcp.pop %v3250
        %v3267 = vrcp.pop %v3251
        %v3268 = vrcp.pop %v3252
        %v3269 = vrcp.pop %v3253
        %3271 = vset.pattern.permute.xlu0 16
        %3272 = vperm.xlu0 %3271, %v3254
        %v3273 = vpop.permute.xlu0 %3272
        %3276 = vset.pattern.permute.xlu0 16
        %3277 = vperm.xlu0 %3276, %v3255
        %v3278 = vpop.permute.xlu0 %3277
        %3281 = vset.pattern.permute.xlu0 16
        %3282 = vperm.xlu0 %3281, %v3256
        %v3283 = vpop.permute.xlu0 %3282
        %3286 = vset.pattern.permute.xlu0 16
        %3287 = vperm.xlu0 %3286, %v3257
        %v3288 = vpop.permute.xlu0 %3287
        %3291 = vset.pattern.permute.xlu0 16
        %3292 = vperm.xlu0 %3291, %v3258
        %v3293 = vpop.permute.xlu0 %3292
        %3296 = vset.pattern.permute.xlu0 16
        %3297 = vperm.xlu0 %3296, %v3259
        %v3298 = vpop.permute.xlu0 %3297
        %3301 = vset.pattern.permute.xlu0 16
        %3302 = vperm.xlu0 %3301, %v3260
        %v3303 = vpop.permute.xlu0 %3302
        %3306 = vset.pattern.permute.xlu0 16
        %3307 = vperm.xlu0 %3306, %v3261
        %v3308 = vpop.permute.xlu0 %3307
        %3311 = vset.pattern.permute.xlu0 16
        %3312 = vperm.xlu0 %3311, %v3262
        %v3313 = vpop.permute.xlu0 %3312
        %3316 = vset.pattern.permute.xlu0 16
        %3317 = vperm.xlu0 %3316, %v3263
        %v3318 = vpop.permute.xlu0 %3317
        %3321 = vset.pattern.permute.xlu0 16
        %3322 = vperm.xlu0 %3321, %v3264
        %v3323 = vpop.permute.xlu0 %3322
        %3326 = vset.pattern.permute.xlu0 16
        %3327 = vperm.xlu0 %3326, %v3265
        %v3328 = vpop.permute.xlu0 %3327
        %3331 = vset.pattern.permute.xlu0 16
        %3332 = vperm.xlu0 %3331, %v3266
        %v3333 = vpop.permute.xlu0 %3332
        %3336 = vset.pattern.permute.xlu0 16
        %3337 = vperm.xlu0 %3336, %v3267
        %v3338 = vpop.permute.xlu0 %3337
        %3341 = vset.pattern.permute.xlu0 16
        %3342 = vperm.xlu0 %3341, %v3268
        %v3343 = vpop.permute.xlu0 %3342
        %3346 = vset.pattern.permute.xlu0 16
        %3347 = vperm.xlu0 %3346, %v3269
        %v3348 = vpop.permute.xlu0 %3347
        %v3350 = vmul.f32 %v3238, %v3273
        %v3351 = vmul.f32 %v3239, %v3278
        %v3352 = vmul.f32 %v3240, %v3283
        %v3353 = vmul.f32 %v3241, %v3288
        %v3354 = vmul.f32 %v3242, %v3293
        %v3355 = vmul.f32 %v3243, %v3298
        %v3356 = vmul.f32 %v3244, %v3303
        %v3357 = vmul.f32 %v3245, %v3308
        %v3358 = vmul.f32 %v3246, %v3313
        %v3359 = vmul.f32 %v3247, %v3318
        %v3360 = vmul.f32 %v3248, %v3323
        %v3361 = vmul.f32 %v3249, %v3328
        %v3362 = vmul.f32 %v3250, %v3333
        %v3363 = vmul.f32 %v3251, %v3338
        %v3364 = vmul.f32 %v3252, %v3343
        %v3365 = vmul.f32 %v3253, %v3348
        %vm3366 = vcmp.gt.f32.partialorder %v3350, 0.0
        %vm3367 = vcmp.gt.f32.partialorder %v3351, 0.0
        %vm3368 = vcmp.gt.f32.partialorder %v3352, 0.0
        %vm3369 = vcmp.gt.f32.partialorder %v3353, 0.0
        %vm3370 = vcmp.gt.f32.partialorder %v3354, 0.0
        %vm3371 = vcmp.gt.f32.partialorder %v3355, 0.0
        %vm3372 = vcmp.gt.f32.partialorder %v3356, 0.0
        %vm3373 = vcmp.gt.f32.partialorder %v3357, 0.0
        %vm3374 = vcmp.gt.f32.partialorder %v3358, 0.0
        %vm3375 = vcmp.gt.f32.partialorder %v3359, 0.0
        %vm3376 = vcmp.gt.f32.partialorder %v3360, 0.0
        %vm3377 = vcmp.gt.f32.partialorder %v3361, 0.0
        %vm3378 = vcmp.gt.f32.partialorder %v3362, 0.0
        %vm3379 = vcmp.gt.f32.partialorder %v3363, 0.0
        %vm3380 = vcmp.gt.f32.partialorder %v3364, 0.0
        %vm3381 = vcmp.gt.f32.partialorder %v3365, 0.0
        %v3382 = vmul.f32 %v3350, 1.442695
        %v3383 = vpow.pop %v3382
        %v3384 = vmul.f32 %v3351, 1.442695
        %v3385 = vpow.pop %v3384
        %v3386 = vmul.f32 %v3352, 1.442695
        %v3387 = vpow.pop %v3386
        %v3388 = vmul.f32 %v3353, 1.442695
        %v3389 = vpow.pop %v3388
        %v3390 = vmul.f32 %v3354, 1.442695
        %v3391 = vpow.pop %v3390
        %v3392 = vmul.f32 %v3355, 1.442695
        %v3393 = vpow.pop %v3392
        %v3394 = vmul.f32 %v3356, 1.442695
        %v3395 = vpow.pop %v3394
        %v3396 = vmul.f32 %v3357, 1.442695
        %v3397 = vpow.pop %v3396
        %v3398 = vmul.f32 %v3358, 1.442695
        %v3399 = vpow.pop %v3398
        %v3400 = vmul.f32 %v3359, 1.442695
        %v3401 = vpow.pop %v3400
        %v3402 = vmul.f32 %v3360, 1.442695
        %v3403 = vpow.pop %v3402
        %v3404 = vmul.f32 %v3361, 1.442695
        %v3405 = vpow.pop %v3404
        %v3406 = vmul.f32 %v3362, 1.442695
        %v3407 = vpow.pop %v3406
        %v3408 = vmul.f32 %v3363, 1.442695
        %v3409 = vpow.pop %v3408
        %v3410 = vmul.f32 %v3364, 1.442695
        %v3411 = vpow.pop %v3410
        %v3412 = vmul.f32 %v3365, 1.442695
        %v3413 = vpow.pop %v3412
        %v3414 = vsub.f32 %v3383, 1.0
        %v3415 = vsub.f32 %v3385, 1.0
        %v3416 = vsub.f32 %v3387, 1.0
        %v3417 = vsub.f32 %v3389, 1.0
        %v3418 = vsub.f32 %v3391, 1.0
        %v3419 = vsub.f32 %v3393, 1.0
        %v3420 = vsub.f32 %v3395, 1.0
        %v3421 = vsub.f32 %v3397, 1.0
        %v3422 = vsub.f32 %v3399, 1.0
        %v3423 = vsub.f32 %v3401, 1.0
        %v3424 = vsub.f32 %v3403, 1.0
        %v3425 = vsub.f32 %v3405, 1.0
        %v3426 = vsub.f32 %v3407, 1.0
        %v3427 = vsub.f32 %v3409, 1.0
        %v3428 = vsub.f32 %v3411, 1.0
        %v3429 = vsub.f32 %v3413, 1.0
        %v3430 = vsel %vm3366, %v3350, %v3414
        %v3431 = vsel %vm3367, %v3351, %v3415
        %v3432 = vsel %vm3368, %v3352, %v3416
        %v3433 = vsel %vm3369, %v3353, %v3417
        %v3434 = vsel %vm3370, %v3354, %v3418
        %v3435 = vsel %vm3371, %v3355, %v3419
        %v3436 = vsel %vm3372, %v3356, %v3420
        %v3437 = vsel %vm3373, %v3357, %v3421
        %v3438 = vsel %vm3374, %v3358, %v3422
        %v3439 = vsel %vm3375, %v3359, %v3423
        %v3440 = vsel %vm3376, %v3360, %v3424
        %v3441 = vsel %vm3377, %v3361, %v3425
        %v3442 = vsel %vm3378, %v3362, %v3426
        %v3443 = vsel %vm3379, %v3363, %v3427
        %v3444 = vsel %vm3380, %v3364, %v3428
        %v3445 = vsel %vm3381, %v3365, %v3429
        %v3446 = vld [vmem:[%s1517] sm:$0xff]
        %v3447 = vld [vmem:[%s1517 + $0x8] sm:$0xff]
        %v3448 = vld [vmem:[%s1517 + $0x10] sm:$0xff]
        %v3449 = vld [vmem:[%s1517 + $0x18] sm:$0xff]
        %v3450 = vld [vmem:[%s1517 + $0x20] sm:$0xff]
        %v3451 = vld [vmem:[%s1517 + $0x28] sm:$0xff]
        %v3452 = vld [vmem:[%s1517 + $0x30] sm:$0xff]
        %v3453 = vld [vmem:[%s1517 + $0x38] sm:$0xff]
        %v3454 = vld [vmem:[%s1517 + $0x40] sm:$0xff]
        %v3455 = vld [vmem:[%s1517 + $0x48] sm:$0xff]
        %v3456 = vld [vmem:[%s1517 + $0x50] sm:$0xff]
        %v3457 = vld [vmem:[%s1517 + $0x58] sm:$0xff]
        %v3458 = vld [vmem:[%s1517 + $0x60] sm:$0xff]
        %v3459 = vld [vmem:[%s1517 + $0x68] sm:$0xff]
        %v3460 = vld [vmem:[%s1517 + $0x70] sm:$0xff]
        %v3461 = vld [vmem:[%s1517 + $0x78] sm:$0xff]
        %v3462 = vrcp.pop %v3446
        %v3463 = vrcp.pop %v3447
        %v3464 = vrcp.pop %v3448
        %v3465 = vrcp.pop %v3449
        %v3466 = vrcp.pop %v3450
        %v3467 = vrcp.pop %v3451
        %v3468 = vrcp.pop %v3452
        %v3469 = vrcp.pop %v3453
        %v3470 = vrcp.pop %v3454
        %v3471 = vrcp.pop %v3455
        %v3472 = vrcp.pop %v3456
        %v3473 = vrcp.pop %v3457
        %v3474 = vrcp.pop %v3458
        %v3475 = vrcp.pop %v3459
        %v3476 = vrcp.pop %v3460
        %v3477 = vrcp.pop %v3461
        %3479 = vset.pattern.permute.xlu0 16
        %3480 = vperm.xlu0 %3479, %v3462
        %v3481 = vpop.permute.xlu0 %3480
        %3484 = vset.pattern.permute.xlu0 16
        %3485 = vperm.xlu0 %3484, %v3463
        %v3486 = vpop.permute.xlu0 %3485
        %3489 = vset.pattern.permute.xlu0 16
        %3490 = vperm.xlu0 %3489, %v3464
        %v3491 = vpop.permute.xlu0 %3490
        %3494 = vset.pattern.permute.xlu0 16
        %3495 = vperm.xlu0 %3494, %v3465
        %v3496 = vpop.permute.xlu0 %3495
        %3499 = vset.pattern.permute.xlu0 16
        %3500 = vperm.xlu0 %3499, %v3466
        %v3501 = vpop.permute.xlu0 %3500
        %3504 = vset.pattern.permute.xlu0 16
        %3505 = vperm.xlu0 %3504, %v3467
        %v3506 = vpop.permute.xlu0 %3505
        %3509 = vset.pattern.permute.xlu0 16
        %3510 = vperm.xlu0 %3509, %v3468
        %v3511 = vpop.permute.xlu0 %3510
        %3514 = vset.pattern.permute.xlu0 16
        %3515 = vperm.xlu0 %3514, %v3469
        %v3516 = vpop.permute.xlu0 %3515
        %3519 = vset.pattern.permute.xlu0 16
        %3520 = vperm.xlu0 %3519, %v3470
        %v3521 = vpop.permute.xlu0 %3520
        %3524 = vset.pattern.permute.xlu0 16
        %3525 = vperm.xlu0 %3524, %v3471
        %v3526 = vpop.permute.xlu0 %3525
        %3529 = vset.pattern.permute.xlu0 16
        %3530 = vperm.xlu0 %3529, %v3472
        %v3531 = vpop.permute.xlu0 %3530
        %3534 = vset.pattern.permute.xlu0 16
        %3535 = vperm.xlu0 %3534, %v3473
        %v3536 = vpop.permute.xlu0 %3535
        %3539 = vset.pattern.permute.xlu0 16
        %3540 = vperm.xlu0 %3539, %v3474
        %v3541 = vpop.permute.xlu0 %3540
        %3544 = vset.pattern.permute.xlu0 16
        %3545 = vperm.xlu0 %3544, %v3475
        %v3546 = vpop.permute.xlu0 %3545
        %3549 = vset.pattern.permute.xlu0 16
        %3550 = vperm.xlu0 %3549, %v3476
        %v3551 = vpop.permute.xlu0 %3550
        %3554 = vset.pattern.permute.xlu0 16
        %3555 = vperm.xlu0 %3554, %v3477
        %v3556 = vpop.permute.xlu0 %3555
        %v3558 = vmul.f32 %v3446, %v3481
        %v3559 = vmul.f32 %v3447, %v3486
        %v3560 = vmul.f32 %v3448, %v3491
        %v3561 = vmul.f32 %v3449, %v3496
        %v3562 = vmul.f32 %v3450, %v3501
        %v3563 = vmul.f32 %v3451, %v3506
        %v3564 = vmul.f32 %v3452, %v3511
        %v3565 = vmul.f32 %v3453, %v3516
        %v3566 = vmul.f32 %v3454, %v3521
        %v3567 = vmul.f32 %v3455, %v3526
        %v3568 = vmul.f32 %v3456, %v3531
        %v3569 = vmul.f32 %v3457, %v3536
        %v3570 = vmul.f32 %v3458, %v3541
        %v3571 = vmul.f32 %v3459, %v3546
        %v3572 = vmul.f32 %v3460, %v3551
        %v3573 = vmul.f32 %v3461, %v3556
        %vm3574 = vcmp.gt.f32.partialorder %v3558, 0.0
        %vm3575 = vcmp.gt.f32.partialorder %v3559, 0.0
        %vm3576 = vcmp.gt.f32.partialorder %v3560, 0.0
        %vm3577 = vcmp.gt.f32.partialorder %v3561, 0.0
        %vm3578 = vcmp.gt.f32.partialorder %v3562, 0.0
        %vm3579 = vcmp.gt.f32.partialorder %v3563, 0.0
        %vm3580 = vcmp.gt.f32.partialorder %v3564, 0.0
        %vm3581 = vcmp.gt.f32.partialorder %v3565, 0.0
        %vm3582 = vcmp.gt.f32.partialorder %v3566, 0.0
        %vm3583 = vcmp.gt.f32.partialorder %v3567, 0.0
        %vm3584 = vcmp.gt.f32.partialorder %v3568, 0.0
        %vm3585 = vcmp.gt.f32.partialorder %v3569, 0.0
        %vm3586 = vcmp.gt.f32.partialorder %v3570, 0.0
        %vm3587 = vcmp.gt.f32.partialorder %v3571, 0.0
        %vm3588 = vcmp.gt.f32.partialorder %v3572, 0.0
        %vm3589 = vcmp.gt.f32.partialorder %v3573, 0.0
        %v3590 = vmul.f32 %v3558, 1.442695
        %v3591 = vpow.pop %v3590
        %v3592 = vmul.f32 %v3559, 1.442695
        %v3593 = vpow.pop %v3592
        %v3594 = vmul.f32 %v3560, 1.442695
        %v3595 = vpow.pop %v3594
        %v3596 = vmul.f32 %v3561, 1.442695
        %v3597 = vpow.pop %v3596
        %v3598 = vmul.f32 %v3562, 1.442695
        %v3599 = vpow.pop %v3598
        %v3600 = vmul.f32 %v3563, 1.442695
        %v3601 = vpow.pop %v3600
        %v3602 = vmul.f32 %v3564, 1.442695
        %v3603 = vpow.pop %v3602
        %v3604 = vmul.f32 %v3565, 1.442695
        %v3605 = vpow.pop %v3604
        %v3606 = vmul.f32 %v3566, 1.442695
        %v3607 = vpow.pop %v3606
        %v3608 = vmul.f32 %v3567, 1.442695
        %v3609 = vpow.pop %v3608
        %v3610 = vmul.f32 %v3568, 1.442695
        %v3611 = vpow.pop %v3610
        %v3612 = vmul.f32 %v3569, 1.442695
        %v3613 = vpow.pop %v3612
        %v3614 = vmul.f32 %v3570, 1.442695
        %v3615 = vpow.pop %v3614
        %v3616 = vmul.f32 %v3571, 1.442695
        %v3617 = vpow.pop %v3616
        %v3618 = vmul.f32 %v3572, 1.442695
        %v3619 = vpow.pop %v3618
        %v3620 = vmul.f32 %v3573, 1.442695
        %v3621 = vpow.pop %v3620
        %v3622 = vsub.f32 %v3591, 1.0
        %v3623 = vsub.f32 %v3593, 1.0
        %v3624 = vsub.f32 %v3595, 1.0
        %v3625 = vsub.f32 %v3597, 1.0
        %v3626 = vsub.f32 %v3599, 1.0
        %v3627 = vsub.f32 %v3601, 1.0
        %v3628 = vsub.f32 %v3603, 1.0
        %v3629 = vsub.f32 %v3605, 1.0
        %v3630 = vsub.f32 %v3607, 1.0
        %v3631 = vsub.f32 %v3609, 1.0
        %v3632 = vsub.f32 %v3611, 1.0
        %v3633 = vsub.f32 %v3613, 1.0
        %v3634 = vsub.f32 %v3615, 1.0
        %v3635 = vsub.f32 %v3617, 1.0
        %v3636 = vsub.f32 %v3619, 1.0
        %v3637 = vsub.f32 %v3621, 1.0
        %v3638 = vsel %vm3574, %v3558, %v3622
        %v3639 = vsel %vm3575, %v3559, %v3623
        %v3640 = vsel %vm3576, %v3560, %v3624
        %v3641 = vsel %vm3577, %v3561, %v3625
        %v3642 = vsel %vm3578, %v3562, %v3626
        %v3643 = vsel %vm3579, %v3563, %v3627
        %v3644 = vsel %vm3580, %v3564, %v3628
        %v3645 = vsel %vm3581, %v3565, %v3629
        %v3646 = vsel %vm3582, %v3566, %v3630
        %v3647 = vsel %vm3583, %v3567, %v3631
        %v3648 = vsel %vm3584, %v3568, %v3632
        %v3649 = vsel %vm3585, %v3569, %v3633
        %v3650 = vsel %vm3586, %v3570, %v3634
        %v3651 = vsel %vm3587, %v3571, %v3635
        %v3652 = vsel %vm3588, %v3572, %v3636
        %v3653 = vsel %vm3589, %v3573, %v3637
        %v3654 = vld [vmem:[%s2247] sm:$0xff]
        %v3655 = vld [vmem:[%s2247 + $0x8] sm:$0xff]
        %v3656 = vld [vmem:[%s2247 + $0x10] sm:$0xff]
        %v3657 = vld [vmem:[%s2247 + $0x18] sm:$0xff]
        %v3658 = vld [vmem:[%s2247 + $0x20] sm:$0xff]
        %v3659 = vld [vmem:[%s2247 + $0x28] sm:$0xff]
        %v3660 = vld [vmem:[%s2247 + $0x30] sm:$0xff]
        %v3661 = vld [vmem:[%s2247 + $0x38] sm:$0xff]
        %v3662 = vld [vmem:[%s2247 + $0x40] sm:$0xff]
        %v3663 = vld [vmem:[%s2247 + $0x48] sm:$0xff]
        %v3664 = vld [vmem:[%s2247 + $0x50] sm:$0xff]
        %v3665 = vld [vmem:[%s2247 + $0x58] sm:$0xff]
        %v3666 = vld [vmem:[%s2247 + $0x60] sm:$0xff]
        %v3667 = vld [vmem:[%s2247 + $0x68] sm:$0xff]
        %v3668 = vld [vmem:[%s2247 + $0x70] sm:$0xff]
        %v3669 = vld [vmem:[%s2247 + $0x78] sm:$0xff]
        %v3670 = vrcp.pop %v3654
        %v3671 = vrcp.pop %v3655
        %v3672 = vrcp.pop %v3656
        %v3673 = vrcp.pop %v3657
        %v3674 = vrcp.pop %v3658
        %v3675 = vrcp.pop %v3659
        %v3676 = vrcp.pop %v3660
        %v3677 = vrcp.pop %v3661
        %v3678 = vrcp.pop %v3662
        %v3679 = vrcp.pop %v3663
        %v3680 = vrcp.pop %v3664
        %v3681 = vrcp.pop %v3665
        %v3682 = vrcp.pop %v3666
        %v3683 = vrcp.pop %v3667
        %v3684 = vrcp.pop %v3668
        %v3685 = vrcp.pop %v3669
        %3687 = vset.pattern.permute.xlu0 16
        %3688 = vperm.xlu0 %3687, %v3670
        %v3689 = vpop.permute.xlu0 %3688
        %3692 = vset.pattern.permute.xlu0 16
        %3693 = vperm.xlu0 %3692, %v3671
        %v3694 = vpop.permute.xlu0 %3693
        %3697 = vset.pattern.permute.xlu0 16
        %3698 = vperm.xlu0 %3697, %v3672
        %v3699 = vpop.permute.xlu0 %3698
        %3702 = vset.pattern.permute.xlu0 16
        %3703 = vperm.xlu0 %3702, %v3673
        %v3704 = vpop.permute.xlu0 %3703
        %3707 = vset.pattern.permute.xlu0 16
        %3708 = vperm.xlu0 %3707, %v3674
        %v3709 = vpop.permute.xlu0 %3708
        %3712 = vset.pattern.permute.xlu0 16
        %3713 = vperm.xlu0 %3712, %v3675
        %v3714 = vpop.permute.xlu0 %3713
        %3717 = vset.pattern.permute.xlu0 16
        %3718 = vperm.xlu0 %3717, %v3676
        %v3719 = vpop.permute.xlu0 %3718
        %3722 = vset.pattern.permute.xlu0 16
        %3723 = vperm.xlu0 %3722, %v3677
        %v3724 = vpop.permute.xlu0 %3723
        %3727 = vset.pattern.permute.xlu0 16
        %3728 = vperm.xlu0 %3727, %v3678
        %v3729 = vpop.permute.xlu0 %3728
        %3732 = vset.pattern.permute.xlu0 16
        %3733 = vperm.xlu0 %3732, %v3679
        %v3734 = vpop.permute.xlu0 %3733
        %3737 = vset.pattern.permute.xlu0 16
        %3738 = vperm.xlu0 %3737, %v3680
        %v3739 = vpop.permute.xlu0 %3738
        %3742 = vset.pattern.permute.xlu0 16
        %3743 = vperm.xlu0 %3742, %v3681
        %v3744 = vpop.permute.xlu0 %3743
        %3747 = vset.pattern.permute.xlu0 16
        %3748 = vperm.xlu0 %3747, %v3682
        %v3749 = vpop.permute.xlu0 %3748
        %3752 = vset.pattern.permute.xlu0 16
        %3753 = vperm.xlu0 %3752, %v3683
        %v3754 = vpop.permute.xlu0 %3753
        %3757 = vset.pattern.permute.xlu0 16
        %3758 = vperm.xlu0 %3757, %v3684
        %v3759 = vpop.permute.xlu0 %3758
        %3762 = vset.pattern.permute.xlu0 16
        %3763 = vperm.xlu0 %3762, %v3685
        %v3764 = vpop.permute.xlu0 %3763
        %v3766 = vmul.f32 %v3654, %v3689
        %v3767 = vmul.f32 %v3655, %v3694
        %v3768 = vmul.f32 %v3656, %v3699
        %v3769 = vmul.f32 %v3657, %v3704
        %v3770 = vmul.f32 %v3658, %v3709
        %v3771 = vmul.f32 %v3659, %v3714
        %v3772 = vmul.f32 %v3660, %v3719
        %v3773 = vmul.f32 %v3661, %v3724
        %v3774 = vmul.f32 %v3662, %v3729
        %v3775 = vmul.f32 %v3663, %v3734
        %v3776 = vmul.f32 %v3664, %v3739
        %v3777 = vmul.f32 %v3665, %v3744
        %v3778 = vmul.f32 %v3666, %v3749
        %v3779 = vmul.f32 %v3667, %v3754
        %v3780 = vmul.f32 %v3668, %v3759
        %v3781 = vmul.f32 %v3669, %v3764
        %vm3782 = vcmp.gt.f32.partialorder %v3766, 0.0
        %vm3783 = vcmp.gt.f32.partialorder %v3767, 0.0
        %vm3784 = vcmp.gt.f32.partialorder %v3768, 0.0
        %vm3785 = vcmp.gt.f32.partialorder %v3769, 0.0
        %vm3786 = vcmp.gt.f32.partialorder %v3770, 0.0
        %vm3787 = vcmp.gt.f32.partialorder %v3771, 0.0
        %vm3788 = vcmp.gt.f32.partialorder %v3772, 0.0
        %vm3789 = vcmp.gt.f32.partialorder %v3773, 0.0
        %vm3790 = vcmp.gt.f32.partialorder %v3774, 0.0
        %vm3791 = vcmp.gt.f32.partialorder %v3775, 0.0
        %vm3792 = vcmp.gt.f32.partialorder %v3776, 0.0
        %vm3793 = vcmp.gt.f32.partialorder %v3777, 0.0
        %vm3794 = vcmp.gt.f32.partialorder %v3778, 0.0
        %vm3795 = vcmp.gt.f32.partialorder %v3779, 0.0
        %vm3796 = vcmp.gt.f32.partialorder %v3780, 0.0
        %vm3797 = vcmp.gt.f32.partialorder %v3781, 0.0
        %v3798 = vmul.f32 %v3766, 1.442695
        %v3799 = vpow.pop %v3798
        %v3800 = vmul.f32 %v3767, 1.442695
        %v3801 = vpow.pop %v3800
        %v3802 = vmul.f32 %v3768, 1.442695
        %v3803 = vpow.pop %v3802
        %v3804 = vmul.f32 %v3769, 1.442695
        %v3805 = vpow.pop %v3804
        %v3806 = vmul.f32 %v3770, 1.442695
        %v3807 = vpow.pop %v3806
        %v3808 = vmul.f32 %v3771, 1.442695
        %v3809 = vpow.pop %v3808
        %v3810 = vmul.f32 %v3772, 1.442695
        %v3811 = vpow.pop %v3810
        %v3812 = vmul.f32 %v3773, 1.442695
        %v3813 = vpow.pop %v3812
        %v3814 = vmul.f32 %v3774, 1.442695
        %v3815 = vpow.pop %v3814
        %v3816 = vmul.f32 %v3775, 1.442695
        %v3817 = vpow.pop %v3816
        %v3818 = vmul.f32 %v3776, 1.442695
        %v3819 = vpow.pop %v3818
        %v3820 = vmul.f32 %v3777, 1.442695
        %v3821 = vpow.pop %v3820
        %v3822 = vmul.f32 %v3778, 1.442695
        %v3823 = vpow.pop %v3822
        %v3824 = vmul.f32 %v3779, 1.442695
        %v3825 = vpow.pop %v3824
        %v3826 = vmul.f32 %v3780, 1.442695
        %v3827 = vpow.pop %v3826
        %v3828 = vmul.f32 %v3781, 1.442695
        %v3829 = vpow.pop %v3828
        %v3830 = vsub.f32 %v3799, 1.0
        %v3831 = vsub.f32 %v3801, 1.0
        %v3832 = vsub.f32 %v3803, 1.0
        %v3833 = vsub.f32 %v3805, 1.0
        %v3834 = vsub.f32 %v3807, 1.0
        %v3835 = vsub.f32 %v3809, 1.0
        %v3836 = vsub.f32 %v3811, 1.0
        %v3837 = vsub.f32 %v3813, 1.0
        %v3838 = vsub.f32 %v3815, 1.0
        %v3839 = vsub.f32 %v3817, 1.0
        %v3840 = vsub.f32 %v3819, 1.0
        %v3841 = vsub.f32 %v3821, 1.0
        %v3842 = vsub.f32 %v3823, 1.0
        %v3843 = vsub.f32 %v3825, 1.0
        %v3844 = vsub.f32 %v3827, 1.0
        %v3845 = vsub.f32 %v3829, 1.0
        %v3846 = vsel %vm3782, %v3766, %v3830
        %v3847 = vsel %vm3783, %v3767, %v3831
        %v3848 = vsel %vm3784, %v3768, %v3832
        %v3849 = vsel %vm3785, %v3769, %v3833
        %v3850 = vsel %vm3786, %v3770, %v3834
        %v3851 = vsel %vm3787, %v3771, %v3835
        %v3852 = vsel %vm3788, %v3772, %v3836
        %v3853 = vsel %vm3789, %v3773, %v3837
        %v3854 = vsel %vm3790, %v3774, %v3838
        %v3855 = vsel %vm3791, %v3775, %v3839
        %v3856 = vsel %vm3792, %v3776, %v3840
        %v3857 = vsel %vm3793, %v3777, %v3841
        %v3858 = vsel %vm3794, %v3778, %v3842
        %v3859 = vsel %vm3795, %v3779, %v3843
        %v3860 = vsel %vm3796, %v3780, %v3844
        %v3861 = vsel %vm3797, %v3781, %v3845
        %v3862 = vld [vmem:[%s2945] sm:$0xff]
        %v3863 = vld [vmem:[%s2945 + $0x8] sm:$0xff]
        %v3864 = vld [vmem:[%s2945 + $0x10] sm:$0xff]
        %v3865 = vld [vmem:[%s2945 + $0x18] sm:$0xff]
        %v3866 = vld [vmem:[%s2945 + $0x20] sm:$0xff]
        %v3867 = vld [vmem:[%s2945 + $0x28] sm:$0xff]
        %v3868 = vld [vmem:[%s2945 + $0x30] sm:$0xff]
        %v3869 = vld [vmem:[%s2945 + $0x38] sm:$0xff]
        %v3870 = vld [vmem:[%s2945 + $0x40] sm:$0xff]
        %v3871 = vld [vmem:[%s2945 + $0x48] sm:$0xff]
        %v3872 = vld [vmem:[%s2945 + $0x50] sm:$0xff]
        %v3873 = vld [vmem:[%s2945 + $0x58] sm:$0xff]
        %v3874 = vld [vmem:[%s2945 + $0x60] sm:$0xff]
        %v3875 = vld [vmem:[%s2945 + $0x68] sm:$0xff]
        %v3876 = vld [vmem:[%s2945 + $0x70] sm:$0xff]
        %v3877 = vld [vmem:[%s2945 + $0x78] sm:$0xff]
        %v3878 = vrcp.pop %v3862
        %v3879 = vrcp.pop %v3863
        %v3880 = vrcp.pop %v3864
        %v3881 = vrcp.pop %v3865
        %v3882 = vrcp.pop %v3866
        %v3883 = vrcp.pop %v3867
        %v3884 = vrcp.pop %v3868
        %v3885 = vrcp.pop %v3869
        %v3886 = vrcp.pop %v3870
        %v3887 = vrcp.pop %v3871
        %v3888 = vrcp.pop %v3872
        %v3889 = vrcp.pop %v3873
        %v3890 = vrcp.pop %v3874
        %v3891 = vrcp.pop %v3875
        %v3892 = vrcp.pop %v3876
        %v3893 = vrcp.pop %v3877
        %3895 = vset.pattern.permute.xlu0 16
        %3896 = vperm.xlu0 %3895, %v3878
        %v3897 = vpop.permute.xlu0 %3896
        %3900 = vset.pattern.permute.xlu0 16
        %3901 = vperm.xlu0 %3900, %v3879
        %v3902 = vpop.permute.xlu0 %3901
        %3905 = vset.pattern.permute.xlu0 16
        %3906 = vperm.xlu0 %3905, %v3880
        %v3907 = vpop.permute.xlu0 %3906
        %3910 = vset.pattern.permute.xlu0 16
        %3911 = vperm.xlu0 %3910, %v3881
        %v3912 = vpop.permute.xlu0 %3911
        %3915 = vset.pattern.permute.xlu0 16
        %3916 = vperm.xlu0 %3915, %v3882
        %v3917 = vpop.permute.xlu0 %3916
        %3920 = vset.pattern.permute.xlu0 16
        %3921 = vperm.xlu0 %3920, %v3883
        %v3922 = vpop.permute.xlu0 %3921
        %3925 = vset.pattern.permute.xlu0 16
        %3926 = vperm.xlu0 %3925, %v3884
        %v3927 = vpop.permute.xlu0 %3926
        %3930 = vset.pattern.permute.xlu0 16
        %3931 = vperm.xlu0 %3930, %v3885
        %v3932 = vpop.permute.xlu0 %3931
        %3935 = vset.pattern.permute.xlu0 16
        %3936 = vperm.xlu0 %3935, %v3886
        %v3937 = vpop.permute.xlu0 %3936
        %3940 = vset.pattern.permute.xlu0 16
        %3941 = vperm.xlu0 %3940, %v3887
        %v3942 = vpop.permute.xlu0 %3941
        %3945 = vset.pattern.permute.xlu0 16
        %3946 = vperm.xlu0 %3945, %v3888
        %v3947 = vpop.permute.xlu0 %3946
        %3950 = vset.pattern.permute.xlu0 16
        %3951 = vperm.xlu0 %3950, %v3889
        %v3952 = vpop.permute.xlu0 %3951
        %3955 = vset.pattern.permute.xlu0 16
        %3956 = vperm.xlu0 %3955, %v3890
        %v3957 = vpop.permute.xlu0 %3956
        %3960 = vset.pattern.permute.xlu0 16
        %3961 = vperm.xlu0 %3960, %v3891
        %v3962 = vpop.permute.xlu0 %3961
        %3965 = vset.pattern.permute.xlu0 16
        %3966 = vperm.xlu0 %3965, %v3892
        %v3967 = vpop.permute.xlu0 %3966
        %3970 = vset.pattern.permute.xlu0 16
        %3971 = vperm.xlu0 %3970, %v3893
        %v3972 = vpop.permute.xlu0 %3971
        %v3974 = vmul.f32 %v3862, %v3897
        %v3975 = vmul.f32 %v3863, %v3902
        %v3976 = vmul.f32 %v3864, %v3907
        %v3977 = vmul.f32 %v3865, %v3912
        %v3978 = vmul.f32 %v3866, %v3917
        %v3979 = vmul.f32 %v3867, %v3922
        %v3980 = vmul.f32 %v3868, %v3927
        %v3981 = vmul.f32 %v3869, %v3932
        %v3982 = vmul.f32 %v3870, %v3937
        %v3983 = vmul.f32 %v3871, %v3942
        %v3984 = vmul.f32 %v3872, %v3947
        %v3985 = vmul.f32 %v3873, %v3952
        %v3986 = vmul.f32 %v3874, %v3957
        %v3987 = vmul.f32 %v3875, %v3962
        %v3988 = vmul.f32 %v3876, %v3967
        %v3989 = vmul.f32 %v3877, %v3972
        %vm3990 = vcmp.gt.f32.partialorder %v3974, 0.0
        %vm3991 = vcmp.gt.f32.partialorder %v3975, 0.0
        %vm3992 = vcmp.gt.f32.partialorder %v3976, 0.0
        %vm3993 = vcmp.gt.f32.partialorder %v3977, 0.0
        %vm3994 = vcmp.gt.f32.partialorder %v3978, 0.0
        %vm3995 = vcmp.gt.f32.partialorder %v3979, 0.0
        %vm3996 = vcmp.gt.f32.partialorder %v3980, 0.0
        %vm3997 = vcmp.gt.f32.partialorder %v3981, 0.0
        %vm3998 = vcmp.gt.f32.partialorder %v3982, 0.0
        %vm3999 = vcmp.gt.f32.partialorder %v3983, 0.0
        %vm4000 = vcmp.gt.f32.partialorder %v3984, 0.0
        %vm4001 = vcmp.gt.f32.partialorder %v3985, 0.0
        %vm4002 = vcmp.gt.f32.partialorder %v3986, 0.0
        %vm4003 = vcmp.gt.f32.partialorder %v3987, 0.0
        %vm4004 = vcmp.gt.f32.partialorder %v3988, 0.0
        %vm4005 = vcmp.gt.f32.partialorder %v3989, 0.0
        %v4006 = vmul.f32 %v3974, 1.442695
        %v4007 = vpow.pop %v4006
        %v4008 = vmul.f32 %v3975, 1.442695
        %v4009 = vpow.pop %v4008
        %v4010 = vmul.f32 %v3976, 1.442695
        %v4011 = vpow.pop %v4010
        %v4012 = vmul.f32 %v3977, 1.442695
        %v4013 = vpow.pop %v4012
        %v4014 = vmul.f32 %v3978, 1.442695
        %v4015 = vpow.pop %v4014
        %v4016 = vmul.f32 %v3979, 1.442695
        %v4017 = vpow.pop %v4016
        %v4018 = vmul.f32 %v3980, 1.442695
        %v4019 = vpow.pop %v4018
        %v4020 = vmul.f32 %v3981, 1.442695
        %v4021 = vpow.pop %v4020
        %v4022 = vmul.f32 %v3982, 1.442695
        %v4023 = vpow.pop %v4022
        %v4024 = vmul.f32 %v3983, 1.442695
        %v4025 = vpow.pop %v4024
        %v4026 = vmul.f32 %v3984, 1.442695
        %v4027 = vpow.pop %v4026
        %v4028 = vmul.f32 %v3985, 1.442695
        %v4029 = vpow.pop %v4028
        %v4030 = vmul.f32 %v3986, 1.442695
        %v4031 = vpow.pop %v4030
        %v4032 = vmul.f32 %v3987, 1.442695
        %v4033 = vpow.pop %v4032
        %v4034 = vmul.f32 %v3988, 1.442695
        %v4035 = vpow.pop %v4034
        %v4036 = vmul.f32 %v3989, 1.442695
        %v4037 = vpow.pop %v4036
        %v4038 = vsub.f32 %v4007, 1.0
        %v4039 = vsub.f32 %v4009, 1.0
        %v4040 = vsub.f32 %v4011, 1.0
        %v4041 = vsub.f32 %v4013, 1.0
        %v4042 = vsub.f32 %v4015, 1.0
        %v4043 = vsub.f32 %v4017, 1.0
        %v4044 = vsub.f32 %v4019, 1.0
        %v4045 = vsub.f32 %v4021, 1.0
        %v4046 = vsub.f32 %v4023, 1.0
        %v4047 = vsub.f32 %v4025, 1.0
        %v4048 = vsub.f32 %v4027, 1.0
        %v4049 = vsub.f32 %v4029, 1.0
        %v4050 = vsub.f32 %v4031, 1.0
        %v4051 = vsub.f32 %v4033, 1.0
        %v4052 = vsub.f32 %v4035, 1.0
        %v4053 = vsub.f32 %v4037, 1.0
        %v4054 = vsel %vm3990, %v3974, %v4038
        %v4055 = vsel %vm3991, %v3975, %v4039
        %v4056 = vsel %vm3992, %v3976, %v4040
        %v4057 = vsel %vm3993, %v3977, %v4041
        %v4058 = vsel %vm3994, %v3978, %v4042
        %v4059 = vsel %vm3995, %v3979, %v4043
        %v4060 = vsel %vm3996, %v3980, %v4044
        %v4061 = vsel %vm3997, %v3981, %v4045
        %v4062 = vsel %vm3998, %v3982, %v4046
        %v4063 = vsel %vm3999, %v3983, %v4047
        %v4064 = vsel %vm4000, %v3984, %v4048
        %v4065 = vsel %vm4001, %v3985, %v4049
        %v4066 = vsel %vm4002, %v3986, %v4050
        %v4067 = vsel %vm4003, %v3987, %v4051
        %v4068 = vsel %vm4004, %v3988, %v4052
        %v4069 = vsel %vm4005, %v3989, %v4053
        %4086 = vrot.lane.b32.xlu0 %v3638, 16
        %v4087 = vpop.permute.xlu0 %4086
        %4088 = vrot.lane.b32.xlu0 %v3639, 16
        %v4089 = vpop.permute.xlu0 %4088
        %4090 = vrot.lane.b32.xlu0 %v3640, 16
        %v4091 = vpop.permute.xlu0 %4090
        %4092 = vrot.lane.b32.xlu0 %v3641, 16
        %v4093 = vpop.permute.xlu0 %4092
        %4094 = vrot.lane.b32.xlu0 %v3642, 16
        %v4095 = vpop.permute.xlu0 %4094
        %4096 = vrot.lane.b32.xlu0 %v3643, 16
        %v4097 = vpop.permute.xlu0 %4096
        %4098 = vrot.lane.b32.xlu0 %v3644, 16
        %v4099 = vpop.permute.xlu0 %4098
        %4100 = vrot.lane.b32.xlu0 %v3645, 16
        %v4101 = vpop.permute.xlu0 %4100
        %4102 = vrot.lane.b32.xlu0 %v3646, 16
        %v4103 = vpop.permute.xlu0 %4102
        %4104 = vrot.lane.b32.xlu0 %v3647, 16
        %v4105 = vpop.permute.xlu0 %4104
        %4106 = vrot.lane.b32.xlu0 %v3648, 16
        %v4107 = vpop.permute.xlu0 %4106
        %4108 = vrot.lane.b32.xlu0 %v3649, 16
        %v4109 = vpop.permute.xlu0 %4108
        %4110 = vrot.lane.b32.xlu0 %v3650, 16
        %v4111 = vpop.permute.xlu0 %4110
        %4112 = vrot.lane.b32.xlu0 %v3651, 16
        %v4113 = vpop.permute.xlu0 %4112
        %4114 = vrot.lane.b32.xlu0 %v3652, 16
        %v4115 = vpop.permute.xlu0 %4114
        %4116 = vrot.lane.b32.xlu0 %v3653, 16
        %v4117 = vpop.permute.xlu0 %4116
        %4150 = vrot.lane.b32.xlu0 %v3846, 32
        %v4151 = vpop.permute.xlu0 %4150
        %4152 = vrot.lane.b32.xlu0 %v3847, 32
        %v4153 = vpop.permute.xlu0 %4152
        %4154 = vrot.lane.b32.xlu0 %v3848, 32
        %v4155 = vpop.permute.xlu0 %4154
        %4156 = vrot.lane.b32.xlu0 %v3849, 32
        %v4157 = vpop.permute.xlu0 %4156
        %4158 = vrot.lane.b32.xlu0 %v3850, 32
        %v4159 = vpop.permute.xlu0 %4158
        %4160 = vrot.lane.b32.xlu0 %v3851, 32
        %v4161 = vpop.permute.xlu0 %4160
        %4162 = vrot.lane.b32.xlu0 %v3852, 32
        %v4163 = vpop.permute.xlu0 %4162
        %4164 = vrot.lane.b32.xlu0 %v3853, 32
        %v4165 = vpop.permute.xlu0 %4164
        %4166 = vrot.lane.b32.xlu0 %v3854, 32
        %v4167 = vpop.permute.xlu0 %4166
        %4168 = vrot.lane.b32.xlu0 %v3855, 32
        %v4169 = vpop.permute.xlu0 %4168
        %4170 = vrot.lane.b32.xlu0 %v3856, 32
        %v4171 = vpop.permute.xlu0 %4170
        %4172 = vrot.lane.b32.xlu0 %v3857, 32
        %v4173 = vpop.permute.xlu0 %4172
        %4174 = vrot.lane.b32.xlu0 %v3858, 32
        %v4175 = vpop.permute.xlu0 %4174
        %4176 = vrot.lane.b32.xlu0 %v3859, 32
        %v4177 = vpop.permute.xlu0 %4176
        %4178 = vrot.lane.b32.xlu0 %v3860, 32
        %v4179 = vpop.permute.xlu0 %4178
        %4180 = vrot.lane.b32.xlu0 %v3861, 32
        %v4181 = vpop.permute.xlu0 %4180
        %4214 = vrot.lane.b32.xlu0 %v4054, 48
        %v4215 = vpop.permute.xlu0 %4214
        %4216 = vrot.lane.b32.xlu0 %v4055, 48
        %v4217 = vpop.permute.xlu0 %4216
        %4218 = vrot.lane.b32.xlu0 %v4056, 48
        %v4219 = vpop.permute.xlu0 %4218
        %4220 = vrot.lane.b32.xlu0 %v4057, 48
        %v4221 = vpop.permute.xlu0 %4220
        %4222 = vrot.lane.b32.xlu0 %v4058, 48
        %v4223 = vpop.permute.xlu0 %4222
        %4224 = vrot.lane.b32.xlu0 %v4059, 48
        %v4225 = vpop.permute.xlu0 %4224
        %4226 = vrot.lane.b32.xlu0 %v4060, 48
        %v4227 = vpop.permute.xlu0 %4226
        %4228 = vrot.lane.b32.xlu0 %v4061, 48
        %v4229 = vpop.permute.xlu0 %4228
        %4230 = vrot.lane.b32.xlu0 %v4062, 48
        %v4231 = vpop.permute.xlu0 %4230
        %4232 = vrot.lane.b32.xlu0 %v4063, 48
        %v4233 = vpop.permute.xlu0 %4232
        %4234 = vrot.lane.b32.xlu0 %v4064, 48
        %v4235 = vpop.permute.xlu0 %4234
        %4236 = vrot.lane.b32.xlu0 %v4065, 48
        %v4237 = vpop.permute.xlu0 %4236
        %4238 = vrot.lane.b32.xlu0 %v4066, 48
        %v4239 = vpop.permute.xlu0 %4238
        %4240 = vrot.lane.b32.xlu0 %v4067, 48
        %v4241 = vpop.permute.xlu0 %4240
        %4242 = vrot.lane.b32.xlu0 %v4068, 48
        %v4243 = vpop.permute.xlu0 %4242
        %4244 = vrot.lane.b32.xlu0 %v4069, 48
        %v4245 = vpop.permute.xlu0 %4244
        %vm4262 = vcmask 130048
        %v4263 = vsel %vm4262, %v3430, %v4087
        %v4264 = vsel %vm4262, %v3431, %v4089
        %v4265 = vsel %vm4262, %v3432, %v4091
        %v4266 = vsel %vm4262, %v3433, %v4093
        %v4267 = vsel %vm4262, %v3434, %v4095
        %v4268 = vsel %vm4262, %v3435, %v4097
        %v4269 = vsel %vm4262, %v3436, %v4099
        %v4270 = vsel %vm4262, %v3437, %v4101
        %v4271 = vsel %vm4262, %v3438, %v4103
        %v4272 = vsel %vm4262, %v3439, %v4105
        %v4273 = vsel %vm4262, %v3440, %v4107
        %v4274 = vsel %vm4262, %v3441, %v4109
        %v4275 = vsel %vm4262, %v3442, %v4111
        %v4276 = vsel %vm4262, %v3443, %v4113
        %v4277 = vsel %vm4262, %v3444, %v4115
        %v4278 = vsel %vm4262, %v3445, %v4117
        %vm4279 = vcmask 261120
        %v4280 = vsel %vm4279, %v4263, %v4151
        %v4281 = vsel %vm4279, %v4264, %v4153
        %v4282 = vsel %vm4279, %v4265, %v4155
        %v4283 = vsel %vm4279, %v4266, %v4157
        %v4284 = vsel %vm4279, %v4267, %v4159
        %v4285 = vsel %vm4279, %v4268, %v4161
        %v4286 = vsel %vm4279, %v4269, %v4163
        %v4287 = vsel %vm4279, %v4270, %v4165
        %v4288 = vsel %vm4279, %v4271, %v4167
        %v4289 = vsel %vm4279, %v4272, %v4169
        %v4290 = vsel %vm4279, %v4273, %v4171
        %v4291 = vsel %vm4279, %v4274, %v4173
        %v4292 = vsel %vm4279, %v4275, %v4175
        %v4293 = vsel %vm4279, %v4276, %v4177
        %v4294 = vsel %vm4279, %v4277, %v4179
        %v4295 = vsel %vm4279, %v4278, %v4181
        %vm4296 = vcmask 392192
        %v4297 = vsel %vm4296, %v4280, %v4215
        %v4298 = vsel %vm4296, %v4281, %v4217
        %v4299 = vsel %vm4296, %v4282, %v4219
        %v4300 = vsel %vm4296, %v4283, %v4221
        %v4301 = vsel %vm4296, %v4284, %v4223
        %v4302 = vsel %vm4296, %v4285, %v4225
        %v4303 = vsel %vm4296, %v4286, %v4227
        %v4304 = vsel %vm4296, %v4287, %v4229
        %v4305 = vsel %vm4296, %v4288, %v4231
        %v4306 = vsel %vm4296, %v4289, %v4233
        %v4307 = vsel %vm4296, %v4290, %v4235
        %v4308 = vsel %vm4296, %v4291, %v4237
        %v4309 = vsel %vm4296, %v4292, %v4239
        %v4310 = vsel %vm4296, %v4293, %v4241
        %v4311 = vsel %vm4296, %v4294, %v4243
        %v4312 = vsel %vm4296, %v4295, %v4245
        %vm4313 = vcmask 523264
        %4314 = vst.msk [vmem:[%s296] sm:$0xff] %vm4313, %v4297
        %4315 = vst.msk [vmem:[%s296 + $0x8] sm:$0xff] %vm4313, %v4298
        %4316 = vst.msk [vmem:[%s296 + $0x10] sm:$0xff] %vm4313, %v4299
        %4317 = vst.msk [vmem:[%s296 + $0x18] sm:$0xff] %vm4313, %v4300
        %4318 = vst.msk [vmem:[%s296 + $0x20] sm:$0xff] %vm4313, %v4301
        %4319 = vst.msk [vmem:[%s296 + $0x28] sm:$0xff] %vm4313, %v4302
        %4320 = vst.msk [vmem:[%s296 + $0x30] sm:$0xff] %vm4313, %v4303
        %4321 = vst.msk [vmem:[%s296 + $0x38] sm:$0xff] %vm4313, %v4304
        %4322 = vst.msk [vmem:[%s296 + $0x40] sm:$0xff] %vm4313, %v4305
        %4323 = vst.msk [vmem:[%s296 + $0x48] sm:$0xff] %vm4313, %v4306
        %4324 = vst.msk [vmem:[%s296 + $0x50] sm:$0xff] %vm4313, %v4307
        %4325 = vst.msk [vmem:[%s296 + $0x58] sm:$0xff] %vm4313, %v4308
        %4326 = vst.msk [vmem:[%s296 + $0x60] sm:$0xff] %vm4313, %v4309
        %4327 = vst.msk [vmem:[%s296 + $0x68] sm:$0xff] %vm4313, %v4310
        %4328 = vst.msk [vmem:[%s296 + $0x70] sm:$0xff] %vm4313, %v4311
        %4329 = vst.msk [vmem:[%s296 + $0x78] sm:$0xff] %vm4313, %v4312
      $region44: #{spgat_forward.5} parent=35 // pred_fallthru
        _
      %s4330 = smul.u32 16, %s19
      %p4331 = scmp.lt.s32.totalorder %s4330, 31
      %s4332 = scalar_select %p4331, %s4330, 31
      %s4333 = smul.addr %s4332, 8
      %s4334 = scalar_lea.vmem %s4, %s4333
      // Predicated region
      $region45: #{spgat_forward.5} parent=35 // pred_check
        %p4335 = pneg %p151
      $region46: #{spgat_forward.5} parent=35 // pred_check_branch
        %4337 = sbr.rel (%p4335) target = $region48
      $region47: #{spgat_forward.5} parent=35 // pred_region
        %s4338 = smul.u32 16, %s19
      $region48: #{spgat_forward.5} parent=35 // pred_fallthru
        _
    $region36: #{spgat_forward.5} parent=5 // pred_fallthru
      _
    %p4339 = scmp.le.s32.totalorder 2, %s10
    // Predicated region
    $region49: #{spgat_forward.5} parent=5 // pred_check
      %p4340 = pneg %p4339
    $region50: #{spgat_forward.5} parent=5 // pred_check_branch
      %4342 = sbr.rel (%p4340) target = $region52
    $region51: #{spgat_forward.5} parent=5 // pred_region
      %s4343 = ssub.s32 %s10, 2
      // Predicated region
      $region53: #{spgat_forward.5} parent=51 // pred_check
        %p4344 = pneg %p157
      $region54: #{spgat_forward.5} parent=51 // pred_check_branch
        %4346 = sbr.rel (%p4344) target = $region56
      $region55: #{spgat_forward.5} parent=51 // pred_region
        %s4347 = smul.u32 16, %s21
        %p4348 = scmp.lt.s32.totalorder %s4347, 31
        %s4349 = scalar_select %p4348, %s4347, 31
        %s4350 = smul.addr %s4349, 8
        %s4351 = scalar_lea.vmem %s4, %s4350
      $region56: #{spgat_forward.5} parent=51 // pred_fallthru
        _
    $region52: #{spgat_forward.5} parent=5 // pred_fallthru
      _
  $region6: #{spgat_forward.5} parent=0 // loop_footer
    %s14 = sadd.s32 1, %s10
  $region7: #{spgat_forward.5} parent=0 // loop_footer_branch
    %9 = sbr.rel target = $region3
  $region8: #{spgat_forward.5} parent=0 // loop_exit
    _

</llo_original>
